<compile_context>
chip_gen: v6e
topology: v6e:2x2x1
jax: 0.10.0
libtpu: 0.0.40
codegen_flags: <defaults>
</compile_context>

<pallas_src>
import jax
import jax.numpy as jnp
from jax.experimental import pallas as pl
from jax.experimental.pallas import tpu as pltpu

Z_DIM = 100
N_CLASSES = 4
IN_DIM = Z_DIM + N_CLASSES        # 104
H1, H2, H3 = 256, 512, 1024
OUT_DIM = 1500

# padded sizes for clean (8,128)-aligned VMEM tiles
IN_PAD = 128                      # 104 -> 128 (zero-padded features / weight rows)
OUT_PAD = 1536                    # 1500 -> 1536 (zero-padded weight cols / bias)
MAX_TB = 256                      # max batch-tile rows per grid step


def _generator_kernel(x_ref,
                      w1_ref, b1_ref,
                      w2_ref, b2_ref,
                      w3_ref, b3_ref,
                      w4_ref, b4_ref,
                      o_ref):
    # One batch tile: 4 chained MXU matmuls (bf16 operands, f32 accumulation)
    # + VPU bias/ReLU. Weights stay resident across grid steps.
    h = jnp.dot(x_ref[...], w1_ref[...], preferred_element_type=jnp.float32) + b1_ref[...]
    h = jnp.maximum(h, 0.0).astype(jnp.bfloat16)
    h = jnp.dot(h, w2_ref[...], preferred_element_type=jnp.float32) + b2_ref[...]
    h = jnp.maximum(h, 0.0).astype(jnp.bfloat16)
    h = jnp.dot(h, w3_ref[...], preferred_element_type=jnp.float32) + b3_ref[...]
    h = jnp.maximum(h, 0.0).astype(jnp.bfloat16)
    o_ref[...] = (
        jnp.dot(h, w4_ref[...], preferred_element_type=jnp.float32) + b4_ref[...])


def _init_linear(key, fan_in, fan_out):
    """PyTorch nn.Linear default init: U(-1/sqrt(fan_in), 1/sqrt(fan_in))."""
    kw, kb = jax.random.split(key)
    bound = 1.0 / jnp.sqrt(jnp.float32(fan_in))
    # stored as (in, out) so the kernel does x @ W
    w = jax.random.uniform(kw, (fan_in, fan_out), jnp.float32, -bound, bound)
    b = jax.random.uniform(kb, (1, fan_out), jnp.float32, -bound, bound)
    return w, b


def init_generator_params(key):
    k1, k2, k3, k4 = jax.random.split(key, 4)
    w1, b1 = _init_linear(k1, IN_DIM, H1)
    w2, b2 = _init_linear(k2, H1, H2)
    w3, b3 = _init_linear(k3, H2, H3)
    w4, b4 = _init_linear(k4, H3, OUT_DIM)
    return dict(w1=w1, b1=b1, w2=w2, b2=b2, w3=w3, b3=b3, w4=w4, b4=b4)


def prepare_params(params):
    """One-time step: cast weights to bf16 and pad to tile-friendly shapes.

    Done once at init so the per-call path does not re-materialize padded
    copies of the ~4.5 MB weight set on every forward.
    """
    w1_p = (jnp.zeros((IN_PAD, H1), jnp.bfloat16)
            .at[:IN_DIM, :].set(params["w1"].astype(jnp.bfloat16)))
    w2_p = params["w2"].astype(jnp.bfloat16)
    w3_p = params["w3"].astype(jnp.bfloat16)
    w4_p = (jnp.zeros((H3, OUT_PAD), jnp.bfloat16)
            .at[:, :OUT_DIM].set(params["w4"].astype(jnp.bfloat16)))
    b4_p = (jnp.zeros((1, OUT_PAD), jnp.float32)
            .at[:, :OUT_DIM].set(params["b4"]))
    return dict(w1=w1_p, b1=params["b1"],
                w2=w2_p, b2=params["b2"],
                w3=w3_p, b3=params["b3"],
                w4=w4_p, b4=b4_p)


def music_gan_forward(z, labels, prepared):
    """Equivalent of MusicGAN.forward(z, labels): generator(cat([z, labels], 1))."""
    assert z.ndim == 2 and z.shape[1] == Z_DIM
    assert labels.ndim == 2 and labels.shape[1] == N_CLASSES
    batch = z.shape[0]

    # glue in plain JAX: concat + zero-pad the (small) input to tile sizes
    x = jnp.concatenate([z, labels], axis=1)                          # (B, 104)
    b8 = ((batch + 7) // 8) * 8
    if b8 > MAX_TB:
        tb = MAX_TB
        b_pad = ((b8 + tb - 1) // tb) * tb
    else:
        tb = b8
        b_pad = b8
    x_p = (jnp.zeros((b_pad, IN_PAD), jnp.bfloat16)
           .at[:batch, :IN_DIM].set(x.astype(jnp.bfloat16)))

    operands = (
        x_p,
        prepared["w1"], prepared["b1"],
        prepared["w2"], prepared["b2"],
        prepared["w3"], prepared["b3"],
        prepared["w4"], prepared["b4"],
    )

    out_p = pl.pallas_call(
        _generator_kernel,
        out_shape=jax.ShapeDtypeStruct((b_pad, OUT_PAD), jnp.float32),
        grid=(b_pad // tb,),
        in_specs=[
            pl.BlockSpec((tb, IN_PAD),    lambda i: (i, 0)),   # batch-tiled input
            pl.BlockSpec((IN_PAD, H1),    lambda i: (0, 0)),   # weights: fixed block,
            pl.BlockSpec((1, H1),         lambda i: (0, 0)),   # stay resident across grid
            pl.BlockSpec((H1, H2),        lambda i: (0, 0)),
            pl.BlockSpec((1, H2),         lambda i: (0, 0)),
            pl.BlockSpec((H2, H3),        lambda i: (0, 0)),
            pl.BlockSpec((1, H3),         lambda i: (0, 0)),
            pl.BlockSpec((H3, OUT_PAD),   lambda i: (0, 0)),
            pl.BlockSpec((1, OUT_PAD),    lambda i: (0, 0)),
        ],
        out_specs=pl.BlockSpec((tb, OUT_PAD), lambda i: (i, 0)),
        compiler_params=pltpu.CompilerParams(
            dimension_semantics=("parallel",),
            vmem_limit_bytes=32 << 20,
        ),
    )(*operands)

    return out_p[:batch, :OUT_DIM]                                    # (B, 1500)


def _reference_forward_f32(z, labels, params):
    x = jnp.concatenate([z, labels], axis=1).astype(jnp.float32)
    h = jnp.maximum(x @ params["w1"] + params["b1"], 0.0)
    h = jnp.maximum(h @ params["w2"] + params["b2"], 0.0)
    h = jnp.maximum(h @ params["w3"] + params["b3"], 0.0)
    return h @ params["w4"] + params["b4"]


def _reference_forward_bf16(z, labels, params):
    # Same bf16-operand / f32-accumulate recipe as the kernel, in plain jnp.
    h = jnp.concatenate([z, labels], axis=1).astype(jnp.bfloat16)
    for wn, bn in (("w1", "b1"), ("w2", "b2"), ("w3", "b3")):
        h = jnp.dot(h, params[wn].astype(jnp.bfloat16),
                    preferred_element_type=jnp.float32) + params[bn]
        h = jnp.maximum(h, 0.0).astype(jnp.bfloat16)
    return jnp.dot(h, params["w4"].astype(jnp.bfloat16),
                   preferred_element_type=jnp.float32) + params["b4"]


if __name__ == "__main__":
    key = jax.random.PRNGKey(0)
    kp, kz, kl = jax.random.split(key, 3)

    params = init_generator_params(kp)
    prepared = prepare_params(params)          # one-time bf16 cast + padding

    batch = 2
    z = jax.random.normal(kz, (batch, Z_DIM), jnp.float32)            # noise, like torch.randn
    label_ids = jax.random.randint(kl, (batch,), 1, 5)                # emotion labels in 1..4
    labels = jax.nn.one_hot(label_ids - 1, N_CLASSES, dtype=jnp.float32)

    out = music_gan_forward(z, labels, prepared)
    out = jax.block_until_ready(out)
    assert out.shape == (batch, OUT_DIM), out.shape

    # Tight check against a bf16-matched plain-JAX reference (same arithmetic).
    ref_bf16 = _reference_forward_bf16(z, labels, params)
    assert jnp.allclose(out, ref_bf16, atol=1e-3, rtol=1e-3), "mismatch vs bf16 reference"

    # Loose check against the original f32 PyTorch-equivalent semantics
    # (bf16 weight storage costs ~1% relative error, f32 accumulation).
    ref_f32 = _reference_forward_f32(z, labels, params)
    assert jnp.allclose(out, ref_f32, atol=5e-2, rtol=5e-2), "mismatch vs f32 reference"

    # TODO(synk): discriminator + training loop (BCE loss, Adam, dropout) are
    # host-side orchestration / not part of forward(); intentionally not kernelized.
    print("KERNEL_OK")
</pallas_src>

<mosaic_0001>
module attributes {stable_mosaic.version = 11 : i64} {
  func.func @_generator_kernel(%arg0: i32, %arg1: memref<8x128xbf16, #tpu.memory_space<vmem>>, %arg2: memref<128x256xbf16, #tpu.memory_space<vmem>>, %arg3: memref<1x256xf32, #tpu.memory_space<vmem>>, %arg4: memref<256x512xbf16, #tpu.memory_space<vmem>>, %arg5: memref<1x512xf32, #tpu.memory_space<vmem>>, %arg6: memref<512x1024xbf16, #tpu.memory_space<vmem>>, %arg7: memref<1x1024xf32, #tpu.memory_space<vmem>>, %arg8: memref<1024x1536xbf16, #tpu.memory_space<vmem>>, %arg9: memref<1x1536xf32, #tpu.memory_space<vmem>>, %arg10: memref<8x1536xf32, #tpu.memory_space<vmem>>) attributes {dimension_semantics = [#tpu.dimension_semantics<parallel>], iteration_bounds = array<i64: 1>, scalar_prefetch = 0 : i64, scratch_operands = 0 : i64, tpu.core_type = #tpu.core_type<tc>, window_params = [{transform_indices = @transform_0, window_bounds = array<i64: 8, 128>}, {pipeline_mode = #tpu.pipeline_mode<synchronous>, transform_indices = @transform_1, window_bounds = array<i64: 128, 256>}, {pipeline_mode = #tpu.pipeline_mode<synchronous>, transform_indices = @transform_2, window_bounds = array<i64: 1, 256>}, {pipeline_mode = #tpu.pipeline_mode<synchronous>, transform_indices = @transform_3, window_bounds = array<i64: 256, 512>}, {pipeline_mode = #tpu.pipeline_mode<synchronous>, transform_indices = @transform_4, window_bounds = array<i64: 1, 512>}, {pipeline_mode = #tpu.pipeline_mode<synchronous>, transform_indices = @transform_5, window_bounds = array<i64: 512, 1024>}, {pipeline_mode = #tpu.pipeline_mode<synchronous>, transform_indices = @transform_6, window_bounds = array<i64: 1, 1024>}, {pipeline_mode = #tpu.pipeline_mode<synchronous>, transform_indices = @transform_7, window_bounds = array<i64: 1024, 1536>}, {pipeline_mode = #tpu.pipeline_mode<synchronous>, transform_indices = @transform_8, window_bounds = array<i64: 1, 1536>}, {transform_indices = @transform_9, window_bounds = array<i64: 8, 1536>}]} {
    %c0 = arith.constant 0 : index
    %c0_0 = arith.constant 0 : index
    %0 = vector.load %arg1[%c0, %c0_0] : memref<8x128xbf16, #tpu.memory_space<vmem>>, vector<8x128xbf16>
    %c0_1 = arith.constant 0 : index
    %c0_2 = arith.constant 0 : index
    %1 = vector.load %arg2[%c0_1, %c0_2] : memref<128x256xbf16, #tpu.memory_space<vmem>>, vector<128x256xbf16>
    %cst = arith.constant dense<0.000000e+00> : vector<8x256xf32>
    %2 = tpu.matmul %0, %1, %cst {dimension_numbers = #tpu.dot_dimension_numbers<[1], [0], [0], [1], [0, 0, 1, 1], [], []>} : vector<8x128xbf16>, vector<128x256xbf16>, vector<8x256xf32> -> vector<8x256xf32>
    %c0_3 = arith.constant 0 : index
    %c0_4 = arith.constant 0 : index
    %3 = vector.load %arg3[%c0_3, %c0_4] : memref<1x256xf32, #tpu.memory_space<vmem>>, vector<1x256xf32>
    %4 = vector.broadcast %3 : vector<1x256xf32> to vector<8x256xf32>
    %5 = arith.addf %2, %4 : vector<8x256xf32>
    %cst_5 = arith.constant 0.000000e+00 : f32
    %6 = vector.broadcast %cst_5 : f32 to vector<8x256xf32>
    %7 = arith.maximumf %5, %6 : vector<8x256xf32>
    %8 = arith.truncf %7 : vector<8x256xf32> to vector<8x256xbf16>
    %c0_6 = arith.constant 0 : index
    %c0_7 = arith.constant 0 : index
    %9 = vector.load %arg4[%c0_6, %c0_7] : memref<256x512xbf16, #tpu.memory_space<vmem>>, vector<256x512xbf16>
    %cst_8 = arith.constant dense<0.000000e+00> : vector<8x512xf32>
    %10 = tpu.matmul %8, %9, %cst_8 {dimension_numbers = #tpu.dot_dimension_numbers<[1], [0], [0], [1], [0, 0, 1, 1], [], []>} : vector<8x256xbf16>, vector<256x512xbf16>, vector<8x512xf32> -> vector<8x512xf32>
    %c0_9 = arith.constant 0 : index
    %c0_10 = arith.constant 0 : index
    %11 = vector.load %arg5[%c0_9, %c0_10] : memref<1x512xf32, #tpu.memory_space<vmem>>, vector<1x512xf32>
    %12 = vector.broadcast %11 : vector<1x512xf32> to vector<8x512xf32>
    %13 = arith.addf %10, %12 : vector<8x512xf32>
    %cst_11 = arith.constant 0.000000e+00 : f32
    %14 = vector.broadcast %cst_11 : f32 to vector<8x512xf32>
    %15 = arith.maximumf %13, %14 : vector<8x512xf32>
    %16 = arith.truncf %15 : vector<8x512xf32> to vector<8x512xbf16>
    %c0_12 = arith.constant 0 : index
    %c0_13 = arith.constant 0 : index
    %17 = vector.load %arg6[%c0_12, %c0_13] : memref<512x1024xbf16, #tpu.memory_space<vmem>>, vector<512x1024xbf16>
    %cst_14 = arith.constant dense<0.000000e+00> : vector<8x1024xf32>
    %18 = tpu.matmul %16, %17, %cst_14 {dimension_numbers = #tpu.dot_dimension_numbers<[1], [0], [0], [1], [0, 0, 1, 1], [], []>} : vector<8x512xbf16>, vector<512x1024xbf16>, vector<8x1024xf32> -> vector<8x1024xf32>
    %c0_15 = arith.constant 0 : index
    %c0_16 = arith.constant 0 : index
    %19 = vector.load %arg7[%c0_15, %c0_16] : memref<1x1024xf32, #tpu.memory_space<vmem>>, vector<1x1024xf32>
    %20 = vector.broadcast %19 : vector<1x1024xf32> to vector<8x1024xf32>
    %21 = arith.addf %18, %20 : vector<8x1024xf32>
    %cst_17 = arith.constant 0.000000e+00 : f32
    %22 = vector.broadcast %cst_17 : f32 to vector<8x1024xf32>
    %23 = arith.maximumf %21, %22 : vector<8x1024xf32>
    %24 = arith.truncf %23 : vector<8x1024xf32> to vector<8x1024xbf16>
    %c0_18 = arith.constant 0 : index
    %c0_19 = arith.constant 0 : index
    %25 = vector.load %arg8[%c0_18, %c0_19] : memref<1024x1536xbf16, #tpu.memory_space<vmem>>, vector<1024x1536xbf16>
    %cst_20 = arith.constant dense<0.000000e+00> : vector<8x1536xf32>
    %26 = tpu.matmul %24, %25, %cst_20 {dimension_numbers = #tpu.dot_dimension_numbers<[1], [0], [0], [1], [0, 0, 1, 1], [], []>} : vector<8x1024xbf16>, vector<1024x1536xbf16>, vector<8x1536xf32> -> vector<8x1536xf32>
    %c0_21 = arith.constant 0 : index
    %c0_22 = arith.constant 0 : index
    %27 = vector.load %arg9[%c0_21, %c0_22] : memref<1x1536xf32, #tpu.memory_space<vmem>>, vector<1x1536xf32>
    %28 = vector.broadcast %27 : vector<1x1536xf32> to vector<8x1536xf32>
    %29 = arith.addf %26, %28 : vector<8x1536xf32>
    %c0_23 = arith.constant 0 : index
    %c0_24 = arith.constant 0 : index
    %30 = vector.load %arg10[%c0_23, %c0_24] : memref<8x1536xf32, #tpu.memory_space<vmem>>, vector<8x1536xf32>
    tpu.vector_store %arg10[%c0_23, %c0_24], %29 {strides = array<i32>} : memref<8x1536xf32, #tpu.memory_space<vmem>>, vector<8x1536xf32>,
    return
  }
  func.func @transform_0(%arg0: i32) -> (i32, i32) {
    %c0_i32 = arith.constant 0 : i32
    %c0_i32_0 = arith.constant 0 : i32
    return %arg0, %c0_i32 : i32, i32
  }
  func.func @transform_1(%arg0: i32) -> (i32, i32) {
    %c0_i32 = arith.constant 0 : i32
    %c0_i32_0 = arith.constant 0 : i32
    %c0_i32_1 = arith.constant 0 : i32
    return %c0_i32, %c0_i32_0 : i32, i32
  }
  func.func @transform_2(%arg0: i32) -> (i32, i32) {
    %c0_i32 = arith.constant 0 : i32
    %c0_i32_0 = arith.constant 0 : i32
    %c0_i32_1 = arith.constant 0 : i32
    return %c0_i32, %c0_i32_0 : i32, i32
  }
  func.func @transform_3(%arg0: i32) -> (i32, i32) {
    %c0_i32 = arith.constant 0 : i32
    %c0_i32_0 = arith.constant 0 : i32
    %c0_i32_1 = arith.constant 0 : i32
    return %c0_i32, %c0_i32_0 : i32, i32
  }
  func.func @transform_4(%arg0: i32) -> (i32, i32) {
    %c0_i32 = arith.constant 0 : i32
    %c0_i32_0 = arith.constant 0 : i32
    %c0_i32_1 = arith.constant 0 : i32
    return %c0_i32, %c0_i32_0 : i32, i32
  }
  func.func @transform_5(%arg0: i32) -> (i32, i32) {
    %c0_i32 = arith.constant 0 : i32
    %c0_i32_0 = arith.constant 0 : i32
    %c0_i32_1 = arith.constant 0 : i32
    return %c0_i32, %c0_i32_0 : i32, i32
  }
  func.func @transform_6(%arg0: i32) -> (i32, i32) {
    %c0_i32 = arith.constant 0 : i32
    %c0_i32_0 = arith.constant 0 : i32
    %c0_i32_1 = arith.constant 0 : i32
    return %c0_i32, %c0_i32_0 : i32, i32
  }
  func.func @transform_7(%arg0: i32) -> (i32, i32) {
    %c0_i32 = arith.constant 0 : i32
    %c0_i32_0 = arith.constant 0 : i32
    %c0_i32_1 = arith.constant 0 : i32
    return %c0_i32, %c0_i32_0 : i32, i32
  }
  func.func @transform_8(%arg0: i32) -> (i32, i32) {
    %c0_i32 = arith.constant 0 : i32
    %c0_i32_0 = arith.constant 0 : i32
    %c0_i32_1 = arith.constant 0 : i32
    return %c0_i32, %c0_i32_0 : i32, i32
  }
  func.func @transform_9(%arg0: i32) -> (i32, i32) {
    %c0_i32 = arith.constant 0 : i32
    %c0_i32_0 = arith.constant 0 : i32
    return %arg0, %c0_i32 : i32, i32
  }
}

</mosaic_0001>

<llo_original>
// kernel: tpu_custom_call.1
$region0: #{tpu_custom_call.1}
  #allocation0 [shape = 'u32[]', space=smem, size = 0x4, offset = 0x4, fixed_abs, tag = 'smem constant byte address 0x4 - core index']
  #allocation1 [shape = 'u32[144,128]{1,0:T(1,128)}', space=vmem, size = 0x12000, scoped, tag = 'internal scratch']
  %s0 = inlined_call_operand.hbm [shape: bf16[8,128], index: 0, kind: input, shape index: {}]
  %s1 = inlined_call_operand.hbm [shape: bf16[128,256], index: 1, kind: input, shape index: {}]
  %s2 = inlined_call_operand.hbm [shape: f32[1,256], index: 2, kind: input, shape index: {}]
  %s3 = inlined_call_operand.hbm [shape: bf16[256,512], index: 3, kind: input, shape index: {}]
  %s4 = inlined_call_operand.hbm [shape: f32[1,512], index: 4, kind: input, shape index: {}]
  %s5 = inlined_call_operand.hbm [shape: bf16[512,1024], index: 5, kind: input, shape index: {}]
  %s6 = inlined_call_operand.hbm [shape: f32[1,1024], index: 6, kind: input, shape index: {}]
  %s7 = inlined_call_operand.hbm [shape: bf16[1024,1536], index: 7, kind: input, shape index: {}]
  %s8 = inlined_call_operand.hbm [shape: f32[1,1536], index: 8, kind: input, shape index: {}]
  %s9 = inlined_call_operand.hbm [shape: f32[8,1536], index: 9, kind: output, shape index: {}]
  %s10 = sld [smem:[#allocation0]]
  $region82: #{tpu_custom_call.1} parent=0
    _
  %s12 = ssub.s32 1, %s10
  %s13 = scalar_select 0, %s12, %s10
  $region1: #{tpu_custom_call.1} parent=0
    #allocation2 [shape = 'u8[2048]{0}', space=vmem, size = 0x800, scoped, tag = 'input window, operand 0, single buffered']
    #allocation3 [shape = 's32[1]{0}', space=sflag, size = 0x4, scoped, tag = 'scoped memory for tpu_custom_call.1']
    #allocation4 [shape = 's32[1]{0}', space=sflag, size = 0x4, scoped, tag = 'scoped memory for tpu_custom_call.1']
    #allocation5 [shape = 'u8[65536]{0}', space=vmem, size = 0x10000, scoped, tag = 'input window, operand 1, single buffered']
    #allocation6 [shape = 's32[1]{0}', space=sflag, size = 0x4, scoped, tag = 'scoped memory for tpu_custom_call.1']
    #allocation7 [shape = 'u8[1024]{0}', space=vmem, size = 0x400, scoped, tag = 'input window, operand 2, single buffered']
    #allocation8 [shape = 'u8[262144]{0}', space=vmem, size = 0x40000, scoped, tag = 'input window, operand 3, single buffered']
    #allocation9 [shape = 's32[1]{0}', space=sflag, size = 0x4, scoped, tag = 'scoped memory for tpu_custom_call.1']
    #allocation10 [shape = 'u8[2048]{0}', space=vmem, size = 0x800, scoped, tag = 'input window, operand 4, single buffered']
    #allocation11 [shape = 'u8[1048576]{0}', space=vmem, size = 0x100000, scoped, tag = 'input window, operand 5, single buffered']
    #allocation12 [shape = 's32[1]{0}', space=sflag, size = 0x4, scoped, tag = 'scoped memory for tpu_custom_call.1']
    #allocation13 [shape = 'u8[4096]{0}', space=vmem, size = 0x1000, scoped, tag = 'input window, operand 6, single buffered']
    #allocation14 [shape = 'u8[3145728]{0}', space=vmem, size = 0x300000, scoped, tag = 'input window, operand 7, single buffered']
    #allocation15 [shape = 's32[1]{0}', space=sflag, size = 0x4, scoped, tag = 'scoped memory for tpu_custom_call.1']
    #allocation16 [shape = 'u8[6144]{0}', space=vmem, size = 0x1800, scoped, tag = 'input window, operand 8, single buffered']
    #allocation17 [shape = 'u8[49152]{0}', space=vmem, size = 0xc000, scoped, tag = 'output window, operand 0, single buffered']
    %14 = vsyncpa [#allocation3], 0
    %15 = vsyncpa [#allocation6], 0
    %16 = vsyncpa [#allocation9], 0
    %17 = vsyncpa [#allocation12], 0
    %18 = vsyncpa [#allocation15], 0
    %19 = vsyncpa [#allocation4], 0
    // Predicated region
    $region2: #{tpu_custom_call.1} parent=1 // pred_check
      _
    $region3: #{tpu_custom_call.1} parent=1 // pred_check_branch
      %21 = sbr.rel (0) target = $region5
    $region4: #{tpu_custom_call.1} parent=1 // pred_region
      %s23 = ssub.s32 64, 64
      %24 = vsyncadd [#allocation3], %s23
      %s26 = sshll.u32 [#allocation2], 4
      %s27 = int_to_ptr.vmem [resolvable:$true] %s26
      %29 = dma.hbm_to_vmem [thread:$0]  %s0, 64, %s27, [#allocation3]
    $region5: #{tpu_custom_call.1} parent=1 // pred_fallthru
      _
    // Predicated region
    $region6: #{tpu_custom_call.1} parent=1 // pred_check
      _
    $region7: #{tpu_custom_call.1} parent=1 // pred_check_branch
      %31 = sbr.rel (0) target = $region9
    $region8: #{tpu_custom_call.1} parent=1 // pred_region
      %s33 = ssub.s32 2048, 2048
      %34 = vsyncadd [#allocation6], %s33
      %s35 = sshll.u32 [#allocation5], 4
      %s36 = int_to_ptr.vmem [resolvable:$true] %s35
      %41 = dma.hbm_to_vmem [thread:$0]  %s1, 2048, %s36, [#allocation6], 128, 128, 8
    $region9: #{tpu_custom_call.1} parent=1 // pred_fallthru
      _
    // Predicated region
    $region10: #{tpu_custom_call.1} parent=1 // pred_check
      _
    $region11: #{tpu_custom_call.1} parent=1 // pred_check_branch
      %43 = sbr.rel (0) target = $region13
    $region12: #{tpu_custom_call.1} parent=1 // pred_region
      %s45 = ssub.s32 32, 32
      %46 = vsyncadd [#allocation6], %s45
      %s48 = sshll.u32 [#allocation7], 4
      %s49 = int_to_ptr.vmem [resolvable:$true] %s48
      %51 = dma.hbm_to_vmem [thread:$0]  %s2, 32, %s49, [#allocation6]
    $region13: #{tpu_custom_call.1} parent=1 // pred_fallthru
      _
    // Predicated region
    $region14: #{tpu_custom_call.1} parent=1 // pred_check
      _
    $region15: #{tpu_custom_call.1} parent=1 // pred_check_branch
      %53 = sbr.rel (0) target = $region17
    $region16: #{tpu_custom_call.1} parent=1 // pred_region
      %s55 = ssub.s32 8192, 8192
      %56 = vsyncadd [#allocation9], %s55
      %s57 = sshll.u32 [#allocation8], 4
      %s58 = int_to_ptr.vmem [resolvable:$true] %s57
      %63 = dma.hbm_to_vmem [thread:$0]  %s3, 8192, %s58, [#allocation9], 256, 256, 16
    $region17: #{tpu_custom_call.1} parent=1 // pred_fallthru
      _
    // Predicated region
    $region18: #{tpu_custom_call.1} parent=1 // pred_check
      _
    $region19: #{tpu_custom_call.1} parent=1 // pred_check_branch
      %65 = sbr.rel (0) target = $region21
    $region20: #{tpu_custom_call.1} parent=1 // pred_region
      %s67 = ssub.s32 64, 64
      %68 = vsyncadd [#allocation9], %s67
      %s70 = sshll.u32 [#allocation10], 4
      %s71 = int_to_ptr.vmem [resolvable:$true] %s70
      %73 = dma.hbm_to_vmem [thread:$0]  %s4, 64, %s71, [#allocation9]
    $region21: #{tpu_custom_call.1} parent=1 // pred_fallthru
      _
    // Predicated region
    $region22: #{tpu_custom_call.1} parent=1 // pred_check
      _
    $region23: #{tpu_custom_call.1} parent=1 // pred_check_branch
      %75 = sbr.rel (0) target = $region25
    $region24: #{tpu_custom_call.1} parent=1 // pred_region
      %s77 = ssub.s32 32768, 32768
      %78 = vsyncadd [#allocation12], %s77
      %s79 = sshll.u32 [#allocation11], 4
      %s80 = int_to_ptr.vmem [resolvable:$true] %s79
      %85 = dma.hbm_to_vmem [thread:$0]  %s5, 32768, %s80, [#allocation12], 512, 512, 32
    $region25: #{tpu_custom_call.1} parent=1 // pred_fallthru
      _
    // Predicated region
    $region26: #{tpu_custom_call.1} parent=1 // pred_check
      _
    $region27: #{tpu_custom_call.1} parent=1 // pred_check_branch
      %87 = sbr.rel (0) target = $region29
    $region28: #{tpu_custom_call.1} parent=1 // pred_region
      %s89 = ssub.s32 128, 128
      %90 = vsyncadd [#allocation12], %s89
      %s92 = sshll.u32 [#allocation13], 4
      %s93 = int_to_ptr.vmem [resolvable:$true] %s92
      %95 = dma.hbm_to_vmem [thread:$0]  %s6, 128, %s93, [#allocation12]
    $region29: #{tpu_custom_call.1} parent=1 // pred_fallthru
      _
    // Predicated region
    $region30: #{tpu_custom_call.1} parent=1 // pred_check
      _
    $region31: #{tpu_custom_call.1} parent=1 // pred_check_branch
      %97 = sbr.rel (0) target = $region33
    $region32: #{tpu_custom_call.1} parent=1 // pred_region
      %s99 = ssub.s32 98304, 98304
      %100 = vsyncadd [#allocation15], %s99
      %s101 = sshll.u32 [#allocation14], 4
      %s102 = int_to_ptr.vmem [resolvable:$true] %s101
      %107 = dma.hbm_to_vmem [thread:$0]  %s7, 98304, %s102, [#allocation15], 768, 768, 48
    $region33: #{tpu_custom_call.1} parent=1 // pred_fallthru
      _
    // Predicated region
    $region34: #{tpu_custom_call.1} parent=1 // pred_check
      _
    $region35: #{tpu_custom_call.1} parent=1 // pred_check_branch
      %109 = sbr.rel (0) target = $region37
    $region36: #{tpu_custom_call.1} parent=1 // pred_region
      %s111 = ssub.s32 192, 192
      %112 = vsyncadd [#allocation15], %s111
      %s114 = sshll.u32 [#allocation16], 4
      %s115 = int_to_ptr.vmem [resolvable:$true] %s114
      %117 = dma.hbm_to_vmem [thread:$0]  %s8, 192, %s115, [#allocation15]
    $region37: #{tpu_custom_call.1} parent=1 // pred_fallthru
      _
    // Predicated region
    $region38: #{tpu_custom_call.1} parent=1 // pred_check
      _
    $region39: #{tpu_custom_call.1} parent=1 // pred_check_branch
      %119 = sbr.rel (0) target = $region41
    $region40: #{tpu_custom_call.1} parent=1 // pred_region
      %120 = dma.done [#allocation3], 64
    $region41: #{tpu_custom_call.1} parent=1 // pred_fallthru
      _
    // Predicated region
    $region42: #{tpu_custom_call.1} parent=1 // pred_check
      _
    $region43: #{tpu_custom_call.1} parent=1 // pred_check_branch
      %122 = sbr.rel (0) target = $region45
    $region44: #{tpu_custom_call.1} parent=1 // pred_region
      %123 = dma.done [#allocation6], 2048
    $region45: #{tpu_custom_call.1} parent=1 // pred_fallthru
      _
    // Predicated region
    $region46: #{tpu_custom_call.1} parent=1 // pred_check
      _
    $region47: #{tpu_custom_call.1} parent=1 // pred_check_branch
      %125 = sbr.rel (0) target = $region49
    $region48: #{tpu_custom_call.1} parent=1 // pred_region
      %126 = dma.done [#allocation6], 32
    $region49: #{tpu_custom_call.1} parent=1 // pred_fallthru
      _
    // Predicated region
    $region50: #{tpu_custom_call.1} parent=1 // pred_check
      _
    $region51: #{tpu_custom_call.1} parent=1 // pred_check_branch
      %128 = sbr.rel (0) target = $region53
    $region52: #{tpu_custom_call.1} parent=1 // pred_region
      %129 = dma.done [#allocation9], 8192
    $region53: #{tpu_custom_call.1} parent=1 // pred_fallthru
      _
    // Predicated region
    $region54: #{tpu_custom_call.1} parent=1 // pred_check
      _
    $region55: #{tpu_custom_call.1} parent=1 // pred_check_branch
      %131 = sbr.rel (0) target = $region57
    $region56: #{tpu_custom_call.1} parent=1 // pred_region
      %132 = dma.done [#allocation9], 64
    $region57: #{tpu_custom_call.1} parent=1 // pred_fallthru
      _
    // Predicated region
    $region58: #{tpu_custom_call.1} parent=1 // pred_check
      _
    $region59: #{tpu_custom_call.1} parent=1 // pred_check_branch
      %134 = sbr.rel (0) target = $region61
    $region60: #{tpu_custom_call.1} parent=1 // pred_region
      %135 = dma.done [#allocation12], 32768
    $region61: #{tpu_custom_call.1} parent=1 // pred_fallthru
      _
    // Predicated region
    $region62: #{tpu_custom_call.1} parent=1 // pred_check
      _
    $region63: #{tpu_custom_call.1} parent=1 // pred_check_branch
      %137 = sbr.rel (0) target = $region65
    $region64: #{tpu_custom_call.1} parent=1 // pred_region
      %138 = dma.done [#allocation12], 128
    $region65: #{tpu_custom_call.1} parent=1 // pred_fallthru
      _
    // Predicated region
    $region66: #{tpu_custom_call.1} parent=1 // pred_check
      _
    $region67: #{tpu_custom_call.1} parent=1 // pred_check_branch
      %140 = sbr.rel (0) target = $region69
    $region68: #{tpu_custom_call.1} parent=1 // pred_region
      %141 = dma.done [#allocation15], 98304
    $region69: #{tpu_custom_call.1} parent=1 // pred_fallthru
      _
    // Predicated region
    $region70: #{tpu_custom_call.1} parent=1 // pred_check
      _
    $region71: #{tpu_custom_call.1} parent=1 // pred_check_branch
      %143 = sbr.rel (0) target = $region73
    $region72: #{tpu_custom_call.1} parent=1 // pred_region
      %144 = dma.done [#allocation15], 192
    $region73: #{tpu_custom_call.1} parent=1 // pred_fallthru
      _
    %v146 = vld [vmem:[#allocation2] sm:$0xf]
    %v147 = vld [vmem:[#allocation5] sm:$0xff]
    %v148 = vld [vmem:[#allocation5 + $0x8] sm:$0xff]
    %v149 = vld [vmem:[#allocation5 + $0x10] sm:$0xff]
    %v150 = vld [vmem:[#allocation5 + $0x18] sm:$0xff]
    %v151 = vld [vmem:[#allocation5 + $0x20] sm:$0xff]
    %v152 = vld [vmem:[#allocation5 + $0x28] sm:$0xff]
    %v153 = vld [vmem:[#allocation5 + $0x30] sm:$0xff]
    %v154 = vld [vmem:[#allocation5 + $0x38] sm:$0xff]
    %v155 = vld [vmem:[#allocation5 + $0x40] sm:$0xff]
    %v156 = vld [vmem:[#allocation5 + $0x48] sm:$0xff]
    %v157 = vld [vmem:[#allocation5 + $0x50] sm:$0xff]
    %v158 = vld [vmem:[#allocation5 + $0x58] sm:$0xff]
    %v159 = vld [vmem:[#allocation5 + $0x60] sm:$0xff]
    %v160 = vld [vmem:[#allocation5 + $0x68] sm:$0xff]
    %v161 = vld [vmem:[#allocation5 + $0x70] sm:$0xff]
    %v162 = vld [vmem:[#allocation5 + $0x78] sm:$0xff]
    %v163 = vld [vmem:[#allocation7] sm:$0x3]
    %v165 = vlaneseq
    %v166 = vshrl.u32 %v165, 7
    %v167 = vsub.s32 0, %v166
    %v168 = vrot.slane %v163, %v167
    %v169 = vlaneseq
    %v170 = vshrl.u32 %v169, 7
    %v171 = vsub.s32 1, %v170
    %v172 = vrot.slane %v163, %v171
    %v191 = vunpack.c.l.b16 %v147
    %v192 = vunpack.c.h.b16 %v147
    %v193 = vunpack.c.l.b16 %v148
    %v194 = vunpack.c.h.b16 %v148
    %v195 = vunpack.c.l.b16 %v149
    %v196 = vunpack.c.h.b16 %v149
    %v197 = vunpack.c.l.b16 %v150
    %v198 = vunpack.c.h.b16 %v150
    %v199 = vunpack.c.l.b16 %v151
    %v200 = vunpack.c.h.b16 %v151
    %v201 = vunpack.c.l.b16 %v152
    %v202 = vunpack.c.h.b16 %v152
    %v203 = vunpack.c.l.b16 %v153
    %v204 = vunpack.c.h.b16 %v153
    %v205 = vunpack.c.l.b16 %v154
    %v206 = vunpack.c.h.b16 %v154
    %v207 = vunpack.c.l.b16 %v155
    %v208 = vunpack.c.h.b16 %v155
    %v209 = vunpack.c.l.b16 %v156
    %v210 = vunpack.c.h.b16 %v156
    %v211 = vunpack.c.l.b16 %v157
    %v212 = vunpack.c.h.b16 %v157
    %v213 = vunpack.c.l.b16 %v158
    %v214 = vunpack.c.h.b16 %v158
    %v215 = vunpack.c.l.b16 %v159
    %v216 = vunpack.c.h.b16 %v159
    %v217 = vunpack.c.l.b16 %v160
    %v218 = vunpack.c.h.b16 %v160
    %v219 = vunpack.c.l.b16 %v161
    %v220 = vunpack.c.h.b16 %v161
    %v221 = vunpack.c.l.b16 %v162
    %v222 = vunpack.c.h.b16 %v162
    %v223 = vpack.c.b16 %v193, %v191
    %v224 = vpack.c.b16 %v194, %v192
    %v225 = vpack.c.b16 %v197, %v195
    %v226 = vpack.c.b16 %v198, %v196
    %v227 = vpack.c.b16 %v201, %v199
    %v228 = vpack.c.b16 %v202, %v200
    %v229 = vpack.c.b16 %v205, %v203
    %v230 = vpack.c.b16 %v206, %v204
    %v231 = vpack.c.b16 %v209, %v207
    %v232 = vpack.c.b16 %v210, %v208
    %v233 = vpack.c.b16 %v213, %v211
    %v234 = vpack.c.b16 %v214, %v212
    %v235 = vpack.c.b16 %v217, %v215
    %v236 = vpack.c.b16 %v218, %v216
    %v237 = vpack.c.b16 %v221, %v219
    %v238 = vpack.c.b16 %v222, %v220
    %255 = vmatprep.subr.bf16.mxu0 %v238
    %256 = vmatpush1.bf16.msra.mxu0 %v237
    %257 = vmatprep.subr.bf16.mxu0 %v236
    %258 = vmatpush1.bf16.msra.mxu0 %v235
    %259 = vmatprep.subr.bf16.mxu0 %v234
    %260 = vmatpush1.bf16.msra.mxu0 %v233
    %261 = vmatprep.subr.bf16.mxu0 %v232
    %262 = vmatpush1.bf16.msra.mxu0 %v231
    %263 = vmatprep.subr.bf16.mxu0 %v230
    %264 = vmatpush1.bf16.msra.mxu0 %v229
    %265 = vmatprep.subr.bf16.mxu0 %v228
    %266 = vmatpush1.bf16.msra.mxu0 %v227
    %267 = vmatprep.subr.bf16.mxu0 %v226
    %268 = vmatpush1.bf16.msra.mxu0 %v225
    %269 = vmatprep.subr.bf16.mxu0 %v224
    %270 = vmatpush1.bf16.msra.mxu0 %v223
    %271 = vmatprep.subr.bf16.mxu0 0
    %272 = vmatpush2.bf16.msra.mxu0 0
    %273 = vmatprep.subr.bf16.mxu0 0
    %274 = vmatpush2.bf16.msra.mxu0 0
    %275 = vmatprep.subr.bf16.mxu0 0
    %276 = vmatpush2.bf16.msra.mxu0 0
    %277 = vmatprep.subr.bf16.mxu0 0
    %278 = vmatpush2.bf16.msra.mxu0 0
    %279 = vmatprep.subr.bf16.mxu0 0
    %280 = vmatpush2.bf16.msra.mxu0 0
    %281 = vmatprep.subr.bf16.mxu0 0
    %282 = vmatpush2.bf16.msra.mxu0 0
    %283 = vmatprep.subr.bf16.mxu0 0
    %284 = vmatpush2.bf16.msra.mxu0 0
    %285 = vmatprep.subr.bf16.mxu0 0
    %286 = vmatpush2.bf16.msra.mxu0 0
    %287 = vmatprep.mubr.bf16.mxu0 0
    %288 = vmatmul.mubr.bf16.gmra.mxu0 %v146
    %v289 = vpop.f32.mrf.mxu0
    %v290 = vadd.f32 %v168, %v289
    %v291 = vpop.f32.mrf.mxu0
    %v292 = vadd.f32 %v172, %v291
    %v293 = vpop.f32.mrf.mxu0
    %v294 = vpop.f32.mrf.mxu0
    %295 = vdwg.mxu0
    %v296 = vmax.f32 %v290, 0.0
    %v297 = vmax.f32 %v292, 0.0
    %v298 = vpack.c.bf16 %v296, %v296
    %v299 = vpack.c.bf16 %v297, %v297
    %v300 = vld [vmem:[#allocation8] sm:$0xff]
    %v301 = vld [vmem:[#allocation8 + $0x8] sm:$0xff]
    %v302 = vld [vmem:[#allocation8 + $0x10] sm:$0xff]
    %v303 = vld [vmem:[#allocation8 + $0x18] sm:$0xff]
    %v304 = vld [vmem:[#allocation8 + $0x20] sm:$0xff]
    %v305 = vld [vmem:[#allocation8 + $0x28] sm:$0xff]
    %v306 = vld [vmem:[#allocation8 + $0x30] sm:$0xff]
    %v307 = vld [vmem:[#allocation8 + $0x38] sm:$0xff]
    %v308 = vld [vmem:[#allocation8 + $0x40] sm:$0xff]
    %v309 = vld [vmem:[#allocation8 + $0x48] sm:$0xff]
    %v310 = vld [vmem:[#allocation8 + $0x50] sm:$0xff]
    %v311 = vld [vmem:[#allocation8 + $0x58] sm:$0xff]
    %v312 = vld [vmem:[#allocation8 + $0x60] sm:$0xff]
    %v313 = vld [vmem:[#allocation8 + $0x68] sm:$0xff]
    %v314 = vld [vmem:[#allocation8 + $0x70] sm:$0xff]
    %v315 = vld [vmem:[#allocation8 + $0x78] sm:$0xff]
    %v316 = vld [vmem:[#allocation8 + $0x80] sm:$0xff]
    %v317 = vld [vmem:[#allocation8 + $0x88] sm:$0xff]
    %v318 = vld [vmem:[#allocation8 + $0x90] sm:$0xff]
    %v319 = vld [vmem:[#allocation8 + $0x98] sm:$0xff]
    %v320 = vld [vmem:[#allocation8 + $0xa0] sm:$0xff]
    %v321 = vld [vmem:[#allocation8 + $0xa8] sm:$0xff]
    %v322 = vld [vmem:[#allocation8 + $0xb0] sm:$0xff]
    %v323 = vld [vmem:[#allocation8 + $0xb8] sm:$0xff]
    %v324 = vld [vmem:[#allocation8 + $0xc0] sm:$0xff]
    %v325 = vld [vmem:[#allocation8 + $0xc8] sm:$0xff]
    %v326 = vld [vmem:[#allocation8 + $0xd0] sm:$0xff]
    %v327 = vld [vmem:[#allocation8 + $0xd8] sm:$0xff]
    %v328 = vld [vmem:[#allocation8 + $0xe0] sm:$0xff]
    %v329 = vld [vmem:[#allocation8 + $0xe8] sm:$0xff]
    %v330 = vld [vmem:[#allocation8 + $0xf0] sm:$0xff]
    %v331 = vld [vmem:[#allocation8 + $0xf8] sm:$0xff]
    %v332 = vld [vmem:[#allocation8 + $0x100] sm:$0xff]
    %v333 = vld [vmem:[#allocation8 + $0x108] sm:$0xff]
    %v334 = vld [vmem:[#allocation8 + $0x110] sm:$0xff]
    %v335 = vld [vmem:[#allocation8 + $0x118] sm:$0xff]
    %v336 = vld [vmem:[#allocation8 + $0x120] sm:$0xff]
    %v337 = vld [vmem:[#allocation8 + $0x128] sm:$0xff]
    %v338 = vld [vmem:[#allocation8 + $0x130] sm:$0xff]
    %v339 = vld [vmem:[#allocation8 + $0x138] sm:$0xff]
    %v340 = vld [vmem:[#allocation8 + $0x140] sm:$0xff]
    %v341 = vld [vmem:[#allocation8 + $0x148] sm:$0xff]
    %v342 = vld [vmem:[#allocation8 + $0x150] sm:$0xff]
    %v343 = vld [vmem:[#allocation8 + $0x158] sm:$0xff]
    %v344 = vld [vmem:[#allocation8 + $0x160] sm:$0xff]
    %v345 = vld [vmem:[#allocation8 + $0x168] sm:$0xff]
    %v346 = vld [vmem:[#allocation8 + $0x170] sm:$0xff]
    %v347 = vld [vmem:[#allocation8 + $0x178] sm:$0xff]
    %v348 = vld [vmem:[#allocation8 + $0x180] sm:$0xff]
    %v349 = vld [vmem:[#allocation8 + $0x188] sm:$0xff]
    %v350 = vld [vmem:[#allocation8 + $0x190] sm:$0xff]
    %v351 = vld [vmem:[#allocation8 + $0x198] sm:$0xff]
    %v352 = vld [vmem:[#allocation8 + $0x1a0] sm:$0xff]
    %v353 = vld [vmem:[#allocation8 + $0x1a8] sm:$0xff]
    %v354 = vld [vmem:[#allocation8 + $0x1b0] sm:$0xff]
    %v355 = vld [vmem:[#allocation8 + $0x1b8] sm:$0xff]
    %v356 = vld [vmem:[#allocation8 + $0x1c0] sm:$0xff]
    %v357 = vld [vmem:[#allocation8 + $0x1c8] sm:$0xff]
    %v358 = vld [vmem:[#allocation8 + $0x1d0] sm:$0xff]
    %v359 = vld [vmem:[#allocation8 + $0x1d8] sm:$0xff]
    %v360 = vld [vmem:[#allocation8 + $0x1e0] sm:$0xff]
    %v361 = vld [vmem:[#allocation8 + $0x1e8] sm:$0xff]
    %v362 = vld [vmem:[#allocation8 + $0x1f0] sm:$0xff]
    %v363 = vld [vmem:[#allocation8 + $0x1f8] sm:$0xff]
    %v364 = vld [vmem:[#allocation10] sm:$0xf]
    %v366 = vlaneseq
    %v367 = vshrl.u32 %v366, 7
    %v368 = vsub.s32 0, %v367
    %v369 = vrot.slane %v364, %v368
    %v370 = vlaneseq
    %v371 = vshrl.u32 %v370, 7
    %v372 = vsub.s32 1, %v371
    %v373 = vrot.slane %v364, %v372
    %v374 = vlaneseq
    %v375 = vshrl.u32 %v374, 7
    %v376 = vsub.s32 2, %v375
    %v377 = vrot.slane %v364, %v376
    %v378 = vlaneseq
    %v379 = vshrl.u32 %v378, 7
    %v380 = vsub.s32 3, %v379
    %v381 = vrot.slane %v364, %v380
    %v450 = vunpack.c.l.b16 %v300
    %v451 = vunpack.c.h.b16 %v300
    %v452 = vunpack.c.l.b16 %v301
    %v453 = vunpack.c.h.b16 %v301
    %v454 = vunpack.c.l.b16 %v302
    %v455 = vunpack.c.h.b16 %v302
    %v456 = vunpack.c.l.b16 %v303
    %v457 = vunpack.c.h.b16 %v303
    %v458 = vunpack.c.l.b16 %v304
    %v459 = vunpack.c.h.b16 %v304
    %v460 = vunpack.c.l.b16 %v305
    %v461 = vunpack.c.h.b16 %v305
    %v462 = vunpack.c.l.b16 %v306
    %v463 = vunpack.c.h.b16 %v306
    %v464 = vunpack.c.l.b16 %v307
    %v465 = vunpack.c.h.b16 %v307
    %v466 = vunpack.c.l.b16 %v308
    %v467 = vunpack.c.h.b16 %v308
    %v468 = vunpack.c.l.b16 %v309
    %v469 = vunpack.c.h.b16 %v309
    %v470 = vunpack.c.l.b16 %v310
    %v471 = vunpack.c.h.b16 %v310
    %v472 = vunpack.c.l.b16 %v311
    %v473 = vunpack.c.h.b16 %v311
    %v474 = vunpack.c.l.b16 %v312
    %v475 = vunpack.c.h.b16 %v312
    %v476 = vunpack.c.l.b16 %v313
    %v477 = vunpack.c.h.b16 %v313
    %v478 = vunpack.c.l.b16 %v314
    %v479 = vunpack.c.h.b16 %v314
    %v480 = vunpack.c.l.b16 %v315
    %v481 = vunpack.c.h.b16 %v315
    %v482 = vunpack.c.l.b16 %v316
    %v483 = vunpack.c.h.b16 %v316
    %v484 = vunpack.c.l.b16 %v317
    %v485 = vunpack.c.h.b16 %v317
    %v486 = vunpack.c.l.b16 %v318
    %v487 = vunpack.c.h.b16 %v318
    %v488 = vunpack.c.l.b16 %v319
    %v489 = vunpack.c.h.b16 %v319
    %v490 = vunpack.c.l.b16 %v320
    %v491 = vunpack.c.h.b16 %v320
    %v492 = vunpack.c.l.b16 %v321
    %v493 = vunpack.c.h.b16 %v321
    %v494 = vunpack.c.l.b16 %v322
    %v495 = vunpack.c.h.b16 %v322
    %v496 = vunpack.c.l.b16 %v323
    %v497 = vunpack.c.h.b16 %v323
    %v498 = vunpack.c.l.b16 %v324
    %v499 = vunpack.c.h.b16 %v324
    %v500 = vunpack.c.l.b16 %v325
    %v501 = vunpack.c.h.b16 %v325
    %v502 = vunpack.c.l.b16 %v326
    %v503 = vunpack.c.h.b16 %v326
    %v504 = vunpack.c.l.b16 %v327
    %v505 = vunpack.c.h.b16 %v327
    %v506 = vunpack.c.l.b16 %v328
    %v507 = vunpack.c.h.b16 %v328
    %v508 = vunpack.c.l.b16 %v329
    %v509 = vunpack.c.h.b16 %v329
    %v510 = vunpack.c.l.b16 %v330
    %v511 = vunpack.c.h.b16 %v330
    %v512 = vunpack.c.l.b16 %v331
    %v513 = vunpack.c.h.b16 %v331
    %v514 = vunpack.c.l.b16 %v332
    %v515 = vunpack.c.h.b16 %v332
    %v516 = vunpack.c.l.b16 %v333
    %v517 = vunpack.c.h.b16 %v333
    %v518 = vunpack.c.l.b16 %v334
    %v519 = vunpack.c.h.b16 %v334
    %v520 = vunpack.c.l.b16 %v335
    %v521 = vunpack.c.h.b16 %v335
    %v522 = vunpack.c.l.b16 %v336
    %v523 = vunpack.c.h.b16 %v336
    %v524 = vunpack.c.l.b16 %v337
    %v525 = vunpack.c.h.b16 %v337
    %v526 = vunpack.c.l.b16 %v338
    %v527 = vunpack.c.h.b16 %v338
    %v528 = vunpack.c.l.b16 %v339
    %v529 = vunpack.c.h.b16 %v339
    %v530 = vunpack.c.l.b16 %v340
    %v531 = vunpack.c.h.b16 %v340
    %v532 = vunpack.c.l.b16 %v341
    %v533 = vunpack.c.h.b16 %v341
    %v534 = vunpack.c.l.b16 %v342
    %v535 = vunpack.c.h.b16 %v342
    %v536 = vunpack.c.l.b16 %v343
    %v537 = vunpack.c.h.b16 %v343
    %v538 = vunpack.c.l.b16 %v344
    %v539 = vunpack.c.h.b16 %v344
    %v540 = vunpack.c.l.b16 %v345
    %v541 = vunpack.c.h.b16 %v345
    %v542 = vunpack.c.l.b16 %v346
    %v543 = vunpack.c.h.b16 %v346
    %v544 = vunpack.c.l.b16 %v347
    %v545 = vunpack.c.h.b16 %v347
    %v546 = vunpack.c.l.b16 %v348
    %v547 = vunpack.c.h.b16 %v348
    %v548 = vunpack.c.l.b16 %v349
    %v549 = vunpack.c.h.b16 %v349
    %v550 = vunpack.c.l.b16 %v350
    %v551 = vunpack.c.h.b16 %v350
    %v552 = vunpack.c.l.b16 %v351
    %v553 = vunpack.c.h.b16 %v351
    %v554 = vunpack.c.l.b16 %v352
    %v555 = vunpack.c.h.b16 %v352
    %v556 = vunpack.c.l.b16 %v353
    %v557 = vunpack.c.h.b16 %v353
    %v558 = vunpack.c.l.b16 %v354
    %v559 = vunpack.c.h.b16 %v354
    %v560 = vunpack.c.l.b16 %v355
    %v561 = vunpack.c.h.b16 %v355
    %v562 = vunpack.c.l.b16 %v356
    %v563 = vunpack.c.h.b16 %v356
    %v564 = vunpack.c.l.b16 %v357
    %v565 = vunpack.c.h.b16 %v357
    %v566 = vunpack.c.l.b16 %v358
    %v567 = vunpack.c.h.b16 %v358
    %v568 = vunpack.c.l.b16 %v359
    %v569 = vunpack.c.h.b16 %v359
    %v570 = vunpack.c.l.b16 %v360
    %v571 = vunpack.c.h.b16 %v360
    %v572 = vunpack.c.l.b16 %v361
    %v573 = vunpack.c.h.b16 %v361
    %v574 = vunpack.c.l.b16 %v362
    %v575 = vunpack.c.h.b16 %v362
    %v576 = vunpack.c.l.b16 %v363
    %v577 = vunpack.c.h.b16 %v363
    %v578 = vpack.c.b16 %v454, %v450
    %v579 = vpack.c.b16 %v455, %v451
    %v580 = vpack.c.b16 %v456, %v452
    %v581 = vpack.c.b16 %v457, %v453
    %v582 = vpack.c.b16 %v462, %v458
    %v583 = vpack.c.b16 %v463, %v459
    %v584 = vpack.c.b16 %v464, %v460
    %v585 = vpack.c.b16 %v465, %v461
    %v586 = vpack.c.b16 %v470, %v466
    %v587 = vpack.c.b16 %v471, %v467
    %v588 = vpack.c.b16 %v472, %v468
    %v589 = vpack.c.b16 %v473, %v469
    %v590 = vpack.c.b16 %v478, %v474
    %v591 = vpack.c.b16 %v479, %v475
    %v592 = vpack.c.b16 %v480, %v476
    %v593 = vpack.c.b16 %v481, %v477
    %v594 = vpack.c.b16 %v486, %v482
    %v595 = vpack.c.b16 %v487, %v483
    %v596 = vpack.c.b16 %v488, %v484
    %v597 = vpack.c.b16 %v489, %v485
    %v598 = vpack.c.b16 %v494, %v490
    %v599 = vpack.c.b16 %v495, %v491
    %v600 = vpack.c.b16 %v496, %v492
    %v601 = vpack.c.b16 %v497, %v493
    %v602 = vpack.c.b16 %v502, %v498
    %v603 = vpack.c.b16 %v503, %v499
    %v604 = vpack.c.b16 %v504, %v500
    %v605 = vpack.c.b16 %v505, %v501
    %v606 = vpack.c.b16 %v510, %v506
    %v607 = vpack.c.b16 %v511, %v507
    %v608 = vpack.c.b16 %v512, %v508
    %v609 = vpack.c.b16 %v513, %v509
    %v610 = vpack.c.b16 %v518, %v514
    %v611 = vpack.c.b16 %v519, %v515
    %v612 = vpack.c.b16 %v520, %v516
    %v613 = vpack.c.b16 %v521, %v517
    %v614 = vpack.c.b16 %v526, %v522
    %v615 = vpack.c.b16 %v527, %v523
    %v616 = vpack.c.b16 %v528, %v524
    %v617 = vpack.c.b16 %v529, %v525
    %v618 = vpack.c.b16 %v534, %v530
    %v619 = vpack.c.b16 %v535, %v531
    %v620 = vpack.c.b16 %v536, %v532
    %v621 = vpack.c.b16 %v537, %v533
    %v622 = vpack.c.b16 %v542, %v538
    %v623 = vpack.c.b16 %v543, %v539
    %v624 = vpack.c.b16 %v544, %v540
    %v625 = vpack.c.b16 %v545, %v541
    %v626 = vpack.c.b16 %v550, %v546
    %v627 = vpack.c.b16 %v551, %v547
    %v628 = vpack.c.b16 %v552, %v548
    %v629 = vpack.c.b16 %v553, %v549
    %v630 = vpack.c.b16 %v558, %v554
    %v631 = vpack.c.b16 %v559, %v555
    %v632 = vpack.c.b16 %v560, %v556
    %v633 = vpack.c.b16 %v561, %v557
    %v634 = vpack.c.b16 %v566, %v562
    %v635 = vpack.c.b16 %v567, %v563
    %v636 = vpack.c.b16 %v568, %v564
    %v637 = vpack.c.b16 %v569, %v565
    %v638 = vpack.c.b16 %v574, %v570
    %v639 = vpack.c.b16 %v575, %v571
    %v640 = vpack.c.b16 %v576, %v572
    %v641 = vpack.c.b16 %v577, %v573
    %706 = vmatprep.subr.bf16.mxu0 %v607
    %707 = vmatpush1.bf16.msra.mxu0 %v606
    %708 = vmatprep.subr.bf16.mxu0 %v603
    %709 = vmatpush1.bf16.msra.mxu0 %v602
    %710 = vmatprep.subr.bf16.mxu0 %v599
    %711 = vmatpush1.bf16.msra.mxu0 %v598
    %712 = vmatprep.subr.bf16.mxu0 %v595
    %713 = vmatpush1.bf16.msra.mxu0 %v594
    %714 = vmatprep.subr.bf16.mxu0 %v591
    %715 = vmatpush1.bf16.msra.mxu0 %v590
    %716 = vmatprep.subr.bf16.mxu0 %v587
    %717 = vmatpush1.bf16.msra.mxu0 %v586
    %718 = vmatprep.subr.bf16.mxu0 %v583
    %719 = vmatpush1.bf16.msra.mxu0 %v582
    %720 = vmatprep.subr.bf16.mxu0 %v579
    %721 = vmatpush1.bf16.msra.mxu0 %v578
    %722 = vmatprep.subr.bf16.mxu0 %v639
    %723 = vmatpush2.bf16.msra.mxu0 %v638
    %724 = vmatprep.subr.bf16.mxu0 %v635
    %725 = vmatpush2.bf16.msra.mxu0 %v634
    %726 = vmatprep.subr.bf16.mxu0 %v631
    %727 = vmatpush2.bf16.msra.mxu0 %v630
    %728 = vmatprep.subr.bf16.mxu0 %v627
    %729 = vmatpush2.bf16.msra.mxu0 %v626
    %730 = vmatprep.subr.bf16.mxu0 %v623
    %731 = vmatpush2.bf16.msra.mxu0 %v622
    %732 = vmatprep.subr.bf16.mxu0 %v619
    %733 = vmatpush2.bf16.msra.mxu0 %v618
    %734 = vmatprep.subr.bf16.mxu0 %v615
    %735 = vmatpush2.bf16.msra.mxu0 %v614
    %736 = vmatprep.subr.bf16.mxu0 %v611
    %737 = vmatpush2.bf16.msra.mxu0 %v610
    %738 = vmatprep.mubr.bf16.mxu0 %v299
    %739 = vmatmul.mubr.bf16.gmra.mxu0 %v298
    %v740 = vpop.f32.mrf.mxu0
    %v741 = vadd.f32 %v369, %v740
    %v742 = vpop.f32.mrf.mxu0
    %v743 = vadd.f32 %v373, %v742
    %v744 = vpop.f32.mrf.mxu0
    %v745 = vpop.f32.mrf.mxu0
    %746 = vdwg.mxu0
    %747 = vmatprep.subr.bf16.mxu0 %v609
    %748 = vmatpush1.bf16.msra.mxu0 %v608
    %749 = vmatprep.subr.bf16.mxu0 %v605
    %750 = vmatpush1.bf16.msra.mxu0 %v604
    %751 = vmatprep.subr.bf16.mxu0 %v601
    %752 = vmatpush1.bf16.msra.mxu0 %v600
    %753 = vmatprep.subr.bf16.mxu0 %v597
    %754 = vmatpush1.bf16.msra.mxu0 %v596
    %755 = vmatprep.subr.bf16.mxu0 %v593
    %756 = vmatpush1.bf16.msra.mxu0 %v592
    %757 = vmatprep.subr.bf16.mxu0 %v589
    %758 = vmatpush1.bf16.msra.mxu0 %v588
    %759 = vmatprep.subr.bf16.mxu0 %v585
    %760 = vmatpush1.bf16.msra.mxu0 %v584
    %761 = vmatprep.subr.bf16.mxu0 %v581
    %762 = vmatpush1.bf16.msra.mxu0 %v580
    %763 = vmatprep.subr.bf16.mxu0 %v641
    %764 = vmatpush2.bf16.msra.mxu0 %v640
    %765 = vmatprep.subr.bf16.mxu0 %v637
    %766 = vmatpush2.bf16.msra.mxu0 %v636
    %767 = vmatprep.subr.bf16.mxu0 %v633
    %768 = vmatpush2.bf16.msra.mxu0 %v632
    %769 = vmatprep.subr.bf16.mxu0 %v629
    %770 = vmatpush2.bf16.msra.mxu0 %v628
    %771 = vmatprep.subr.bf16.mxu0 %v625
    %772 = vmatpush2.bf16.msra.mxu0 %v624
    %773 = vmatprep.subr.bf16.mxu0 %v621
    %774 = vmatpush2.bf16.msra.mxu0 %v620
    %775 = vmatprep.subr.bf16.mxu0 %v617
    %776 = vmatpush2.bf16.msra.mxu0 %v616
    %777 = vmatprep.subr.bf16.mxu0 %v613
    %778 = vmatpush2.bf16.msra.mxu0 %v612
    %779 = vmatprep.mubr.bf16.mxu0 %v299
    %780 = vmatmul.mubr.bf16.gmra.mxu0 %v298
    %v781 = vpop.f32.mrf.mxu0
    %v782 = vadd.f32 %v377, %v781
    %v783 = vpop.f32.mrf.mxu0
    %v784 = vadd.f32 %v381, %v783
    %v785 = vpop.f32.mrf.mxu0
    %v786 = vpop.f32.mrf.mxu0
    %787 = vdwg.mxu0
    %v788 = vmax.f32 %v741, 0.0
    %v789 = vmax.f32 %v743, 0.0
    %v790 = vmax.f32 %v782, 0.0
    %v791 = vmax.f32 %v784, 0.0
    %v792 = vpack.c.bf16 %v788, %v788
    %v793 = vpack.c.bf16 %v789, %v789
    %v794 = vpack.c.bf16 %v790, %v790
    %v795 = vpack.c.bf16 %v791, %v791
    %v796 = vld [vmem:[#allocation11] sm:$0xff]
    %v797 = vld [vmem:[#allocation11 + $0x8] sm:$0xff]
    %v798 = vld [vmem:[#allocation11 + $0x10] sm:$0xff]
    %v799 = vld [vmem:[#allocation11 + $0x18] sm:$0xff]
    %v800 = vld [vmem:[#allocation11 + $0x20] sm:$0xff]
    %v801 = vld [vmem:[#allocation11 + $0x28] sm:$0xff]
    %v802 = vld [vmem:[#allocation11 + $0x30] sm:$0xff]
    %v803 = vld [vmem:[#allocation11 + $0x38] sm:$0xff]
    %v804 = vld [vmem:[#allocation11 + $0x40] sm:$0xff]
    %v805 = vld [vmem:[#allocation11 + $0x48] sm:$0xff]
    %v806 = vld [vmem:[#allocation11 + $0x50] sm:$0xff]
    %v807 = vld [vmem:[#allocation11 + $0x58] sm:$0xff]
    %v808 = vld [vmem:[#allocation11 + $0x60] sm:$0xff]
    %v809 = vld [vmem:[#allocation11 + $0x68] sm:$0xff]
    %v810 = vld [vmem:[#allocation11 + $0x70] sm:$0xff]
    %v811 = vld [vmem:[#allocation11 + $0x78] sm:$0xff]
    %v812 = vld [vmem:[#allocation11 + $0x80] sm:$0xff]
    %v813 = vld [vmem:[#allocation11 + $0x88] sm:$0xff]
    %v814 = vld [vmem:[#allocation11 + $0x90] sm:$0xff]
    %v815 = vld [vmem:[#allocation11 + $0x98] sm:$0xff]
    %v816 = vld [vmem:[#allocation11 + $0xa0] sm:$0xff]
    %v817 = vld [vmem:[#allocation11 + $0xa8] sm:$0xff]
    %v818 = vld [vmem:[#allocation11 + $0xb0] sm:$0xff]
    %v819 = vld [vmem:[#allocation11 + $0xb8] sm:$0xff]
    %v820 = vld [vmem:[#allocation11 + $0xc0] sm:$0xff]
    %v821 = vld [vmem:[#allocation11 + $0xc8] sm:$0xff]
    %v822 = vld [vmem:[#allocation11 + $0xd0] sm:$0xff]
    %v823 = vld [vmem:[#allocation11 + $0xd8] sm:$0xff]
    %v824 = vld [vmem:[#allocation11 + $0xe0] sm:$0xff]
    %v825 = vld [vmem:[#allocation11 + $0xe8] sm:$0xff]
    %v826 = vld [vmem:[#allocation11 + $0xf0] sm:$0xff]
    %v827 = vld [vmem:[#allocation11 + $0xf8] sm:$0xff]
    %v828 = vld [vmem:[#allocation11 + $0x100] sm:$0xff]
    %v829 = vld [vmem:[#allocation11 + $0x108] sm:$0xff]
    %v830 = vld [vmem:[#allocation11 + $0x110] sm:$0xff]
    %v831 = vld [vmem:[#allocation11 + $0x118] sm:$0xff]
    %v832 = vld [vmem:[#allocation11 + $0x120] sm:$0xff]
    %v833 = vld [vmem:[#allocation11 + $0x128] sm:$0xff]
    %v834 = vld [vmem:[#allocation11 + $0x130] sm:$0xff]
    %v835 = vld [vmem:[#allocation11 + $0x138] sm:$0xff]
    %v836 = vld [vmem:[#allocation11 + $0x140] sm:$0xff]
    %v837 = vld [vmem:[#allocation11 + $0x148] sm:$0xff]
    %v838 = vld [vmem:[#allocation11 + $0x150] sm:$0xff]
    %v839 = vld [vmem:[#allocation11 + $0x158] sm:$0xff]
    %v840 = vld [vmem:[#allocation11 + $0x160] sm:$0xff]
    %v841 = vld [vmem:[#allocation11 + $0x168] sm:$0xff]
    %v842 = vld [vmem:[#allocation11 + $0x170] sm:$0xff]
    %v843 = vld [vmem:[#allocation11 + $0x178] sm:$0xff]
    %v844 = vld [vmem:[#allocation11 + $0x180] sm:$0xff]
    %v845 = vld [vmem:[#allocation11 + $0x188] sm:$0xff]
    %v846 = vld [vmem:[#allocation11 + $0x190] sm:$0xff]
    %v847 = vld [vmem:[#allocation11 + $0x198] sm:$0xff]
    %v848 = vld [vmem:[#allocation11 + $0x1a0] sm:$0xff]
    %v849 = vld [vmem:[#allocation11 + $0x1a8] sm:$0xff]
    %v850 = vld [vmem:[#allocation11 + $0x1b0] sm:$0xff]
    %v851 = vld [vmem:[#allocation11 + $0x1b8] sm:$0xff]
    %v852 = vld [vmem:[#allocation11 + $0x1c0] sm:$0xff]
    %v853 = vld [vmem:[#allocation11 + $0x1c8] sm:$0xff]
    %v854 = vld [vmem:[#allocation11 + $0x1d0] sm:$0xff]
    %v855 = vld [vmem:[#allocation11 + $0x1d8] sm:$0xff]
    %v856 = vld [vmem:[#allocation11 + $0x1e0] sm:$0xff]
    %v857 = vld [vmem:[#allocation11 + $0x1e8] sm:$0xff]
    %v858 = vld [vmem:[#allocation11 + $0x1f0] sm:$0xff]
    %v859 = vld [vmem:[#allocation11 + $0x1f8] sm:$0xff]
    %v860 = vld [vmem:[#allocation11 + $0x200] sm:$0xff]
    %v861 = vld [vmem:[#allocation11 + $0x208] sm:$0xff]
    %v862 = vld [vmem:[#allocation11 + $0x210] sm:$0xff]
    %v863 = vld [vmem:[#allocation11 + $0x218] sm:$0xff]
    %v864 = vld [vmem:[#allocation11 + $0x220] sm:$0xff]
    %v865 = vld [vmem:[#allocation11 + $0x228] sm:$0xff]
    %v866 = vld [vmem:[#allocation11 + $0x230] sm:$0xff]
    %v867 = vld [vmem:[#allocation11 + $0x238] sm:$0xff]
    %v868 = vld [vmem:[#allocation11 + $0x240] sm:$0xff]
    %v869 = vld [vmem:[#allocation11 + $0x248] sm:$0xff]
    %v870 = vld [vmem:[#allocation11 + $0x250] sm:$0xff]
    %v871 = vld [vmem:[#allocation11 + $0x258] sm:$0xff]
    %v872 = vld [vmem:[#allocation11 + $0x260] sm:$0xff]
    %v873 = vld [vmem:[#allocation11 + $0x268] sm:$0xff]
    %v874 = vld [vmem:[#allocation11 + $0x270] sm:$0xff]
    %v875 = vld [vmem:[#allocation11 + $0x278] sm:$0xff]
    %v876 = vld [vmem:[#allocation11 + $0x280] sm:$0xff]
    %v877 = vld [vmem:[#allocation11 + $0x288] sm:$0xff]
    %v878 = vld [vmem:[#allocation11 + $0x290] sm:$0xff]
    %v879 = vld [vmem:[#allocation11 + $0x298] sm:$0xff]
    %v880 = vld [vmem:[#allocation11 + $0x2a0] sm:$0xff]
    %v881 = vld [vmem:[#allocation11 + $0x2a8] sm:$0xff]
    %v882 = vld [vmem:[#allocation11 + $0x2b0] sm:$0xff]
    %v883 = vld [vmem:[#allocation11 + $0x2b8] sm:$0xff]
    %v884 = vld [vmem:[#allocation11 + $0x2c0] sm:$0xff]
    %v885 = vld [vmem:[#allocation11 + $0x2c8] sm:$0xff]
    %v886 = vld [vmem:[#allocation11 + $0x2d0] sm:$0xff]
    %v887 = vld [vmem:[#allocation11 + $0x2d8] sm:$0xff]
    %v888 = vld [vmem:[#allocation11 + $0x2e0] sm:$0xff]
    %v889 = vld [vmem:[#allocation11 + $0x2e8] sm:$0xff]
    %v890 = vld [vmem:[#allocation11 + $0x2f0] sm:$0xff]
    %v891 = vld [vmem:[#allocation11 + $0x2f8] sm:$0xff]
    %v892 = vld [vmem:[#allocation11 + $0x300] sm:$0xff]
    %v893 = vld [vmem:[#allocation11 + $0x308] sm:$0xff]
    %v894 = vld [vmem:[#allocation11 + $0x310] sm:$0xff]
    %v895 = vld [vmem:[#allocation11 + $0x318] sm:$0xff]
    %v896 = vld [vmem:[#allocation11 + $0x320] sm:$0xff]
    %v897 = vld [vmem:[#allocation11 + $0x328] sm:$0xff]
    %v898 = vld [vmem:[#allocation11 + $0x330] sm:$0xff]
    %v899 = vld [vmem:[#allocation11 + $0x338] sm:$0xff]
    %v900 = vld [vmem:[#allocation11 + $0x340] sm:$0xff]
    %v901 = vld [vmem:[#allocation11 + $0x348] sm:$0xff]
    %v902 = vld [vmem:[#allocation11 + $0x350] sm:$0xff]
    %v903 = vld [vmem:[#allocation11 + $0x358] sm:$0xff]
    %v904 = vld [vmem:[#allocation11 + $0x360] sm:$0xff]
    %v905 = vld [vmem:[#allocation11 + $0x368] sm:$0xff]
    %v906 = vld [vmem:[#allocation11 + $0x370] sm:$0xff]
    %v907 = vld [vmem:[#allocation11 + $0x378] sm:$0xff]
    %v908 = vld [vmem:[#allocation11 + $0x380] sm:$0xff]
    %v909 = vld [vmem:[#allocation11 + $0x388] sm:$0xff]
    %v910 = vld [vmem:[#allocation11 + $0x390] sm:$0xff]
    %v911 = vld [vmem:[#allocation11 + $0x398] sm:$0xff]
    %v912 = vld [vmem:[#allocation11 + $0x3a0] sm:$0xff]
    %v913 = vld [vmem:[#allocation11 + $0x3a8] sm:$0xff]
    %v914 = vld [vmem:[#allocation11 + $0x3b0] sm:$0xff]
    %v915 = vld [vmem:[#allocation11 + $0x3b8] sm:$0xff]
    %v916 = vld [vmem:[#allocation11 + $0x3c0] sm:$0xff]
    %v917 = vld [vmem:[#allocation11 + $0x3c8] sm:$0xff]
    %v918 = vld [vmem:[#allocation11 + $0x3d0] sm:$0xff]
    %v919 = vld [vmem:[#allocation11 + $0x3d8] sm:$0xff]
    %v920 = vld [vmem:[#allocation11 + $0x3e0] sm:$0xff]
    %v921 = vld [vmem:[#allocation11 + $0x3e8] sm:$0xff]
    %v922 = vld [vmem:[#allocation11 + $0x3f0] sm:$0xff]
    %v923 = vld [vmem:[#allocation11 + $0x3f8] sm:$0xff]
    %v924 = vld [vmem:[#allocation11 + $0x400] sm:$0xff]
    %v925 = vld [vmem:[#allocation11 + $0x408] sm:$0xff]
    %v926 = vld [vmem:[#allocation11 + $0x410] sm:$0xff]
    %v927 = vld [vmem:[#allocation11 + $0x418] sm:$0xff]
    %v928 = vld [vmem:[#allocation11 + $0x420] sm:$0xff]
    %v929 = vld [vmem:[#allocation11 + $0x428] sm:$0xff]
    %v930 = vld [vmem:[#allocation11 + $0x430] sm:$0xff]
    %v931 = vld [vmem:[#allocation11 + $0x438] sm:$0xff]
    %v932 = vld [vmem:[#allocation11 + $0x440] sm:$0xff]
    %v933 = vld [vmem:[#allocation11 + $0x448] sm:$0xff]
    %v934 = vld [vmem:[#allocation11 + $0x450] sm:$0xff]
    %v935 = vld [vmem:[#allocation11 + $0x458] sm:$0xff]
    %v936 = vld [vmem:[#allocation11 + $0x460] sm:$0xff]
    %v937 = vld [vmem:[#allocation11 + $0x468] sm:$0xff]
    %v938 = vld [vmem:[#allocation11 + $0x470] sm:$0xff]
    %v939 = vld [vmem:[#allocation11 + $0x478] sm:$0xff]
    %v940 = vld [vmem:[#allocation11 + $0x480] sm:$0xff]
    %v941 = vld [vmem:[#allocation11 + $0x488] sm:$0xff]
    %v942 = vld [vmem:[#allocation11 + $0x490] sm:$0xff]
    %v943 = vld [vmem:[#allocation11 + $0x498] sm:$0xff]
    %v944 = vld [vmem:[#allocation11 + $0x4a0] sm:$0xff]
    %v945 = vld [vmem:[#allocation11 + $0x4a8] sm:$0xff]
    %v946 = vld [vmem:[#allocation11 + $0x4b0] sm:$0xff]
    %v947 = vld [vmem:[#allocation11 + $0x4b8] sm:$0xff]
    %v948 = vld [vmem:[#allocation11 + $0x4c0] sm:$0xff]
    %v949 = vld [vmem:[#allocation11 + $0x4c8] sm:$0xff]
    %v950 = vld [vmem:[#allocation11 + $0x4d0] sm:$0xff]
    %v951 = vld [vmem:[#allocation11 + $0x4d8] sm:$0xff]
    %v952 = vld [vmem:[#allocation11 + $0x4e0] sm:$0xff]
    %v953 = vld [vmem:[#allocation11 + $0x4e8] sm:$0xff]
    %v954 = vld [vmem:[#allocation11 + $0x4f0] sm:$0xff]
    %v955 = vld [vmem:[#allocation11 + $0x4f8] sm:$0xff]
    %v956 = vld [vmem:[#allocation11 + $0x500] sm:$0xff]
    %v957 = vld [vmem:[#allocation11 + $0x508] sm:$0xff]
    %v958 = vld [vmem:[#allocation11 + $0x510] sm:$0xff]
    %v959 = vld [vmem:[#allocation11 + $0x518] sm:$0xff]
    %v960 = vld [vmem:[#allocation11 + $0x520] sm:$0xff]
    %v961 = vld [vmem:[#allocation11 + $0x528] sm:$0xff]
    %v962 = vld [vmem:[#allocation11 + $0x530] sm:$0xff]
    %v963 = vld [vmem:[#allocation11 + $0x538] sm:$0xff]
    %v964 = vld [vmem:[#allocation11 + $0x540] sm:$0xff]
    %v965 = vld [vmem:[#allocation11 + $0x548] sm:$0xff]
    %v966 = vld [vmem:[#allocation11 + $0x550] sm:$0xff]
    %v967 = vld [vmem:[#allocation11 + $0x558] sm:$0xff]
    %v968 = vld [vmem:[#allocation11 + $0x560] sm:$0xff]
    %v969 = vld [vmem:[#allocation11 + $0x568] sm:$0xff]
    %v970 = vld [vmem:[#allocation11 + $0x570] sm:$0xff]
    %v971 = vld [vmem:[#allocation11 + $0x578] sm:$0xff]
    %v972 = vld [vmem:[#allocation11 + $0x580] sm:$0xff]
    %v973 = vld [vmem:[#allocation11 + $0x588] sm:$0xff]
    %v974 = vld [vmem:[#allocation11 + $0x590] sm:$0xff]
    %v975 = vld [vmem:[#allocation11 + $0x598] sm:$0xff]
    %v976 = vld [vmem:[#allocation11 + $0x5a0] sm:$0xff]
    %v977 = vld [vmem:[#allocation11 + $0x5a8] sm:$0xff]
    %v978 = vld [vmem:[#allocation11 + $0x5b0] sm:$0xff]
    %v979 = vld [vmem:[#allocation11 + $0x5b8] sm:$0xff]
    %v980 = vld [vmem:[#allocation11 + $0x5c0] sm:$0xff]
    %v981 = vld [vmem:[#allocation11 + $0x5c8] sm:$0xff]
    %v982 = vld [vmem:[#allocation11 + $0x5d0] sm:$0xff]
    %v983 = vld [vmem:[#allocation11 + $0x5d8] sm:$0xff]
    %v984 = vld [vmem:[#allocation11 + $0x5e0] sm:$0xff]
    %v985 = vld [vmem:[#allocation11 + $0x5e8] sm:$0xff]
    %v986 = vld [vmem:[#allocation11 + $0x5f0] sm:$0xff]
    %v987 = vld [vmem:[#allocation11 + $0x5f8] sm:$0xff]
    %v988 = vld [vmem:[#allocation11 + $0x600] sm:$0xff]
    %v989 = vld [vmem:[#allocation11 + $0x608] sm:$0xff]
    %v990 = vld [vmem:[#allocation11 + $0x610] sm:$0xff]
    %v991 = vld [vmem:[#allocation11 + $0x618] sm:$0xff]
    %v992 = vld [vmem:[#allocation11 + $0x620] sm:$0xff]
    %v993 = vld [vmem:[#allocation11 + $0x628] sm:$0xff]
    %v994 = vld [vmem:[#allocation11 + $0x630] sm:$0xff]
    %v995 = vld [vmem:[#allocation11 + $0x638] sm:$0xff]
    %v996 = vld [vmem:[#allocation11 + $0x640] sm:$0xff]
    %v997 = vld [vmem:[#allocation11 + $0x648] sm:$0xff]
    %v998 = vld [vmem:[#allocation11 + $0x650] sm:$0xff]
    %v999 = vld [vmem:[#allocation11 + $0x658] sm:$0xff]
    %v1000 = vld [vmem:[#allocation11 + $0x660] sm:$0xff]
    %v1001 = vld [vmem:[#allocation11 + $0x668] sm:$0xff]
    %v1002 = vld [vmem:[#allocation11 + $0x670] sm:$0xff]
    %v1003 = vld [vmem:[#allocation11 + $0x678] sm:$0xff]
    %v1004 = vld [vmem:[#allocation11 + $0x680] sm:$0xff]
    %v1005 = vld [vmem:[#allocation11 + $0x688] sm:$0xff]
    %v1006 = vld [vmem:[#allocation11 + $0x690] sm:$0xff]
    %v1007 = vld [vmem:[#allocation11 + $0x698] sm:$0xff]
    %v1008 = vld [vmem:[#allocation11 + $0x6a0] sm:$0xff]
    %v1009 = vld [vmem:[#allocation11 + $0x6a8] sm:$0xff]
    %v1010 = vld [vmem:[#allocation11 + $0x6b0] sm:$0xff]
    %v1011 = vld [vmem:[#allocation11 + $0x6b8] sm:$0xff]
    %v1012 = vld [vmem:[#allocation11 + $0x6c0] sm:$0xff]
    %v1013 = vld [vmem:[#allocation11 + $0x6c8] sm:$0xff]
    %v1014 = vld [vmem:[#allocation11 + $0x6d0] sm:$0xff]
    %v1015 = vld [vmem:[#allocation11 + $0x6d8] sm:$0xff]
    %v1016 = vld [vmem:[#allocation11 + $0x6e0] sm:$0xff]
    %v1017 = vld [vmem:[#allocation11 + $0x6e8] sm:$0xff]
    %v1018 = vld [vmem:[#allocation11 + $0x6f0] sm:$0xff]
    %v1019 = vld [vmem:[#allocation11 + $0x6f8] sm:$0xff]
    %v1020 = vld [vmem:[#allocation11 + $0x700] sm:$0xff]
    %v1021 = vld [vmem:[#allocation11 + $0x708] sm:$0xff]
    %v1022 = vld [vmem:[#allocation11 + $0x710] sm:$0xff]
    %v1023 = vld [vmem:[#allocation11 + $0x718] sm:$0xff]
    %v1024 = vld [vmem:[#allocation11 + $0x720] sm:$0xff]
    %v1025 = vld [vmem:[#allocation11 + $0x728] sm:$0xff]
    %v1026 = vld [vmem:[#allocation11 + $0x730] sm:$0xff]
    %v1027 = vld [vmem:[#allocation11 + $0x738] sm:$0xff]
    %v1028 = vld [vmem:[#allocation11 + $0x740] sm:$0xff]
    %v1029 = vld [vmem:[#allocation11 + $0x748] sm:$0xff]
    %v1030 = vld [vmem:[#allocation11 + $0x750] sm:$0xff]
    %v1031 = vld [vmem:[#allocation11 + $0x758] sm:$0xff]
    %v1032 = vld [vmem:[#allocation11 + $0x760] sm:$0xff]
    %v1033 = vld [vmem:[#allocation11 + $0x768] sm:$0xff]
    %v1034 = vld [vmem:[#allocation11 + $0x770] sm:$0xff]
    %v1035 = vld [vmem:[#allocation11 + $0x778] sm:$0xff]
    %v1036 = vld [vmem:[#allocation11 + $0x780] sm:$0xff]
    %v1037 = vld [vmem:[#allocation11 + $0x788] sm:$0xff]
    %v1038 = vld [vmem:[#allocation11 + $0x790] sm:$0xff]
    %v1039 = vld [vmem:[#allocation11 + $0x798] sm:$0xff]
    %v1040 = vld [vmem:[#allocation11 + $0x7a0] sm:$0xff]
    %v1041 = vld [vmem:[#allocation11 + $0x7a8] sm:$0xff]
    %v1042 = vld [vmem:[#allocation11 + $0x7b0] sm:$0xff]
    %v1043 = vld [vmem:[#allocation11 + $0x7b8] sm:$0xff]
    %v1044 = vld [vmem:[#allocation11 + $0x7c0] sm:$0xff]
    %v1045 = vld [vmem:[#allocation11 + $0x7c8] sm:$0xff]
    %v1046 = vld [vmem:[#allocation11 + $0x7d0] sm:$0xff]
    %v1047 = vld [vmem:[#allocation11 + $0x7d8] sm:$0xff]
    %v1048 = vld [vmem:[#allocation11 + $0x7e0] sm:$0xff]
    %v1049 = vld [vmem:[#allocation11 + $0x7e8] sm:$0xff]
    %v1050 = vld [vmem:[#allocation11 + $0x7f0] sm:$0xff]
    %v1051 = vld [vmem:[#allocation11 + $0x7f8] sm:$0xff]
    %v1052 = vld [vmem:[#allocation13] sm:$0xff]
    %v1054 = vlaneseq
    %v1055 = vshrl.u32 %v1054, 7
    %v1056 = vsub.s32 0, %v1055
    %v1057 = vrot.slane %v1052, %v1056
    %v1058 = vlaneseq
    %v1059 = vshrl.u32 %v1058, 7
    %v1060 = vsub.s32 1, %v1059
    %v1061 = vrot.slane %v1052, %v1060
    %v1062 = vlaneseq
    %v1063 = vshrl.u32 %v1062, 7
    %v1064 = vsub.s32 2, %v1063
    %v1065 = vrot.slane %v1052, %v1064
    %v1066 = vlaneseq
    %v1067 = vshrl.u32 %v1066, 7
    %v1068 = vsub.s32 3, %v1067
    %v1069 = vrot.slane %v1052, %v1068
    %v1070 = vlaneseq
    %v1071 = vshrl.u32 %v1070, 7
    %v1072 = vsub.s32 4, %v1071
    %v1073 = vrot.slane %v1052, %v1072
    %v1074 = vlaneseq
    %v1075 = vshrl.u32 %v1074, 7
    %v1076 = vsub.s32 5, %v1075
    %v1077 = vrot.slane %v1052, %v1076
    %v1078 = vlaneseq
    %v1079 = vshrl.u32 %v1078, 7
    %v1080 = vsub.s32 6, %v1079
    %v1081 = vrot.slane %v1052, %v1080
    %v1082 = vlaneseq
    %v1083 = vshrl.u32 %v1082, 7
    %v1084 = vsub.s32 7, %v1083
    %v1085 = vrot.slane %v1052, %v1084
    %v1350 = vunpack.c.l.b16 %v796
    %v1351 = vunpack.c.h.b16 %v796
    %v1352 = vunpack.c.l.b16 %v797
    %v1353 = vunpack.c.h.b16 %v797
    %v1354 = vunpack.c.l.b16 %v798
    %v1355 = vunpack.c.h.b16 %v798
    %v1356 = vunpack.c.l.b16 %v799
    %v1357 = vunpack.c.h.b16 %v799
    %v1358 = vunpack.c.l.b16 %v800
    %v1359 = vunpack.c.h.b16 %v800
    %v1360 = vunpack.c.l.b16 %v801
    %v1361 = vunpack.c.h.b16 %v801
    %v1362 = vunpack.c.l.b16 %v802
    %v1363 = vunpack.c.h.b16 %v802
    %v1364 = vunpack.c.l.b16 %v803
    %v1365 = vunpack.c.h.b16 %v803
    %v1366 = vunpack.c.l.b16 %v804
    %v1367 = vunpack.c.h.b16 %v804
    %v1368 = vunpack.c.l.b16 %v805
    %v1369 = vunpack.c.h.b16 %v805
    %v1370 = vunpack.c.l.b16 %v806
    %v1371 = vunpack.c.h.b16 %v806
    %v1372 = vunpack.c.l.b16 %v807
    %v1373 = vunpack.c.h.b16 %v807
    %v1374 = vunpack.c.l.b16 %v808
    %v1375 = vunpack.c.h.b16 %v808
    %v1376 = vunpack.c.l.b16 %v809
    %v1377 = vunpack.c.h.b16 %v809
    %v1378 = vunpack.c.l.b16 %v810
    %v1379 = vunpack.c.h.b16 %v810
    %v1380 = vunpack.c.l.b16 %v811
    %v1381 = vunpack.c.h.b16 %v811
    %v1382 = vunpack.c.l.b16 %v812
    %v1383 = vunpack.c.h.b16 %v812
    %v1384 = vunpack.c.l.b16 %v813
    %v1385 = vunpack.c.h.b16 %v813
    %v1386 = vunpack.c.l.b16 %v814
    %v1387 = vunpack.c.h.b16 %v814
    %v1388 = vunpack.c.l.b16 %v815
    %v1389 = vunpack.c.h.b16 %v815
    %v1390 = vunpack.c.l.b16 %v816
    %v1391 = vunpack.c.h.b16 %v816
    %v1392 = vunpack.c.l.b16 %v817
    %v1393 = vunpack.c.h.b16 %v817
    %v1394 = vunpack.c.l.b16 %v818
    %v1395 = vunpack.c.h.b16 %v818
    %v1396 = vunpack.c.l.b16 %v819
    %v1397 = vunpack.c.h.b16 %v819
    %v1398 = vunpack.c.l.b16 %v820
    %v1399 = vunpack.c.h.b16 %v820
    %v1400 = vunpack.c.l.b16 %v821
    %v1401 = vunpack.c.h.b16 %v821
    %v1402 = vunpack.c.l.b16 %v822
    %v1403 = vunpack.c.h.b16 %v822
    %v1404 = vunpack.c.l.b16 %v823
    %v1405 = vunpack.c.h.b16 %v823
    %v1406 = vunpack.c.l.b16 %v824
    %v1407 = vunpack.c.h.b16 %v824
    %v1408 = vunpack.c.l.b16 %v825
    %v1409 = vunpack.c.h.b16 %v825
    %v1410 = vunpack.c.l.b16 %v826
    %v1411 = vunpack.c.h.b16 %v826
    %v1412 = vunpack.c.l.b16 %v827
    %v1413 = vunpack.c.h.b16 %v827
    %v1414 = vunpack.c.l.b16 %v828
    %v1415 = vunpack.c.h.b16 %v828
    %v1416 = vunpack.c.l.b16 %v829
    %v1417 = vunpack.c.h.b16 %v829
    %v1418 = vunpack.c.l.b16 %v830
    %v1419 = vunpack.c.h.b16 %v830
    %v1420 = vunpack.c.l.b16 %v831
    %v1421 = vunpack.c.h.b16 %v831
    %v1422 = vunpack.c.l.b16 %v832
    %v1423 = vunpack.c.h.b16 %v832
    %v1424 = vunpack.c.l.b16 %v833
    %v1425 = vunpack.c.h.b16 %v833
    %v1426 = vunpack.c.l.b16 %v834
    %v1427 = vunpack.c.h.b16 %v834
    %v1428 = vunpack.c.l.b16 %v835
    %v1429 = vunpack.c.h.b16 %v835
    %v1430 = vunpack.c.l.b16 %v836
    %v1431 = vunpack.c.h.b16 %v836
    %v1432 = vunpack.c.l.b16 %v837
    %v1433 = vunpack.c.h.b16 %v837
    %v1434 = vunpack.c.l.b16 %v838
    %v1435 = vunpack.c.h.b16 %v838
    %v1436 = vunpack.c.l.b16 %v839
    %v1437 = vunpack.c.h.b16 %v839
    %v1438 = vunpack.c.l.b16 %v840
    %v1439 = vunpack.c.h.b16 %v840
    %v1440 = vunpack.c.l.b16 %v841
    %v1441 = vunpack.c.h.b16 %v841
    %v1442 = vunpack.c.l.b16 %v842
    %v1443 = vunpack.c.h.b16 %v842
    %v1444 = vunpack.c.l.b16 %v843
    %v1445 = vunpack.c.h.b16 %v843
    %v1446 = vunpack.c.l.b16 %v844
    %v1447 = vunpack.c.h.b16 %v844
    %v1448 = vunpack.c.l.b16 %v845
    %v1449 = vunpack.c.h.b16 %v845
    %v1450 = vunpack.c.l.b16 %v846
    %v1451 = vunpack.c.h.b16 %v846
    %v1452 = vunpack.c.l.b16 %v847
    %v1453 = vunpack.c.h.b16 %v847
    %v1454 = vunpack.c.l.b16 %v848
    %v1455 = vunpack.c.h.b16 %v848
    %v1456 = vunpack.c.l.b16 %v849
    %v1457 = vunpack.c.h.b16 %v849
    %v1458 = vunpack.c.l.b16 %v850
    %v1459 = vunpack.c.h.b16 %v850
    %v1460 = vunpack.c.l.b16 %v851
    %v1461 = vunpack.c.h.b16 %v851
    %v1462 = vunpack.c.l.b16 %v852
    %v1463 = vunpack.c.h.b16 %v852
    %v1464 = vunpack.c.l.b16 %v853
    %v1465 = vunpack.c.h.b16 %v853
    %v1466 = vunpack.c.l.b16 %v854
    %v1467 = vunpack.c.h.b16 %v854
    %v1468 = vunpack.c.l.b16 %v855
    %v1469 = vunpack.c.h.b16 %v855
    %v1470 = vunpack.c.l.b16 %v856
    %v1471 = vunpack.c.h.b16 %v856
    %v1472 = vunpack.c.l.b16 %v857
    %v1473 = vunpack.c.h.b16 %v857
    %v1474 = vunpack.c.l.b16 %v858
    %v1475 = vunpack.c.h.b16 %v858
    %v1476 = vunpack.c.l.b16 %v859
    %v1477 = vunpack.c.h.b16 %v859
    %v1478 = vunpack.c.l.b16 %v860
    %v1479 = vunpack.c.h.b16 %v860
    %v1480 = vunpack.c.l.b16 %v861
    %v1481 = vunpack.c.h.b16 %v861
    %v1482 = vunpack.c.l.b16 %v862
    %v1483 = vunpack.c.h.b16 %v862
    %v1484 = vunpack.c.l.b16 %v863
    %v1485 = vunpack.c.h.b16 %v863
    %v1486 = vunpack.c.l.b16 %v864
    %v1487 = vunpack.c.h.b16 %v864
    %v1488 = vunpack.c.l.b16 %v865
    %v1489 = vunpack.c.h.b16 %v865
    %v1490 = vunpack.c.l.b16 %v866
    %v1491 = vunpack.c.h.b16 %v866
    %v1492 = vunpack.c.l.b16 %v867
    %v1493 = vunpack.c.h.b16 %v867
    %v1494 = vunpack.c.l.b16 %v868
    %v1495 = vunpack.c.h.b16 %v868
    %v1496 = vunpack.c.l.b16 %v869
    %v1497 = vunpack.c.h.b16 %v869
    %v1498 = vunpack.c.l.b16 %v870
    %v1499 = vunpack.c.h.b16 %v870
    %v1500 = vunpack.c.l.b16 %v871
    %v1501 = vunpack.c.h.b16 %v871
    %v1502 = vunpack.c.l.b16 %v872
    %v1503 = vunpack.c.h.b16 %v872
    %v1504 = vunpack.c.l.b16 %v873
    %v1505 = vunpack.c.h.b16 %v873
    %v1506 = vunpack.c.l.b16 %v874
    %v1507 = vunpack.c.h.b16 %v874
    %v1508 = vunpack.c.l.b16 %v875
    %v1509 = vunpack.c.h.b16 %v875
    %v1510 = vunpack.c.l.b16 %v876
    %v1511 = vunpack.c.h.b16 %v876
    %v1512 = vunpack.c.l.b16 %v877
    %v1513 = vunpack.c.h.b16 %v877
    %v1514 = vunpack.c.l.b16 %v878
    %v1515 = vunpack.c.h.b16 %v878
    %v1516 = vunpack.c.l.b16 %v879
    %v1517 = vunpack.c.h.b16 %v879
    %v1518 = vunpack.c.l.b16 %v880
    %v1519 = vunpack.c.h.b16 %v880
    %v1520 = vunpack.c.l.b16 %v881
    %v1521 = vunpack.c.h.b16 %v881
    %v1522 = vunpack.c.l.b16 %v882
    %v1523 = vunpack.c.h.b16 %v882
    %v1524 = vunpack.c.l.b16 %v883
    %v1525 = vunpack.c.h.b16 %v883
    %v1526 = vunpack.c.l.b16 %v884
    %v1527 = vunpack.c.h.b16 %v884
    %v1528 = vunpack.c.l.b16 %v885
    %v1529 = vunpack.c.h.b16 %v885
    %v1530 = vunpack.c.l.b16 %v886
    %v1531 = vunpack.c.h.b16 %v886
    %v1532 = vunpack.c.l.b16 %v887
    %v1533 = vunpack.c.h.b16 %v887
    %v1534 = vunpack.c.l.b16 %v888
    %v1535 = vunpack.c.h.b16 %v888
    %v1536 = vunpack.c.l.b16 %v889
    %v1537 = vunpack.c.h.b16 %v889
    %v1538 = vunpack.c.l.b16 %v890
    %v1539 = vunpack.c.h.b16 %v890
    %v1540 = vunpack.c.l.b16 %v891
    %v1541 = vunpack.c.h.b16 %v891
    %v1542 = vunpack.c.l.b16 %v892
    %v1543 = vunpack.c.h.b16 %v892
    %v1544 = vunpack.c.l.b16 %v893
    %v1545 = vunpack.c.h.b16 %v893
    %v1546 = vunpack.c.l.b16 %v894
    %v1547 = vunpack.c.h.b16 %v894
    %v1548 = vunpack.c.l.b16 %v895
    %v1549 = vunpack.c.h.b16 %v895
    %v1550 = vunpack.c.l.b16 %v896
    %v1551 = vunpack.c.h.b16 %v896
    %v1552 = vunpack.c.l.b16 %v897
    %v1553 = vunpack.c.h.b16 %v897
    %v1554 = vunpack.c.l.b16 %v898
    %v1555 = vunpack.c.h.b16 %v898
    %v1556 = vunpack.c.l.b16 %v899
    %v1557 = vunpack.c.h.b16 %v899
    %v1558 = vunpack.c.l.b16 %v900
    %v1559 = vunpack.c.h.b16 %v900
    %v1560 = vunpack.c.l.b16 %v901
    %v1561 = vunpack.c.h.b16 %v901
    %v1562 = vunpack.c.l.b16 %v902
    %v1563 = vunpack.c.h.b16 %v902
    %v1564 = vunpack.c.l.b16 %v903
    %v1565 = vunpack.c.h.b16 %v903
    %v1566 = vunpack.c.l.b16 %v904
    %v1567 = vunpack.c.h.b16 %v904
    %v1568 = vunpack.c.l.b16 %v905
    %v1569 = vunpack.c.h.b16 %v905
    %v1570 = vunpack.c.l.b16 %v906
    %v1571 = vunpack.c.h.b16 %v906
    %v1572 = vunpack.c.l.b16 %v907
    %v1573 = vunpack.c.h.b16 %v907
    %v1574 = vunpack.c.l.b16 %v908
    %v1575 = vunpack.c.h.b16 %v908
    %v1576 = vunpack.c.l.b16 %v909
    %v1577 = vunpack.c.h.b16 %v909
    %v1578 = vunpack.c.l.b16 %v910
    %v1579 = vunpack.c.h.b16 %v910
    %v1580 = vunpack.c.l.b16 %v911
    %v1581 = vunpack.c.h.b16 %v911
    %v1582 = vunpack.c.l.b16 %v912
    %v1583 = vunpack.c.h.b16 %v912
    %v1584 = vunpack.c.l.b16 %v913
    %v1585 = vunpack.c.h.b16 %v913
    %v1586 = vunpack.c.l.b16 %v914
    %v1587 = vunpack.c.h.b16 %v914
    %v1588 = vunpack.c.l.b16 %v915
    %v1589 = vunpack.c.h.b16 %v915
    %v1590 = vunpack.c.l.b16 %v916
    %v1591 = vunpack.c.h.b16 %v916
    %v1592 = vunpack.c.l.b16 %v917
    %v1593 = vunpack.c.h.b16 %v917
    %v1594 = vunpack.c.l.b16 %v918
    %v1595 = vunpack.c.h.b16 %v918
    %v1596 = vunpack.c.l.b16 %v919
    %v1597 = vunpack.c.h.b16 %v919
    %v1598 = vunpack.c.l.b16 %v920
    %v1599 = vunpack.c.h.b16 %v920
    %v1600 = vunpack.c.l.b16 %v921
    %v1601 = vunpack.c.h.b16 %v921
    %v1602 = vunpack.c.l.b16 %v922
    %v1603 = vunpack.c.h.b16 %v922
    %v1604 = vunpack.c.l.b16 %v923
    %v1605 = vunpack.c.h.b16 %v923
    %v1606 = vunpack.c.l.b16 %v924
    %v1607 = vunpack.c.h.b16 %v924
    %v1608 = vunpack.c.l.b16 %v925
    %v1609 = vunpack.c.h.b16 %v925
    %v1610 = vunpack.c.l.b16 %v926
    %v1611 = vunpack.c.h.b16 %v926
    %v1612 = vunpack.c.l.b16 %v927
    %v1613 = vunpack.c.h.b16 %v927
    %v1614 = vunpack.c.l.b16 %v928
    %v1615 = vunpack.c.h.b16 %v928
    %v1616 = vunpack.c.l.b16 %v929
    %v1617 = vunpack.c.h.b16 %v929
    %v1618 = vunpack.c.l.b16 %v930
    %v1619 = vunpack.c.h.b16 %v930
    %v1620 = vunpack.c.l.b16 %v931
    %v1621 = vunpack.c.h.b16 %v931
    %v1622 = vunpack.c.l.b16 %v932
    %v1623 = vunpack.c.h.b16 %v932
    %v1624 = vunpack.c.l.b16 %v933
    %v1625 = vunpack.c.h.b16 %v933
    %v1626 = vunpack.c.l.b16 %v934
    %v1627 = vunpack.c.h.b16 %v934
    %v1628 = vunpack.c.l.b16 %v935
    %v1629 = vunpack.c.h.b16 %v935
    %v1630 = vunpack.c.l.b16 %v936
    %v1631 = vunpack.c.h.b16 %v936
    %v1632 = vunpack.c.l.b16 %v937
    %v1633 = vunpack.c.h.b16 %v937
    %v1634 = vunpack.c.l.b16 %v938
    %v1635 = vunpack.c.h.b16 %v938
    %v1636 = vunpack.c.l.b16 %v939
    %v1637 = vunpack.c.h.b16 %v939
    %v1638 = vunpack.c.l.b16 %v940
    %v1639 = vunpack.c.h.b16 %v940
    %v1640 = vunpack.c.l.b16 %v941
    %v1641 = vunpack.c.h.b16 %v941
    %v1642 = vunpack.c.l.b16 %v942
    %v1643 = vunpack.c.h.b16 %v942
    %v1644 = vunpack.c.l.b16 %v943
    %v1645 = vunpack.c.h.b16 %v943
    %v1646 = vunpack.c.l.b16 %v944
    %v1647 = vunpack.c.h.b16 %v944
    %v1648 = vunpack.c.l.b16 %v945
    %v1649 = vunpack.c.h.b16 %v945
    %v1650 = vunpack.c.l.b16 %v946
    %v1651 = vunpack.c.h.b16 %v946
    %v1652 = vunpack.c.l.b16 %v947
    %v1653 = vunpack.c.h.b16 %v947
    %v1654 = vunpack.c.l.b16 %v948
    %v1655 = vunpack.c.h.b16 %v948
    %v1656 = vunpack.c.l.b16 %v949
    %v1657 = vunpack.c.h.b16 %v949
    %v1658 = vunpack.c.l.b16 %v950
    %v1659 = vunpack.c.h.b16 %v950
    %v1660 = vunpack.c.l.b16 %v951
    %v1661 = vunpack.c.h.b16 %v951
    %v1662 = vunpack.c.l.b16 %v952
    %v1663 = vunpack.c.h.b16 %v952
    %v1664 = vunpack.c.l.b16 %v953
    %v1665 = vunpack.c.h.b16 %v953
    %v1666 = vunpack.c.l.b16 %v954
    %v1667 = vunpack.c.h.b16 %v954
    %v1668 = vunpack.c.l.b16 %v955
    %v1669 = vunpack.c.h.b16 %v955
    %v1670 = vunpack.c.l.b16 %v956
    %v1671 = vunpack.c.h.b16 %v956
    %v1672 = vunpack.c.l.b16 %v957
    %v1673 = vunpack.c.h.b16 %v957
    %v1674 = vunpack.c.l.b16 %v958
    %v1675 = vunpack.c.h.b16 %v958
    %v1676 = vunpack.c.l.b16 %v959
    %v1677 = vunpack.c.h.b16 %v959
    %v1678 = vunpack.c.l.b16 %v960
    %v1679 = vunpack.c.h.b16 %v960
    %v1680 = vunpack.c.l.b16 %v961
    %v1681 = vunpack.c.h.b16 %v961
    %v1682 = vunpack.c.l.b16 %v962
    %v1683 = vunpack.c.h.b16 %v962
    %v1684 = vunpack.c.l.b16 %v963
    %v1685 = vunpack.c.h.b16 %v963
    %v1686 = vunpack.c.l.b16 %v964
    %v1687 = vunpack.c.h.b16 %v964
    %v1688 = vunpack.c.l.b16 %v965
    %v1689 = vunpack.c.h.b16 %v965
    %v1690 = vunpack.c.l.b16 %v966
    %v1691 = vunpack.c.h.b16 %v966
    %v1692 = vunpack.c.l.b16 %v967
    %v1693 = vunpack.c.h.b16 %v967
    %v1694 = vunpack.c.l.b16 %v968
    %v1695 = vunpack.c.h.b16 %v968
    %v1696 = vunpack.c.l.b16 %v969
    %v1697 = vunpack.c.h.b16 %v969
    %v1698 = vunpack.c.l.b16 %v970
    %v1699 = vunpack.c.h.b16 %v970
    %v1700 = vunpack.c.l.b16 %v971
    %v1701 = vunpack.c.h.b16 %v971
    %v1702 = vunpack.c.l.b16 %v972
    %v1703 = vunpack.c.h.b16 %v972
    %v1704 = vunpack.c.l.b16 %v973
    %v1705 = vunpack.c.h.b16 %v973
    %v1706 = vunpack.c.l.b16 %v974
    %v1707 = vunpack.c.h.b16 %v974
    %v1708 = vunpack.c.l.b16 %v975
    %v1709 = vunpack.c.h.b16 %v975
    %v1710 = vunpack.c.l.b16 %v976
    %v1711 = vunpack.c.h.b16 %v976
    %v1712 = vunpack.c.l.b16 %v977
    %v1713 = vunpack.c.h.b16 %v977
    %v1714 = vunpack.c.l.b16 %v978
    %v1715 = vunpack.c.h.b16 %v978
    %v1716 = vunpack.c.l.b16 %v979
    %v1717 = vunpack.c.h.b16 %v979
    %v1718 = vunpack.c.l.b16 %v980
    %v1719 = vunpack.c.h.b16 %v980
    %v1720 = vunpack.c.l.b16 %v981
    %v1721 = vunpack.c.h.b16 %v981
    %v1722 = vunpack.c.l.b16 %v982
    %v1723 = vunpack.c.h.b16 %v982
    %v1724 = vunpack.c.l.b16 %v983
    %v1725 = vunpack.c.h.b16 %v983
    %v1726 = vunpack.c.l.b16 %v984
    %v1727 = vunpack.c.h.b16 %v984
    %v1728 = vunpack.c.l.b16 %v985
    %v1729 = vunpack.c.h.b16 %v985
    %v1730 = vunpack.c.l.b16 %v986
    %v1731 = vunpack.c.h.b16 %v986
    %v1732 = vunpack.c.l.b16 %v987
    %v1733 = vunpack.c.h.b16 %v987
    %v1734 = vunpack.c.l.b16 %v988
    %v1735 = vunpack.c.h.b16 %v988
    %v1736 = vunpack.c.l.b16 %v989
    %v1737 = vunpack.c.h.b16 %v989
    %v1738 = vunpack.c.l.b16 %v990
    %v1739 = vunpack.c.h.b16 %v990
    %v1740 = vunpack.c.l.b16 %v991
    %v1741 = vunpack.c.h.b16 %v991
    %v1742 = vunpack.c.l.b16 %v992
    %v1743 = vunpack.c.h.b16 %v992
    %v1744 = vunpack.c.l.b16 %v993
    %v1745 = vunpack.c.h.b16 %v993
    %v1746 = vunpack.c.l.b16 %v994
    %v1747 = vunpack.c.h.b16 %v994
    %v1748 = vunpack.c.l.b16 %v995
    %v1749 = vunpack.c.h.b16 %v995
    %v1750 = vunpack.c.l.b16 %v996
    %v1751 = vunpack.c.h.b16 %v996
    %v1752 = vunpack.c.l.b16 %v997
    %v1753 = vunpack.c.h.b16 %v997
    %v1754 = vunpack.c.l.b16 %v998
    %v1755 = vunpack.c.h.b16 %v998
    %v1756 = vunpack.c.l.b16 %v999
    %v1757 = vunpack.c.h.b16 %v999
    %v1758 = vunpack.c.l.b16 %v1000
    %v1759 = vunpack.c.h.b16 %v1000
    %v1760 = vunpack.c.l.b16 %v1001
    %v1761 = vunpack.c.h.b16 %v1001
    %v1762 = vunpack.c.l.b16 %v1002
    %v1763 = vunpack.c.h.b16 %v1002
    %v1764 = vunpack.c.l.b16 %v1003
    %v1765 = vunpack.c.h.b16 %v1003
    %v1766 = vunpack.c.l.b16 %v1004
    %v1767 = vunpack.c.h.b16 %v1004
    %v1768 = vunpack.c.l.b16 %v1005
    %v1769 = vunpack.c.h.b16 %v1005
    %v1770 = vunpack.c.l.b16 %v1006
    %v1771 = vunpack.c.h.b16 %v1006
    %v1772 = vunpack.c.l.b16 %v1007
    %v1773 = vunpack.c.h.b16 %v1007
    %v1774 = vunpack.c.l.b16 %v1008
    %v1775 = vunpack.c.h.b16 %v1008
    %v1776 = vunpack.c.l.b16 %v1009
    %v1777 = vunpack.c.h.b16 %v1009
    %v1778 = vunpack.c.l.b16 %v1010
    %v1779 = vunpack.c.h.b16 %v1010
    %v1780 = vunpack.c.l.b16 %v1011
    %v1781 = vunpack.c.h.b16 %v1011
    %v1782 = vunpack.c.l.b16 %v1012
    %v1783 = vunpack.c.h.b16 %v1012
    %v1784 = vunpack.c.l.b16 %v1013
    %v1785 = vunpack.c.h.b16 %v1013
    %v1786 = vunpack.c.l.b16 %v1014
    %v1787 = vunpack.c.h.b16 %v1014
    %v1788 = vunpack.c.l.b16 %v1015
    %v1789 = vunpack.c.h.b16 %v1015
    %v1790 = vunpack.c.l.b16 %v1016
    %v1791 = vunpack.c.h.b16 %v1016
    %v1792 = vunpack.c.l.b16 %v1017
    %v1793 = vunpack.c.h.b16 %v1017
    %v1794 = vunpack.c.l.b16 %v1018
    %v1795 = vunpack.c.h.b16 %v1018
    %v1796 = vunpack.c.l.b16 %v1019
    %v1797 = vunpack.c.h.b16 %v1019
    %v1798 = vunpack.c.l.b16 %v1020
    %v1799 = vunpack.c.h.b16 %v1020
    %v1800 = vunpack.c.l.b16 %v1021
    %v1801 = vunpack.c.h.b16 %v1021
    %v1802 = vunpack.c.l.b16 %v1022
    %v1803 = vunpack.c.h.b16 %v1022
    %v1804 = vunpack.c.l.b16 %v1023
    %v1805 = vunpack.c.h.b16 %v1023
    %v1806 = vunpack.c.l.b16 %v1024
    %v1807 = vunpack.c.h.b16 %v1024
    %v1808 = vunpack.c.l.b16 %v1025
    %v1809 = vunpack.c.h.b16 %v1025
    %v1810 = vunpack.c.l.b16 %v1026
    %v1811 = vunpack.c.h.b16 %v1026
    %v1812 = vunpack.c.l.b16 %v1027
    %v1813 = vunpack.c.h.b16 %v1027
    %v1814 = vunpack.c.l.b16 %v1028
    %v1815 = vunpack.c.h.b16 %v1028
    %v1816 = vunpack.c.l.b16 %v1029
    %v1817 = vunpack.c.h.b16 %v1029
    %v1818 = vunpack.c.l.b16 %v1030
    %v1819 = vunpack.c.h.b16 %v1030
    %v1820 = vunpack.c.l.b16 %v1031
    %v1821 = vunpack.c.h.b16 %v1031
    %v1822 = vunpack.c.l.b16 %v1032
    %v1823 = vunpack.c.h.b16 %v1032
    %v1824 = vunpack.c.l.b16 %v1033
    %v1825 = vunpack.c.h.b16 %v1033
    %v1826 = vunpack.c.l.b16 %v1034
    %v1827 = vunpack.c.h.b16 %v1034
    %v1828 = vunpack.c.l.b16 %v1035
    %v1829 = vunpack.c.h.b16 %v1035
    %v1830 = vunpack.c.l.b16 %v1036
    %v1831 = vunpack.c.h.b16 %v1036
    %v1832 = vunpack.c.l.b16 %v1037
    %v1833 = vunpack.c.h.b16 %v1037
    %v1834 = vunpack.c.l.b16 %v1038
    %v1835 = vunpack.c.h.b16 %v1038
    %v1836 = vunpack.c.l.b16 %v1039
    %v1837 = vunpack.c.h.b16 %v1039
    %v1838 = vunpack.c.l.b16 %v1040
    %v1839 = vunpack.c.h.b16 %v1040
    %v1840 = vunpack.c.l.b16 %v1041
    %v1841 = vunpack.c.h.b16 %v1041
    %v1842 = vunpack.c.l.b16 %v1042
    %v1843 = vunpack.c.h.b16 %v1042
    %v1844 = vunpack.c.l.b16 %v1043
    %v1845 = vunpack.c.h.b16 %v1043
    %v1846 = vunpack.c.l.b16 %v1044
    %v1847 = vunpack.c.h.b16 %v1044
    %v1848 = vunpack.c.l.b16 %v1045
    %v1849 = vunpack.c.h.b16 %v1045
    %v1850 = vunpack.c.l.b16 %v1046
    %v1851 = vunpack.c.h.b16 %v1046
    %v1852 = vunpack.c.l.b16 %v1047
    %v1853 = vunpack.c.h.b16 %v1047
    %v1854 = vunpack.c.l.b16 %v1048
    %v1855 = vunpack.c.h.b16 %v1048
    %v1856 = vunpack.c.l.b16 %v1049
    %v1857 = vunpack.c.h.b16 %v1049
    %v1858 = vunpack.c.l.b16 %v1050
    %v1859 = vunpack.c.h.b16 %v1050
    %v1860 = vunpack.c.l.b16 %v1051
    %v1861 = vunpack.c.h.b16 %v1051
    %v1862 = vpack.c.b16 %v1358, %v1350
    %v1863 = vpack.c.b16 %v1359, %v1351
    %v1864 = vpack.c.b16 %v1360, %v1352
    %v1865 = vpack.c.b16 %v1361, %v1353
    %v1866 = vpack.c.b16 %v1362, %v1354
    %v1867 = vpack.c.b16 %v1363, %v1355
    %v1868 = vpack.c.b16 %v1364, %v1356
    %v1869 = vpack.c.b16 %v1365, %v1357
    %v1870 = vpack.c.b16 %v1374, %v1366
    %v1871 = vpack.c.b16 %v1375, %v1367
    %v1872 = vpack.c.b16 %v1376, %v1368
    %v1873 = vpack.c.b16 %v1377, %v1369
    %v1874 = vpack.c.b16 %v1378, %v1370
    %v1875 = vpack.c.b16 %v1379, %v1371
    %v1876 = vpack.c.b16 %v1380, %v1372
    %v1877 = vpack.c.b16 %v1381, %v1373
    %v1878 = vpack.c.b16 %v1390, %v1382
    %v1879 = vpack.c.b16 %v1391, %v1383
    %v1880 = vpack.c.b16 %v1392, %v1384
    %v1881 = vpack.c.b16 %v1393, %v1385
    %v1882 = vpack.c.b16 %v1394, %v1386
    %v1883 = vpack.c.b16 %v1395, %v1387
    %v1884 = vpack.c.b16 %v1396, %v1388
    %v1885 = vpack.c.b16 %v1397, %v1389
    %v1886 = vpack.c.b16 %v1406, %v1398
    %v1887 = vpack.c.b16 %v1407, %v1399
    %v1888 = vpack.c.b16 %v1408, %v1400
    %v1889 = vpack.c.b16 %v1409, %v1401
    %v1890 = vpack.c.b16 %v1410, %v1402
    %v1891 = vpack.c.b16 %v1411, %v1403
    %v1892 = vpack.c.b16 %v1412, %v1404
    %v1893 = vpack.c.b16 %v1413, %v1405
    %v1894 = vpack.c.b16 %v1422, %v1414
    %v1895 = vpack.c.b16 %v1423, %v1415
    %v1896 = vpack.c.b16 %v1424, %v1416
    %v1897 = vpack.c.b16 %v1425, %v1417
    %v1898 = vpack.c.b16 %v1426, %v1418
    %v1899 = vpack.c.b16 %v1427, %v1419
    %v1900 = vpack.c.b16 %v1428, %v1420
    %v1901 = vpack.c.b16 %v1429, %v1421
    %v1902 = vpack.c.b16 %v1438, %v1430
    %v1903 = vpack.c.b16 %v1439, %v1431
    %v1904 = vpack.c.b16 %v1440, %v1432
    %v1905 = vpack.c.b16 %v1441, %v1433
    %v1906 = vpack.c.b16 %v1442, %v1434
    %v1907 = vpack.c.b16 %v1443, %v1435
    %v1908 = vpack.c.b16 %v1444, %v1436
    %v1909 = vpack.c.b16 %v1445, %v1437
    %v1910 = vpack.c.b16 %v1454, %v1446
    %v1911 = vpack.c.b16 %v1455, %v1447
    %v1912 = vpack.c.b16 %v1456, %v1448
    %v1913 = vpack.c.b16 %v1457, %v1449
    %v1914 = vpack.c.b16 %v1458, %v1450
    %v1915 = vpack.c.b16 %v1459, %v1451
    %v1916 = vpack.c.b16 %v1460, %v1452
    %v1917 = vpack.c.b16 %v1461, %v1453
    %v1918 = vpack.c.b16 %v1470, %v1462
    %v1919 = vpack.c.b16 %v1471, %v1463
    %v1920 = vpack.c.b16 %v1472, %v1464
    %v1921 = vpack.c.b16 %v1473, %v1465
    %v1922 = vpack.c.b16 %v1474, %v1466
    %v1923 = vpack.c.b16 %v1475, %v1467
    %v1924 = vpack.c.b16 %v1476, %v1468
    %v1925 = vpack.c.b16 %v1477, %v1469
    %v1926 = vpack.c.b16 %v1486, %v1478
    %v1927 = vpack.c.b16 %v1487, %v1479
    %v1928 = vpack.c.b16 %v1488, %v1480
    %v1929 = vpack.c.b16 %v1489, %v1481
    %v1930 = vpack.c.b16 %v1490, %v1482
    %v1931 = vpack.c.b16 %v1491, %v1483
    %v1932 = vpack.c.b16 %v1492, %v1484
    %v1933 = vpack.c.b16 %v1493, %v1485
    %v1934 = vpack.c.b16 %v1502, %v1494
    %v1935 = vpack.c.b16 %v1503, %v1495
    %v1936 = vpack.c.b16 %v1504, %v1496
    %v1937 = vpack.c.b16 %v1505, %v1497
    %v1938 = vpack.c.b16 %v1506, %v1498
    %v1939 = vpack.c.b16 %v1507, %v1499
    %v1940 = vpack.c.b16 %v1508, %v1500
    %v1941 = vpack.c.b16 %v1509, %v1501
    %v1942 = vpack.c.b16 %v1518, %v1510
    %v1943 = vpack.c.b16 %v1519, %v1511
    %v1944 = vpack.c.b16 %v1520, %v1512
    %v1945 = vpack.c.b16 %v1521, %v1513
    %v1946 = vpack.c.b16 %v1522, %v1514
    %v1947 = vpack.c.b16 %v1523, %v1515
    %v1948 = vpack.c.b16 %v1524, %v1516
    %v1949 = vpack.c.b16 %v1525, %v1517
    %v1950 = vpack.c.b16 %v1534, %v1526
    %v1951 = vpack.c.b16 %v1535, %v1527
    %v1952 = vpack.c.b16 %v1536, %v1528
    %v1953 = vpack.c.b16 %v1537, %v1529
    %v1954 = vpack.c.b16 %v1538, %v1530
    %v1955 = vpack.c.b16 %v1539, %v1531
    %v1956 = vpack.c.b16 %v1540, %v1532
    %v1957 = vpack.c.b16 %v1541, %v1533
    %v1958 = vpack.c.b16 %v1550, %v1542
    %v1959 = vpack.c.b16 %v1551, %v1543
    %v1960 = vpack.c.b16 %v1552, %v1544
    %v1961 = vpack.c.b16 %v1553, %v1545
    %v1962 = vpack.c.b16 %v1554, %v1546
    %v1963 = vpack.c.b16 %v1555, %v1547
    %v1964 = vpack.c.b16 %v1556, %v1548
    %v1965 = vpack.c.b16 %v1557, %v1549
    %v1966 = vpack.c.b16 %v1566, %v1558
    %v1967 = vpack.c.b16 %v1567, %v1559
    %v1968 = vpack.c.b16 %v1568, %v1560
    %v1969 = vpack.c.b16 %v1569, %v1561
    %v1970 = vpack.c.b16 %v1570, %v1562
    %v1971 = vpack.c.b16 %v1571, %v1563
    %v1972 = vpack.c.b16 %v1572, %v1564
    %v1973 = vpack.c.b16 %v1573, %v1565
    %v1974 = vpack.c.b16 %v1582, %v1574
    %v1975 = vpack.c.b16 %v1583, %v1575
    %v1976 = vpack.c.b16 %v1584, %v1576
    %v1977 = vpack.c.b16 %v1585, %v1577
    %v1978 = vpack.c.b16 %v1586, %v1578
    %v1979 = vpack.c.b16 %v1587, %v1579
    %v1980 = vpack.c.b16 %v1588, %v1580
    %v1981 = vpack.c.b16 %v1589, %v1581
    %v1982 = vpack.c.b16 %v1598, %v1590
    %v1983 = vpack.c.b16 %v1599, %v1591
    %v1984 = vpack.c.b16 %v1600, %v1592
    %v1985 = vpack.c.b16 %v1601, %v1593
    %v1986 = vpack.c.b16 %v1602, %v1594
    %v1987 = vpack.c.b16 %v1603, %v1595
    %v1988 = vpack.c.b16 %v1604, %v1596
    %v1989 = vpack.c.b16 %v1605, %v1597
    %v1990 = vpack.c.b16 %v1614, %v1606
    %v1991 = vpack.c.b16 %v1615, %v1607
    %v1992 = vpack.c.b16 %v1616, %v1608
    %v1993 = vpack.c.b16 %v1617, %v1609
    %v1994 = vpack.c.b16 %v1618, %v1610
    %v1995 = vpack.c.b16 %v1619, %v1611
    %v1996 = vpack.c.b16 %v1620, %v1612
    %v1997 = vpack.c.b16 %v1621, %v1613
    %v1998 = vpack.c.b16 %v1630, %v1622
    %v1999 = vpack.c.b16 %v1631, %v1623
    %v2000 = vpack.c.b16 %v1632, %v1624
    %v2001 = vpack.c.b16 %v1633, %v1625
    %v2002 = vpack.c.b16 %v1634, %v1626
    %v2003 = vpack.c.b16 %v1635, %v1627
    %v2004 = vpack.c.b16 %v1636, %v1628
    %v2005 = vpack.c.b16 %v1637, %v1629
    %v2006 = vpack.c.b16 %v1646, %v1638
    %v2007 = vpack.c.b16 %v1647, %v1639
    %v2008 = vpack.c.b16 %v1648, %v1640
    %v2009 = vpack.c.b16 %v1649, %v1641
    %v2010 = vpack.c.b16 %v1650, %v1642
    %v2011 = vpack.c.b16 %v1651, %v1643
    %v2012 = vpack.c.b16 %v1652, %v1644
    %v2013 = vpack.c.b16 %v1653, %v1645
    %v2014 = vpack.c.b16 %v1662, %v1654
    %v2015 = vpack.c.b16 %v1663, %v1655
    %v2016 = vpack.c.b16 %v1664, %v1656
    %v2017 = vpack.c.b16 %v1665, %v1657
    %v2018 = vpack.c.b16 %v1666, %v1658
    %v2019 = vpack.c.b16 %v1667, %v1659
    %v2020 = vpack.c.b16 %v1668, %v1660
    %v2021 = vpack.c.b16 %v1669, %v1661
    %v2022 = vpack.c.b16 %v1678, %v1670
    %v2023 = vpack.c.b16 %v1679, %v1671
    %v2024 = vpack.c.b16 %v1680, %v1672
    %v2025 = vpack.c.b16 %v1681, %v1673
    %v2026 = vpack.c.b16 %v1682, %v1674
    %v2027 = vpack.c.b16 %v1683, %v1675
    %v2028 = vpack.c.b16 %v1684, %v1676
    %v2029 = vpack.c.b16 %v1685, %v1677
    %v2030 = vpack.c.b16 %v1694, %v1686
    %v2031 = vpack.c.b16 %v1695, %v1687
    %v2032 = vpack.c.b16 %v1696, %v1688
    %v2033 = vpack.c.b16 %v1697, %v1689
    %v2034 = vpack.c.b16 %v1698, %v1690
    %v2035 = vpack.c.b16 %v1699, %v1691
    %v2036 = vpack.c.b16 %v1700, %v1692
    %v2037 = vpack.c.b16 %v1701, %v1693
    %v2038 = vpack.c.b16 %v1710, %v1702
    %v2039 = vpack.c.b16 %v1711, %v1703
    %v2040 = vpack.c.b16 %v1712, %v1704
    %v2041 = vpack.c.b16 %v1713, %v1705
    %v2042 = vpack.c.b16 %v1714, %v1706
    %v2043 = vpack.c.b16 %v1715, %v1707
    %v2044 = vpack.c.b16 %v1716, %v1708
    %v2045 = vpack.c.b16 %v1717, %v1709
    %v2046 = vpack.c.b16 %v1726, %v1718
    %v2047 = vpack.c.b16 %v1727, %v1719
    %v2048 = vpack.c.b16 %v1728, %v1720
    %v2049 = vpack.c.b16 %v1729, %v1721
    %v2050 = vpack.c.b16 %v1730, %v1722
    %v2051 = vpack.c.b16 %v1731, %v1723
    %v2052 = vpack.c.b16 %v1732, %v1724
    %v2053 = vpack.c.b16 %v1733, %v1725
    %v2054 = vpack.c.b16 %v1742, %v1734
    %v2055 = vpack.c.b16 %v1743, %v1735
    %v2056 = vpack.c.b16 %v1744, %v1736
    %v2057 = vpack.c.b16 %v1745, %v1737
    %v2058 = vpack.c.b16 %v1746, %v1738
    %v2059 = vpack.c.b16 %v1747, %v1739
    %v2060 = vpack.c.b16 %v1748, %v1740
    %v2061 = vpack.c.b16 %v1749, %v1741
    %v2062 = vpack.c.b16 %v1758, %v1750
    %v2063 = vpack.c.b16 %v1759, %v1751
    %v2064 = vpack.c.b16 %v1760, %v1752
    %v2065 = vpack.c.b16 %v1761, %v1753
    %v2066 = vpack.c.b16 %v1762, %v1754
    %v2067 = vpack.c.b16 %v1763, %v1755
    %v2068 = vpack.c.b16 %v1764, %v1756
    %v2069 = vpack.c.b16 %v1765, %v1757
    %v2070 = vpack.c.b16 %v1774, %v1766
    %v2071 = vpack.c.b16 %v1775, %v1767
    %v2072 = vpack.c.b16 %v1776, %v1768
    %v2073 = vpack.c.b16 %v1777, %v1769
    %v2074 = vpack.c.b16 %v1778, %v1770
    %v2075 = vpack.c.b16 %v1779, %v1771
    %v2076 = vpack.c.b16 %v1780, %v1772
    %v2077 = vpack.c.b16 %v1781, %v1773
    %v2078 = vpack.c.b16 %v1790, %v1782
    %v2079 = vpack.c.b16 %v1791, %v1783
    %v2080 = vpack.c.b16 %v1792, %v1784
    %v2081 = vpack.c.b16 %v1793, %v1785
    %v2082 = vpack.c.b16 %v1794, %v1786
    %v2083 = vpack.c.b16 %v1795, %v1787
    %v2084 = vpack.c.b16 %v1796, %v1788
    %v2085 = vpack.c.b16 %v1797, %v1789
    %v2086 = vpack.c.b16 %v1806, %v1798
    %v2087 = vpack.c.b16 %v1807, %v1799
    %v2088 = vpack.c.b16 %v1808, %v1800
    %v2089 = vpack.c.b16 %v1809, %v1801
    %v2090 = vpack.c.b16 %v1810, %v1802
    %v2091 = vpack.c.b16 %v1811, %v1803
    %v2092 = vpack.c.b16 %v1812, %v1804
    %v2093 = vpack.c.b16 %v1813, %v1805
    %v2094 = vpack.c.b16 %v1822, %v1814
    %v2095 = vpack.c.b16 %v1823, %v1815
    %v2096 = vpack.c.b16 %v1824, %v1816
    %v2097 = vpack.c.b16 %v1825, %v1817
    %v2098 = vpack.c.b16 %v1826, %v1818
    %v2099 = vpack.c.b16 %v1827, %v1819
    %v2100 = vpack.c.b16 %v1828, %v1820
    %v2101 = vpack.c.b16 %v1829, %v1821
    %v2102 = vpack.c.b16 %v1838, %v1830
    %v2103 = vpack.c.b16 %v1839, %v1831
    %v2104 = vpack.c.b16 %v1840, %v1832
    %v2105 = vpack.c.b16 %v1841, %v1833
    %v2106 = vpack.c.b16 %v1842, %v1834
    %v2107 = vpack.c.b16 %v1843, %v1835
    %v2108 = vpack.c.b16 %v1844, %v1836
    %v2109 = vpack.c.b16 %v1845, %v1837
    %v2110 = vpack.c.b16 %v1854, %v1846
    %v2111 = vpack.c.b16 %v1855, %v1847
    %v2112 = vpack.c.b16 %v1856, %v1848
    %v2113 = vpack.c.b16 %v1857, %v1849
    %v2114 = vpack.c.b16 %v1858, %v1850
    %v2115 = vpack.c.b16 %v1859, %v1851
    %v2116 = vpack.c.b16 %v1860, %v1852
    %v2117 = vpack.c.b16 %v1861, %v1853
    %2374 = vmatprep.subr.bf16.mxu0 %v1919
    %2375 = vmatpush1.bf16.msra.mxu0 %v1918
    %2376 = vmatprep.subr.bf16.mxu0 %v1911
    %2377 = vmatpush1.bf16.msra.mxu0 %v1910
    %2378 = vmatprep.subr.bf16.mxu0 %v1903
    %2379 = vmatpush1.bf16.msra.mxu0 %v1902
    %2380 = vmatprep.subr.bf16.mxu0 %v1895
    %2381 = vmatpush1.bf16.msra.mxu0 %v1894
    %2382 = vmatprep.subr.bf16.mxu0 %v1887
    %2383 = vmatpush1.bf16.msra.mxu0 %v1886
    %2384 = vmatprep.subr.bf16.mxu0 %v1879
    %2385 = vmatpush1.bf16.msra.mxu0 %v1878
    %2386 = vmatprep.subr.bf16.mxu0 %v1871
    %2387 = vmatpush1.bf16.msra.mxu0 %v1870
    %2388 = vmatprep.subr.bf16.mxu0 %v1863
    %2389 = vmatpush1.bf16.msra.mxu0 %v1862
    %2390 = vmatprep.subr.bf16.mxu0 %v1983
    %2391 = vmatpush2.bf16.msra.mxu0 %v1982
    %2392 = vmatprep.subr.bf16.mxu0 %v1975
    %2393 = vmatpush2.bf16.msra.mxu0 %v1974
    %2394 = vmatprep.subr.bf16.mxu0 %v1967
    %2395 = vmatpush2.bf16.msra.mxu0 %v1966
    %2396 = vmatprep.subr.bf16.mxu0 %v1959
    %2397 = vmatpush2.bf16.msra.mxu0 %v1958
    %2398 = vmatprep.subr.bf16.mxu0 %v1951
    %2399 = vmatpush2.bf16.msra.mxu0 %v1950
    %2400 = vmatprep.subr.bf16.mxu0 %v1943
    %2401 = vmatpush2.bf16.msra.mxu0 %v1942
    %2402 = vmatprep.subr.bf16.mxu0 %v1935
    %2403 = vmatpush2.bf16.msra.mxu0 %v1934
    %2404 = vmatprep.subr.bf16.mxu0 %v1927
    %2405 = vmatpush2.bf16.msra.mxu0 %v1926
    %2406 = vmatprep.mubr.bf16.mxu0 %v793
    %2407 = vmatmul.mubr.bf16.gmra.mxu0 %v792
    %v2408 = vpop.f32.mrf.mxu0
    %v2409 = vadd.f32 %v1057, %v2408
    %v2410 = vpop.f32.mrf.mxu0
    %v2411 = vadd.f32 %v1061, %v2410
    %v2412 = vpop.f32.mrf.mxu0
    %v2413 = vpop.f32.mrf.mxu0
    %2414 = vdwg.mxu0
    %2415 = vmatprep.subr.bf16.mxu0 %v2047
    %2416 = vmatpush1.bf16.msra.mxu0 %v2046
    %2417 = vmatprep.subr.bf16.mxu0 %v2039
    %2418 = vmatpush1.bf16.msra.mxu0 %v2038
    %2419 = vmatprep.subr.bf16.mxu0 %v2031
    %2420 = vmatpush1.bf16.msra.mxu0 %v2030
    %2421 = vmatprep.subr.bf16.mxu0 %v2023
    %2422 = vmatpush1.bf16.msra.mxu0 %v2022
    %2423 = vmatprep.subr.bf16.mxu0 %v2015
    %2424 = vmatpush1.bf16.msra.mxu0 %v2014
    %2425 = vmatprep.subr.bf16.mxu0 %v2007
    %2426 = vmatpush1.bf16.msra.mxu0 %v2006
    %2427 = vmatprep.subr.bf16.mxu0 %v1999
    %2428 = vmatpush1.bf16.msra.mxu0 %v1998
    %2429 = vmatprep.subr.bf16.mxu0 %v1991
    %2430 = vmatpush1.bf16.msra.mxu0 %v1990
    %2431 = vmatprep.subr.bf16.mxu0 %v2111
    %2432 = vmatpush2.bf16.msra.mxu0 %v2110
    %2433 = vmatprep.subr.bf16.mxu0 %v2103
    %2434 = vmatpush2.bf16.msra.mxu0 %v2102
    %2435 = vmatprep.subr.bf16.mxu0 %v2095
    %2436 = vmatpush2.bf16.msra.mxu0 %v2094
    %2437 = vmatprep.subr.bf16.mxu0 %v2087
    %2438 = vmatpush2.bf16.msra.mxu0 %v2086
    %2439 = vmatprep.subr.bf16.mxu0 %v2079
    %2440 = vmatpush2.bf16.msra.mxu0 %v2078
    %2441 = vmatprep.subr.bf16.mxu0 %v2071
    %2442 = vmatpush2.bf16.msra.mxu0 %v2070
    %2443 = vmatprep.subr.bf16.mxu0 %v2063
    %2444 = vmatpush2.bf16.msra.mxu0 %v2062
    %2445 = vmatprep.subr.bf16.mxu0 %v2055
    %2446 = vmatpush2.bf16.msra.mxu0 %v2054
    %2447 = vmatprep.mubr.bf16.mxu0 %v795
    %2448 = vmatmul.mubr.bf16.gmra.mxu0 %v794
    %v2449 = vpop.f32.mrf.mxu0
    %v2450 = vadd.f32 %v2409, %v2449
    %v2451 = vpop.f32.mrf.mxu0
    %v2452 = vadd.f32 %v2411, %v2451
    %v2453 = vpop.f32.mrf.mxu0
    %v2454 = vpop.f32.mrf.mxu0
    %2455 = vdwg.mxu0
    %2456 = vmatprep.subr.bf16.mxu0 %v1921
    %2457 = vmatpush1.bf16.msra.mxu0 %v1920
    %2458 = vmatprep.subr.bf16.mxu0 %v1913
    %2459 = vmatpush1.bf16.msra.mxu0 %v1912
    %2460 = vmatprep.subr.bf16.mxu0 %v1905
    %2461 = vmatpush1.bf16.msra.mxu0 %v1904
    %2462 = vmatprep.subr.bf16.mxu0 %v1897
    %2463 = vmatpush1.bf16.msra.mxu0 %v1896
    %2464 = vmatprep.subr.bf16.mxu0 %v1889
    %2465 = vmatpush1.bf16.msra.mxu0 %v1888
    %2466 = vmatprep.subr.bf16.mxu0 %v1881
    %2467 = vmatpush1.bf16.msra.mxu0 %v1880
    %2468 = vmatprep.subr.bf16.mxu0 %v1873
    %2469 = vmatpush1.bf16.msra.mxu0 %v1872
    %2470 = vmatprep.subr.bf16.mxu0 %v1865
    %2471 = vmatpush1.bf16.msra.mxu0 %v1864
    %2472 = vmatprep.subr.bf16.mxu0 %v1985
    %2473 = vmatpush2.bf16.msra.mxu0 %v1984
    %2474 = vmatprep.subr.bf16.mxu0 %v1977
    %2475 = vmatpush2.bf16.msra.mxu0 %v1976
    %2476 = vmatprep.subr.bf16.mxu0 %v1969
    %2477 = vmatpush2.bf16.msra.mxu0 %v1968
    %2478 = vmatprep.subr.bf16.mxu0 %v1961
    %2479 = vmatpush2.bf16.msra.mxu0 %v1960
    %2480 = vmatprep.subr.bf16.mxu0 %v1953
    %2481 = vmatpush2.bf16.msra.mxu0 %v1952
    %2482 = vmatprep.subr.bf16.mxu0 %v1945
    %2483 = vmatpush2.bf16.msra.mxu0 %v1944
    %2484 = vmatprep.subr.bf16.mxu0 %v1937
    %2485 = vmatpush2.bf16.msra.mxu0 %v1936
    %2486 = vmatprep.subr.bf16.mxu0 %v1929
    %2487 = vmatpush2.bf16.msra.mxu0 %v1928
    %2488 = vmatprep.mubr.bf16.mxu0 %v793
    %2489 = vmatmul.mubr.bf16.gmra.mxu0 %v792
    %v2490 = vpop.f32.mrf.mxu0
    %v2491 = vadd.f32 %v1065, %v2490
    %v2492 = vpop.f32.mrf.mxu0
    %v2493 = vadd.f32 %v1069, %v2492
    %v2494 = vpop.f32.mrf.mxu0
    %v2495 = vpop.f32.mrf.mxu0
    %2496 = vdwg.mxu0
    %2497 = vmatprep.subr.bf16.mxu0 %v2049
    %2498 = vmatpush1.bf16.msra.mxu0 %v2048
    %2499 = vmatprep.subr.bf16.mxu0 %v2041
    %2500 = vmatpush1.bf16.msra.mxu0 %v2040
    %2501 = vmatprep.subr.bf16.mxu0 %v2033
    %2502 = vmatpush1.bf16.msra.mxu0 %v2032
    %2503 = vmatprep.subr.bf16.mxu0 %v2025
    %2504 = vmatpush1.bf16.msra.mxu0 %v2024
    %2505 = vmatprep.subr.bf16.mxu0 %v2017
    %2506 = vmatpush1.bf16.msra.mxu0 %v2016
    %2507 = vmatprep.subr.bf16.mxu0 %v2009
    %2508 = vmatpush1.bf16.msra.mxu0 %v2008
    %2509 = vmatprep.subr.bf16.mxu0 %v2001
    %2510 = vmatpush1.bf16.msra.mxu0 %v2000
    %2511 = vmatprep.subr.bf16.mxu0 %v1993
    %2512 = vmatpush1.bf16.msra.mxu0 %v1992
    %2513 = vmatprep.subr.bf16.mxu0 %v2113
    %2514 = vmatpush2.bf16.msra.mxu0 %v2112
    %2515 = vmatprep.subr.bf16.mxu0 %v2105
    %2516 = vmatpush2.bf16.msra.mxu0 %v2104
    %2517 = vmatprep.subr.bf16.mxu0 %v2097
    %2518 = vmatpush2.bf16.msra.mxu0 %v2096
    %2519 = vmatprep.subr.bf16.mxu0 %v2089
    %2520 = vmatpush2.bf16.msra.mxu0 %v2088
    %2521 = vmatprep.subr.bf16.mxu0 %v2081
    %2522 = vmatpush2.bf16.msra.mxu0 %v2080
    %2523 = vmatprep.subr.bf16.mxu0 %v2073
    %2524 = vmatpush2.bf16.msra.mxu0 %v2072
    %2525 = vmatprep.subr.bf16.mxu0 %v2065
    %2526 = vmatpush2.bf16.msra.mxu0 %v2064
    %2527 = vmatprep.subr.bf16.mxu0 %v2057
    %2528 = vmatpush2.bf16.msra.mxu0 %v2056
    %2529 = vmatprep.mubr.bf16.mxu0 %v795
    %2530 = vmatmul.mubr.bf16.gmra.mxu0 %v794
    %v2531 = vpop.f32.mrf.mxu0
    %v2532 = vadd.f32 %v2491, %v2531
    %v2533 = vpop.f32.mrf.mxu0
    %v2534 = vadd.f32 %v2493, %v2533
    %v2535 = vpop.f32.mrf.mxu0
    %v2536 = vpop.f32.mrf.mxu0
    %2537 = vdwg.mxu0
    %2538 = vmatprep.subr.bf16.mxu0 %v1923
    %2539 = vmatpush1.bf16.msra.mxu0 %v1922
    %2540 = vmatprep.subr.bf16.mxu0 %v1915
    %2541 = vmatpush1.bf16.msra.mxu0 %v1914
    %2542 = vmatprep.subr.bf16.mxu0 %v1907
    %2543 = vmatpush1.bf16.msra.mxu0 %v1906
    %2544 = vmatprep.subr.bf16.mxu0 %v1899
    %2545 = vmatpush1.bf16.msra.mxu0 %v1898
    %2546 = vmatprep.subr.bf16.mxu0 %v1891
    %2547 = vmatpush1.bf16.msra.mxu0 %v1890
    %2548 = vmatprep.subr.bf16.mxu0 %v1883
    %2549 = vmatpush1.bf16.msra.mxu0 %v1882
    %2550 = vmatprep.subr.bf16.mxu0 %v1875
    %2551 = vmatpush1.bf16.msra.mxu0 %v1874
    %2552 = vmatprep.subr.bf16.mxu0 %v1867
    %2553 = vmatpush1.bf16.msra.mxu0 %v1866
    %2554 = vmatprep.subr.bf16.mxu0 %v1987
    %2555 = vmatpush2.bf16.msra.mxu0 %v1986
    %2556 = vmatprep.subr.bf16.mxu0 %v1979
    %2557 = vmatpush2.bf16.msra.mxu0 %v1978
    %2558 = vmatprep.subr.bf16.mxu0 %v1971
    %2559 = vmatpush2.bf16.msra.mxu0 %v1970
    %2560 = vmatprep.subr.bf16.mxu0 %v1963
    %2561 = vmatpush2.bf16.msra.mxu0 %v1962
    %2562 = vmatprep.subr.bf16.mxu0 %v1955
    %2563 = vmatpush2.bf16.msra.mxu0 %v1954
    %2564 = vmatprep.subr.bf16.mxu0 %v1947
    %2565 = vmatpush2.bf16.msra.mxu0 %v1946
    %2566 = vmatprep.subr.bf16.mxu0 %v1939
    %2567 = vmatpush2.bf16.msra.mxu0 %v1938
    %2568 = vmatprep.subr.bf16.mxu0 %v1931
    %2569 = vmatpush2.bf16.msra.mxu0 %v1930
    %2570 = vmatprep.mubr.bf16.mxu0 %v793
    %2571 = vmatmul.mubr.bf16.gmra.mxu0 %v792
    %v2572 = vpop.f32.mrf.mxu0
    %v2573 = vadd.f32 %v1073, %v2572
    %v2574 = vpop.f32.mrf.mxu0
    %v2575 = vadd.f32 %v1077, %v2574
    %v2576 = vpop.f32.mrf.mxu0
    %v2577 = vpop.f32.mrf.mxu0
    %2578 = vdwg.mxu0
    %2579 = vmatprep.subr.bf16.mxu0 %v2051
    %2580 = vmatpush1.bf16.msra.mxu0 %v2050
    %2581 = vmatprep.subr.bf16.mxu0 %v2043
    %2582 = vmatpush1.bf16.msra.mxu0 %v2042
    %2583 = vmatprep.subr.bf16.mxu0 %v2035
    %2584 = vmatpush1.bf16.msra.mxu0 %v2034
    %2585 = vmatprep.subr.bf16.mxu0 %v2027
    %2586 = vmatpush1.bf16.msra.mxu0 %v2026
    %2587 = vmatprep.subr.bf16.mxu0 %v2019
    %2588 = vmatpush1.bf16.msra.mxu0 %v2018
    %2589 = vmatprep.subr.bf16.mxu0 %v2011
    %2590 = vmatpush1.bf16.msra.mxu0 %v2010
    %2591 = vmatprep.subr.bf16.mxu0 %v2003
    %2592 = vmatpush1.bf16.msra.mxu0 %v2002
    %2593 = vmatprep.subr.bf16.mxu0 %v1995
    %2594 = vmatpush1.bf16.msra.mxu0 %v1994
    %2595 = vmatprep.subr.bf16.mxu0 %v2115
    %2596 = vmatpush2.bf16.msra.mxu0 %v2114
    %2597 = vmatprep.subr.bf16.mxu0 %v2107
    %2598 = vmatpush2.bf16.msra.mxu0 %v2106
    %2599 = vmatprep.subr.bf16.mxu0 %v2099
    %2600 = vmatpush2.bf16.msra.mxu0 %v2098
    %2601 = vmatprep.subr.bf16.mxu0 %v2091
    %2602 = vmatpush2.bf16.msra.mxu0 %v2090
    %2603 = vmatprep.subr.bf16.mxu0 %v2083
    %2604 = vmatpush2.bf16.msra.mxu0 %v2082
    %2605 = vmatprep.subr.bf16.mxu0 %v2075
    %2606 = vmatpush2.bf16.msra.mxu0 %v2074
    %2607 = vmatprep.subr.bf16.mxu0 %v2067
    %2608 = vmatpush2.bf16.msra.mxu0 %v2066
    %2609 = vmatprep.subr.bf16.mxu0 %v2059
    %2610 = vmatpush2.bf16.msra.mxu0 %v2058
    %2611 = vmatprep.mubr.bf16.mxu0 %v795
    %2612 = vmatmul.mubr.bf16.gmra.mxu0 %v794
    %v2613 = vpop.f32.mrf.mxu0
    %v2614 = vadd.f32 %v2573, %v2613
    %v2615 = vpop.f32.mrf.mxu0
    %v2616 = vadd.f32 %v2575, %v2615
    %v2617 = vpop.f32.mrf.mxu0
    %v2618 = vpop.f32.mrf.mxu0
    %2619 = vdwg.mxu0
    %2620 = vmatprep.subr.bf16.mxu0 %v1925
    %2621 = vmatpush1.bf16.msra.mxu0 %v1924
    %2622 = vmatprep.subr.bf16.mxu0 %v1917
    %2623 = vmatpush1.bf16.msra.mxu0 %v1916
    %2624 = vmatprep.subr.bf16.mxu0 %v1909
    %2625 = vmatpush1.bf16.msra.mxu0 %v1908
    %2626 = vmatprep.subr.bf16.mxu0 %v1901
    %2627 = vmatpush1.bf16.msra.mxu0 %v1900
    %2628 = vmatprep.subr.bf16.mxu0 %v1893
    %2629 = vmatpush1.bf16.msra.mxu0 %v1892
    %2630 = vmatprep.subr.bf16.mxu0 %v1885
    %2631 = vmatpush1.bf16.msra.mxu0 %v1884
    %2632 = vmatprep.subr.bf16.mxu0 %v1877
    %2633 = vmatpush1.bf16.msra.mxu0 %v1876
    %2634 = vmatprep.subr.bf16.mxu0 %v1869
    %2635 = vmatpush1.bf16.msra.mxu0 %v1868
    %2636 = vmatprep.subr.bf16.mxu0 %v1989
    %2637 = vmatpush2.bf16.msra.mxu0 %v1988
    %2638 = vmatprep.subr.bf16.mxu0 %v1981
    %2639 = vmatpush2.bf16.msra.mxu0 %v1980
    %2640 = vmatprep.subr.bf16.mxu0 %v1973
    %2641 = vmatpush2.bf16.msra.mxu0 %v1972
    %2642 = vmatprep.subr.bf16.mxu0 %v1965
    %2643 = vmatpush2.bf16.msra.mxu0 %v1964
    %2644 = vmatprep.subr.bf16.mxu0 %v1957
    %2645 = vmatpush2.bf16.msra.mxu0 %v1956
    %2646 = vmatprep.subr.bf16.mxu0 %v1949
    %2647 = vmatpush2.bf16.msra.mxu0 %v1948
    %2648 = vmatprep.subr.bf16.mxu0 %v1941
    %2649 = vmatpush2.bf16.msra.mxu0 %v1940
    %2650 = vmatprep.subr.bf16.mxu0 %v1933
    %2651 = vmatpush2.bf16.msra.mxu0 %v1932
    %2652 = vmatprep.mubr.bf16.mxu0 %v793
    %2653 = vmatmul.mubr.bf16.gmra.mxu0 %v792
    %v2654 = vpop.f32.mrf.mxu0
    %v2655 = vadd.f32 %v1081, %v2654
    %v2656 = vpop.f32.mrf.mxu0
    %v2657 = vadd.f32 %v1085, %v2656
    %v2658 = vpop.f32.mrf.mxu0
    %v2659 = vpop.f32.mrf.mxu0
    %2660 = vdwg.mxu0
    %2661 = vmatprep.subr.bf16.mxu0 %v2053
    %2662 = vmatpush1.bf16.msra.mxu0 %v2052
    %2663 = vmatprep.subr.bf16.mxu0 %v2045
    %2664 = vmatpush1.bf16.msra.mxu0 %v2044
    %2665 = vmatprep.subr.bf16.mxu0 %v2037
    %2666 = vmatpush1.bf16.msra.mxu0 %v2036
    %2667 = vmatprep.subr.bf16.mxu0 %v2029
    %2668 = vmatpush1.bf16.msra.mxu0 %v2028
    %2669 = vmatprep.subr.bf16.mxu0 %v2021
    %2670 = vmatpush1.bf16.msra.mxu0 %v2020
    %2671 = vmatprep.subr.bf16.mxu0 %v2013
    %2672 = vmatpush1.bf16.msra.mxu0 %v2012
    %2673 = vmatprep.subr.bf16.mxu0 %v2005
    %2674 = vmatpush1.bf16.msra.mxu0 %v2004
    %2675 = vmatprep.subr.bf16.mxu0 %v1997
    %2676 = vmatpush1.bf16.msra.mxu0 %v1996
    %2677 = vmatprep.subr.bf16.mxu0 %v2117
    %2678 = vmatpush2.bf16.msra.mxu0 %v2116
    %2679 = vmatprep.subr.bf16.mxu0 %v2109
    %2680 = vmatpush2.bf16.msra.mxu0 %v2108
    %2681 = vmatprep.subr.bf16.mxu0 %v2101
    %2682 = vmatpush2.bf16.msra.mxu0 %v2100
    %2683 = vmatprep.subr.bf16.mxu0 %v2093
    %2684 = vmatpush2.bf16.msra.mxu0 %v2092
    %2685 = vmatprep.subr.bf16.mxu0 %v2085
    %2686 = vmatpush2.bf16.msra.mxu0 %v2084
    %2687 = vmatprep.subr.bf16.mxu0 %v2077
    %2688 = vmatpush2.bf16.msra.mxu0 %v2076
    %2689 = vmatprep.subr.bf16.mxu0 %v2069
    %2690 = vmatpush2.bf16.msra.mxu0 %v2068
    %2691 = vmatprep.subr.bf16.mxu0 %v2061
    %2692 = vmatpush2.bf16.msra.mxu0 %v2060
    %2693 = vmatprep.mubr.bf16.mxu0 %v795
    %2694 = vmatmul.mubr.bf16.gmra.mxu0 %v794
    %v2695 = vpop.f32.mrf.mxu0
    %v2696 = vadd.f32 %v2655, %v2695
    %v2697 = vpop.f32.mrf.mxu0
    %v2698 = vadd.f32 %v2657, %v2697
    %v2699 = vpop.f32.mrf.mxu0
    %v2700 = vpop.f32.mrf.mxu0
    %2701 = vdwg.mxu0
    %v2702 = vmax.f32 %v2450, 0.0
    %v2703 = vmax.f32 %v2452, 0.0
    %v2704 = vmax.f32 %v2532, 0.0
    %v2705 = vmax.f32 %v2534, 0.0
    %v2706 = vmax.f32 %v2614, 0.0
    %v2707 = vmax.f32 %v2616, 0.0
    %v2708 = vmax.f32 %v2696, 0.0
    %v2709 = vmax.f32 %v2698, 0.0
    %v2710 = vpack.c.bf16 %v2702, %v2702
    %v2711 = vpack.c.bf16 %v2703, %v2703
    %v2712 = vpack.c.bf16 %v2704, %v2704
    %v2713 = vpack.c.bf16 %v2705, %v2705
    %v2714 = vpack.c.bf16 %v2706, %v2706
    %v2715 = vpack.c.bf16 %v2707, %v2707
    %v2716 = vpack.c.bf16 %v2708, %v2708
    %v2717 = vpack.c.bf16 %v2709, %v2709
    %v2718 = vld [vmem:[#allocation14] sm:$0xff]
    %v2719 = vld [vmem:[#allocation14 + $0x8] sm:$0xff]
    %v2720 = vld [vmem:[#allocation14 + $0x10] sm:$0xff]
    %v2721 = vld [vmem:[#allocation14 + $0x18] sm:$0xff]
    %v2722 = vld [vmem:[#allocation14 + $0x20] sm:$0xff]
    %v2723 = vld [vmem:[#allocation14 + $0x28] sm:$0xff]
    %v2724 = vld [vmem:[#allocation14 + $0x30] sm:$0xff]
    %v2725 = vld [vmem:[#allocation14 + $0x38] sm:$0xff]
    %v2726 = vld [vmem:[#allocation14 + $0x40] sm:$0xff]
    %v2727 = vld [vmem:[#allocation14 + $0x48] sm:$0xff]
    %v2728 = vld [vmem:[#allocation14 + $0x50] sm:$0xff]
    %v2729 = vld [vmem:[#allocation14 + $0x58] sm:$0xff]
    %v2730 = vld [vmem:[#allocation14 + $0x60] sm:$0xff]
    %v2731 = vld [vmem:[#allocation14 + $0x68] sm:$0xff]
    %v2732 = vld [vmem:[#allocation14 + $0x70] sm:$0xff]
    %v2733 = vld [vmem:[#allocation14 + $0x78] sm:$0xff]
    %v2734 = vld [vmem:[#allocation14 + $0x80] sm:$0xff]
    %v2735 = vld [vmem:[#allocation14 + $0x88] sm:$0xff]
    %v2736 = vld [vmem:[#allocation14 + $0x90] sm:$0xff]
    %v2737 = vld [vmem:[#allocation14 + $0x98] sm:$0xff]
    %v2738 = vld [vmem:[#allocation14 + $0xa0] sm:$0xff]
    %v2739 = vld [vmem:[#allocation14 + $0xa8] sm:$0xff]
    %v2740 = vld [vmem:[#allocation14 + $0xb0] sm:$0xff]
    %v2741 = vld [vmem:[#allocation14 + $0xb8] sm:$0xff]
    %v2742 = vld [vmem:[#allocation14 + $0xc0] sm:$0xff]
    %v2743 = vld [vmem:[#allocation14 + $0xc8] sm:$0xff]
    %v2744 = vld [vmem:[#allocation14 + $0xd0] sm:$0xff]
    %v2745 = vld [vmem:[#allocation14 + $0xd8] sm:$0xff]
    %v2746 = vld [vmem:[#allocation14 + $0xe0] sm:$0xff]
    %v2747 = vld [vmem:[#allocation14 + $0xe8] sm:$0xff]
    %v2748 = vld [vmem:[#allocation14 + $0xf0] sm:$0xff]
    %v2749 = vld [vmem:[#allocation14 + $0xf8] sm:$0xff]
    %v2750 = vld [vmem:[#allocation14 + $0x100] sm:$0xff]
    %v2751 = vld [vmem:[#allocation14 + $0x108] sm:$0xff]
    %v2752 = vld [vmem:[#allocation14 + $0x110] sm:$0xff]
    %v2753 = vld [vmem:[#allocation14 + $0x118] sm:$0xff]
    %v2754 = vld [vmem:[#allocation14 + $0x120] sm:$0xff]
    %v2755 = vld [vmem:[#allocation14 + $0x128] sm:$0xff]
    %v2756 = vld [vmem:[#allocation14 + $0x130] sm:$0xff]
    %v2757 = vld [vmem:[#allocation14 + $0x138] sm:$0xff]
    %v2758 = vld [vmem:[#allocation14 + $0x140] sm:$0xff]
    %v2759 = vld [vmem:[#allocation14 + $0x148] sm:$0xff]
    %v2760 = vld [vmem:[#allocation14 + $0x150] sm:$0xff]
    %v2761 = vld [vmem:[#allocation14 + $0x158] sm:$0xff]
    %v2762 = vld [vmem:[#allocation14 + $0x160] sm:$0xff]
    %v2763 = vld [vmem:[#allocation14 + $0x168] sm:$0xff]
    %v2764 = vld [vmem:[#allocation14 + $0x170] sm:$0xff]
    %v2765 = vld [vmem:[#allocation14 + $0x178] sm:$0xff]
    %v2766 = vld [vmem:[#allocation14 + $0x180] sm:$0xff]
    %v2767 = vld [vmem:[#allocation14 + $0x188] sm:$0xff]
    %v2768 = vld [vmem:[#allocation14 + $0x190] sm:$0xff]
    %v2769 = vld [vmem:[#allocation14 + $0x198] sm:$0xff]
    %v2770 = vld [vmem:[#allocation14 + $0x1a0] sm:$0xff]
    %v2771 = vld [vmem:[#allocation14 + $0x1a8] sm:$0xff]
    %v2772 = vld [vmem:[#allocation14 + $0x1b0] sm:$0xff]
    %v2773 = vld [vmem:[#allocation14 + $0x1b8] sm:$0xff]
    %v2774 = vld [vmem:[#allocation14 + $0x1c0] sm:$0xff]
    %v2775 = vld [vmem:[#allocation14 + $0x1c8] sm:$0xff]
    %v2776 = vld [vmem:[#allocation14 + $0x1d0] sm:$0xff]
    %v2777 = vld [vmem:[#allocation14 + $0x1d8] sm:$0xff]
    %v2778 = vld [vmem:[#allocation14 + $0x1e0] sm:$0xff]
    %v2779 = vld [vmem:[#allocation14 + $0x1e8] sm:$0xff]
    %v2780 = vld [vmem:[#allocation14 + $0x1f0] sm:$0xff]
    %v2781 = vld [vmem:[#allocation14 + $0x1f8] sm:$0xff]
    %v2782 = vld [vmem:[#allocation14 + $0x200] sm:$0xff]
    %v2783 = vld [vmem:[#allocation14 + $0x208] sm:$0xff]
    %v2784 = vld [vmem:[#allocation14 + $0x210] sm:$0xff]
    %v2785 = vld [vmem:[#allocation14 + $0x218] sm:$0xff]
    %v2786 = vld [vmem:[#allocation14 + $0x220] sm:$0xff]
    %v2787 = vld [vmem:[#allocation14 + $0x228] sm:$0xff]
    %v2788 = vld [vmem:[#allocation14 + $0x230] sm:$0xff]
    %v2789 = vld [vmem:[#allocation14 + $0x238] sm:$0xff]
    %v2790 = vld [vmem:[#allocation14 + $0x240] sm:$0xff]
    %v2791 = vld [vmem:[#allocation14 + $0x248] sm:$0xff]
    %v2792 = vld [vmem:[#allocation14 + $0x250] sm:$0xff]
    %v2793 = vld [vmem:[#allocation14 + $0x258] sm:$0xff]
    %v2794 = vld [vmem:[#allocation14 + $0x260] sm:$0xff]
    %v2795 = vld [vmem:[#allocation14 + $0x268] sm:$0xff]
    %v2796 = vld [vmem:[#allocation14 + $0x270] sm:$0xff]
    %v2797 = vld [vmem:[#allocation14 + $0x278] sm:$0xff]
    %v2798 = vld [vmem:[#allocation14 + $0x280] sm:$0xff]
    %v2799 = vld [vmem:[#allocation14 + $0x288] sm:$0xff]
    %v2800 = vld [vmem:[#allocation14 + $0x290] sm:$0xff]
    %v2801 = vld [vmem:[#allocation14 + $0x298] sm:$0xff]
    %v2802 = vld [vmem:[#allocation14 + $0x2a0] sm:$0xff]
    %v2803 = vld [vmem:[#allocation14 + $0x2a8] sm:$0xff]
    %v2804 = vld [vmem:[#allocation14 + $0x2b0] sm:$0xff]
    %v2805 = vld [vmem:[#allocation14 + $0x2b8] sm:$0xff]
    %v2806 = vld [vmem:[#allocation14 + $0x2c0] sm:$0xff]
    %v2807 = vld [vmem:[#allocation14 + $0x2c8] sm:$0xff]
    %v2808 = vld [vmem:[#allocation14 + $0x2d0] sm:$0xff]
    %v2809 = vld [vmem:[#allocation14 + $0x2d8] sm:$0xff]
    %v2810 = vld [vmem:[#allocation14 + $0x2e0] sm:$0xff]
    %v2811 = vld [vmem:[#allocation14 + $0x2e8] sm:$0xff]
    %v2812 = vld [vmem:[#allocation14 + $0x2f0] sm:$0xff]
    %v2813 = vld [vmem:[#allocation14 + $0x2f8] sm:$0xff]
    %v2814 = vld [vmem:[#allocation14 + $0x300] sm:$0xff]
    %v2815 = vld [vmem:[#allocation14 + $0x308] sm:$0xff]
    %v2816 = vld [vmem:[#allocation14 + $0x310] sm:$0xff]
    %v2817 = vld [vmem:[#allocation14 + $0x318] sm:$0xff]
    %v2818 = vld [vmem:[#allocation14 + $0x320] sm:$0xff]
    %v2819 = vld [vmem:[#allocation14 + $0x328] sm:$0xff]
    %v2820 = vld [vmem:[#allocation14 + $0x330] sm:$0xff]
    %v2821 = vld [vmem:[#allocation14 + $0x338] sm:$0xff]
    %v2822 = vld [vmem:[#allocation14 + $0x340] sm:$0xff]
    %v2823 = vld [vmem:[#allocation14 + $0x348] sm:$0xff]
    %v2824 = vld [vmem:[#allocation14 + $0x350] sm:$0xff]
    %v2825 = vld [vmem:[#allocation14 + $0x358] sm:$0xff]
    %v2826 = vld [vmem:[#allocation14 + $0x360] sm:$0xff]
    %v2827 = vld [vmem:[#allocation14 + $0x368] sm:$0xff]
    %v2828 = vld [vmem:[#allocation14 + $0x370] sm:$0xff]
    %v2829 = vld [vmem:[#allocation14 + $0x378] sm:$0xff]
    %v2830 = vld [vmem:[#allocation14 + $0x380] sm:$0xff]
    %v2831 = vld [vmem:[#allocation14 + $0x388] sm:$0xff]
    %v2832 = vld [vmem:[#allocation14 + $0x390] sm:$0xff]
    %v2833 = vld [vmem:[#allocation14 + $0x398] sm:$0xff]
    %v2834 = vld [vmem:[#allocation14 + $0x3a0] sm:$0xff]
    %v2835 = vld [vmem:[#allocation14 + $0x3a8] sm:$0xff]
    %v2836 = vld [vmem:[#allocation14 + $0x3b0] sm:$0xff]
    %v2837 = vld [vmem:[#allocation14 + $0x3b8] sm:$0xff]
    %v2838 = vld [vmem:[#allocation14 + $0x3c0] sm:$0xff]
    %v2839 = vld [vmem:[#allocation14 + $0x3c8] sm:$0xff]
    %v2840 = vld [vmem:[#allocation14 + $0x3d0] sm:$0xff]
    %v2841 = vld [vmem:[#allocation14 + $0x3d8] sm:$0xff]
    %v2842 = vld [vmem:[#allocation14 + $0x3e0] sm:$0xff]
    %v2843 = vld [vmem:[#allocation14 + $0x3e8] sm:$0xff]
    %v2844 = vld [vmem:[#allocation14 + $0x3f0] sm:$0xff]
    %v2845 = vld [vmem:[#allocation14 + $0x3f8] sm:$0xff]
    %v2846 = vld [vmem:[#allocation14 + $0x400] sm:$0xff]
    %v2847 = vld [vmem:[#allocation14 + $0x408] sm:$0xff]
    %v2848 = vld [vmem:[#allocation14 + $0x410] sm:$0xff]
    %v2849 = vld [vmem:[#allocation14 + $0x418] sm:$0xff]
    %v2850 = vld [vmem:[#allocation14 + $0x420] sm:$0xff]
    %v2851 = vld [vmem:[#allocation14 + $0x428] sm:$0xff]
    %v2852 = vld [vmem:[#allocation14 + $0x430] sm:$0xff]
    %v2853 = vld [vmem:[#allocation14 + $0x438] sm:$0xff]
    %v2854 = vld [vmem:[#allocation14 + $0x440] sm:$0xff]
    %v2855 = vld [vmem:[#allocation14 + $0x448] sm:$0xff]
    %v2856 = vld [vmem:[#allocation14 + $0x450] sm:$0xff]
    %v2857 = vld [vmem:[#allocation14 + $0x458] sm:$0xff]
    %v2858 = vld [vmem:[#allocation14 + $0x460] sm:$0xff]
    %v2859 = vld [vmem:[#allocation14 + $0x468] sm:$0xff]
    %v2860 = vld [vmem:[#allocation14 + $0x470] sm:$0xff]
    %v2861 = vld [vmem:[#allocation14 + $0x478] sm:$0xff]
    %v2862 = vld [vmem:[#allocation14 + $0x480] sm:$0xff]
    %v2863 = vld [vmem:[#allocation14 + $0x488] sm:$0xff]
    %v2864 = vld [vmem:[#allocation14 + $0x490] sm:$0xff]
    %v2865 = vld [vmem:[#allocation14 + $0x498] sm:$0xff]
    %v2866 = vld [vmem:[#allocation14 + $0x4a0] sm:$0xff]
    %v2867 = vld [vmem:[#allocation14 + $0x4a8] sm:$0xff]
    %v2868 = vld [vmem:[#allocation14 + $0x4b0] sm:$0xff]
    %v2869 = vld [vmem:[#allocation14 + $0x4b8] sm:$0xff]
    %v2870 = vld [vmem:[#allocation14 + $0x4c0] sm:$0xff]
    %v2871 = vld [vmem:[#allocation14 + $0x4c8] sm:$0xff]
    %v2872 = vld [vmem:[#allocation14 + $0x4d0] sm:$0xff]
    %v2873 = vld [vmem:[#allocation14 + $0x4d8] sm:$0xff]
    %v2874 = vld [vmem:[#allocation14 + $0x4e0] sm:$0xff]
    %v2875 = vld [vmem:[#allocation14 + $0x4e8] sm:$0xff]
    %v2876 = vld [vmem:[#allocation14 + $0x4f0] sm:$0xff]
    %v2877 = vld [vmem:[#allocation14 + $0x4f8] sm:$0xff]
    %v2878 = vld [vmem:[#allocation14 + $0x500] sm:$0xff]
    %v2879 = vld [vmem:[#allocation14 + $0x508] sm:$0xff]
    %v2880 = vld [vmem:[#allocation14 + $0x510] sm:$0xff]
    %v2881 = vld [vmem:[#allocation14 + $0x518] sm:$0xff]
    %v2882 = vld [vmem:[#allocation14 + $0x520] sm:$0xff]
    %v2883 = vld [vmem:[#allocation14 + $0x528] sm:$0xff]
    %v2884 = vld [vmem:[#allocation14 + $0x530] sm:$0xff]
    %v2885 = vld [vmem:[#allocation14 + $0x538] sm:$0xff]
    %v2886 = vld [vmem:[#allocation14 + $0x540] sm:$0xff]
    %v2887 = vld [vmem:[#allocation14 + $0x548] sm:$0xff]
    %v2888 = vld [vmem:[#allocation14 + $0x550] sm:$0xff]
    %v2889 = vld [vmem:[#allocation14 + $0x558] sm:$0xff]
    %v2890 = vld [vmem:[#allocation14 + $0x560] sm:$0xff]
    %v2891 = vld [vmem:[#allocation14 + $0x568] sm:$0xff]
    %v2892 = vld [vmem:[#allocation14 + $0x570] sm:$0xff]
    %v2893 = vld [vmem:[#allocation14 + $0x578] sm:$0xff]
    %v2894 = vld [vmem:[#allocation14 + $0x580] sm:$0xff]
    %v2895 = vld [vmem:[#allocation14 + $0x588] sm:$0xff]
    %v2896 = vld [vmem:[#allocation14 + $0x590] sm:$0xff]
    %v2897 = vld [vmem:[#allocation14 + $0x598] sm:$0xff]
    %v2898 = vld [vmem:[#allocation14 + $0x5a0] sm:$0xff]
    %v2899 = vld [vmem:[#allocation14 + $0x5a8] sm:$0xff]
    %v2900 = vld [vmem:[#allocation14 + $0x5b0] sm:$0xff]
    %v2901 = vld [vmem:[#allocation14 + $0x5b8] sm:$0xff]
    %v2902 = vld [vmem:[#allocation14 + $0x5c0] sm:$0xff]
    %v2903 = vld [vmem:[#allocation14 + $0x5c8] sm:$0xff]
    %v2904 = vld [vmem:[#allocation14 + $0x5d0] sm:$0xff]
    %v2905 = vld [vmem:[#allocation14 + $0x5d8] sm:$0xff]
    %v2906 = vld [vmem:[#allocation14 + $0x5e0] sm:$0xff]
    %v2907 = vld [vmem:[#allocation14 + $0x5e8] sm:$0xff]
    %v2908 = vld [vmem:[#allocation14 + $0x5f0] sm:$0xff]
    %v2909 = vld [vmem:[#allocation14 + $0x5f8] sm:$0xff]
    %v2910 = vld [vmem:[#allocation14 + $0x600] sm:$0xff]
    %v2911 = vld [vmem:[#allocation14 + $0x608] sm:$0xff]
    %v2912 = vld [vmem:[#allocation14 + $0x610] sm:$0xff]
    %v2913 = vld [vmem:[#allocation14 + $0x618] sm:$0xff]
    %v2914 = vld [vmem:[#allocation14 + $0x620] sm:$0xff]
    %v2915 = vld [vmem:[#allocation14 + $0x628] sm:$0xff]
    %v2916 = vld [vmem:[#allocation14 + $0x630] sm:$0xff]
    %v2917 = vld [vmem:[#allocation14 + $0x638] sm:$0xff]
    %v2918 = vld [vmem:[#allocation14 + $0x640] sm:$0xff]
    %v2919 = vld [vmem:[#allocation14 + $0x648] sm:$0xff]
    %v2920 = vld [vmem:[#allocation14 + $0x650] sm:$0xff]
    %v2921 = vld [vmem:[#allocation14 + $0x658] sm:$0xff]
    %v2922 = vld [vmem:[#allocation14 + $0x660] sm:$0xff]
    %v2923 = vld [vmem:[#allocation14 + $0x668] sm:$0xff]
    %v2924 = vld [vmem:[#allocation14 + $0x670] sm:$0xff]
    %v2925 = vld [vmem:[#allocation14 + $0x678] sm:$0xff]
    %v2926 = vld [vmem:[#allocation14 + $0x680] sm:$0xff]
    %v2927 = vld [vmem:[#allocation14 + $0x688] sm:$0xff]
    %v2928 = vld [vmem:[#allocation14 + $0x690] sm:$0xff]
    %v2929 = vld [vmem:[#allocation14 + $0x698] sm:$0xff]
    %v2930 = vld [vmem:[#allocation14 + $0x6a0] sm:$0xff]
    %v2931 = vld [vmem:[#allocation14 + $0x6a8] sm:$0xff]
    %v2932 = vld [vmem:[#allocation14 + $0x6b0] sm:$0xff]
    %v2933 = vld [vmem:[#allocation14 + $0x6b8] sm:$0xff]
    %v2934 = vld [vmem:[#allocation14 + $0x6c0] sm:$0xff]
    %v2935 = vld [vmem:[#allocation14 + $0x6c8] sm:$0xff]
    %v2936 = vld [vmem:[#allocation14 + $0x6d0] sm:$0xff]
    %v2937 = vld [vmem:[#allocation14 + $0x6d8] sm:$0xff]
    %v2938 = vld [vmem:[#allocation14 + $0x6e0] sm:$0xff]
    %v2939 = vld [vmem:[#allocation14 + $0x6e8] sm:$0xff]
    %v2940 = vld [vmem:[#allocation14 + $0x6f0] sm:$0xff]
    %v2941 = vld [vmem:[#allocation14 + $0x6f8] sm:$0xff]
    %v2942 = vld [vmem:[#allocation14 + $0x700] sm:$0xff]
    %v2943 = vld [vmem:[#allocation14 + $0x708] sm:$0xff]
    %v2944 = vld [vmem:[#allocation14 + $0x710] sm:$0xff]
    %v2945 = vld [vmem:[#allocation14 + $0x718] sm:$0xff]
    %v2946 = vld [vmem:[#allocation14 + $0x720] sm:$0xff]
    %v2947 = vld [vmem:[#allocation14 + $0x728] sm:$0xff]
    %v2948 = vld [vmem:[#allocation14 + $0x730] sm:$0xff]
    %v2949 = vld [vmem:[#allocation14 + $0x738] sm:$0xff]
    %v2950 = vld [vmem:[#allocation14 + $0x740] sm:$0xff]
    %v2951 = vld [vmem:[#allocation14 + $0x748] sm:$0xff]
    %v2952 = vld [vmem:[#allocation14 + $0x750] sm:$0xff]
    %v2953 = vld [vmem:[#allocation14 + $0x758] sm:$0xff]
    %v2954 = vld [vmem:[#allocation14 + $0x760] sm:$0xff]
    %v2955 = vld [vmem:[#allocation14 + $0x768] sm:$0xff]
    %v2956 = vld [vmem:[#allocation14 + $0x770] sm:$0xff]
    %v2957 = vld [vmem:[#allocation14 + $0x778] sm:$0xff]
    %v2958 = vld [vmem:[#allocation14 + $0x780] sm:$0xff]
    %v2959 = vld [vmem:[#allocation14 + $0x788] sm:$0xff]
    %v2960 = vld [vmem:[#allocation14 + $0x790] sm:$0xff]
    %v2961 = vld [vmem:[#allocation14 + $0x798] sm:$0xff]
    %v2962 = vld [vmem:[#allocation14 + $0x7a0] sm:$0xff]
    %v2963 = vld [vmem:[#allocation14 + $0x7a8] sm:$0xff]
    %v2964 = vld [vmem:[#allocation14 + $0x7b0] sm:$0xff]
    %v2965 = vld [vmem:[#allocation14 + $0x7b8] sm:$0xff]
    %v2966 = vld [vmem:[#allocation14 + $0x7c0] sm:$0xff]
    %v2967 = vld [vmem:[#allocation14 + $0x7c8] sm:$0xff]
    %v2968 = vld [vmem:[#allocation14 + $0x7d0] sm:$0xff]
    %v2969 = vld [vmem:[#allocation14 + $0x7d8] sm:$0xff]
    %v2970 = vld [vmem:[#allocation14 + $0x7e0] sm:$0xff]
    %v2971 = vld [vmem:[#allocation14 + $0x7e8] sm:$0xff]
    %v2972 = vld [vmem:[#allocation14 + $0x7f0] sm:$0xff]
    %v2973 = vld [vmem:[#allocation14 + $0x7f8] sm:$0xff]
    %v2974 = vld [vmem:[#allocation14 + $0x800] sm:$0xff]
    %v2975 = vld [vmem:[#allocation14 + $0x808] sm:$0xff]
    %v2976 = vld [vmem:[#allocation14 + $0x810] sm:$0xff]
    %v2977 = vld [vmem:[#allocation14 + $0x818] sm:$0xff]
    %v2978 = vld [vmem:[#allocation14 + $0x820] sm:$0xff]
    %v2979 = vld [vmem:[#allocation14 + $0x828] sm:$0xff]
    %v2980 = vld [vmem:[#allocation14 + $0x830] sm:$0xff]
    %v2981 = vld [vmem:[#allocation14 + $0x838] sm:$0xff]
    %v2982 = vld [vmem:[#allocation14 + $0x840] sm:$0xff]
    %v2983 = vld [vmem:[#allocation14 + $0x848] sm:$0xff]
    %v2984 = vld [vmem:[#allocation14 + $0x850] sm:$0xff]
    %v2985 = vld [vmem:[#allocation14 + $0x858] sm:$0xff]
    %v2986 = vld [vmem:[#allocation14 + $0x860] sm:$0xff]
    %v2987 = vld [vmem:[#allocation14 + $0x868] sm:$0xff]
    %v2988 = vld [vmem:[#allocation14 + $0x870] sm:$0xff]
    %v2989 = vld [vmem:[#allocation14 + $0x878] sm:$0xff]
    %v2990 = vld [vmem:[#allocation14 + $0x880] sm:$0xff]
    %v2991 = vld [vmem:[#allocation14 + $0x888] sm:$0xff]
    %v2992 = vld [vmem:[#allocation14 + $0x890] sm:$0xff]
    %v2993 = vld [vmem:[#allocation14 + $0x898] sm:$0xff]
    %v2994 = vld [vmem:[#allocation14 + $0x8a0] sm:$0xff]
    %v2995 = vld [vmem:[#allocation14 + $0x8a8] sm:$0xff]
    %v2996 = vld [vmem:[#allocation14 + $0x8b0] sm:$0xff]
    %v2997 = vld [vmem:[#allocation14 + $0x8b8] sm:$0xff]
    %v2998 = vld [vmem:[#allocation14 + $0x8c0] sm:$0xff]
    %v2999 = vld [vmem:[#allocation14 + $0x8c8] sm:$0xff]
    %v3000 = vld [vmem:[#allocation14 + $0x8d0] sm:$0xff]
    %v3001 = vld [vmem:[#allocation14 + $0x8d8] sm:$0xff]
    %v3002 = vld [vmem:[#allocation14 + $0x8e0] sm:$0xff]
    %v3003 = vld [vmem:[#allocation14 + $0x8e8] sm:$0xff]
    %v3004 = vld [vmem:[#allocation14 + $0x8f0] sm:$0xff]
    %v3005 = vld [vmem:[#allocation14 + $0x8f8] sm:$0xff]
    %v3006 = vld [vmem:[#allocation14 + $0x900] sm:$0xff]
    %v3007 = vld [vmem:[#allocation14 + $0x908] sm:$0xff]
    %v3008 = vld [vmem:[#allocation14 + $0x910] sm:$0xff]
    %v3009 = vld [vmem:[#allocation14 + $0x918] sm:$0xff]
    %v3010 = vld [vmem:[#allocation14 + $0x920] sm:$0xff]
    %v3011 = vld [vmem:[#allocation14 + $0x928] sm:$0xff]
    %v3012 = vld [vmem:[#allocation14 + $0x930] sm:$0xff]
    %v3013 = vld [vmem:[#allocation14 + $0x938] sm:$0xff]
    %v3014 = vld [vmem:[#allocation14 + $0x940] sm:$0xff]
    %v3015 = vld [vmem:[#allocation14 + $0x948] sm:$0xff]
    %v3016 = vld [vmem:[#allocation14 + $0x950] sm:$0xff]
    %v3017 = vld [vmem:[#allocation14 + $0x958] sm:$0xff]
    %v3018 = vld [vmem:[#allocation14 + $0x960] sm:$0xff]
    %v3019 = vld [vmem:[#allocation14 + $0x968] sm:$0xff]
    %v3020 = vld [vmem:[#allocation14 + $0x970] sm:$0xff]
    %v3021 = vld [vmem:[#allocation14 + $0x978] sm:$0xff]
    %v3022 = vld [vmem:[#allocation14 + $0x980] sm:$0xff]
    %v3023 = vld [vmem:[#allocation14 + $0x988] sm:$0xff]
    %v3024 = vld [vmem:[#allocation14 + $0x990] sm:$0xff]
    %v3025 = vld [vmem:[#allocation14 + $0x998] sm:$0xff]
    %v3026 = vld [vmem:[#allocation14 + $0x9a0] sm:$0xff]
    %v3027 = vld [vmem:[#allocation14 + $0x9a8] sm:$0xff]
    %v3028 = vld [vmem:[#allocation14 + $0x9b0] sm:$0xff]
    %v3029 = vld [vmem:[#allocation14 + $0x9b8] sm:$0xff]
    %v3030 = vld [vmem:[#allocation14 + $0x9c0] sm:$0xff]
    %v3031 = vld [vmem:[#allocation14 + $0x9c8] sm:$0xff]
    %v3032 = vld [vmem:[#allocation14 + $0x9d0] sm:$0xff]
    %v3033 = vld [vmem:[#allocation14 + $0x9d8] sm:$0xff]
    %v3034 = vld [vmem:[#allocation14 + $0x9e0] sm:$0xff]
    %v3035 = vld [vmem:[#allocation14 + $0x9e8] sm:$0xff]
    %v3036 = vld [vmem:[#allocation14 + $0x9f0] sm:$0xff]
    %v3037 = vld [vmem:[#allocation14 + $0x9f8] sm:$0xff]
    %v3038 = vld [vmem:[#allocation14 + $0xa00] sm:$0xff]
    %v3039 = vld [vmem:[#allocation14 + $0xa08] sm:$0xff]
    %v3040 = vld [vmem:[#allocation14 + $0xa10] sm:$0xff]
    %v3041 = vld [vmem:[#allocation14 + $0xa18] sm:$0xff]
    %v3042 = vld [vmem:[#allocation14 + $0xa20] sm:$0xff]
    %v3043 = vld [vmem:[#allocation14 + $0xa28] sm:$0xff]
    %v3044 = vld [vmem:[#allocation14 + $0xa30] sm:$0xff]
    %v3045 = vld [vmem:[#allocation14 + $0xa38] sm:$0xff]
    %v3046 = vld [vmem:[#allocation14 + $0xa40] sm:$0xff]
    %v3047 = vld [vmem:[#allocation14 + $0xa48] sm:$0xff]
    %v3048 = vld [vmem:[#allocation14 + $0xa50] sm:$0xff]
    %v3049 = vld [vmem:[#allocation14 + $0xa58] sm:$0xff]
    %v3050 = vld [vmem:[#allocation14 + $0xa60] sm:$0xff]
    %v3051 = vld [vmem:[#allocation14 + $0xa68] sm:$0xff]
    %v3052 = vld [vmem:[#allocation14 + $0xa70] sm:$0xff]
    %v3053 = vld [vmem:[#allocation14 + $0xa78] sm:$0xff]
    %v3054 = vld [vmem:[#allocation14 + $0xa80] sm:$0xff]
    %v3055 = vld [vmem:[#allocation14 + $0xa88] sm:$0xff]
    %v3056 = vld [vmem:[#allocation14 + $0xa90] sm:$0xff]
    %v3057 = vld [vmem:[#allocation14 + $0xa98] sm:$0xff]
    %v3058 = vld [vmem:[#allocation14 + $0xaa0] sm:$0xff]
    %v3059 = vld [vmem:[#allocation14 + $0xaa8] sm:$0xff]
    %v3060 = vld [vmem:[#allocation14 + $0xab0] sm:$0xff]
    %v3061 = vld [vmem:[#allocation14 + $0xab8] sm:$0xff]
    %v3062 = vld [vmem:[#allocation14 + $0xac0] sm:$0xff]
    %v3063 = vld [vmem:[#allocation14 + $0xac8] sm:$0xff]
    %v3064 = vld [vmem:[#allocation14 + $0xad0] sm:$0xff]
    %v3065 = vld [vmem:[#allocation14 + $0xad8] sm:$0xff]
    %v3066 = vld [vmem:[#allocation14 + $0xae0] sm:$0xff]
    %v3067 = vld [vmem:[#allocation14 + $0xae8] sm:$0xff]
    %v3068 = vld [vmem:[#allocation14 + $0xaf0] sm:$0xff]
    %v3069 = vld [vmem:[#allocation14 + $0xaf8] sm:$0xff]
    %v3070 = vld [vmem:[#allocation14 + $0xb00] sm:$0xff]
    %v3071 = vld [vmem:[#allocation14 + $0xb08] sm:$0xff]
    %v3072 = vld [vmem:[#allocation14 + $0xb10] sm:$0xff]
    %v3073 = vld [vmem:[#allocation14 + $0xb18] sm:$0xff]
    %v3074 = vld [vmem:[#allocation14 + $0xb20] sm:$0xff]
    %v3075 = vld [vmem:[#allocation14 + $0xb28] sm:$0xff]
    %v3076 = vld [vmem:[#allocation14 + $0xb30] sm:$0xff]
    %v3077 = vld [vmem:[#allocation14 + $0xb38] sm:$0xff]
    %v3078 = vld [vmem:[#allocation14 + $0xb40] sm:$0xff]
    %v3079 = vld [vmem:[#allocation14 + $0xb48] sm:$0xff]
    %v3080 = vld [vmem:[#allocation14 + $0xb50] sm:$0xff]
    %v3081 = vld [vmem:[#allocation14 + $0xb58] sm:$0xff]
    %v3082 = vld [vmem:[#allocation14 + $0xb60] sm:$0xff]
    %v3083 = vld [vmem:[#allocation14 + $0xb68] sm:$0xff]
    %v3084 = vld [vmem:[#allocation14 + $0xb70] sm:$0xff]
    %v3085 = vld [vmem:[#allocation14 + $0xb78] sm:$0xff]
    %v3086 = vld [vmem:[#allocation14 + $0xb80] sm:$0xff]
    %v3087 = vld [vmem:[#allocation14 + $0xb88] sm:$0xff]
    %v3088 = vld [vmem:[#allocation14 + $0xb90] sm:$0xff]
    %v3089 = vld [vmem:[#allocation14 + $0xb98] sm:$0xff]
    %v3090 = vld [vmem:[#allocation14 + $0xba0] sm:$0xff]
    %v3091 = vld [vmem:[#allocation14 + $0xba8] sm:$0xff]
    %v3092 = vld [vmem:[#allocation14 + $0xbb0] sm:$0xff]
    %v3093 = vld [vmem:[#allocation14 + $0xbb8] sm:$0xff]
    %v3094 = vld [vmem:[#allocation14 + $0xbc0] sm:$0xff]
    %v3095 = vld [vmem:[#allocation14 + $0xbc8] sm:$0xff]
    %v3096 = vld [vmem:[#allocation14 + $0xbd0] sm:$0xff]
    %v3097 = vld [vmem:[#allocation14 + $0xbd8] sm:$0xff]
    %v3098 = vld [vmem:[#allocation14 + $0xbe0] sm:$0xff]
    %v3099 = vld [vmem:[#allocation14 + $0xbe8] sm:$0xff]
    %v3100 = vld [vmem:[#allocation14 + $0xbf0] sm:$0xff]
    %v3101 = vld [vmem:[#allocation14 + $0xbf8] sm:$0xff]
    %v3102 = vld [vmem:[#allocation14 + $0xc00] sm:$0xff]
    %v3103 = vld [vmem:[#allocation14 + $0xc08] sm:$0xff]
    %v3104 = vld [vmem:[#allocation14 + $0xc10] sm:$0xff]
    %v3105 = vld [vmem:[#allocation14 + $0xc18] sm:$0xff]
    %v3106 = vld [vmem:[#allocation14 + $0xc20] sm:$0xff]
    %v3107 = vld [vmem:[#allocation14 + $0xc28] sm:$0xff]
    %v3108 = vld [vmem:[#allocation14 + $0xc30] sm:$0xff]
    %v3109 = vld [vmem:[#allocation14 + $0xc38] sm:$0xff]
    %v3110 = vld [vmem:[#allocation14 + $0xc40] sm:$0xff]
    %v3111 = vld [vmem:[#allocation14 + $0xc48] sm:$0xff]
    %v3112 = vld [vmem:[#allocation14 + $0xc50] sm:$0xff]
    %v3113 = vld [vmem:[#allocation14 + $0xc58] sm:$0xff]
    %v3114 = vld [vmem:[#allocation14 + $0xc60] sm:$0xff]
    %v3115 = vld [vmem:[#allocation14 + $0xc68] sm:$0xff]
    %v3116 = vld [vmem:[#allocation14 + $0xc70] sm:$0xff]
    %v3117 = vld [vmem:[#allocation14 + $0xc78] sm:$0xff]
    %v3118 = vld [vmem:[#allocation14 + $0xc80] sm:$0xff]
    %v3119 = vld [vmem:[#allocation14 + $0xc88] sm:$0xff]
    %v3120 = vld [vmem:[#allocation14 + $0xc90] sm:$0xff]
    %v3121 = vld [vmem:[#allocation14 + $0xc98] sm:$0xff]
    %v3122 = vld [vmem:[#allocation14 + $0xca0] sm:$0xff]
    %v3123 = vld [vmem:[#allocation14 + $0xca8] sm:$0xff]
    %v3124 = vld [vmem:[#allocation14 + $0xcb0] sm:$0xff]
    %v3125 = vld [vmem:[#allocation14 + $0xcb8] sm:$0xff]
    %v3126 = vld [vmem:[#allocation14 + $0xcc0] sm:$0xff]
    %v3127 = vld [vmem:[#allocation14 + $0xcc8] sm:$0xff]
    %v3128 = vld [vmem:[#allocation14 + $0xcd0] sm:$0xff]
    %v3129 = vld [vmem:[#allocation14 + $0xcd8] sm:$0xff]
    %v3130 = vld [vmem:[#allocation14 + $0xce0] sm:$0xff]
    %v3131 = vld [vmem:[#allocation14 + $0xce8] sm:$0xff]
    %v3132 = vld [vmem:[#allocation14 + $0xcf0] sm:$0xff]
    %v3133 = vld [vmem:[#allocation14 + $0xcf8] sm:$0xff]
    %v3134 = vld [vmem:[#allocation14 + $0xd00] sm:$0xff]
    %v3135 = vld [vmem:[#allocation14 + $0xd08] sm:$0xff]
    %v3136 = vld [vmem:[#allocation14 + $0xd10] sm:$0xff]
    %v3137 = vld [vmem:[#allocation14 + $0xd18] sm:$0xff]
    %v3138 = vld [vmem:[#allocation14 + $0xd20] sm:$0xff]
    %v3139 = vld [vmem:[#allocation14 + $0xd28] sm:$0xff]
    %v3140 = vld [vmem:[#allocation14 + $0xd30] sm:$0xff]
    %v3141 = vld [vmem:[#allocation14 + $0xd38] sm:$0xff]
    %v3142 = vld [vmem:[#allocation14 + $0xd40] sm:$0xff]
    %v3143 = vld [vmem:[#allocation14 + $0xd48] sm:$0xff]
    %v3144 = vld [vmem:[#allocation14 + $0xd50] sm:$0xff]
    %v3145 = vld [vmem:[#allocation14 + $0xd58] sm:$0xff]
    %v3146 = vld [vmem:[#allocation14 + $0xd60] sm:$0xff]
    %v3147 = vld [vmem:[#allocation14 + $0xd68] sm:$0xff]
    %v3148 = vld [vmem:[#allocation14 + $0xd70] sm:$0xff]
    %v3149 = vld [vmem:[#allocation14 + $0xd78] sm:$0xff]
    %v3150 = vld [vmem:[#allocation14 + $0xd80] sm:$0xff]
    %v3151 = vld [vmem:[#allocation14 + $0xd88] sm:$0xff]
    %v3152 = vld [vmem:[#allocation14 + $0xd90] sm:$0xff]
    %v3153 = vld [vmem:[#allocation14 + $0xd98] sm:$0xff]
    %v3154 = vld [vmem:[#allocation14 + $0xda0] sm:$0xff]
    %v3155 = vld [vmem:[#allocation14 + $0xda8] sm:$0xff]
    %v3156 = vld [vmem:[#allocation14 + $0xdb0] sm:$0xff]
    %v3157 = vld [vmem:[#allocation14 + $0xdb8] sm:$0xff]
    %v3158 = vld [vmem:[#allocation14 + $0xdc0] sm:$0xff]
    %v3159 = vld [vmem:[#allocation14 + $0xdc8] sm:$0xff]
    %v3160 = vld [vmem:[#allocation14 + $0xdd0] sm:$0xff]
    %v3161 = vld [vmem:[#allocation14 + $0xdd8] sm:$0xff]
    %v3162 = vld [vmem:[#allocation14 + $0xde0] sm:$0xff]
    %v3163 = vld [vmem:[#allocation14 + $0xde8] sm:$0xff]
    %v3164 = vld [vmem:[#allocation14 + $0xdf0] sm:$0xff]
    %v3165 = vld [vmem:[#allocation14 + $0xdf8] sm:$0xff]
    %v3166 = vld [vmem:[#allocation14 + $0xe00] sm:$0xff]
    %v3167 = vld [vmem:[#allocation14 + $0xe08] sm:$0xff]
    %v3168 = vld [vmem:[#allocation14 + $0xe10] sm:$0xff]
    %v3169 = vld [vmem:[#allocation14 + $0xe18] sm:$0xff]
    %v3170 = vld [vmem:[#allocation14 + $0xe20] sm:$0xff]
    %v3171 = vld [vmem:[#allocation14 + $0xe28] sm:$0xff]
    %v3172 = vld [vmem:[#allocation14 + $0xe30] sm:$0xff]
    %v3173 = vld [vmem:[#allocation14 + $0xe38] sm:$0xff]
    %v3174 = vld [vmem:[#allocation14 + $0xe40] sm:$0xff]
    %v3175 = vld [vmem:[#allocation14 + $0xe48] sm:$0xff]
    %v3176 = vld [vmem:[#allocation14 + $0xe50] sm:$0xff]
    %v3177 = vld [vmem:[#allocation14 + $0xe58] sm:$0xff]
    %v3178 = vld [vmem:[#allocation14 + $0xe60] sm:$0xff]
    %v3179 = vld [vmem:[#allocation14 + $0xe68] sm:$0xff]
    %v3180 = vld [vmem:[#allocation14 + $0xe70] sm:$0xff]
    %v3181 = vld [vmem:[#allocation14 + $0xe78] sm:$0xff]
    %v3182 = vld [vmem:[#allocation14 + $0xe80] sm:$0xff]
    %v3183 = vld [vmem:[#allocation14 + $0xe88] sm:$0xff]
    %v3184 = vld [vmem:[#allocation14 + $0xe90] sm:$0xff]
    %v3185 = vld [vmem:[#allocation14 + $0xe98] sm:$0xff]
    %v3186 = vld [vmem:[#allocation14 + $0xea0] sm:$0xff]
    %v3187 = vld [vmem:[#allocation14 + $0xea8] sm:$0xff]
    %v3188 = vld [vmem:[#allocation14 + $0xeb0] sm:$0xff]
    %v3189 = vld [vmem:[#allocation14 + $0xeb8] sm:$0xff]
    %v3190 = vld [vmem:[#allocation14 + $0xec0] sm:$0xff]
    %v3191 = vld [vmem:[#allocation14 + $0xec8] sm:$0xff]
    %v3192 = vld [vmem:[#allocation14 + $0xed0] sm:$0xff]
    %v3193 = vld [vmem:[#allocation14 + $0xed8] sm:$0xff]
    %v3194 = vld [vmem:[#allocation14 + $0xee0] sm:$0xff]
    %v3195 = vld [vmem:[#allocation14 + $0xee8] sm:$0xff]
    %v3196 = vld [vmem:[#allocation14 + $0xef0] sm:$0xff]
    %v3197 = vld [vmem:[#allocation14 + $0xef8] sm:$0xff]
    %v3198 = vld [vmem:[#allocation14 + $0xf00] sm:$0xff]
    %v3199 = vld [vmem:[#allocation14 + $0xf08] sm:$0xff]
    %v3200 = vld [vmem:[#allocation14 + $0xf10] sm:$0xff]
    %v3201 = vld [vmem:[#allocation14 + $0xf18] sm:$0xff]
    %v3202 = vld [vmem:[#allocation14 + $0xf20] sm:$0xff]
    %v3203 = vld [vmem:[#allocation14 + $0xf28] sm:$0xff]
    %v3204 = vld [vmem:[#allocation14 + $0xf30] sm:$0xff]
    %v3205 = vld [vmem:[#allocation14 + $0xf38] sm:$0xff]
    %v3206 = vld [vmem:[#allocation14 + $0xf40] sm:$0xff]
    %v3207 = vld [vmem:[#allocation14 + $0xf48] sm:$0xff]
    %v3208 = vld [vmem:[#allocation14 + $0xf50] sm:$0xff]
    %v3209 = vld [vmem:[#allocation14 + $0xf58] sm:$0xff]
    %v3210 = vld [vmem:[#allocation14 + $0xf60] sm:$0xff]
    %v3211 = vld [vmem:[#allocation14 + $0xf68] sm:$0xff]
    %v3212 = vld [vmem:[#allocation14 + $0xf70] sm:$0xff]
    %v3213 = vld [vmem:[#allocation14 + $0xf78] sm:$0xff]
    %v3214 = vld [vmem:[#allocation14 + $0xf80] sm:$0xff]
    %v3215 = vld [vmem:[#allocation14 + $0xf88] sm:$0xff]
    %v3216 = vld [vmem:[#allocation14 + $0xf90] sm:$0xff]
    %v3217 = vld [vmem:[#allocation14 + $0xf98] sm:$0xff]
    %v3218 = vld [vmem:[#allocation14 + $0xfa0] sm:$0xff]
    %v3219 = vld [vmem:[#allocation14 + $0xfa8] sm:$0xff]
    %v3220 = vld [vmem:[#allocation14 + $0xfb0] sm:$0xff]
    %v3221 = vld [vmem:[#allocation14 + $0xfb8] sm:$0xff]
    %v3222 = vld [vmem:[#allocation14 + $0xfc0] sm:$0xff]
    %v3223 = vld [vmem:[#allocation14 + $0xfc8] sm:$0xff]
    %v3224 = vld [vmem:[#allocation14 + $0xfd0] sm:$0xff]
    %v3225 = vld [vmem:[#allocation14 + $0xfd8] sm:$0xff]
    %v3226 = vld [vmem:[#allocation14 + $0xfe0] sm:$0xff]
    %v3227 = vld [vmem:[#allocation14 + $0xfe8] sm:$0xff]
    %v3228 = vld [vmem:[#allocation14 + $0xff0] sm:$0xff]
    %v3229 = vld [vmem:[#allocation14 + $0xff8] sm:$0xff]
    %v3230 = vld [vmem:[#allocation14 + $0x1000] sm:$0xff]
    %v3231 = vld [vmem:[#allocation14 + $0x1008] sm:$0xff]
    %v3232 = vld [vmem:[#allocation14 + $0x1010] sm:$0xff]
    %v3233 = vld [vmem:[#allocation14 + $0x1018] sm:$0xff]
    %v3234 = vld [vmem:[#allocation14 + $0x1020] sm:$0xff]
    %v3235 = vld [vmem:[#allocation14 + $0x1028] sm:$0xff]
    %v3236 = vld [vmem:[#allocation14 + $0x1030] sm:$0xff]
    %v3237 = vld [vmem:[#allocation14 + $0x1038] sm:$0xff]
    %v3238 = vld [vmem:[#allocation14 + $0x1040] sm:$0xff]
    %v3239 = vld [vmem:[#allocation14 + $0x1048] sm:$0xff]
    %v3240 = vld [vmem:[#allocation14 + $0x1050] sm:$0xff]
    %v3241 = vld [vmem:[#allocation14 + $0x1058] sm:$0xff]
    %v3242 = vld [vmem:[#allocation14 + $0x1060] sm:$0xff]
    %v3243 = vld [vmem:[#allocation14 + $0x1068] sm:$0xff]
    %v3244 = vld [vmem:[#allocation14 + $0x1070] sm:$0xff]
    %v3245 = vld [vmem:[#allocation14 + $0x1078] sm:$0xff]
    %v3246 = vld [vmem:[#allocation14 + $0x1080] sm:$0xff]
    %v3247 = vld [vmem:[#allocation14 + $0x1088] sm:$0xff]
    %v3248 = vld [vmem:[#allocation14 + $0x1090] sm:$0xff]
    %v3249 = vld [vmem:[#allocation14 + $0x1098] sm:$0xff]
    %v3250 = vld [vmem:[#allocation14 + $0x10a0] sm:$0xff]
    %v3251 = vld [vmem:[#allocation14 + $0x10a8] sm:$0xff]
    %v3252 = vld [vmem:[#allocation14 + $0x10b0] sm:$0xff]
    %v3253 = vld [vmem:[#allocation14 + $0x10b8] sm:$0xff]
    %v3254 = vld [vmem:[#allocation14 + $0x10c0] sm:$0xff]
    %v3255 = vld [vmem:[#allocation14 + $0x10c8] sm:$0xff]
    %v3256 = vld [vmem:[#allocation14 + $0x10d0] sm:$0xff]
    %v3257 = vld [vmem:[#allocation14 + $0x10d8] sm:$0xff]
    %v3258 = vld [vmem:[#allocation14 + $0x10e0] sm:$0xff]
    %v3259 = vld [vmem:[#allocation14 + $0x10e8] sm:$0xff]
    %v3260 = vld [vmem:[#allocation14 + $0x10f0] sm:$0xff]
    %v3261 = vld [vmem:[#allocation14 + $0x10f8] sm:$0xff]
    %v3262 = vld [vmem:[#allocation14 + $0x1100] sm:$0xff]
    %v3263 = vld [vmem:[#allocation14 + $0x1108] sm:$0xff]
    %v3264 = vld [vmem:[#allocation14 + $0x1110] sm:$0xff]
    %v3265 = vld [vmem:[#allocation14 + $0x1118] sm:$0xff]
    %v3266 = vld [vmem:[#allocation14 + $0x1120] sm:$0xff]
    %v3267 = vld [vmem:[#allocation14 + $0x1128] sm:$0xff]
    %v3268 = vld [vmem:[#allocation14 + $0x1130] sm:$0xff]
    %v3269 = vld [vmem:[#allocation14 + $0x1138] sm:$0xff]
    %v3270 = vld [vmem:[#allocation14 + $0x1140] sm:$0xff]
    %v3271 = vld [vmem:[#allocation14 + $0x1148] sm:$0xff]
    %v3272 = vld [vmem:[#allocation14 + $0x1150] sm:$0xff]
    %v3273 = vld [vmem:[#allocation14 + $0x1158] sm:$0xff]
    %v3274 = vld [vmem:[#allocation14 + $0x1160] sm:$0xff]
    %v3275 = vld [vmem:[#allocation14 + $0x1168] sm:$0xff]
    %v3276 = vld [vmem:[#allocation14 + $0x1170] sm:$0xff]
    %v3277 = vld [vmem:[#allocation14 + $0x1178] sm:$0xff]
    %v3278 = vld [vmem:[#allocation14 + $0x1180] sm:$0xff]
    %v3279 = vld [vmem:[#allocation14 + $0x1188] sm:$0xff]
    %v3280 = vld [vmem:[#allocation14 + $0x1190] sm:$0xff]
    %v3281 = vld [vmem:[#allocation14 + $0x1198] sm:$0xff]
    %v3282 = vld [vmem:[#allocation14 + $0x11a0] sm:$0xff]
    %v3283 = vld [vmem:[#allocation14 + $0x11a8] sm:$0xff]
    %v3284 = vld [vmem:[#allocation14 + $0x11b0] sm:$0xff]
    %v3285 = vld [vmem:[#allocation14 + $0x11b8] sm:$0xff]
    %v3286 = vld [vmem:[#allocation14 + $0x11c0] sm:$0xff]
    %v3287 = vld [vmem:[#allocation14 + $0x11c8] sm:$0xff]
    %v3288 = vld [vmem:[#allocation14 + $0x11d0] sm:$0xff]
    %v3289 = vld [vmem:[#allocation14 + $0x11d8] sm:$0xff]
    %v3290 = vld [vmem:[#allocation14 + $0x11e0] sm:$0xff]
    %v3291 = vld [vmem:[#allocation14 + $0x11e8] sm:$0xff]
    %v3292 = vld [vmem:[#allocation14 + $0x11f0] sm:$0xff]
    %v3293 = vld [vmem:[#allocation14 + $0x11f8] sm:$0xff]
    %v3294 = vld [vmem:[#allocation14 + $0x1200] sm:$0xff]
    %v3295 = vld [vmem:[#allocation14 + $0x1208] sm:$0xff]
    %v3296 = vld [vmem:[#allocation14 + $0x1210] sm:$0xff]
    %v3297 = vld [vmem:[#allocation14 + $0x1218] sm:$0xff]
    %v3298 = vld [vmem:[#allocation14 + $0x1220] sm:$0xff]
    %v3299 = vld [vmem:[#allocation14 + $0x1228] sm:$0xff]
    %v3300 = vld [vmem:[#allocation14 + $0x1230] sm:$0xff]
    %v3301 = vld [vmem:[#allocation14 + $0x1238] sm:$0xff]
    %v3302 = vld [vmem:[#allocation14 + $0x1240] sm:$0xff]
    %v3303 = vld [vmem:[#allocation14 + $0x1248] sm:$0xff]
    %v3304 = vld [vmem:[#allocation14 + $0x1250] sm:$0xff]
    %v3305 = vld [vmem:[#allocation14 + $0x1258] sm:$0xff]
    %v3306 = vld [vmem:[#allocation14 + $0x1260] sm:$0xff]
    %v3307 = vld [vmem:[#allocation14 + $0x1268] sm:$0xff]
    %v3308 = vld [vmem:[#allocation14 + $0x1270] sm:$0xff]
    %v3309 = vld [vmem:[#allocation14 + $0x1278] sm:$0xff]
    %v3310 = vld [vmem:[#allocation14 + $0x1280] sm:$0xff]
    %v3311 = vld [vmem:[#allocation14 + $0x1288] sm:$0xff]
    %v3312 = vld [vmem:[#allocation14 + $0x1290] sm:$0xff]
    %v3313 = vld [vmem:[#allocation14 + $0x1298] sm:$0xff]
    %v3314 = vld [vmem:[#allocation14 + $0x12a0] sm:$0xff]
    %v3315 = vld [vmem:[#allocation14 + $0x12a8] sm:$0xff]
    %v3316 = vld [vmem:[#allocation14 + $0x12b0] sm:$0xff]
    %v3317 = vld [vmem:[#allocation14 + $0x12b8] sm:$0xff]
    %v3318 = vld [vmem:[#allocation14 + $0x12c0] sm:$0xff]
    %v3319 = vld [vmem:[#allocation14 + $0x12c8] sm:$0xff]
    %v3320 = vld [vmem:[#allocation14 + $0x12d0] sm:$0xff]
    %v3321 = vld [vmem:[#allocation14 + $0x12d8] sm:$0xff]
    %v3322 = vld [vmem:[#allocation14 + $0x12e0] sm:$0xff]
    %v3323 = vld [vmem:[#allocation14 + $0x12e8] sm:$0xff]
    %v3324 = vld [vmem:[#allocation14 + $0x12f0] sm:$0xff]
    %v3325 = vld [vmem:[#allocation14 + $0x12f8] sm:$0xff]
    %v3326 = vld [vmem:[#allocation14 + $0x1300] sm:$0xff]
    %v3327 = vld [vmem:[#allocation14 + $0x1308] sm:$0xff]
    %v3328 = vld [vmem:[#allocation14 + $0x1310] sm:$0xff]
    %v3329 = vld [vmem:[#allocation14 + $0x1318] sm:$0xff]
    %v3330 = vld [vmem:[#allocation14 + $0x1320] sm:$0xff]
    %v3331 = vld [vmem:[#allocation14 + $0x1328] sm:$0xff]
    %v3332 = vld [vmem:[#allocation14 + $0x1330] sm:$0xff]
    %v3333 = vld [vmem:[#allocation14 + $0x1338] sm:$0xff]
    %v3334 = vld [vmem:[#allocation14 + $0x1340] sm:$0xff]
    %v3335 = vld [vmem:[#allocation14 + $0x1348] sm:$0xff]
    %v3336 = vld [vmem:[#allocation14 + $0x1350] sm:$0xff]
    %v3337 = vld [vmem:[#allocation14 + $0x1358] sm:$0xff]
    %v3338 = vld [vmem:[#allocation14 + $0x1360] sm:$0xff]
    %v3339 = vld [vmem:[#allocation14 + $0x1368] sm:$0xff]
    %v3340 = vld [vmem:[#allocation14 + $0x1370] sm:$0xff]
    %v3341 = vld [vmem:[#allocation14 + $0x1378] sm:$0xff]
    %v3342 = vld [vmem:[#allocation14 + $0x1380] sm:$0xff]
    %v3343 = vld [vmem:[#allocation14 + $0x1388] sm:$0xff]
    %v3344 = vld [vmem:[#allocation14 + $0x1390] sm:$0xff]
    %v3345 = vld [vmem:[#allocation14 + $0x1398] sm:$0xff]
    %v3346 = vld [vmem:[#allocation14 + $0x13a0] sm:$0xff]
    %v3347 = vld [vmem:[#allocation14 + $0x13a8] sm:$0xff]
    %v3348 = vld [vmem:[#allocation14 + $0x13b0] sm:$0xff]
    %v3349 = vld [vmem:[#allocation14 + $0x13b8] sm:$0xff]
    %v3350 = vld [vmem:[#allocation14 + $0x13c0] sm:$0xff]
    %v3351 = vld [vmem:[#allocation14 + $0x13c8] sm:$0xff]
    %v3352 = vld [vmem:[#allocation14 + $0x13d0] sm:$0xff]
    %v3353 = vld [vmem:[#allocation14 + $0x13d8] sm:$0xff]
    %v3354 = vld [vmem:[#allocation14 + $0x13e0] sm:$0xff]
    %v3355 = vld [vmem:[#allocation14 + $0x13e8] sm:$0xff]
    %v3356 = vld [vmem:[#allocation14 + $0x13f0] sm:$0xff]
    %v3357 = vld [vmem:[#allocation14 + $0x13f8] sm:$0xff]
    %v3358 = vld [vmem:[#allocation14 + $0x1400] sm:$0xff]
    %v3359 = vld [vmem:[#allocation14 + $0x1408] sm:$0xff]
    %v3360 = vld [vmem:[#allocation14 + $0x1410] sm:$0xff]
    %v3361 = vld [vmem:[#allocation14 + $0x1418] sm:$0xff]
    %v3362 = vld [vmem:[#allocation14 + $0x1420] sm:$0xff]
    %v3363 = vld [vmem:[#allocation14 + $0x1428] sm:$0xff]
    %v3364 = vld [vmem:[#allocation14 + $0x1430] sm:$0xff]
    %v3365 = vld [vmem:[#allocation14 + $0x1438] sm:$0xff]
    %v3366 = vld [vmem:[#allocation14 + $0x1440] sm:$0xff]
    %v3367 = vld [vmem:[#allocation14 + $0x1448] sm:$0xff]
    %v3368 = vld [vmem:[#allocation14 + $0x1450] sm:$0xff]
    %v3369 = vld [vmem:[#allocation14 + $0x1458] sm:$0xff]
    %v3370 = vld [vmem:[#allocation14 + $0x1460] sm:$0xff]
    %v3371 = vld [vmem:[#allocation14 + $0x1468] sm:$0xff]
    %v3372 = vld [vmem:[#allocation14 + $0x1470] sm:$0xff]
    %v3373 = vld [vmem:[#allocation14 + $0x1478] sm:$0xff]
    %v3374 = vld [vmem:[#allocation14 + $0x1480] sm:$0xff]
    %v3375 = vld [vmem:[#allocation14 + $0x1488] sm:$0xff]
    %v3376 = vld [vmem:[#allocation14 + $0x1490] sm:$0xff]
    %v3377 = vld [vmem:[#allocation14 + $0x1498] sm:$0xff]
    %v3378 = vld [vmem:[#allocation14 + $0x14a0] sm:$0xff]
    %v3379 = vld [vmem:[#allocation14 + $0x14a8] sm:$0xff]
    %v3380 = vld [vmem:[#allocation14 + $0x14b0] sm:$0xff]
    %v3381 = vld [vmem:[#allocation14 + $0x14b8] sm:$0xff]
    %v3382 = vld [vmem:[#allocation14 + $0x14c0] sm:$0xff]
    %v3383 = vld [vmem:[#allocation14 + $0x14c8] sm:$0xff]
    %v3384 = vld [vmem:[#allocation14 + $0x14d0] sm:$0xff]
    %v3385 = vld [vmem:[#allocation14 + $0x14d8] sm:$0xff]
    %v3386 = vld [vmem:[#allocation14 + $0x14e0] sm:$0xff]
    %v3387 = vld [vmem:[#allocation14 + $0x14e8] sm:$0xff]
    %v3388 = vld [vmem:[#allocation14 + $0x14f0] sm:$0xff]
    %v3389 = vld [vmem:[#allocation14 + $0x14f8] sm:$0xff]
    %v3390 = vld [vmem:[#allocation14 + $0x1500] sm:$0xff]
    %v3391 = vld [vmem:[#allocation14 + $0x1508] sm:$0xff]
    %v3392 = vld [vmem:[#allocation14 + $0x1510] sm:$0xff]
    %v3393 = vld [vmem:[#allocation14 + $0x1518] sm:$0xff]
    %v3394 = vld [vmem:[#allocation14 + $0x1520] sm:$0xff]
    %v3395 = vld [vmem:[#allocation14 + $0x1528] sm:$0xff]
    %v3396 = vld [vmem:[#allocation14 + $0x1530] sm:$0xff]
    %v3397 = vld [vmem:[#allocation14 + $0x1538] sm:$0xff]
    %v3398 = vld [vmem:[#allocation14 + $0x1540] sm:$0xff]
    %v3399 = vld [vmem:[#allocation14 + $0x1548] sm:$0xff]
    %v3400 = vld [vmem:[#allocation14 + $0x1550] sm:$0xff]
    %v3401 = vld [vmem:[#allocation14 + $0x1558] sm:$0xff]
    %v3402 = vld [vmem:[#allocation14 + $0x1560] sm:$0xff]
    %v3403 = vld [vmem:[#allocation14 + $0x1568] sm:$0xff]
    %v3404 = vld [vmem:[#allocation14 + $0x1570] sm:$0xff]
    %v3405 = vld [vmem:[#allocation14 + $0x1578] sm:$0xff]
    %v3406 = vld [vmem:[#allocation14 + $0x1580] sm:$0xff]
    %v3407 = vld [vmem:[#allocation14 + $0x1588] sm:$0xff]
    %v3408 = vld [vmem:[#allocation14 + $0x1590] sm:$0xff]
    %v3409 = vld [vmem:[#allocation14 + $0x1598] sm:$0xff]
    %v3410 = vld [vmem:[#allocation14 + $0x15a0] sm:$0xff]
    %v3411 = vld [vmem:[#allocation14 + $0x15a8] sm:$0xff]
    %v3412 = vld [vmem:[#allocation14 + $0x15b0] sm:$0xff]
    %v3413 = vld [vmem:[#allocation14 + $0x15b8] sm:$0xff]
    %v3414 = vld [vmem:[#allocation14 + $0x15c0] sm:$0xff]
    %v3415 = vld [vmem:[#allocation14 + $0x15c8] sm:$0xff]
    %v3416 = vld [vmem:[#allocation14 + $0x15d0] sm:$0xff]
    %v3417 = vld [vmem:[#allocation14 + $0x15d8] sm:$0xff]
    %v3418 = vld [vmem:[#allocation14 + $0x15e0] sm:$0xff]
    %v3419 = vld [vmem:[#allocation14 + $0x15e8] sm:$0xff]
    %v3420 = vld [vmem:[#allocation14 + $0x15f0] sm:$0xff]
    %v3421 = vld [vmem:[#allocation14 + $0x15f8] sm:$0xff]
    %v3422 = vld [vmem:[#allocation14 + $0x1600] sm:$0xff]
    %v3423 = vld [vmem:[#allocation14 + $0x1608] sm:$0xff]
    %v3424 = vld [vmem:[#allocation14 + $0x1610] sm:$0xff]
    %v3425 = vld [vmem:[#allocation14 + $0x1618] sm:$0xff]
    %v3426 = vld [vmem:[#allocation14 + $0x1620] sm:$0xff]
    %v3427 = vld [vmem:[#allocation14 + $0x1628] sm:$0xff]
    %v3428 = vld [vmem:[#allocation14 + $0x1630] sm:$0xff]
    %v3429 = vld [vmem:[#allocation14 + $0x1638] sm:$0xff]
    %v3430 = vld [vmem:[#allocation14 + $0x1640] sm:$0xff]
    %v3431 = vld [vmem:[#allocation14 + $0x1648] sm:$0xff]
    %v3432 = vld [vmem:[#allocation14 + $0x1650] sm:$0xff]
    %v3433 = vld [vmem:[#allocation14 + $0x1658] sm:$0xff]
    %v3434 = vld [vmem:[#allocation14 + $0x1660] sm:$0xff]
    %v3435 = vld [vmem:[#allocation14 + $0x1668] sm:$0xff]
    %v3436 = vld [vmem:[#allocation14 + $0x1670] sm:$0xff]
    %v3437 = vld [vmem:[#allocation14 + $0x1678] sm:$0xff]
    %v3438 = vld [vmem:[#allocation14 + $0x1680] sm:$0xff]
    %v3439 = vld [vmem:[#allocation14 + $0x1688] sm:$0xff]
    %v3440 = vld [vmem:[#allocation14 + $0x1690] sm:$0xff]
    %v3441 = vld [vmem:[#allocation14 + $0x1698] sm:$0xff]
    %v3442 = vld [vmem:[#allocation14 + $0x16a0] sm:$0xff]
    %v3443 = vld [vmem:[#allocation14 + $0x16a8] sm:$0xff]
    %v3444 = vld [vmem:[#allocation14 + $0x16b0] sm:$0xff]
    %v3445 = vld [vmem:[#allocation14 + $0x16b8] sm:$0xff]
    %v3446 = vld [vmem:[#allocation14 + $0x16c0] sm:$0xff]
    %v3447 = vld [vmem:[#allocation14 + $0x16c8] sm:$0xff]
    %v3448 = vld [vmem:[#allocation14 + $0x16d0] sm:$0xff]
    %v3449 = vld [vmem:[#allocation14 + $0x16d8] sm:$0xff]
    %v3450 = vld [vmem:[#allocation14 + $0x16e0] sm:$0xff]
    %v3451 = vld [vmem:[#allocation14 + $0x16e8] sm:$0xff]
    %v3452 = vld [vmem:[#allocation14 + $0x16f0] sm:$0xff]
    %v3453 = vld [vmem:[#allocation14 + $0x16f8] sm:$0xff]
    %v3454 = vld [vmem:[#allocation14 + $0x1700] sm:$0xff]
    %v3455 = vld [vmem:[#allocation14 + $0x1708] sm:$0xff]
    %v3456 = vld [vmem:[#allocation14 + $0x1710] sm:$0xff]
    %v3457 = vld [vmem:[#allocation14 + $0x1718] sm:$0xff]
    %v3458 = vld [vmem:[#allocation14 + $0x1720] sm:$0xff]
    %v3459 = vld [vmem:[#allocation14 + $0x1728] sm:$0xff]
    %v3460 = vld [vmem:[#allocation14 + $0x1730] sm:$0xff]
    %v3461 = vld [vmem:[#allocation14 + $0x1738] sm:$0xff]
    %v3462 = vld [vmem:[#allocation14 + $0x1740] sm:$0xff]
    %v3463 = vld [vmem:[#allocation14 + $0x1748] sm:$0xff]
    %v3464 = vld [vmem:[#allocation14 + $0x1750] sm:$0xff]
    %v3465 = vld [vmem:[#allocation14 + $0x1758] sm:$0xff]
    %v3466 = vld [vmem:[#allocation14 + $0x1760] sm:$0xff]
    %v3467 = vld [vmem:[#allocation14 + $0x1768] sm:$0xff]
    %v3468 = vld [vmem:[#allocation14 + $0x1770] sm:$0xff]
    %v3469 = vld [vmem:[#allocation14 + $0x1778] sm:$0xff]
    %v3470 = vld [vmem:[#allocation14 + $0x1780] sm:$0xff]
    %v3471 = vld [vmem:[#allocation14 + $0x1788] sm:$0xff]
    %v3472 = vld [vmem:[#allocation14 + $0x1790] sm:$0xff]
    %v3473 = vld [vmem:[#allocation14 + $0x1798] sm:$0xff]
    %v3474 = vld [vmem:[#allocation14 + $0x17a0] sm:$0xff]
    %v3475 = vld [vmem:[#allocation14 + $0x17a8] sm:$0xff]
    %v3476 = vld [vmem:[#allocation14 + $0x17b0] sm:$0xff]
    %v3477 = vld [vmem:[#allocation14 + $0x17b8] sm:$0xff]
    %v3478 = vld [vmem:[#allocation14 + $0x17c0] sm:$0xff]
    %v3479 = vld [vmem:[#allocation14 + $0x17c8] sm:$0xff]
    %v3480 = vld [vmem:[#allocation14 + $0x17d0] sm:$0xff]
    %v3481 = vld [vmem:[#allocation14 + $0x17d8] sm:$0xff]
    %v3482 = vld [vmem:[#allocation14 + $0x17e0] sm:$0xff]
    %v3483 = vld [vmem:[#allocation14 + $0x17e8] sm:$0xff]
    %v3484 = vld [vmem:[#allocation14 + $0x17f0] sm:$0xff]
    %v3485 = vld [vmem:[#allocation14 + $0x17f8] sm:$0xff]
    %v3486 = vld [vmem:[#allocation16] sm:$0xff]
    %v3487 = vld [vmem:[#allocation16 + $0x8] sm:$0xf]
    %v3490 = vlaneseq
    %v3491 = vshrl.u32 %v3490, 7
    %v3492 = vsub.s32 0, %v3491
    %v3493 = vrot.slane %v3486, %v3492
    %v3494 = vlaneseq
    %v3495 = vshrl.u32 %v3494, 7
    %v3496 = vsub.s32 1, %v3495
    %v3497 = vrot.slane %v3486, %v3496
    %v3498 = vlaneseq
    %v3499 = vshrl.u32 %v3498, 7
    %v3500 = vsub.s32 2, %v3499
    %v3501 = vrot.slane %v3486, %v3500
    %v3502 = vlaneseq
    %v3503 = vshrl.u32 %v3502, 7
    %v3504 = vsub.s32 3, %v3503
    %v3505 = vrot.slane %v3486, %v3504
    %v3506 = vlaneseq
    %v3507 = vshrl.u32 %v3506, 7
    %v3508 = vsub.s32 4, %v3507
    %v3509 = vrot.slane %v3486, %v3508
    %v3510 = vlaneseq
    %v3511 = vshrl.u32 %v3510, 7
    %v3512 = vsub.s32 5, %v3511
    %v3513 = vrot.slane %v3486, %v3512
    %v3514 = vlaneseq
    %v3515 = vshrl.u32 %v3514, 7
    %v3516 = vsub.s32 6, %v3515
    %v3517 = vrot.slane %v3486, %v3516
    %v3518 = vlaneseq
    %v3519 = vshrl.u32 %v3518, 7
    %v3520 = vsub.s32 7, %v3519
    %v3521 = vrot.slane %v3486, %v3520
    %v3522 = vlaneseq
    %v3523 = vshrl.u32 %v3522, 7
    %v3524 = vsub.s32 0, %v3523
    %v3525 = vrot.slane %v3487, %v3524
    %v3526 = vlaneseq
    %v3527 = vshrl.u32 %v3526, 7
    %v3528 = vsub.s32 1, %v3527
    %v3529 = vrot.slane %v3487, %v3528
    %v3530 = vlaneseq
    %v3531 = vshrl.u32 %v3530, 7
    %v3532 = vsub.s32 2, %v3531
    %v3533 = vrot.slane %v3487, %v3532
    %v3534 = vlaneseq
    %v3535 = vshrl.u32 %v3534, 7
    %v3536 = vsub.s32 3, %v3535
    %v3537 = vrot.slane %v3487, %v3536
    %v4318 = vunpack.c.l.b16 %v2718
    %v4319 = vunpack.c.h.b16 %v2718
    %v4320 = vunpack.c.l.b16 %v2719
    %v4321 = vunpack.c.h.b16 %v2719
    %v4322 = vunpack.c.l.b16 %v2720
    %v4323 = vunpack.c.h.b16 %v2720
    %v4324 = vunpack.c.l.b16 %v2721
    %v4325 = vunpack.c.h.b16 %v2721
    %v4326 = vunpack.c.l.b16 %v2722
    %v4327 = vunpack.c.h.b16 %v2722
    %v4328 = vunpack.c.l.b16 %v2723
    %v4329 = vunpack.c.h.b16 %v2723
    %v4330 = vunpack.c.l.b16 %v2724
    %v4331 = vunpack.c.h.b16 %v2724
    %v4332 = vunpack.c.l.b16 %v2725
    %v4333 = vunpack.c.h.b16 %v2725
    %v4334 = vunpack.c.l.b16 %v2726
    %v4335 = vunpack.c.h.b16 %v2726
    %v4336 = vunpack.c.l.b16 %v2727
    %v4337 = vunpack.c.h.b16 %v2727
    %v4338 = vunpack.c.l.b16 %v2728
    %v4339 = vunpack.c.h.b16 %v2728
    %v4340 = vunpack.c.l.b16 %v2729
    %v4341 = vunpack.c.h.b16 %v2729
    %v4342 = vunpack.c.l.b16 %v2730
    %v4343 = vunpack.c.h.b16 %v2730
    %v4344 = vunpack.c.l.b16 %v2731
    %v4345 = vunpack.c.h.b16 %v2731
    %v4346 = vunpack.c.l.b16 %v2732
    %v4347 = vunpack.c.h.b16 %v2732
    %v4348 = vunpack.c.l.b16 %v2733
    %v4349 = vunpack.c.h.b16 %v2733
    %v4350 = vunpack.c.l.b16 %v2734
    %v4351 = vunpack.c.h.b16 %v2734
    %v4352 = vunpack.c.l.b16 %v2735
    %v4353 = vunpack.c.h.b16 %v2735
    %v4354 = vunpack.c.l.b16 %v2736
    %v4355 = vunpack.c.h.b16 %v2736
    %v4356 = vunpack.c.l.b16 %v2737
    %v4357 = vunpack.c.h.b16 %v2737
    %v4358 = vunpack.c.l.b16 %v2738
    %v4359 = vunpack.c.h.b16 %v2738
    %v4360 = vunpack.c.l.b16 %v2739
    %v4361 = vunpack.c.h.b16 %v2739
    %v4362 = vunpack.c.l.b16 %v2740
    %v4363 = vunpack.c.h.b16 %v2740
    %v4364 = vunpack.c.l.b16 %v2741
    %v4365 = vunpack.c.h.b16 %v2741
    %v4366 = vunpack.c.l.b16 %v2742
    %v4367 = vunpack.c.h.b16 %v2742
    %v4368 = vunpack.c.l.b16 %v2743
    %v4369 = vunpack.c.h.b16 %v2743
    %v4370 = vunpack.c.l.b16 %v2744
    %v4371 = vunpack.c.h.b16 %v2744
    %v4372 = vunpack.c.l.b16 %v2745
    %v4373 = vunpack.c.h.b16 %v2745
    %v4374 = vunpack.c.l.b16 %v2746
    %v4375 = vunpack.c.h.b16 %v2746
    %v4376 = vunpack.c.l.b16 %v2747
    %v4377 = vunpack.c.h.b16 %v2747
    %v4378 = vunpack.c.l.b16 %v2748
    %v4379 = vunpack.c.h.b16 %v2748
    %v4380 = vunpack.c.l.b16 %v2749
    %v4381 = vunpack.c.h.b16 %v2749
    %v4382 = vunpack.c.l.b16 %v2750
    %v4383 = vunpack.c.h.b16 %v2750
    %v4384 = vunpack.c.l.b16 %v2751
    %v4385 = vunpack.c.h.b16 %v2751
    %v4386 = vunpack.c.l.b16 %v2752
    %v4387 = vunpack.c.h.b16 %v2752
    %v4388 = vunpack.c.l.b16 %v2753
    %v4389 = vunpack.c.h.b16 %v2753
    %v4390 = vunpack.c.l.b16 %v2754
    %v4391 = vunpack.c.h.b16 %v2754
    %v4392 = vunpack.c.l.b16 %v2755
    %v4393 = vunpack.c.h.b16 %v2755
    %v4394 = vunpack.c.l.b16 %v2756
    %v4395 = vunpack.c.h.b16 %v2756
    %v4396 = vunpack.c.l.b16 %v2757
    %v4397 = vunpack.c.h.b16 %v2757
    %v4398 = vunpack.c.l.b16 %v2758
    %v4399 = vunpack.c.h.b16 %v2758
    %v4400 = vunpack.c.l.b16 %v2759
    %v4401 = vunpack.c.h.b16 %v2759
    %v4402 = vunpack.c.l.b16 %v2760
    %v4403 = vunpack.c.h.b16 %v2760
    %v4404 = vunpack.c.l.b16 %v2761
    %v4405 = vunpack.c.h.b16 %v2761
    %v4406 = vunpack.c.l.b16 %v2762
    %v4407 = vunpack.c.h.b16 %v2762
    %v4408 = vunpack.c.l.b16 %v2763
    %v4409 = vunpack.c.h.b16 %v2763
    %v4410 = vunpack.c.l.b16 %v2764
    %v4411 = vunpack.c.h.b16 %v2764
    %v4412 = vunpack.c.l.b16 %v2765
    %v4413 = vunpack.c.h.b16 %v2765
    %v4414 = vunpack.c.l.b16 %v2766
    %v4415 = vunpack.c.h.b16 %v2766
    %v4416 = vunpack.c.l.b16 %v2767
    %v4417 = vunpack.c.h.b16 %v2767
    %v4418 = vunpack.c.l.b16 %v2768
    %v4419 = vunpack.c.h.b16 %v2768
    %v4420 = vunpack.c.l.b16 %v2769
    %v4421 = vunpack.c.h.b16 %v2769
    %v4422 = vunpack.c.l.b16 %v2770
    %v4423 = vunpack.c.h.b16 %v2770
    %v4424 = vunpack.c.l.b16 %v2771
    %v4425 = vunpack.c.h.b16 %v2771
    %v4426 = vunpack.c.l.b16 %v2772
    %v4427 = vunpack.c.h.b16 %v2772
    %v4428 = vunpack.c.l.b16 %v2773
    %v4429 = vunpack.c.h.b16 %v2773
    %v4430 = vunpack.c.l.b16 %v2774
    %v4431 = vunpack.c.h.b16 %v2774
    %v4432 = vunpack.c.l.b16 %v2775
    %v4433 = vunpack.c.h.b16 %v2775
    %v4434 = vunpack.c.l.b16 %v2776
    %v4435 = vunpack.c.h.b16 %v2776
    %v4436 = vunpack.c.l.b16 %v2777
    %v4437 = vunpack.c.h.b16 %v2777
    %v4438 = vunpack.c.l.b16 %v2778
    %v4439 = vunpack.c.h.b16 %v2778
    %v4440 = vunpack.c.l.b16 %v2779
    %v4441 = vunpack.c.h.b16 %v2779
    %v4442 = vunpack.c.l.b16 %v2780
    %v4443 = vunpack.c.h.b16 %v2780
    %v4444 = vunpack.c.l.b16 %v2781
    %v4445 = vunpack.c.h.b16 %v2781
    %v4446 = vunpack.c.l.b16 %v2782
    %v4447 = vunpack.c.h.b16 %v2782
    %v4448 = vunpack.c.l.b16 %v2783
    %v4449 = vunpack.c.h.b16 %v2783
    %v4450 = vunpack.c.l.b16 %v2784
    %v4451 = vunpack.c.h.b16 %v2784
    %v4452 = vunpack.c.l.b16 %v2785
    %v4453 = vunpack.c.h.b16 %v2785
    %v4454 = vunpack.c.l.b16 %v2786
    %v4455 = vunpack.c.h.b16 %v2786
    %v4456 = vunpack.c.l.b16 %v2787
    %v4457 = vunpack.c.h.b16 %v2787
    %v4458 = vunpack.c.l.b16 %v2788
    %v4459 = vunpack.c.h.b16 %v2788
    %v4460 = vunpack.c.l.b16 %v2789
    %v4461 = vunpack.c.h.b16 %v2789
    %v4462 = vunpack.c.l.b16 %v2790
    %v4463 = vunpack.c.h.b16 %v2790
    %v4464 = vunpack.c.l.b16 %v2791
    %v4465 = vunpack.c.h.b16 %v2791
    %v4466 = vunpack.c.l.b16 %v2792
    %v4467 = vunpack.c.h.b16 %v2792
    %v4468 = vunpack.c.l.b16 %v2793
    %v4469 = vunpack.c.h.b16 %v2793
    %v4470 = vunpack.c.l.b16 %v2794
    %v4471 = vunpack.c.h.b16 %v2794
    %v4472 = vunpack.c.l.b16 %v2795
    %v4473 = vunpack.c.h.b16 %v2795
    %v4474 = vunpack.c.l.b16 %v2796
    %v4475 = vunpack.c.h.b16 %v2796
    %v4476 = vunpack.c.l.b16 %v2797
    %v4477 = vunpack.c.h.b16 %v2797
    %v4478 = vunpack.c.l.b16 %v2798
    %v4479 = vunpack.c.h.b16 %v2798
    %v4480 = vunpack.c.l.b16 %v2799
    %v4481 = vunpack.c.h.b16 %v2799
    %v4482 = vunpack.c.l.b16 %v2800
    %v4483 = vunpack.c.h.b16 %v2800
    %v4484 = vunpack.c.l.b16 %v2801
    %v4485 = vunpack.c.h.b16 %v2801
    %v4486 = vunpack.c.l.b16 %v2802
    %v4487 = vunpack.c.h.b16 %v2802
    %v4488 = vunpack.c.l.b16 %v2803
    %v4489 = vunpack.c.h.b16 %v2803
    %v4490 = vunpack.c.l.b16 %v2804
    %v4491 = vunpack.c.h.b16 %v2804
    %v4492 = vunpack.c.l.b16 %v2805
    %v4493 = vunpack.c.h.b16 %v2805
    %v4494 = vunpack.c.l.b16 %v2806
    %v4495 = vunpack.c.h.b16 %v2806
    %v4496 = vunpack.c.l.b16 %v2807
    %v4497 = vunpack.c.h.b16 %v2807
    %v4498 = vunpack.c.l.b16 %v2808
    %v4499 = vunpack.c.h.b16 %v2808
    %v4500 = vunpack.c.l.b16 %v2809
    %v4501 = vunpack.c.h.b16 %v2809
    %v4502 = vunpack.c.l.b16 %v2810
    %v4503 = vunpack.c.h.b16 %v2810
    %v4504 = vunpack.c.l.b16 %v2811
    %v4505 = vunpack.c.h.b16 %v2811
    %v4506 = vunpack.c.l.b16 %v2812
    %v4507 = vunpack.c.h.b16 %v2812
    %v4508 = vunpack.c.l.b16 %v2813
    %v4509 = vunpack.c.h.b16 %v2813
    %v4510 = vunpack.c.l.b16 %v2814
    %v4511 = vunpack.c.h.b16 %v2814
    %v4512 = vunpack.c.l.b16 %v2815
    %v4513 = vunpack.c.h.b16 %v2815
    %v4514 = vunpack.c.l.b16 %v2816
    %v4515 = vunpack.c.h.b16 %v2816
    %v4516 = vunpack.c.l.b16 %v2817
    %v4517 = vunpack.c.h.b16 %v2817
    %v4518 = vunpack.c.l.b16 %v2818
    %v4519 = vunpack.c.h.b16 %v2818
    %v4520 = vunpack.c.l.b16 %v2819
    %v4521 = vunpack.c.h.b16 %v2819
    %v4522 = vunpack.c.l.b16 %v2820
    %v4523 = vunpack.c.h.b16 %v2820
    %v4524 = vunpack.c.l.b16 %v2821
    %v4525 = vunpack.c.h.b16 %v2821
    %v4526 = vunpack.c.l.b16 %v2822
    %v4527 = vunpack.c.h.b16 %v2822
    %v4528 = vunpack.c.l.b16 %v2823
    %v4529 = vunpack.c.h.b16 %v2823
    %v4530 = vunpack.c.l.b16 %v2824
    %v4531 = vunpack.c.h.b16 %v2824
    %v4532 = vunpack.c.l.b16 %v2825
    %v4533 = vunpack.c.h.b16 %v2825
    %v4534 = vunpack.c.l.b16 %v2826
    %v4535 = vunpack.c.h.b16 %v2826
    %v4536 = vunpack.c.l.b16 %v2827
    %v4537 = vunpack.c.h.b16 %v2827
    %v4538 = vunpack.c.l.b16 %v2828
    %v4539 = vunpack.c.h.b16 %v2828
    %v4540 = vunpack.c.l.b16 %v2829
    %v4541 = vunpack.c.h.b16 %v2829
    %v4542 = vunpack.c.l.b16 %v2830
    %v4543 = vunpack.c.h.b16 %v2830
    %v4544 = vunpack.c.l.b16 %v2831
    %v4545 = vunpack.c.h.b16 %v2831
    %v4546 = vunpack.c.l.b16 %v2832
    %v4547 = vunpack.c.h.b16 %v2832
    %v4548 = vunpack.c.l.b16 %v2833
    %v4549 = vunpack.c.h.b16 %v2833
    %v4550 = vunpack.c.l.b16 %v2834
    %v4551 = vunpack.c.h.b16 %v2834
    %v4552 = vunpack.c.l.b16 %v2835
    %v4553 = vunpack.c.h.b16 %v2835
    %v4554 = vunpack.c.l.b16 %v2836
    %v4555 = vunpack.c.h.b16 %v2836
    %v4556 = vunpack.c.l.b16 %v2837
    %v4557 = vunpack.c.h.b16 %v2837
    %v4558 = vunpack.c.l.b16 %v2838
    %v4559 = vunpack.c.h.b16 %v2838
    %v4560 = vunpack.c.l.b16 %v2839
    %v4561 = vunpack.c.h.b16 %v2839
    %v4562 = vunpack.c.l.b16 %v2840
    %v4563 = vunpack.c.h.b16 %v2840
    %v4564 = vunpack.c.l.b16 %v2841
    %v4565 = vunpack.c.h.b16 %v2841
    %v4566 = vunpack.c.l.b16 %v2842
    %v4567 = vunpack.c.h.b16 %v2842
    %v4568 = vunpack.c.l.b16 %v2843
    %v4569 = vunpack.c.h.b16 %v2843
    %v4570 = vunpack.c.l.b16 %v2844
    %v4571 = vunpack.c.h.b16 %v2844
    %v4572 = vunpack.c.l.b16 %v2845
    %v4573 = vunpack.c.h.b16 %v2845
    %v4574 = vunpack.c.l.b16 %v2846
    %v4575 = vunpack.c.h.b16 %v2846
    %v4576 = vunpack.c.l.b16 %v2847
    %v4577 = vunpack.c.h.b16 %v2847
    %v4578 = vunpack.c.l.b16 %v2848
    %v4579 = vunpack.c.h.b16 %v2848
    %v4580 = vunpack.c.l.b16 %v2849
    %v4581 = vunpack.c.h.b16 %v2849
    %v4582 = vunpack.c.l.b16 %v2850
    %v4583 = vunpack.c.h.b16 %v2850
    %v4584 = vunpack.c.l.b16 %v2851
    %v4585 = vunpack.c.h.b16 %v2851
    %v4586 = vunpack.c.l.b16 %v2852
    %v4587 = vunpack.c.h.b16 %v2852
    %v4588 = vunpack.c.l.b16 %v2853
    %v4589 = vunpack.c.h.b16 %v2853
    %v4590 = vunpack.c.l.b16 %v2854
    %v4591 = vunpack.c.h.b16 %v2854
    %v4592 = vunpack.c.l.b16 %v2855
    %v4593 = vunpack.c.h.b16 %v2855
    %v4594 = vunpack.c.l.b16 %v2856
    %v4595 = vunpack.c.h.b16 %v2856
    %v4596 = vunpack.c.l.b16 %v2857
    %v4597 = vunpack.c.h.b16 %v2857
    %v4598 = vunpack.c.l.b16 %v2858
    %v4599 = vunpack.c.h.b16 %v2858
    %v4600 = vunpack.c.l.b16 %v2859
    %v4601 = vunpack.c.h.b16 %v2859
    %v4602 = vunpack.c.l.b16 %v2860
    %v4603 = vunpack.c.h.b16 %v2860
    %v4604 = vunpack.c.l.b16 %v2861
    %v4605 = vunpack.c.h.b16 %v2861
    %v4606 = vunpack.c.l.b16 %v2862
    %v4607 = vunpack.c.h.b16 %v2862
    %v4608 = vunpack.c.l.b16 %v2863
    %v4609 = vunpack.c.h.b16 %v2863
    %v4610 = vunpack.c.l.b16 %v2864
    %v4611 = vunpack.c.h.b16 %v2864
    %v4612 = vunpack.c.l.b16 %v2865
    %v4613 = vunpack.c.h.b16 %v2865
    %v4614 = vunpack.c.l.b16 %v2866
    %v4615 = vunpack.c.h.b16 %v2866
    %v4616 = vunpack.c.l.b16 %v2867
    %v4617 = vunpack.c.h.b16 %v2867
    %v4618 = vunpack.c.l.b16 %v2868
    %v4619 = vunpack.c.h.b16 %v2868
    %v4620 = vunpack.c.l.b16 %v2869
    %v4621 = vunpack.c.h.b16 %v2869
    %v4622 = vunpack.c.l.b16 %v2870
    %v4623 = vunpack.c.h.b16 %v2870
    %v4624 = vunpack.c.l.b16 %v2871
    %v4625 = vunpack.c.h.b16 %v2871
    %v4626 = vunpack.c.l.b16 %v2872
    %v4627 = vunpack.c.h.b16 %v2872
    %v4628 = vunpack.c.l.b16 %v2873
    %v4629 = vunpack.c.h.b16 %v2873
    %v4630 = vunpack.c.l.b16 %v2874
    %v4631 = vunpack.c.h.b16 %v2874
    %v4632 = vunpack.c.l.b16 %v2875
    %v4633 = vunpack.c.h.b16 %v2875
    %v4634 = vunpack.c.l.b16 %v2876
    %v4635 = vunpack.c.h.b16 %v2876
    %v4636 = vunpack.c.l.b16 %v2877
    %v4637 = vunpack.c.h.b16 %v2877
    %v4638 = vunpack.c.l.b16 %v2878
    %v4639 = vunpack.c.h.b16 %v2878
    %v4640 = vunpack.c.l.b16 %v2879
    %v4641 = vunpack.c.h.b16 %v2879
    %v4642 = vunpack.c.l.b16 %v2880
    %v4643 = vunpack.c.h.b16 %v2880
    %v4644 = vunpack.c.l.b16 %v2881
    %v4645 = vunpack.c.h.b16 %v2881
    %v4646 = vunpack.c.l.b16 %v2882
    %v4647 = vunpack.c.h.b16 %v2882
    %v4648 = vunpack.c.l.b16 %v2883
    %v4649 = vunpack.c.h.b16 %v2883
    %v4650 = vunpack.c.l.b16 %v2884
    %v4651 = vunpack.c.h.b16 %v2884
    %v4652 = vunpack.c.l.b16 %v2885
    %v4653 = vunpack.c.h.b16 %v2885
    %v4654 = vunpack.c.l.b16 %v2886
    %v4655 = vunpack.c.h.b16 %v2886
    %v4656 = vunpack.c.l.b16 %v2887
    %v4657 = vunpack.c.h.b16 %v2887
    %v4658 = vunpack.c.l.b16 %v2888
    %v4659 = vunpack.c.h.b16 %v2888
    %v4660 = vunpack.c.l.b16 %v2889
    %v4661 = vunpack.c.h.b16 %v2889
    %v4662 = vunpack.c.l.b16 %v2890
    %v4663 = vunpack.c.h.b16 %v2890
    %v4664 = vunpack.c.l.b16 %v2891
    %v4665 = vunpack.c.h.b16 %v2891
    %v4666 = vunpack.c.l.b16 %v2892
    %v4667 = vunpack.c.h.b16 %v2892
    %v4668 = vunpack.c.l.b16 %v2893
    %v4669 = vunpack.c.h.b16 %v2893
    %v4670 = vunpack.c.l.b16 %v2894
    %v4671 = vunpack.c.h.b16 %v2894
    %v4672 = vunpack.c.l.b16 %v2895
    %v4673 = vunpack.c.h.b16 %v2895
    %v4674 = vunpack.c.l.b16 %v2896
    %v4675 = vunpack.c.h.b16 %v2896
    %v4676 = vunpack.c.l.b16 %v2897
    %v4677 = vunpack.c.h.b16 %v2897
    %v4678 = vunpack.c.l.b16 %v2898
    %v4679 = vunpack.c.h.b16 %v2898
    %v4680 = vunpack.c.l.b16 %v2899
    %v4681 = vunpack.c.h.b16 %v2899
    %v4682 = vunpack.c.l.b16 %v2900
    %v4683 = vunpack.c.h.b16 %v2900
    %v4684 = vunpack.c.l.b16 %v2901
    %v4685 = vunpack.c.h.b16 %v2901
    %v4686 = vunpack.c.l.b16 %v2902
    %v4687 = vunpack.c.h.b16 %v2902
    %v4688 = vunpack.c.l.b16 %v2903
    %v4689 = vunpack.c.h.b16 %v2903
    %v4690 = vunpack.c.l.b16 %v2904
    %v4691 = vunpack.c.h.b16 %v2904
    %v4692 = vunpack.c.l.b16 %v2905
    %v4693 = vunpack.c.h.b16 %v2905
    %v4694 = vunpack.c.l.b16 %v2906
    %v4695 = vunpack.c.h.b16 %v2906
    %v4696 = vunpack.c.l.b16 %v2907
    %v4697 = vunpack.c.h.b16 %v2907
    %v4698 = vunpack.c.l.b16 %v2908
    %v4699 = vunpack.c.h.b16 %v2908
    %v4700 = vunpack.c.l.b16 %v2909
    %v4701 = vunpack.c.h.b16 %v2909
    %v4702 = vunpack.c.l.b16 %v2910
    %v4703 = vunpack.c.h.b16 %v2910
    %v4704 = vunpack.c.l.b16 %v2911
    %v4705 = vunpack.c.h.b16 %v2911
    %v4706 = vunpack.c.l.b16 %v2912
    %v4707 = vunpack.c.h.b16 %v2912
    %v4708 = vunpack.c.l.b16 %v2913
    %v4709 = vunpack.c.h.b16 %v2913
    %v4710 = vunpack.c.l.b16 %v2914
    %v4711 = vunpack.c.h.b16 %v2914
    %v4712 = vunpack.c.l.b16 %v2915
    %v4713 = vunpack.c.h.b16 %v2915
    %v4714 = vunpack.c.l.b16 %v2916
    %v4715 = vunpack.c.h.b16 %v2916
    %v4716 = vunpack.c.l.b16 %v2917
    %v4717 = vunpack.c.h.b16 %v2917
    %v4718 = vunpack.c.l.b16 %v2918
    %v4719 = vunpack.c.h.b16 %v2918
    %v4720 = vunpack.c.l.b16 %v2919
    %v4721 = vunpack.c.h.b16 %v2919
    %v4722 = vunpack.c.l.b16 %v2920
    %v4723 = vunpack.c.h.b16 %v2920
    %v4724 = vunpack.c.l.b16 %v2921
    %v4725 = vunpack.c.h.b16 %v2921
    %v4726 = vunpack.c.l.b16 %v2922
    %v4727 = vunpack.c.h.b16 %v2922
    %v4728 = vunpack.c.l.b16 %v2923
    %v4729 = vunpack.c.h.b16 %v2923
    %v4730 = vunpack.c.l.b16 %v2924
    %v4731 = vunpack.c.h.b16 %v2924
    %v4732 = vunpack.c.l.b16 %v2925
    %v4733 = vunpack.c.h.b16 %v2925
    %v4734 = vunpack.c.l.b16 %v2926
    %v4735 = vunpack.c.h.b16 %v2926
    %v4736 = vunpack.c.l.b16 %v2927
    %v4737 = vunpack.c.h.b16 %v2927
    %v4738 = vunpack.c.l.b16 %v2928
    %v4739 = vunpack.c.h.b16 %v2928
    %v4740 = vunpack.c.l.b16 %v2929
    %v4741 = vunpack.c.h.b16 %v2929
    %v4742 = vunpack.c.l.b16 %v2930
    %v4743 = vunpack.c.h.b16 %v2930
    %v4744 = vunpack.c.l.b16 %v2931
    %v4745 = vunpack.c.h.b16 %v2931
    %v4746 = vunpack.c.l.b16 %v2932
    %v4747 = vunpack.c.h.b16 %v2932
    %v4748 = vunpack.c.l.b16 %v2933
    %v4749 = vunpack.c.h.b16 %v2933
    %v4750 = vunpack.c.l.b16 %v2934
    %v4751 = vunpack.c.h.b16 %v2934
    %v4752 = vunpack.c.l.b16 %v2935
    %v4753 = vunpack.c.h.b16 %v2935
    %v4754 = vunpack.c.l.b16 %v2936
    %v4755 = vunpack.c.h.b16 %v2936
    %v4756 = vunpack.c.l.b16 %v2937
    %v4757 = vunpack.c.h.b16 %v2937
    %v4758 = vunpack.c.l.b16 %v2938
    %v4759 = vunpack.c.h.b16 %v2938
    %v4760 = vunpack.c.l.b16 %v2939
    %v4761 = vunpack.c.h.b16 %v2939
    %v4762 = vunpack.c.l.b16 %v2940
    %v4763 = vunpack.c.h.b16 %v2940
    %v4764 = vunpack.c.l.b16 %v2941
    %v4765 = vunpack.c.h.b16 %v2941
    %v4766 = vunpack.c.l.b16 %v2942
    %v4767 = vunpack.c.h.b16 %v2942
    %v4768 = vunpack.c.l.b16 %v2943
    %v4769 = vunpack.c.h.b16 %v2943
    %v4770 = vunpack.c.l.b16 %v2944
    %v4771 = vunpack.c.h.b16 %v2944
    %v4772 = vunpack.c.l.b16 %v2945
    %v4773 = vunpack.c.h.b16 %v2945
    %v4774 = vunpack.c.l.b16 %v2946
    %v4775 = vunpack.c.h.b16 %v2946
    %v4776 = vunpack.c.l.b16 %v2947
    %v4777 = vunpack.c.h.b16 %v2947
    %v4778 = vunpack.c.l.b16 %v2948
    %v4779 = vunpack.c.h.b16 %v2948
    %v4780 = vunpack.c.l.b16 %v2949
    %v4781 = vunpack.c.h.b16 %v2949
    %v4782 = vunpack.c.l.b16 %v2950
    %v4783 = vunpack.c.h.b16 %v2950
    %v4784 = vunpack.c.l.b16 %v2951
    %v4785 = vunpack.c.h.b16 %v2951
    %v4786 = vunpack.c.l.b16 %v2952
    %v4787 = vunpack.c.h.b16 %v2952
    %v4788 = vunpack.c.l.b16 %v2953
    %v4789 = vunpack.c.h.b16 %v2953
    %v4790 = vunpack.c.l.b16 %v2954
    %v4791 = vunpack.c.h.b16 %v2954
    %v4792 = vunpack.c.l.b16 %v2955
    %v4793 = vunpack.c.h.b16 %v2955
    %v4794 = vunpack.c.l.b16 %v2956
    %v4795 = vunpack.c.h.b16 %v2956
    %v4796 = vunpack.c.l.b16 %v2957
    %v4797 = vunpack.c.h.b16 %v2957
    %v4798 = vunpack.c.l.b16 %v2958
    %v4799 = vunpack.c.h.b16 %v2958
    %v4800 = vunpack.c.l.b16 %v2959
    %v4801 = vunpack.c.h.b16 %v2959
    %v4802 = vunpack.c.l.b16 %v2960
    %v4803 = vunpack.c.h.b16 %v2960
    %v4804 = vunpack.c.l.b16 %v2961
    %v4805 = vunpack.c.h.b16 %v2961
    %v4806 = vunpack.c.l.b16 %v2962
    %v4807 = vunpack.c.h.b16 %v2962
    %v4808 = vunpack.c.l.b16 %v2963
    %v4809 = vunpack.c.h.b16 %v2963
    %v4810 = vunpack.c.l.b16 %v2964
    %v4811 = vunpack.c.h.b16 %v2964
    %v4812 = vunpack.c.l.b16 %v2965
    %v4813 = vunpack.c.h.b16 %v2965
    %v4814 = vunpack.c.l.b16 %v2966
    %v4815 = vunpack.c.h.b16 %v2966
    %v4816 = vunpack.c.l.b16 %v2967
    %v4817 = vunpack.c.h.b16 %v2967
    %v4818 = vunpack.c.l.b16 %v2968
    %v4819 = vunpack.c.h.b16 %v2968
    %v4820 = vunpack.c.l.b16 %v2969
    %v4821 = vunpack.c.h.b16 %v2969
    %v4822 = vunpack.c.l.b16 %v2970
    %v4823 = vunpack.c.h.b16 %v2970
    %v4824 = vunpack.c.l.b16 %v2971
    %v4825 = vunpack.c.h.b16 %v2971
    %v4826 = vunpack.c.l.b16 %v2972
    %v4827 = vunpack.c.h.b16 %v2972
    %v4828 = vunpack.c.l.b16 %v2973
    %v4829 = vunpack.c.h.b16 %v2973
    %v4830 = vunpack.c.l.b16 %v2974
    %v4831 = vunpack.c.h.b16 %v2974
    %v4832 = vunpack.c.l.b16 %v2975
    %v4833 = vunpack.c.h.b16 %v2975
    %v4834 = vunpack.c.l.b16 %v2976
    %v4835 = vunpack.c.h.b16 %v2976
    %v4836 = vunpack.c.l.b16 %v2977
    %v4837 = vunpack.c.h.b16 %v2977
    %v4838 = vunpack.c.l.b16 %v2978
    %v4839 = vunpack.c.h.b16 %v2978
    %v4840 = vunpack.c.l.b16 %v2979
    %v4841 = vunpack.c.h.b16 %v2979
    %v4842 = vunpack.c.l.b16 %v2980
    %v4843 = vunpack.c.h.b16 %v2980
    %v4844 = vunpack.c.l.b16 %v2981
    %v4845 = vunpack.c.h.b16 %v2981
    %v4846 = vunpack.c.l.b16 %v2982
    %v4847 = vunpack.c.h.b16 %v2982
    %v4848 = vunpack.c.l.b16 %v2983
    %v4849 = vunpack.c.h.b16 %v2983
    %v4850 = vunpack.c.l.b16 %v2984
    %v4851 = vunpack.c.h.b16 %v2984
    %v4852 = vunpack.c.l.b16 %v2985
    %v4853 = vunpack.c.h.b16 %v2985
    %v4854 = vunpack.c.l.b16 %v2986
    %v4855 = vunpack.c.h.b16 %v2986
    %v4856 = vunpack.c.l.b16 %v2987
    %v4857 = vunpack.c.h.b16 %v2987
    %v4858 = vunpack.c.l.b16 %v2988
    %v4859 = vunpack.c.h.b16 %v2988
    %v4860 = vunpack.c.l.b16 %v2989
    %v4861 = vunpack.c.h.b16 %v2989
    %v4862 = vunpack.c.l.b16 %v2990
    %v4863 = vunpack.c.h.b16 %v2990
    %v4864 = vunpack.c.l.b16 %v2991
    %v4865 = vunpack.c.h.b16 %v2991
    %v4866 = vunpack.c.l.b16 %v2992
    %v4867 = vunpack.c.h.b16 %v2992
    %v4868 = vunpack.c.l.b16 %v2993
    %v4869 = vunpack.c.h.b16 %v2993
    %v4870 = vunpack.c.l.b16 %v2994
    %v4871 = vunpack.c.h.b16 %v2994
    %v4872 = vunpack.c.l.b16 %v2995
    %v4873 = vunpack.c.h.b16 %v2995
    %v4874 = vunpack.c.l.b16 %v2996
    %v4875 = vunpack.c.h.b16 %v2996
    %v4876 = vunpack.c.l.b16 %v2997
    %v4877 = vunpack.c.h.b16 %v2997
    %v4878 = vunpack.c.l.b16 %v2998
    %v4879 = vunpack.c.h.b16 %v2998
    %v4880 = vunpack.c.l.b16 %v2999
    %v4881 = vunpack.c.h.b16 %v2999
    %v4882 = vunpack.c.l.b16 %v3000
    %v4883 = vunpack.c.h.b16 %v3000
    %v4884 = vunpack.c.l.b16 %v3001
    %v4885 = vunpack.c.h.b16 %v3001
    %v4886 = vunpack.c.l.b16 %v3002
    %v4887 = vunpack.c.h.b16 %v3002
    %v4888 = vunpack.c.l.b16 %v3003
    %v4889 = vunpack.c.h.b16 %v3003
    %v4890 = vunpack.c.l.b16 %v3004
    %v4891 = vunpack.c.h.b16 %v3004
    %v4892 = vunpack.c.l.b16 %v3005
    %v4893 = vunpack.c.h.b16 %v3005
    %v4894 = vunpack.c.l.b16 %v3006
    %v4895 = vunpack.c.h.b16 %v3006
    %v4896 = vunpack.c.l.b16 %v3007
    %v4897 = vunpack.c.h.b16 %v3007
    %v4898 = vunpack.c.l.b16 %v3008
    %v4899 = vunpack.c.h.b16 %v3008
    %v4900 = vunpack.c.l.b16 %v3009
    %v4901 = vunpack.c.h.b16 %v3009
    %v4902 = vunpack.c.l.b16 %v3010
    %v4903 = vunpack.c.h.b16 %v3010
    %v4904 = vunpack.c.l.b16 %v3011
    %v4905 = vunpack.c.h.b16 %v3011
    %v4906 = vunpack.c.l.b16 %v3012
    %v4907 = vunpack.c.h.b16 %v3012
    %v4908 = vunpack.c.l.b16 %v3013
    %v4909 = vunpack.c.h.b16 %v3013
    %v4910 = vunpack.c.l.b16 %v3014
    %v4911 = vunpack.c.h.b16 %v3014
    %v4912 = vunpack.c.l.b16 %v3015
    %v4913 = vunpack.c.h.b16 %v3015
    %v4914 = vunpack.c.l.b16 %v3016
    %v4915 = vunpack.c.h.b16 %v3016
    %v4916 = vunpack.c.l.b16 %v3017
    %v4917 = vunpack.c.h.b16 %v3017
    %v4918 = vunpack.c.l.b16 %v3018
    %v4919 = vunpack.c.h.b16 %v3018
    %v4920 = vunpack.c.l.b16 %v3019
    %v4921 = vunpack.c.h.b16 %v3019
    %v4922 = vunpack.c.l.b16 %v3020
    %v4923 = vunpack.c.h.b16 %v3020
    %v4924 = vunpack.c.l.b16 %v3021
    %v4925 = vunpack.c.h.b16 %v3021
    %v4926 = vunpack.c.l.b16 %v3022
    %v4927 = vunpack.c.h.b16 %v3022
    %v4928 = vunpack.c.l.b16 %v3023
    %v4929 = vunpack.c.h.b16 %v3023
    %v4930 = vunpack.c.l.b16 %v3024
    %v4931 = vunpack.c.h.b16 %v3024
    %v4932 = vunpack.c.l.b16 %v3025
    %v4933 = vunpack.c.h.b16 %v3025
    %v4934 = vunpack.c.l.b16 %v3026
    %v4935 = vunpack.c.h.b16 %v3026
    %v4936 = vunpack.c.l.b16 %v3027
    %v4937 = vunpack.c.h.b16 %v3027
    %v4938 = vunpack.c.l.b16 %v3028
    %v4939 = vunpack.c.h.b16 %v3028
    %v4940 = vunpack.c.l.b16 %v3029
    %v4941 = vunpack.c.h.b16 %v3029
    %v4942 = vunpack.c.l.b16 %v3030
    %v4943 = vunpack.c.h.b16 %v3030
    %v4944 = vunpack.c.l.b16 %v3031
    %v4945 = vunpack.c.h.b16 %v3031
    %v4946 = vunpack.c.l.b16 %v3032
    %v4947 = vunpack.c.h.b16 %v3032
    %v4948 = vunpack.c.l.b16 %v3033
    %v4949 = vunpack.c.h.b16 %v3033
    %v4950 = vunpack.c.l.b16 %v3034
    %v4951 = vunpack.c.h.b16 %v3034
    %v4952 = vunpack.c.l.b16 %v3035
    %v4953 = vunpack.c.h.b16 %v3035
    %v4954 = vunpack.c.l.b16 %v3036
    %v4955 = vunpack.c.h.b16 %v3036
    %v4956 = vunpack.c.l.b16 %v3037
    %v4957 = vunpack.c.h.b16 %v3037
    %v4958 = vunpack.c.l.b16 %v3038
    %v4959 = vunpack.c.h.b16 %v3038
    %v4960 = vunpack.c.l.b16 %v3039
    %v4961 = vunpack.c.h.b16 %v3039
    %v4962 = vunpack.c.l.b16 %v3040
    %v4963 = vunpack.c.h.b16 %v3040
    %v4964 = vunpack.c.l.b16 %v3041
    %v4965 = vunpack.c.h.b16 %v3041
    %v4966 = vunpack.c.l.b16 %v3042
    %v4967 = vunpack.c.h.b16 %v3042
    %v4968 = vunpack.c.l.b16 %v3043
    %v4969 = vunpack.c.h.b16 %v3043
    %v4970 = vunpack.c.l.b16 %v3044
    %v4971 = vunpack.c.h.b16 %v3044
    %v4972 = vunpack.c.l.b16 %v3045
    %v4973 = vunpack.c.h.b16 %v3045
    %v4974 = vunpack.c.l.b16 %v3046
    %v4975 = vunpack.c.h.b16 %v3046
    %v4976 = vunpack.c.l.b16 %v3047
    %v4977 = vunpack.c.h.b16 %v3047
    %v4978 = vunpack.c.l.b16 %v3048
    %v4979 = vunpack.c.h.b16 %v3048
    %v4980 = vunpack.c.l.b16 %v3049
    %v4981 = vunpack.c.h.b16 %v3049
    %v4982 = vunpack.c.l.b16 %v3050
    %v4983 = vunpack.c.h.b16 %v3050
    %v4984 = vunpack.c.l.b16 %v3051
    %v4985 = vunpack.c.h.b16 %v3051
    %v4986 = vunpack.c.l.b16 %v3052
    %v4987 = vunpack.c.h.b16 %v3052
    %v4988 = vunpack.c.l.b16 %v3053
    %v4989 = vunpack.c.h.b16 %v3053
    %v4990 = vunpack.c.l.b16 %v3054
    %v4991 = vunpack.c.h.b16 %v3054
    %v4992 = vunpack.c.l.b16 %v3055
    %v4993 = vunpack.c.h.b16 %v3055
    %v4994 = vunpack.c.l.b16 %v3056
    %v4995 = vunpack.c.h.b16 %v3056
    %v4996 = vunpack.c.l.b16 %v3057
    %v4997 = vunpack.c.h.b16 %v3057
    %v4998 = vunpack.c.l.b16 %v3058
    %v4999 = vunpack.c.h.b16 %v3058
    %v5000 = vunpack.c.l.b16 %v3059
    %v5001 = vunpack.c.h.b16 %v3059
    %v5002 = vunpack.c.l.b16 %v3060
    %v5003 = vunpack.c.h.b16 %v3060
    %v5004 = vunpack.c.l.b16 %v3061
    %v5005 = vunpack.c.h.b16 %v3061
    %v5006 = vunpack.c.l.b16 %v3062
    %v5007 = vunpack.c.h.b16 %v3062
    %v5008 = vunpack.c.l.b16 %v3063
    %v5009 = vunpack.c.h.b16 %v3063
    %v5010 = vunpack.c.l.b16 %v3064
    %v5011 = vunpack.c.h.b16 %v3064
    %v5012 = vunpack.c.l.b16 %v3065
    %v5013 = vunpack.c.h.b16 %v3065
    %v5014 = vunpack.c.l.b16 %v3066
    %v5015 = vunpack.c.h.b16 %v3066
    %v5016 = vunpack.c.l.b16 %v3067
    %v5017 = vunpack.c.h.b16 %v3067
    %v5018 = vunpack.c.l.b16 %v3068
    %v5019 = vunpack.c.h.b16 %v3068
    %v5020 = vunpack.c.l.b16 %v3069
    %v5021 = vunpack.c.h.b16 %v3069
    %v5022 = vunpack.c.l.b16 %v3070
    %v5023 = vunpack.c.h.b16 %v3070
    %v5024 = vunpack.c.l.b16 %v3071
    %v5025 = vunpack.c.h.b16 %v3071
    %v5026 = vunpack.c.l.b16 %v3072
    %v5027 = vunpack.c.h.b16 %v3072
    %v5028 = vunpack.c.l.b16 %v3073
    %v5029 = vunpack.c.h.b16 %v3073
    %v5030 = vunpack.c.l.b16 %v3074
    %v5031 = vunpack.c.h.b16 %v3074
    %v5032 = vunpack.c.l.b16 %v3075
    %v5033 = vunpack.c.h.b16 %v3075
    %v5034 = vunpack.c.l.b16 %v3076
    %v5035 = vunpack.c.h.b16 %v3076
    %v5036 = vunpack.c.l.b16 %v3077
    %v5037 = vunpack.c.h.b16 %v3077
    %v5038 = vunpack.c.l.b16 %v3078
    %v5039 = vunpack.c.h.b16 %v3078
    %v5040 = vunpack.c.l.b16 %v3079
    %v5041 = vunpack.c.h.b16 %v3079
    %v5042 = vunpack.c.l.b16 %v3080
    %v5043 = vunpack.c.h.b16 %v3080
    %v5044 = vunpack.c.l.b16 %v3081
    %v5045 = vunpack.c.h.b16 %v3081
    %v5046 = vunpack.c.l.b16 %v3082
    %v5047 = vunpack.c.h.b16 %v3082
    %v5048 = vunpack.c.l.b16 %v3083
    %v5049 = vunpack.c.h.b16 %v3083
    %v5050 = vunpack.c.l.b16 %v3084
    %v5051 = vunpack.c.h.b16 %v3084
    %v5052 = vunpack.c.l.b16 %v3085
    %v5053 = vunpack.c.h.b16 %v3085
    %v5054 = vunpack.c.l.b16 %v3086
    %v5055 = vunpack.c.h.b16 %v3086
    %v5056 = vunpack.c.l.b16 %v3087
    %v5057 = vunpack.c.h.b16 %v3087
    %v5058 = vunpack.c.l.b16 %v3088
    %v5059 = vunpack.c.h.b16 %v3088
    %v5060 = vunpack.c.l.b16 %v3089
    %v5061 = vunpack.c.h.b16 %v3089
    %v5062 = vunpack.c.l.b16 %v3090
    %v5063 = vunpack.c.h.b16 %v3090
    %v5064 = vunpack.c.l.b16 %v3091
    %v5065 = vunpack.c.h.b16 %v3091
    %v5066 = vunpack.c.l.b16 %v3092
    %v5067 = vunpack.c.h.b16 %v3092
    %v5068 = vunpack.c.l.b16 %v3093
    %v5069 = vunpack.c.h.b16 %v3093
    %v5070 = vunpack.c.l.b16 %v3094
    %v5071 = vunpack.c.h.b16 %v3094
    %v5072 = vunpack.c.l.b16 %v3095
    %v5073 = vunpack.c.h.b16 %v3095
    %v5074 = vunpack.c.l.b16 %v3096
    %v5075 = vunpack.c.h.b16 %v3096
    %v5076 = vunpack.c.l.b16 %v3097
    %v5077 = vunpack.c.h.b16 %v3097
    %v5078 = vunpack.c.l.b16 %v3098
    %v5079 = vunpack.c.h.b16 %v3098
    %v5080 = vunpack.c.l.b16 %v3099
    %v5081 = vunpack.c.h.b16 %v3099
    %v5082 = vunpack.c.l.b16 %v3100
    %v5083 = vunpack.c.h.b16 %v3100
    %v5084 = vunpack.c.l.b16 %v3101
    %v5085 = vunpack.c.h.b16 %v3101
    %v5086 = vunpack.c.l.b16 %v3102
    %v5087 = vunpack.c.h.b16 %v3102
    %v5088 = vunpack.c.l.b16 %v3103
    %v5089 = vunpack.c.h.b16 %v3103
    %v5090 = vunpack.c.l.b16 %v3104
    %v5091 = vunpack.c.h.b16 %v3104
    %v5092 = vunpack.c.l.b16 %v3105
    %v5093 = vunpack.c.h.b16 %v3105
    %v5094 = vunpack.c.l.b16 %v3106
    %v5095 = vunpack.c.h.b16 %v3106
    %v5096 = vunpack.c.l.b16 %v3107
    %v5097 = vunpack.c.h.b16 %v3107
    %v5098 = vunpack.c.l.b16 %v3108
    %v5099 = vunpack.c.h.b16 %v3108
    %v5100 = vunpack.c.l.b16 %v3109
    %v5101 = vunpack.c.h.b16 %v3109
    %v5102 = vunpack.c.l.b16 %v3110
    %v5103 = vunpack.c.h.b16 %v3110
    %v5104 = vunpack.c.l.b16 %v3111
    %v5105 = vunpack.c.h.b16 %v3111
    %v5106 = vunpack.c.l.b16 %v3112
    %v5107 = vunpack.c.h.b16 %v3112
    %v5108 = vunpack.c.l.b16 %v3113
    %v5109 = vunpack.c.h.b16 %v3113
    %v5110 = vunpack.c.l.b16 %v3114
    %v5111 = vunpack.c.h.b16 %v3114
    %v5112 = vunpack.c.l.b16 %v3115
    %v5113 = vunpack.c.h.b16 %v3115
    %v5114 = vunpack.c.l.b16 %v3116
    %v5115 = vunpack.c.h.b16 %v3116
    %v5116 = vunpack.c.l.b16 %v3117
    %v5117 = vunpack.c.h.b16 %v3117
    %v5118 = vunpack.c.l.b16 %v3118
    %v5119 = vunpack.c.h.b16 %v3118
    %v5120 = vunpack.c.l.b16 %v3119
    %v5121 = vunpack.c.h.b16 %v3119
    %v5122 = vunpack.c.l.b16 %v3120
    %v5123 = vunpack.c.h.b16 %v3120
    %v5124 = vunpack.c.l.b16 %v3121
    %v5125 = vunpack.c.h.b16 %v3121
    %v5126 = vunpack.c.l.b16 %v3122
    %v5127 = vunpack.c.h.b16 %v3122
    %v5128 = vunpack.c.l.b16 %v3123
    %v5129 = vunpack.c.h.b16 %v3123
    %v5130 = vunpack.c.l.b16 %v3124
    %v5131 = vunpack.c.h.b16 %v3124
    %v5132 = vunpack.c.l.b16 %v3125
    %v5133 = vunpack.c.h.b16 %v3125
    %v5134 = vunpack.c.l.b16 %v3126
    %v5135 = vunpack.c.h.b16 %v3126
    %v5136 = vunpack.c.l.b16 %v3127
    %v5137 = vunpack.c.h.b16 %v3127
    %v5138 = vunpack.c.l.b16 %v3128
    %v5139 = vunpack.c.h.b16 %v3128
    %v5140 = vunpack.c.l.b16 %v3129
    %v5141 = vunpack.c.h.b16 %v3129
    %v5142 = vunpack.c.l.b16 %v3130
    %v5143 = vunpack.c.h.b16 %v3130
    %v5144 = vunpack.c.l.b16 %v3131
    %v5145 = vunpack.c.h.b16 %v3131
    %v5146 = vunpack.c.l.b16 %v3132
    %v5147 = vunpack.c.h.b16 %v3132
    %v5148 = vunpack.c.l.b16 %v3133
    %v5149 = vunpack.c.h.b16 %v3133
    %v5150 = vunpack.c.l.b16 %v3134
    %v5151 = vunpack.c.h.b16 %v3134
    %v5152 = vunpack.c.l.b16 %v3135
    %v5153 = vunpack.c.h.b16 %v3135
    %v5154 = vunpack.c.l.b16 %v3136
    %v5155 = vunpack.c.h.b16 %v3136
    %v5156 = vunpack.c.l.b16 %v3137
    %v5157 = vunpack.c.h.b16 %v3137
    %v5158 = vunpack.c.l.b16 %v3138
    %v5159 = vunpack.c.h.b16 %v3138
    %v5160 = vunpack.c.l.b16 %v3139
    %v5161 = vunpack.c.h.b16 %v3139
    %v5162 = vunpack.c.l.b16 %v3140
    %v5163 = vunpack.c.h.b16 %v3140
    %v5164 = vunpack.c.l.b16 %v3141
    %v5165 = vunpack.c.h.b16 %v3141
    %v5166 = vunpack.c.l.b16 %v3142
    %v5167 = vunpack.c.h.b16 %v3142
    %v5168 = vunpack.c.l.b16 %v3143
    %v5169 = vunpack.c.h.b16 %v3143
    %v5170 = vunpack.c.l.b16 %v3144
    %v5171 = vunpack.c.h.b16 %v3144
    %v5172 = vunpack.c.l.b16 %v3145
    %v5173 = vunpack.c.h.b16 %v3145
    %v5174 = vunpack.c.l.b16 %v3146
    %v5175 = vunpack.c.h.b16 %v3146
    %v5176 = vunpack.c.l.b16 %v3147
    %v5177 = vunpack.c.h.b16 %v3147
    %v5178 = vunpack.c.l.b16 %v3148
    %v5179 = vunpack.c.h.b16 %v3148
    %v5180 = vunpack.c.l.b16 %v3149
    %v5181 = vunpack.c.h.b16 %v3149
    %v5182 = vunpack.c.l.b16 %v3150
    %v5183 = vunpack.c.h.b16 %v3150
    %v5184 = vunpack.c.l.b16 %v3151
    %v5185 = vunpack.c.h.b16 %v3151
    %v5186 = vunpack.c.l.b16 %v3152
    %v5187 = vunpack.c.h.b16 %v3152
    %v5188 = vunpack.c.l.b16 %v3153
    %v5189 = vunpack.c.h.b16 %v3153
    %v5190 = vunpack.c.l.b16 %v3154
    %v5191 = vunpack.c.h.b16 %v3154
    %v5192 = vunpack.c.l.b16 %v3155
    %v5193 = vunpack.c.h.b16 %v3155
    %v5194 = vunpack.c.l.b16 %v3156
    %v5195 = vunpack.c.h.b16 %v3156
    %v5196 = vunpack.c.l.b16 %v3157
    %v5197 = vunpack.c.h.b16 %v3157
    %v5198 = vunpack.c.l.b16 %v3158
    %v5199 = vunpack.c.h.b16 %v3158
    %v5200 = vunpack.c.l.b16 %v3159
    %v5201 = vunpack.c.h.b16 %v3159
    %v5202 = vunpack.c.l.b16 %v3160
    %v5203 = vunpack.c.h.b16 %v3160
    %v5204 = vunpack.c.l.b16 %v3161
    %v5205 = vunpack.c.h.b16 %v3161
    %v5206 = vunpack.c.l.b16 %v3162
    %v5207 = vunpack.c.h.b16 %v3162
    %v5208 = vunpack.c.l.b16 %v3163
    %v5209 = vunpack.c.h.b16 %v3163
    %v5210 = vunpack.c.l.b16 %v3164
    %v5211 = vunpack.c.h.b16 %v3164
    %v5212 = vunpack.c.l.b16 %v3165
    %v5213 = vunpack.c.h.b16 %v3165
    %v5214 = vunpack.c.l.b16 %v3166
    %v5215 = vunpack.c.h.b16 %v3166
    %v5216 = vunpack.c.l.b16 %v3167
    %v5217 = vunpack.c.h.b16 %v3167
    %v5218 = vunpack.c.l.b16 %v3168
    %v5219 = vunpack.c.h.b16 %v3168
    %v5220 = vunpack.c.l.b16 %v3169
    %v5221 = vunpack.c.h.b16 %v3169
    %v5222 = vunpack.c.l.b16 %v3170
    %v5223 = vunpack.c.h.b16 %v3170
    %v5224 = vunpack.c.l.b16 %v3171
    %v5225 = vunpack.c.h.b16 %v3171
    %v5226 = vunpack.c.l.b16 %v3172
    %v5227 = vunpack.c.h.b16 %v3172
    %v5228 = vunpack.c.l.b16 %v3173
    %v5229 = vunpack.c.h.b16 %v3173
    %v5230 = vunpack.c.l.b16 %v3174
    %v5231 = vunpack.c.h.b16 %v3174
    %v5232 = vunpack.c.l.b16 %v3175
    %v5233 = vunpack.c.h.b16 %v3175
    %v5234 = vunpack.c.l.b16 %v3176
    %v5235 = vunpack.c.h.b16 %v3176
    %v5236 = vunpack.c.l.b16 %v3177
    %v5237 = vunpack.c.h.b16 %v3177
    %v5238 = vunpack.c.l.b16 %v3178
    %v5239 = vunpack.c.h.b16 %v3178
    %v5240 = vunpack.c.l.b16 %v3179
    %v5241 = vunpack.c.h.b16 %v3179
    %v5242 = vunpack.c.l.b16 %v3180
    %v5243 = vunpack.c.h.b16 %v3180
    %v5244 = vunpack.c.l.b16 %v3181
    %v5245 = vunpack.c.h.b16 %v3181
    %v5246 = vunpack.c.l.b16 %v3182
    %v5247 = vunpack.c.h.b16 %v3182
    %v5248 = vunpack.c.l.b16 %v3183
    %v5249 = vunpack.c.h.b16 %v3183
    %v5250 = vunpack.c.l.b16 %v3184
    %v5251 = vunpack.c.h.b16 %v3184
    %v5252 = vunpack.c.l.b16 %v3185
    %v5253 = vunpack.c.h.b16 %v3185
    %v5254 = vunpack.c.l.b16 %v3186
    %v5255 = vunpack.c.h.b16 %v3186
    %v5256 = vunpack.c.l.b16 %v3187
    %v5257 = vunpack.c.h.b16 %v3187
    %v5258 = vunpack.c.l.b16 %v3188
    %v5259 = vunpack.c.h.b16 %v3188
    %v5260 = vunpack.c.l.b16 %v3189
    %v5261 = vunpack.c.h.b16 %v3189
    %v5262 = vunpack.c.l.b16 %v3190
    %v5263 = vunpack.c.h.b16 %v3190
    %v5264 = vunpack.c.l.b16 %v3191
    %v5265 = vunpack.c.h.b16 %v3191
    %v5266 = vunpack.c.l.b16 %v3192
    %v5267 = vunpack.c.h.b16 %v3192
    %v5268 = vunpack.c.l.b16 %v3193
    %v5269 = vunpack.c.h.b16 %v3193
    %v5270 = vunpack.c.l.b16 %v3194
    %v5271 = vunpack.c.h.b16 %v3194
    %v5272 = vunpack.c.l.b16 %v3195
    %v5273 = vunpack.c.h.b16 %v3195
    %v5274 = vunpack.c.l.b16 %v3196
    %v5275 = vunpack.c.h.b16 %v3196
    %v5276 = vunpack.c.l.b16 %v3197
    %v5277 = vunpack.c.h.b16 %v3197
    %v5278 = vunpack.c.l.b16 %v3198
    %v5279 = vunpack.c.h.b16 %v3198
    %v5280 = vunpack.c.l.b16 %v3199
    %v5281 = vunpack.c.h.b16 %v3199
    %v5282 = vunpack.c.l.b16 %v3200
    %v5283 = vunpack.c.h.b16 %v3200
    %v5284 = vunpack.c.l.b16 %v3201
    %v5285 = vunpack.c.h.b16 %v3201
    %v5286 = vunpack.c.l.b16 %v3202
    %v5287 = vunpack.c.h.b16 %v3202
    %v5288 = vunpack.c.l.b16 %v3203
    %v5289 = vunpack.c.h.b16 %v3203
    %v5290 = vunpack.c.l.b16 %v3204
    %v5291 = vunpack.c.h.b16 %v3204
    %v5292 = vunpack.c.l.b16 %v3205
    %v5293 = vunpack.c.h.b16 %v3205
    %v5294 = vunpack.c.l.b16 %v3206
    %v5295 = vunpack.c.h.b16 %v3206
    %v5296 = vunpack.c.l.b16 %v3207
    %v5297 = vunpack.c.h.b16 %v3207
    %v5298 = vunpack.c.l.b16 %v3208
    %v5299 = vunpack.c.h.b16 %v3208
    %v5300 = vunpack.c.l.b16 %v3209
    %v5301 = vunpack.c.h.b16 %v3209
    %v5302 = vunpack.c.l.b16 %v3210
    %v5303 = vunpack.c.h.b16 %v3210
    %v5304 = vunpack.c.l.b16 %v3211
    %v5305 = vunpack.c.h.b16 %v3211
    %v5306 = vunpack.c.l.b16 %v3212
    %v5307 = vunpack.c.h.b16 %v3212
    %v5308 = vunpack.c.l.b16 %v3213
    %v5309 = vunpack.c.h.b16 %v3213
    %v5310 = vunpack.c.l.b16 %v3214
    %v5311 = vunpack.c.h.b16 %v3214
    %v5312 = vunpack.c.l.b16 %v3215
    %v5313 = vunpack.c.h.b16 %v3215
    %v5314 = vunpack.c.l.b16 %v3216
    %v5315 = vunpack.c.h.b16 %v3216
    %v5316 = vunpack.c.l.b16 %v3217
    %v5317 = vunpack.c.h.b16 %v3217
    %v5318 = vunpack.c.l.b16 %v3218
    %v5319 = vunpack.c.h.b16 %v3218
    %v5320 = vunpack.c.l.b16 %v3219
    %v5321 = vunpack.c.h.b16 %v3219
    %v5322 = vunpack.c.l.b16 %v3220
    %v5323 = vunpack.c.h.b16 %v3220
    %v5324 = vunpack.c.l.b16 %v3221
    %v5325 = vunpack.c.h.b16 %v3221
    %v5326 = vunpack.c.l.b16 %v3222
    %v5327 = vunpack.c.h.b16 %v3222
    %v5328 = vunpack.c.l.b16 %v3223
    %v5329 = vunpack.c.h.b16 %v3223
    %v5330 = vunpack.c.l.b16 %v3224
    %v5331 = vunpack.c.h.b16 %v3224
    %v5332 = vunpack.c.l.b16 %v3225
    %v5333 = vunpack.c.h.b16 %v3225
    %v5334 = vunpack.c.l.b16 %v3226
    %v5335 = vunpack.c.h.b16 %v3226
    %v5336 = vunpack.c.l.b16 %v3227
    %v5337 = vunpack.c.h.b16 %v3227
    %v5338 = vunpack.c.l.b16 %v3228
    %v5339 = vunpack.c.h.b16 %v3228
    %v5340 = vunpack.c.l.b16 %v3229
    %v5341 = vunpack.c.h.b16 %v3229
    %v5342 = vunpack.c.l.b16 %v3230
    %v5343 = vunpack.c.h.b16 %v3230
    %v5344 = vunpack.c.l.b16 %v3231
    %v5345 = vunpack.c.h.b16 %v3231
    %v5346 = vunpack.c.l.b16 %v3232
    %v5347 = vunpack.c.h.b16 %v3232
    %v5348 = vunpack.c.l.b16 %v3233
    %v5349 = vunpack.c.h.b16 %v3233
    %v5350 = vunpack.c.l.b16 %v3234
    %v5351 = vunpack.c.h.b16 %v3234
    %v5352 = vunpack.c.l.b16 %v3235
    %v5353 = vunpack.c.h.b16 %v3235
    %v5354 = vunpack.c.l.b16 %v3236
    %v5355 = vunpack.c.h.b16 %v3236
    %v5356 = vunpack.c.l.b16 %v3237
    %v5357 = vunpack.c.h.b16 %v3237
    %v5358 = vunpack.c.l.b16 %v3238
    %v5359 = vunpack.c.h.b16 %v3238
    %v5360 = vunpack.c.l.b16 %v3239
    %v5361 = vunpack.c.h.b16 %v3239
    %v5362 = vunpack.c.l.b16 %v3240
    %v5363 = vunpack.c.h.b16 %v3240
    %v5364 = vunpack.c.l.b16 %v3241
    %v5365 = vunpack.c.h.b16 %v3241
    %v5366 = vunpack.c.l.b16 %v3242
    %v5367 = vunpack.c.h.b16 %v3242
    %v5368 = vunpack.c.l.b16 %v3243
    %v5369 = vunpack.c.h.b16 %v3243
    %v5370 = vunpack.c.l.b16 %v3244
    %v5371 = vunpack.c.h.b16 %v3244
    %v5372 = vunpack.c.l.b16 %v3245
    %v5373 = vunpack.c.h.b16 %v3245
    %v5374 = vunpack.c.l.b16 %v3246
    %v5375 = vunpack.c.h.b16 %v3246
    %v5376 = vunpack.c.l.b16 %v3247
    %v5377 = vunpack.c.h.b16 %v3247
    %v5378 = vunpack.c.l.b16 %v3248
    %v5379 = vunpack.c.h.b16 %v3248
    %v5380 = vunpack.c.l.b16 %v3249
    %v5381 = vunpack.c.h.b16 %v3249
    %v5382 = vunpack.c.l.b16 %v3250
    %v5383 = vunpack.c.h.b16 %v3250
    %v5384 = vunpack.c.l.b16 %v3251
    %v5385 = vunpack.c.h.b16 %v3251
    %v5386 = vunpack.c.l.b16 %v3252
    %v5387 = vunpack.c.h.b16 %v3252
    %v5388 = vunpack.c.l.b16 %v3253
    %v5389 = vunpack.c.h.b16 %v3253
    %v5390 = vunpack.c.l.b16 %v3254
    %v5391 = vunpack.c.h.b16 %v3254
    %v5392 = vunpack.c.l.b16 %v3255
    %v5393 = vunpack.c.h.b16 %v3255
    %v5394 = vunpack.c.l.b16 %v3256
    %v5395 = vunpack.c.h.b16 %v3256
    %v5396 = vunpack.c.l.b16 %v3257
    %v5397 = vunpack.c.h.b16 %v3257
    %v5398 = vunpack.c.l.b16 %v3258
    %v5399 = vunpack.c.h.b16 %v3258
    %v5400 = vunpack.c.l.b16 %v3259
    %v5401 = vunpack.c.h.b16 %v3259
    %v5402 = vunpack.c.l.b16 %v3260
    %v5403 = vunpack.c.h.b16 %v3260
    %v5404 = vunpack.c.l.b16 %v3261
    %v5405 = vunpack.c.h.b16 %v3261
    %v5406 = vunpack.c.l.b16 %v3262
    %v5407 = vunpack.c.h.b16 %v3262
    %v5408 = vunpack.c.l.b16 %v3263
    %v5409 = vunpack.c.h.b16 %v3263
    %v5410 = vunpack.c.l.b16 %v3264
    %v5411 = vunpack.c.h.b16 %v3264
    %v5412 = vunpack.c.l.b16 %v3265
    %v5413 = vunpack.c.h.b16 %v3265
    %v5414 = vunpack.c.l.b16 %v3266
    %v5415 = vunpack.c.h.b16 %v3266
    %v5416 = vunpack.c.l.b16 %v3267
    %v5417 = vunpack.c.h.b16 %v3267
    %v5418 = vunpack.c.l.b16 %v3268
    %v5419 = vunpack.c.h.b16 %v3268
    %v5420 = vunpack.c.l.b16 %v3269
    %v5421 = vunpack.c.h.b16 %v3269
    %v5422 = vunpack.c.l.b16 %v3270
    %v5423 = vunpack.c.h.b16 %v3270
    %v5424 = vunpack.c.l.b16 %v3271
    %v5425 = vunpack.c.h.b16 %v3271
    %v5426 = vunpack.c.l.b16 %v3272
    %v5427 = vunpack.c.h.b16 %v3272
    %v5428 = vunpack.c.l.b16 %v3273
    %v5429 = vunpack.c.h.b16 %v3273
    %v5430 = vunpack.c.l.b16 %v3274
    %v5431 = vunpack.c.h.b16 %v3274
    %v5432 = vunpack.c.l.b16 %v3275
    %v5433 = vunpack.c.h.b16 %v3275
    %v5434 = vunpack.c.l.b16 %v3276
    %v5435 = vunpack.c.h.b16 %v3276
    %v5436 = vunpack.c.l.b16 %v3277
    %v5437 = vunpack.c.h.b16 %v3277
    %v5438 = vunpack.c.l.b16 %v3278
    %v5439 = vunpack.c.h.b16 %v3278
    %v5440 = vunpack.c.l.b16 %v3279
    %v5441 = vunpack.c.h.b16 %v3279
    %v5442 = vunpack.c.l.b16 %v3280
    %v5443 = vunpack.c.h.b16 %v3280
    %v5444 = vunpack.c.l.b16 %v3281
    %v5445 = vunpack.c.h.b16 %v3281
    %v5446 = vunpack.c.l.b16 %v3282
    %v5447 = vunpack.c.h.b16 %v3282
    %v5448 = vunpack.c.l.b16 %v3283
    %v5449 = vunpack.c.h.b16 %v3283
    %v5450 = vunpack.c.l.b16 %v3284
    %v5451 = vunpack.c.h.b16 %v3284
    %v5452 = vunpack.c.l.b16 %v3285
    %v5453 = vunpack.c.h.b16 %v3285
    %v5454 = vunpack.c.l.b16 %v3286
    %v5455 = vunpack.c.h.b16 %v3286
    %v5456 = vunpack.c.l.b16 %v3287
    %v5457 = vunpack.c.h.b16 %v3287
    %v5458 = vunpack.c.l.b16 %v3288
    %v5459 = vunpack.c.h.b16 %v3288
    %v5460 = vunpack.c.l.b16 %v3289
    %v5461 = vunpack.c.h.b16 %v3289
    %v5462 = vunpack.c.l.b16 %v3290
    %v5463 = vunpack.c.h.b16 %v3290
    %v5464 = vunpack.c.l.b16 %v3291
    %v5465 = vunpack.c.h.b16 %v3291
    %v5466 = vunpack.c.l.b16 %v3292
    %v5467 = vunpack.c.h.b16 %v3292
    %v5468 = vunpack.c.l.b16 %v3293
    %v5469 = vunpack.c.h.b16 %v3293
    %v5470 = vunpack.c.l.b16 %v3294
    %v5471 = vunpack.c.h.b16 %v3294
    %v5472 = vunpack.c.l.b16 %v3295
    %v5473 = vunpack.c.h.b16 %v3295
    %v5474 = vunpack.c.l.b16 %v3296
    %v5475 = vunpack.c.h.b16 %v3296
    %v5476 = vunpack.c.l.b16 %v3297
    %v5477 = vunpack.c.h.b16 %v3297
    %v5478 = vunpack.c.l.b16 %v3298
    %v5479 = vunpack.c.h.b16 %v3298
    %v5480 = vunpack.c.l.b16 %v3299
    %v5481 = vunpack.c.h.b16 %v3299
    %v5482 = vunpack.c.l.b16 %v3300
    %v5483 = vunpack.c.h.b16 %v3300
    %v5484 = vunpack.c.l.b16 %v3301
    %v5485 = vunpack.c.h.b16 %v3301
    %v5486 = vunpack.c.l.b16 %v3302
    %v5487 = vunpack.c.h.b16 %v3302
    %v5488 = vunpack.c.l.b16 %v3303
    %v5489 = vunpack.c.h.b16 %v3303
    %v5490 = vunpack.c.l.b16 %v3304
    %v5491 = vunpack.c.h.b16 %v3304
    %v5492 = vunpack.c.l.b16 %v3305
    %v5493 = vunpack.c.h.b16 %v3305
    %v5494 = vunpack.c.l.b16 %v3306
    %v5495 = vunpack.c.h.b16 %v3306
    %v5496 = vunpack.c.l.b16 %v3307
    %v5497 = vunpack.c.h.b16 %v3307
    %v5498 = vunpack.c.l.b16 %v3308
    %v5499 = vunpack.c.h.b16 %v3308
    %v5500 = vunpack.c.l.b16 %v3309
    %v5501 = vunpack.c.h.b16 %v3309
    %v5502 = vunpack.c.l.b16 %v3310
    %v5503 = vunpack.c.h.b16 %v3310
    %v5504 = vunpack.c.l.b16 %v3311
    %v5505 = vunpack.c.h.b16 %v3311
    %v5506 = vunpack.c.l.b16 %v3312
    %v5507 = vunpack.c.h.b16 %v3312
    %v5508 = vunpack.c.l.b16 %v3313
    %v5509 = vunpack.c.h.b16 %v3313
    %v5510 = vunpack.c.l.b16 %v3314
    %v5511 = vunpack.c.h.b16 %v3314
    %v5512 = vunpack.c.l.b16 %v3315
    %v5513 = vunpack.c.h.b16 %v3315
    %v5514 = vunpack.c.l.b16 %v3316
    %v5515 = vunpack.c.h.b16 %v3316
    %v5516 = vunpack.c.l.b16 %v3317
    %v5517 = vunpack.c.h.b16 %v3317
    %v5518 = vunpack.c.l.b16 %v3318
    %v5519 = vunpack.c.h.b16 %v3318
    %v5520 = vunpack.c.l.b16 %v3319
    %v5521 = vunpack.c.h.b16 %v3319
    %v5522 = vunpack.c.l.b16 %v3320
    %v5523 = vunpack.c.h.b16 %v3320
    %v5524 = vunpack.c.l.b16 %v3321
    %v5525 = vunpack.c.h.b16 %v3321
    %v5526 = vunpack.c.l.b16 %v3322
    %v5527 = vunpack.c.h.b16 %v3322
    %v5528 = vunpack.c.l.b16 %v3323
    %v5529 = vunpack.c.h.b16 %v3323
    %v5530 = vunpack.c.l.b16 %v3324
    %v5531 = vunpack.c.h.b16 %v3324
    %v5532 = vunpack.c.l.b16 %v3325
    %v5533 = vunpack.c.h.b16 %v3325
    %v5534 = vunpack.c.l.b16 %v3326
    %v5535 = vunpack.c.h.b16 %v3326
    %v5536 = vunpack.c.l.b16 %v3327
    %v5537 = vunpack.c.h.b16 %v3327
    %v5538 = vunpack.c.l.b16 %v3328
    %v5539 = vunpack.c.h.b16 %v3328
    %v5540 = vunpack.c.l.b16 %v3329
    %v5541 = vunpack.c.h.b16 %v3329
    %v5542 = vunpack.c.l.b16 %v3330
    %v5543 = vunpack.c.h.b16 %v3330
    %v5544 = vunpack.c.l.b16 %v3331
    %v5545 = vunpack.c.h.b16 %v3331
    %v5546 = vunpack.c.l.b16 %v3332
    %v5547 = vunpack.c.h.b16 %v3332
    %v5548 = vunpack.c.l.b16 %v3333
    %v5549 = vunpack.c.h.b16 %v3333
    %v5550 = vunpack.c.l.b16 %v3334
    %v5551 = vunpack.c.h.b16 %v3334
    %v5552 = vunpack.c.l.b16 %v3335
    %v5553 = vunpack.c.h.b16 %v3335
    %v5554 = vunpack.c.l.b16 %v3336
    %v5555 = vunpack.c.h.b16 %v3336
    %v5556 = vunpack.c.l.b16 %v3337
    %v5557 = vunpack.c.h.b16 %v3337
    %v5558 = vunpack.c.l.b16 %v3338
    %v5559 = vunpack.c.h.b16 %v3338
    %v5560 = vunpack.c.l.b16 %v3339
    %v5561 = vunpack.c.h.b16 %v3339
    %v5562 = vunpack.c.l.b16 %v3340
    %v5563 = vunpack.c.h.b16 %v3340
    %v5564 = vunpack.c.l.b16 %v3341
    %v5565 = vunpack.c.h.b16 %v3341
    %v5566 = vunpack.c.l.b16 %v3342
    %v5567 = vunpack.c.h.b16 %v3342
    %v5568 = vunpack.c.l.b16 %v3343
    %v5569 = vunpack.c.h.b16 %v3343
    %v5570 = vunpack.c.l.b16 %v3344
    %v5571 = vunpack.c.h.b16 %v3344
    %v5572 = vunpack.c.l.b16 %v3345
    %v5573 = vunpack.c.h.b16 %v3345
    %v5574 = vunpack.c.l.b16 %v3346
    %v5575 = vunpack.c.h.b16 %v3346
    %v5576 = vunpack.c.l.b16 %v3347
    %v5577 = vunpack.c.h.b16 %v3347
    %v5578 = vunpack.c.l.b16 %v3348
    %v5579 = vunpack.c.h.b16 %v3348
    %v5580 = vunpack.c.l.b16 %v3349
    %v5581 = vunpack.c.h.b16 %v3349
    %v5582 = vunpack.c.l.b16 %v3350
    %v5583 = vunpack.c.h.b16 %v3350
    %v5584 = vunpack.c.l.b16 %v3351
    %v5585 = vunpack.c.h.b16 %v3351
    %v5586 = vunpack.c.l.b16 %v3352
    %v5587 = vunpack.c.h.b16 %v3352
    %v5588 = vunpack.c.l.b16 %v3353
    %v5589 = vunpack.c.h.b16 %v3353
    %v5590 = vunpack.c.l.b16 %v3354
    %v5591 = vunpack.c.h.b16 %v3354
    %v5592 = vunpack.c.l.b16 %v3355
    %v5593 = vunpack.c.h.b16 %v3355
    %v5594 = vunpack.c.l.b16 %v3356
    %v5595 = vunpack.c.h.b16 %v3356
    %v5596 = vunpack.c.l.b16 %v3357
    %v5597 = vunpack.c.h.b16 %v3357
    %v5598 = vunpack.c.l.b16 %v3358
    %v5599 = vunpack.c.h.b16 %v3358
    %v5600 = vunpack.c.l.b16 %v3359
    %v5601 = vunpack.c.h.b16 %v3359
    %v5602 = vunpack.c.l.b16 %v3360
    %v5603 = vunpack.c.h.b16 %v3360
    %v5604 = vunpack.c.l.b16 %v3361
    %v5605 = vunpack.c.h.b16 %v3361
    %v5606 = vunpack.c.l.b16 %v3362
    %v5607 = vunpack.c.h.b16 %v3362
    %v5608 = vunpack.c.l.b16 %v3363
    %v5609 = vunpack.c.h.b16 %v3363
    %v5610 = vunpack.c.l.b16 %v3364
    %v5611 = vunpack.c.h.b16 %v3364
    %v5612 = vunpack.c.l.b16 %v3365
    %v5613 = vunpack.c.h.b16 %v3365
    %v5614 = vunpack.c.l.b16 %v3366
    %v5615 = vunpack.c.h.b16 %v3366
    %v5616 = vunpack.c.l.b16 %v3367
    %v5617 = vunpack.c.h.b16 %v3367
    %v5618 = vunpack.c.l.b16 %v3368
    %v5619 = vunpack.c.h.b16 %v3368
    %v5620 = vunpack.c.l.b16 %v3369
    %v5621 = vunpack.c.h.b16 %v3369
    %v5622 = vunpack.c.l.b16 %v3370
    %v5623 = vunpack.c.h.b16 %v3370
    %v5624 = vunpack.c.l.b16 %v3371
    %v5625 = vunpack.c.h.b16 %v3371
    %v5626 = vunpack.c.l.b16 %v3372
    %v5627 = vunpack.c.h.b16 %v3372
    %v5628 = vunpack.c.l.b16 %v3373
    %v5629 = vunpack.c.h.b16 %v3373
    %v5630 = vunpack.c.l.b16 %v3374
    %v5631 = vunpack.c.h.b16 %v3374
    %v5632 = vunpack.c.l.b16 %v3375
    %v5633 = vunpack.c.h.b16 %v3375
    %v5634 = vunpack.c.l.b16 %v3376
    %v5635 = vunpack.c.h.b16 %v3376
    %v5636 = vunpack.c.l.b16 %v3377
    %v5637 = vunpack.c.h.b16 %v3377
    %v5638 = vunpack.c.l.b16 %v3378
    %v5639 = vunpack.c.h.b16 %v3378
    %v5640 = vunpack.c.l.b16 %v3379
    %v5641 = vunpack.c.h.b16 %v3379
    %v5642 = vunpack.c.l.b16 %v3380
    %v5643 = vunpack.c.h.b16 %v3380
    %v5644 = vunpack.c.l.b16 %v3381
    %v5645 = vunpack.c.h.b16 %v3381
    %v5646 = vunpack.c.l.b16 %v3382
    %v5647 = vunpack.c.h.b16 %v3382
    %v5648 = vunpack.c.l.b16 %v3383
    %v5649 = vunpack.c.h.b16 %v3383
    %v5650 = vunpack.c.l.b16 %v3384
    %v5651 = vunpack.c.h.b16 %v3384
    %v5652 = vunpack.c.l.b16 %v3385
    %v5653 = vunpack.c.h.b16 %v3385
    %v5654 = vunpack.c.l.b16 %v3386
    %v5655 = vunpack.c.h.b16 %v3386
    %v5656 = vunpack.c.l.b16 %v3387
    %v5657 = vunpack.c.h.b16 %v3387
    %v5658 = vunpack.c.l.b16 %v3388
    %v5659 = vunpack.c.h.b16 %v3388
    %v5660 = vunpack.c.l.b16 %v3389
    %v5661 = vunpack.c.h.b16 %v3389
    %v5662 = vunpack.c.l.b16 %v3390
    %v5663 = vunpack.c.h.b16 %v3390
    %v5664 = vunpack.c.l.b16 %v3391
    %v5665 = vunpack.c.h.b16 %v3391
    %v5666 = vunpack.c.l.b16 %v3392
    %v5667 = vunpack.c.h.b16 %v3392
    %v5668 = vunpack.c.l.b16 %v3393
    %v5669 = vunpack.c.h.b16 %v3393
    %v5670 = vunpack.c.l.b16 %v3394
    %v5671 = vunpack.c.h.b16 %v3394
    %v5672 = vunpack.c.l.b16 %v3395
    %v5673 = vunpack.c.h.b16 %v3395
    %v5674 = vunpack.c.l.b16 %v3396
    %v5675 = vunpack.c.h.b16 %v3396
    %v5676 = vunpack.c.l.b16 %v3397
    %v5677 = vunpack.c.h.b16 %v3397
    %v5678 = vunpack.c.l.b16 %v3398
    %v5679 = vunpack.c.h.b16 %v3398
    %v5680 = vunpack.c.l.b16 %v3399
    %v5681 = vunpack.c.h.b16 %v3399
    %v5682 = vunpack.c.l.b16 %v3400
    %v5683 = vunpack.c.h.b16 %v3400
    %v5684 = vunpack.c.l.b16 %v3401
    %v5685 = vunpack.c.h.b16 %v3401
    %v5686 = vunpack.c.l.b16 %v3402
    %v5687 = vunpack.c.h.b16 %v3402
    %v5688 = vunpack.c.l.b16 %v3403
    %v5689 = vunpack.c.h.b16 %v3403
    %v5690 = vunpack.c.l.b16 %v3404
    %v5691 = vunpack.c.h.b16 %v3404
    %v5692 = vunpack.c.l.b16 %v3405
    %v5693 = vunpack.c.h.b16 %v3405
    %v5694 = vunpack.c.l.b16 %v3406
    %v5695 = vunpack.c.h.b16 %v3406
    %v5696 = vunpack.c.l.b16 %v3407
    %v5697 = vunpack.c.h.b16 %v3407
    %v5698 = vunpack.c.l.b16 %v3408
    %v5699 = vunpack.c.h.b16 %v3408
    %v5700 = vunpack.c.l.b16 %v3409
    %v5701 = vunpack.c.h.b16 %v3409
    %v5702 = vunpack.c.l.b16 %v3410
    %v5703 = vunpack.c.h.b16 %v3410
    %v5704 = vunpack.c.l.b16 %v3411
    %v5705 = vunpack.c.h.b16 %v3411
    %v5706 = vunpack.c.l.b16 %v3412
    %v5707 = vunpack.c.h.b16 %v3412
    %v5708 = vunpack.c.l.b16 %v3413
    %v5709 = vunpack.c.h.b16 %v3413
    %v5710 = vunpack.c.l.b16 %v3414
    %v5711 = vunpack.c.h.b16 %v3414
    %v5712 = vunpack.c.l.b16 %v3415
    %v5713 = vunpack.c.h.b16 %v3415
    %v5714 = vunpack.c.l.b16 %v3416
    %v5715 = vunpack.c.h.b16 %v3416
    %v5716 = vunpack.c.l.b16 %v3417
    %v5717 = vunpack.c.h.b16 %v3417
    %v5718 = vunpack.c.l.b16 %v3418
    %v5719 = vunpack.c.h.b16 %v3418
    %v5720 = vunpack.c.l.b16 %v3419
    %v5721 = vunpack.c.h.b16 %v3419
    %v5722 = vunpack.c.l.b16 %v3420
    %v5723 = vunpack.c.h.b16 %v3420
    %v5724 = vunpack.c.l.b16 %v3421
    %v5725 = vunpack.c.h.b16 %v3421
    %v5726 = vunpack.c.l.b16 %v3422
    %v5727 = vunpack.c.h.b16 %v3422
    %v5728 = vunpack.c.l.b16 %v3423
    %v5729 = vunpack.c.h.b16 %v3423
    %v5730 = vunpack.c.l.b16 %v3424
    %v5731 = vunpack.c.h.b16 %v3424
    %v5732 = vunpack.c.l.b16 %v3425
    %v5733 = vunpack.c.h.b16 %v3425
    %v5734 = vunpack.c.l.b16 %v3426
    %v5735 = vunpack.c.h.b16 %v3426
    %v5736 = vunpack.c.l.b16 %v3427
    %v5737 = vunpack.c.h.b16 %v3427
    %v5738 = vunpack.c.l.b16 %v3428
    %v5739 = vunpack.c.h.b16 %v3428
    %v5740 = vunpack.c.l.b16 %v3429
    %v5741 = vunpack.c.h.b16 %v3429
    %v5742 = vunpack.c.l.b16 %v3430
    %v5743 = vunpack.c.h.b16 %v3430
    %v5744 = vunpack.c.l.b16 %v3431
    %v5745 = vunpack.c.h.b16 %v3431
    %v5746 = vunpack.c.l.b16 %v3432
    %v5747 = vunpack.c.h.b16 %v3432
    %v5748 = vunpack.c.l.b16 %v3433
    %v5749 = vunpack.c.h.b16 %v3433
    %v5750 = vunpack.c.l.b16 %v3434
    %v5751 = vunpack.c.h.b16 %v3434
    %v5752 = vunpack.c.l.b16 %v3435
    %v5753 = vunpack.c.h.b16 %v3435
    %v5754 = vunpack.c.l.b16 %v3436
    %v5755 = vunpack.c.h.b16 %v3436
    %v5756 = vunpack.c.l.b16 %v3437
    %v5757 = vunpack.c.h.b16 %v3437
    %v5758 = vunpack.c.l.b16 %v3438
    %v5759 = vunpack.c.h.b16 %v3438
    %v5760 = vunpack.c.l.b16 %v3439
    %v5761 = vunpack.c.h.b16 %v3439
    %v5762 = vunpack.c.l.b16 %v3440
    %v5763 = vunpack.c.h.b16 %v3440
    %v5764 = vunpack.c.l.b16 %v3441
    %v5765 = vunpack.c.h.b16 %v3441
    %v5766 = vunpack.c.l.b16 %v3442
    %v5767 = vunpack.c.h.b16 %v3442
    %v5768 = vunpack.c.l.b16 %v3443
    %v5769 = vunpack.c.h.b16 %v3443
    %v5770 = vunpack.c.l.b16 %v3444
    %v5771 = vunpack.c.h.b16 %v3444
    %v5772 = vunpack.c.l.b16 %v3445
    %v5773 = vunpack.c.h.b16 %v3445
    %v5774 = vunpack.c.l.b16 %v3446
    %v5775 = vunpack.c.h.b16 %v3446
    %v5776 = vunpack.c.l.b16 %v3447
    %v5777 = vunpack.c.h.b16 %v3447
    %v5778 = vunpack.c.l.b16 %v3448
    %v5779 = vunpack.c.h.b16 %v3448
    %v5780 = vunpack.c.l.b16 %v3449
    %v5781 = vunpack.c.h.b16 %v3449
    %v5782 = vunpack.c.l.b16 %v3450
    %v5783 = vunpack.c.h.b16 %v3450
    %v5784 = vunpack.c.l.b16 %v3451
    %v5785 = vunpack.c.h.b16 %v3451
    %v5786 = vunpack.c.l.b16 %v3452
    %v5787 = vunpack.c.h.b16 %v3452
    %v5788 = vunpack.c.l.b16 %v3453
    %v5789 = vunpack.c.h.b16 %v3453
    %v5790 = vunpack.c.l.b16 %v3454
    %v5791 = vunpack.c.h.b16 %v3454
    %v5792 = vunpack.c.l.b16 %v3455
    %v5793 = vunpack.c.h.b16 %v3455
    %v5794 = vunpack.c.l.b16 %v3456
    %v5795 = vunpack.c.h.b16 %v3456
    %v5796 = vunpack.c.l.b16 %v3457
    %v5797 = vunpack.c.h.b16 %v3457
    %v5798 = vunpack.c.l.b16 %v3458
    %v5799 = vunpack.c.h.b16 %v3458
    %v5800 = vunpack.c.l.b16 %v3459
    %v5801 = vunpack.c.h.b16 %v3459
    %v5802 = vunpack.c.l.b16 %v3460
    %v5803 = vunpack.c.h.b16 %v3460
    %v5804 = vunpack.c.l.b16 %v3461
    %v5805 = vunpack.c.h.b16 %v3461
    %v5806 = vunpack.c.l.b16 %v3462
    %v5807 = vunpack.c.h.b16 %v3462
    %v5808 = vunpack.c.l.b16 %v3463
    %v5809 = vunpack.c.h.b16 %v3463
    %v5810 = vunpack.c.l.b16 %v3464
    %v5811 = vunpack.c.h.b16 %v3464
    %v5812 = vunpack.c.l.b16 %v3465
    %v5813 = vunpack.c.h.b16 %v3465
    %v5814 = vunpack.c.l.b16 %v3466
    %v5815 = vunpack.c.h.b16 %v3466
    %v5816 = vunpack.c.l.b16 %v3467
    %v5817 = vunpack.c.h.b16 %v3467
    %v5818 = vunpack.c.l.b16 %v3468
    %v5819 = vunpack.c.h.b16 %v3468
    %v5820 = vunpack.c.l.b16 %v3469
    %v5821 = vunpack.c.h.b16 %v3469
    %v5822 = vunpack.c.l.b16 %v3470
    %v5823 = vunpack.c.h.b16 %v3470
    %v5824 = vunpack.c.l.b16 %v3471
    %v5825 = vunpack.c.h.b16 %v3471
    %v5826 = vunpack.c.l.b16 %v3472
    %v5827 = vunpack.c.h.b16 %v3472
    %v5828 = vunpack.c.l.b16 %v3473
    %v5829 = vunpack.c.h.b16 %v3473
    %v5830 = vunpack.c.l.b16 %v3474
    %v5831 = vunpack.c.h.b16 %v3474
    %v5832 = vunpack.c.l.b16 %v3475
    %v5833 = vunpack.c.h.b16 %v3475
    %v5834 = vunpack.c.l.b16 %v3476
    %v5835 = vunpack.c.h.b16 %v3476
    %v5836 = vunpack.c.l.b16 %v3477
    %v5837 = vunpack.c.h.b16 %v3477
    %v5838 = vunpack.c.l.b16 %v3478
    %v5839 = vunpack.c.h.b16 %v3478
    %v5840 = vunpack.c.l.b16 %v3479
    %v5841 = vunpack.c.h.b16 %v3479
    %v5842 = vunpack.c.l.b16 %v3480
    %v5843 = vunpack.c.h.b16 %v3480
    %v5844 = vunpack.c.l.b16 %v3481
    %v5845 = vunpack.c.h.b16 %v3481
    %v5846 = vunpack.c.l.b16 %v3482
    %v5847 = vunpack.c.h.b16 %v3482
    %v5848 = vunpack.c.l.b16 %v3483
    %v5849 = vunpack.c.h.b16 %v3483
    %v5850 = vunpack.c.l.b16 %v3484
    %v5851 = vunpack.c.h.b16 %v3484
    %v5852 = vunpack.c.l.b16 %v3485
    %v5853 = vunpack.c.h.b16 %v3485
    %v5854 = vpack.c.b16 %v4330, %v4318
    %v5855 = vpack.c.b16 %v4331, %v4319
    %v5856 = vpack.c.b16 %v4332, %v4320
    %v5857 = vpack.c.b16 %v4333, %v4321
    %v5858 = vpack.c.b16 %v4334, %v4322
    %v5859 = vpack.c.b16 %v4335, %v4323
    %v5860 = vpack.c.b16 %v4336, %v4324
    %v5861 = vpack.c.b16 %v4337, %v4325
    %v5862 = vpack.c.b16 %v4338, %v4326
    %v5863 = vpack.c.b16 %v4339, %v4327
    %v5864 = vpack.c.b16 %v4340, %v4328
    %v5865 = vpack.c.b16 %v4341, %v4329
    %v5866 = vpack.c.b16 %v4354, %v4342
    %v5867 = vpack.c.b16 %v4355, %v4343
    %v5868 = vpack.c.b16 %v4356, %v4344
    %v5869 = vpack.c.b16 %v4357, %v4345
    %v5870 = vpack.c.b16 %v4358, %v4346
    %v5871 = vpack.c.b16 %v4359, %v4347
    %v5872 = vpack.c.b16 %v4360, %v4348
    %v5873 = vpack.c.b16 %v4361, %v4349
    %v5874 = vpack.c.b16 %v4362, %v4350
    %v5875 = vpack.c.b16 %v4363, %v4351
    %v5876 = vpack.c.b16 %v4364, %v4352
    %v5877 = vpack.c.b16 %v4365, %v4353
    %v5878 = vpack.c.b16 %v4378, %v4366
    %v5879 = vpack.c.b16 %v4379, %v4367
    %v5880 = vpack.c.b16 %v4380, %v4368
    %v5881 = vpack.c.b16 %v4381, %v4369
    %v5882 = vpack.c.b16 %v4382, %v4370
    %v5883 = vpack.c.b16 %v4383, %v4371
    %v5884 = vpack.c.b16 %v4384, %v4372
    %v5885 = vpack.c.b16 %v4385, %v4373
    %v5886 = vpack.c.b16 %v4386, %v4374
    %v5887 = vpack.c.b16 %v4387, %v4375
    %v5888 = vpack.c.b16 %v4388, %v4376
    %v5889 = vpack.c.b16 %v4389, %v4377
    %v5890 = vpack.c.b16 %v4402, %v4390
    %v5891 = vpack.c.b16 %v4403, %v4391
    %v5892 = vpack.c.b16 %v4404, %v4392
    %v5893 = vpack.c.b16 %v4405, %v4393
    %v5894 = vpack.c.b16 %v4406, %v4394
    %v5895 = vpack.c.b16 %v4407, %v4395
    %v5896 = vpack.c.b16 %v4408, %v4396
    %v5897 = vpack.c.b16 %v4409, %v4397
    %v5898 = vpack.c.b16 %v4410, %v4398
    %v5899 = vpack.c.b16 %v4411, %v4399
    %v5900 = vpack.c.b16 %v4412, %v4400
    %v5901 = vpack.c.b16 %v4413, %v4401
    %v5902 = vpack.c.b16 %v4426, %v4414
    %v5903 = vpack.c.b16 %v4427, %v4415
    %v5904 = vpack.c.b16 %v4428, %v4416
    %v5905 = vpack.c.b16 %v4429, %v4417
    %v5906 = vpack.c.b16 %v4430, %v4418
    %v5907 = vpack.c.b16 %v4431, %v4419
    %v5908 = vpack.c.b16 %v4432, %v4420
    %v5909 = vpack.c.b16 %v4433, %v4421
    %v5910 = vpack.c.b16 %v4434, %v4422
    %v5911 = vpack.c.b16 %v4435, %v4423
    %v5912 = vpack.c.b16 %v4436, %v4424
    %v5913 = vpack.c.b16 %v4437, %v4425
    %v5914 = vpack.c.b16 %v4450, %v4438
    %v5915 = vpack.c.b16 %v4451, %v4439
    %v5916 = vpack.c.b16 %v4452, %v4440
    %v5917 = vpack.c.b16 %v4453, %v4441
    %v5918 = vpack.c.b16 %v4454, %v4442
    %v5919 = vpack.c.b16 %v4455, %v4443
    %v5920 = vpack.c.b16 %v4456, %v4444
    %v5921 = vpack.c.b16 %v4457, %v4445
    %v5922 = vpack.c.b16 %v4458, %v4446
    %v5923 = vpack.c.b16 %v4459, %v4447
    %v5924 = vpack.c.b16 %v4460, %v4448
    %v5925 = vpack.c.b16 %v4461, %v4449
    %v5926 = vpack.c.b16 %v4474, %v4462
    %v5927 = vpack.c.b16 %v4475, %v4463
    %v5928 = vpack.c.b16 %v4476, %v4464
    %v5929 = vpack.c.b16 %v4477, %v4465
    %v5930 = vpack.c.b16 %v4478, %v4466
    %v5931 = vpack.c.b16 %v4479, %v4467
    %v5932 = vpack.c.b16 %v4480, %v4468
    %v5933 = vpack.c.b16 %v4481, %v4469
    %v5934 = vpack.c.b16 %v4482, %v4470
    %v5935 = vpack.c.b16 %v4483, %v4471
    %v5936 = vpack.c.b16 %v4484, %v4472
    %v5937 = vpack.c.b16 %v4485, %v4473
    %v5938 = vpack.c.b16 %v4498, %v4486
    %v5939 = vpack.c.b16 %v4499, %v4487
    %v5940 = vpack.c.b16 %v4500, %v4488
    %v5941 = vpack.c.b16 %v4501, %v4489
    %v5942 = vpack.c.b16 %v4502, %v4490
    %v5943 = vpack.c.b16 %v4503, %v4491
    %v5944 = vpack.c.b16 %v4504, %v4492
    %v5945 = vpack.c.b16 %v4505, %v4493
    %v5946 = vpack.c.b16 %v4506, %v4494
    %v5947 = vpack.c.b16 %v4507, %v4495
    %v5948 = vpack.c.b16 %v4508, %v4496
    %v5949 = vpack.c.b16 %v4509, %v4497
    %v5950 = vpack.c.b16 %v4522, %v4510
    %v5951 = vpack.c.b16 %v4523, %v4511
    %v5952 = vpack.c.b16 %v4524, %v4512
    %v5953 = vpack.c.b16 %v4525, %v4513
    %v5954 = vpack.c.b16 %v4526, %v4514
    %v5955 = vpack.c.b16 %v4527, %v4515
    %v5956 = vpack.c.b16 %v4528, %v4516
    %v5957 = vpack.c.b16 %v4529, %v4517
    %v5958 = vpack.c.b16 %v4530, %v4518
    %v5959 = vpack.c.b16 %v4531, %v4519
    %v5960 = vpack.c.b16 %v4532, %v4520
    %v5961 = vpack.c.b16 %v4533, %v4521
    %v5962 = vpack.c.b16 %v4546, %v4534
    %v5963 = vpack.c.b16 %v4547, %v4535
    %v5964 = vpack.c.b16 %v4548, %v4536
    %v5965 = vpack.c.b16 %v4549, %v4537
    %v5966 = vpack.c.b16 %v4550, %v4538
    %v5967 = vpack.c.b16 %v4551, %v4539
    %v5968 = vpack.c.b16 %v4552, %v4540
    %v5969 = vpack.c.b16 %v4553, %v4541
    %v5970 = vpack.c.b16 %v4554, %v4542
    %v5971 = vpack.c.b16 %v4555, %v4543
    %v5972 = vpack.c.b16 %v4556, %v4544
    %v5973 = vpack.c.b16 %v4557, %v4545
    %v5974 = vpack.c.b16 %v4570, %v4558
    %v5975 = vpack.c.b16 %v4571, %v4559
    %v5976 = vpack.c.b16 %v4572, %v4560
    %v5977 = vpack.c.b16 %v4573, %v4561
    %v5978 = vpack.c.b16 %v4574, %v4562
    %v5979 = vpack.c.b16 %v4575, %v4563
    %v5980 = vpack.c.b16 %v4576, %v4564
    %v5981 = vpack.c.b16 %v4577, %v4565
    %v5982 = vpack.c.b16 %v4578, %v4566
    %v5983 = vpack.c.b16 %v4579, %v4567
    %v5984 = vpack.c.b16 %v4580, %v4568
    %v5985 = vpack.c.b16 %v4581, %v4569
    %v5986 = vpack.c.b16 %v4594, %v4582
    %v5987 = vpack.c.b16 %v4595, %v4583
    %v5988 = vpack.c.b16 %v4596, %v4584
    %v5989 = vpack.c.b16 %v4597, %v4585
    %v5990 = vpack.c.b16 %v4598, %v4586
    %v5991 = vpack.c.b16 %v4599, %v4587
    %v5992 = vpack.c.b16 %v4600, %v4588
    %v5993 = vpack.c.b16 %v4601, %v4589
    %v5994 = vpack.c.b16 %v4602, %v4590
    %v5995 = vpack.c.b16 %v4603, %v4591
    %v5996 = vpack.c.b16 %v4604, %v4592
    %v5997 = vpack.c.b16 %v4605, %v4593
    %v5998 = vpack.c.b16 %v4618, %v4606
    %v5999 = vpack.c.b16 %v4619, %v4607
    %v6000 = vpack.c.b16 %v4620, %v4608
    %v6001 = vpack.c.b16 %v4621, %v4609
    %v6002 = vpack.c.b16 %v4622, %v4610
    %v6003 = vpack.c.b16 %v4623, %v4611
    %v6004 = vpack.c.b16 %v4624, %v4612
    %v6005 = vpack.c.b16 %v4625, %v4613
    %v6006 = vpack.c.b16 %v4626, %v4614
    %v6007 = vpack.c.b16 %v4627, %v4615
    %v6008 = vpack.c.b16 %v4628, %v4616
    %v6009 = vpack.c.b16 %v4629, %v4617
    %v6010 = vpack.c.b16 %v4642, %v4630
    %v6011 = vpack.c.b16 %v4643, %v4631
    %v6012 = vpack.c.b16 %v4644, %v4632
    %v6013 = vpack.c.b16 %v4645, %v4633
    %v6014 = vpack.c.b16 %v4646, %v4634
    %v6015 = vpack.c.b16 %v4647, %v4635
    %v6016 = vpack.c.b16 %v4648, %v4636
    %v6017 = vpack.c.b16 %v4649, %v4637
    %v6018 = vpack.c.b16 %v4650, %v4638
    %v6019 = vpack.c.b16 %v4651, %v4639
    %v6020 = vpack.c.b16 %v4652, %v4640
    %v6021 = vpack.c.b16 %v4653, %v4641
    %v6022 = vpack.c.b16 %v4666, %v4654
    %v6023 = vpack.c.b16 %v4667, %v4655
    %v6024 = vpack.c.b16 %v4668, %v4656
    %v6025 = vpack.c.b16 %v4669, %v4657
    %v6026 = vpack.c.b16 %v4670, %v4658
    %v6027 = vpack.c.b16 %v4671, %v4659
    %v6028 = vpack.c.b16 %v4672, %v4660
    %v6029 = vpack.c.b16 %v4673, %v4661
    %v6030 = vpack.c.b16 %v4674, %v4662
    %v6031 = vpack.c.b16 %v4675, %v4663
    %v6032 = vpack.c.b16 %v4676, %v4664
    %v6033 = vpack.c.b16 %v4677, %v4665
    %v6034 = vpack.c.b16 %v4690, %v4678
    %v6035 = vpack.c.b16 %v4691, %v4679
    %v6036 = vpack.c.b16 %v4692, %v4680
    %v6037 = vpack.c.b16 %v4693, %v4681
    %v6038 = vpack.c.b16 %v4694, %v4682
    %v6039 = vpack.c.b16 %v4695, %v4683
    %v6040 = vpack.c.b16 %v4696, %v4684
    %v6041 = vpack.c.b16 %v4697, %v4685
    %v6042 = vpack.c.b16 %v4698, %v4686
    %v6043 = vpack.c.b16 %v4699, %v4687
    %v6044 = vpack.c.b16 %v4700, %v4688
    %v6045 = vpack.c.b16 %v4701, %v4689
    %v6046 = vpack.c.b16 %v4714, %v4702
    %v6047 = vpack.c.b16 %v4715, %v4703
    %v6048 = vpack.c.b16 %v4716, %v4704
    %v6049 = vpack.c.b16 %v4717, %v4705
    %v6050 = vpack.c.b16 %v4718, %v4706
    %v6051 = vpack.c.b16 %v4719, %v4707
    %v6052 = vpack.c.b16 %v4720, %v4708
    %v6053 = vpack.c.b16 %v4721, %v4709
    %v6054 = vpack.c.b16 %v4722, %v4710
    %v6055 = vpack.c.b16 %v4723, %v4711
    %v6056 = vpack.c.b16 %v4724, %v4712
    %v6057 = vpack.c.b16 %v4725, %v4713
    %v6058 = vpack.c.b16 %v4738, %v4726
    %v6059 = vpack.c.b16 %v4739, %v4727
    %v6060 = vpack.c.b16 %v4740, %v4728
    %v6061 = vpack.c.b16 %v4741, %v4729
    %v6062 = vpack.c.b16 %v4742, %v4730
    %v6063 = vpack.c.b16 %v4743, %v4731
    %v6064 = vpack.c.b16 %v4744, %v4732
    %v6065 = vpack.c.b16 %v4745, %v4733
    %v6066 = vpack.c.b16 %v4746, %v4734
    %v6067 = vpack.c.b16 %v4747, %v4735
    %v6068 = vpack.c.b16 %v4748, %v4736
    %v6069 = vpack.c.b16 %v4749, %v4737
    %v6070 = vpack.c.b16 %v4762, %v4750
    %v6071 = vpack.c.b16 %v4763, %v4751
    %v6072 = vpack.c.b16 %v4764, %v4752
    %v6073 = vpack.c.b16 %v4765, %v4753
    %v6074 = vpack.c.b16 %v4766, %v4754
    %v6075 = vpack.c.b16 %v4767, %v4755
    %v6076 = vpack.c.b16 %v4768, %v4756
    %v6077 = vpack.c.b16 %v4769, %v4757
    %v6078 = vpack.c.b16 %v4770, %v4758
    %v6079 = vpack.c.b16 %v4771, %v4759
    %v6080 = vpack.c.b16 %v4772, %v4760
    %v6081 = vpack.c.b16 %v4773, %v4761
    %v6082 = vpack.c.b16 %v4786, %v4774
    %v6083 = vpack.c.b16 %v4787, %v4775
    %v6084 = vpack.c.b16 %v4788, %v4776
    %v6085 = vpack.c.b16 %v4789, %v4777
    %v6086 = vpack.c.b16 %v4790, %v4778
    %v6087 = vpack.c.b16 %v4791, %v4779
    %v6088 = vpack.c.b16 %v4792, %v4780
    %v6089 = vpack.c.b16 %v4793, %v4781
    %v6090 = vpack.c.b16 %v4794, %v4782
    %v6091 = vpack.c.b16 %v4795, %v4783
    %v6092 = vpack.c.b16 %v4796, %v4784
    %v6093 = vpack.c.b16 %v4797, %v4785
    %v6094 = vpack.c.b16 %v4810, %v4798
    %v6095 = vpack.c.b16 %v4811, %v4799
    %v6096 = vpack.c.b16 %v4812, %v4800
    %v6097 = vpack.c.b16 %v4813, %v4801
    %v6098 = vpack.c.b16 %v4814, %v4802
    %v6099 = vpack.c.b16 %v4815, %v4803
    %v6100 = vpack.c.b16 %v4816, %v4804
    %v6101 = vpack.c.b16 %v4817, %v4805
    %v6102 = vpack.c.b16 %v4818, %v4806
    %v6103 = vpack.c.b16 %v4819, %v4807
    %v6104 = vpack.c.b16 %v4820, %v4808
    %v6105 = vpack.c.b16 %v4821, %v4809
    %v6106 = vpack.c.b16 %v4834, %v4822
    %v6107 = vpack.c.b16 %v4835, %v4823
    %v6108 = vpack.c.b16 %v4836, %v4824
    %v6109 = vpack.c.b16 %v4837, %v4825
    %v6110 = vpack.c.b16 %v4838, %v4826
    %v6111 = vpack.c.b16 %v4839, %v4827
    %v6112 = vpack.c.b16 %v4840, %v4828
    %v6113 = vpack.c.b16 %v4841, %v4829
    %v6114 = vpack.c.b16 %v4842, %v4830
    %v6115 = vpack.c.b16 %v4843, %v4831
    %v6116 = vpack.c.b16 %v4844, %v4832
    %v6117 = vpack.c.b16 %v4845, %v4833
    %v6118 = vpack.c.b16 %v4858, %v4846
    %v6119 = vpack.c.b16 %v4859, %v4847
    %v6120 = vpack.c.b16 %v4860, %v4848
    %v6121 = vpack.c.b16 %v4861, %v4849
    %v6122 = vpack.c.b16 %v4862, %v4850
    %v6123 = vpack.c.b16 %v4863, %v4851
    %v6124 = vpack.c.b16 %v4864, %v4852
    %v6125 = vpack.c.b16 %v4865, %v4853
    %v6126 = vpack.c.b16 %v4866, %v4854
    %v6127 = vpack.c.b16 %v4867, %v4855
    %v6128 = vpack.c.b16 %v4868, %v4856
    %v6129 = vpack.c.b16 %v4869, %v4857
    %v6130 = vpack.c.b16 %v4882, %v4870
    %v6131 = vpack.c.b16 %v4883, %v4871
    %v6132 = vpack.c.b16 %v4884, %v4872
    %v6133 = vpack.c.b16 %v4885, %v4873
    %v6134 = vpack.c.b16 %v4886, %v4874
    %v6135 = vpack.c.b16 %v4887, %v4875
    %v6136 = vpack.c.b16 %v4888, %v4876
    %v6137 = vpack.c.b16 %v4889, %v4877
    %v6138 = vpack.c.b16 %v4890, %v4878
    %v6139 = vpack.c.b16 %v4891, %v4879
    %v6140 = vpack.c.b16 %v4892, %v4880
    %v6141 = vpack.c.b16 %v4893, %v4881
    %v6142 = vpack.c.b16 %v4906, %v4894
    %v6143 = vpack.c.b16 %v4907, %v4895
    %v6144 = vpack.c.b16 %v4908, %v4896
    %v6145 = vpack.c.b16 %v4909, %v4897
    %v6146 = vpack.c.b16 %v4910, %v4898
    %v6147 = vpack.c.b16 %v4911, %v4899
    %v6148 = vpack.c.b16 %v4912, %v4900
    %v6149 = vpack.c.b16 %v4913, %v4901
    %v6150 = vpack.c.b16 %v4914, %v4902
    %v6151 = vpack.c.b16 %v4915, %v4903
    %v6152 = vpack.c.b16 %v4916, %v4904
    %v6153 = vpack.c.b16 %v4917, %v4905
    %v6154 = vpack.c.b16 %v4930, %v4918
    %v6155 = vpack.c.b16 %v4931, %v4919
    %v6156 = vpack.c.b16 %v4932, %v4920
    %v6157 = vpack.c.b16 %v4933, %v4921
    %v6158 = vpack.c.b16 %v4934, %v4922
    %v6159 = vpack.c.b16 %v4935, %v4923
    %v6160 = vpack.c.b16 %v4936, %v4924
    %v6161 = vpack.c.b16 %v4937, %v4925
    %v6162 = vpack.c.b16 %v4938, %v4926
    %v6163 = vpack.c.b16 %v4939, %v4927
    %v6164 = vpack.c.b16 %v4940, %v4928
    %v6165 = vpack.c.b16 %v4941, %v4929
    %v6166 = vpack.c.b16 %v4954, %v4942
    %v6167 = vpack.c.b16 %v4955, %v4943
    %v6168 = vpack.c.b16 %v4956, %v4944
    %v6169 = vpack.c.b16 %v4957, %v4945
    %v6170 = vpack.c.b16 %v4958, %v4946
    %v6171 = vpack.c.b16 %v4959, %v4947
    %v6172 = vpack.c.b16 %v4960, %v4948
    %v6173 = vpack.c.b16 %v4961, %v4949
    %v6174 = vpack.c.b16 %v4962, %v4950
    %v6175 = vpack.c.b16 %v4963, %v4951
    %v6176 = vpack.c.b16 %v4964, %v4952
    %v6177 = vpack.c.b16 %v4965, %v4953
    %v6178 = vpack.c.b16 %v4978, %v4966
    %v6179 = vpack.c.b16 %v4979, %v4967
    %v6180 = vpack.c.b16 %v4980, %v4968
    %v6181 = vpack.c.b16 %v4981, %v4969
    %v6182 = vpack.c.b16 %v4982, %v4970
    %v6183 = vpack.c.b16 %v4983, %v4971
    %v6184 = vpack.c.b16 %v4984, %v4972
    %v6185 = vpack.c.b16 %v4985, %v4973
    %v6186 = vpack.c.b16 %v4986, %v4974
    %v6187 = vpack.c.b16 %v4987, %v4975
    %v6188 = vpack.c.b16 %v4988, %v4976
    %v6189 = vpack.c.b16 %v4989, %v4977
    %v6190 = vpack.c.b16 %v5002, %v4990
    %v6191 = vpack.c.b16 %v5003, %v4991
    %v6192 = vpack.c.b16 %v5004, %v4992
    %v6193 = vpack.c.b16 %v5005, %v4993
    %v6194 = vpack.c.b16 %v5006, %v4994
    %v6195 = vpack.c.b16 %v5007, %v4995
    %v6196 = vpack.c.b16 %v5008, %v4996
    %v6197 = vpack.c.b16 %v5009, %v4997
    %v6198 = vpack.c.b16 %v5010, %v4998
    %v6199 = vpack.c.b16 %v5011, %v4999
    %v6200 = vpack.c.b16 %v5012, %v5000
    %v6201 = vpack.c.b16 %v5013, %v5001
    %v6202 = vpack.c.b16 %v5026, %v5014
    %v6203 = vpack.c.b16 %v5027, %v5015
    %v6204 = vpack.c.b16 %v5028, %v5016
    %v6205 = vpack.c.b16 %v5029, %v5017
    %v6206 = vpack.c.b16 %v5030, %v5018
    %v6207 = vpack.c.b16 %v5031, %v5019
    %v6208 = vpack.c.b16 %v5032, %v5020
    %v6209 = vpack.c.b16 %v5033, %v5021
    %v6210 = vpack.c.b16 %v5034, %v5022
    %v6211 = vpack.c.b16 %v5035, %v5023
    %v6212 = vpack.c.b16 %v5036, %v5024
    %v6213 = vpack.c.b16 %v5037, %v5025
    %v6214 = vpack.c.b16 %v5050, %v5038
    %v6215 = vpack.c.b16 %v5051, %v5039
    %v6216 = vpack.c.b16 %v5052, %v5040
    %v6217 = vpack.c.b16 %v5053, %v5041
    %v6218 = vpack.c.b16 %v5054, %v5042
    %v6219 = vpack.c.b16 %v5055, %v5043
    %v6220 = vpack.c.b16 %v5056, %v5044
    %v6221 = vpack.c.b16 %v5057, %v5045
    %v6222 = vpack.c.b16 %v5058, %v5046
    %v6223 = vpack.c.b16 %v5059, %v5047
    %v6224 = vpack.c.b16 %v5060, %v5048
    %v6225 = vpack.c.b16 %v5061, %v5049
    %v6226 = vpack.c.b16 %v5074, %v5062
    %v6227 = vpack.c.b16 %v5075, %v5063
    %v6228 = vpack.c.b16 %v5076, %v5064
    %v6229 = vpack.c.b16 %v5077, %v5065
    %v6230 = vpack.c.b16 %v5078, %v5066
    %v6231 = vpack.c.b16 %v5079, %v5067
    %v6232 = vpack.c.b16 %v5080, %v5068
    %v6233 = vpack.c.b16 %v5081, %v5069
    %v6234 = vpack.c.b16 %v5082, %v5070
    %v6235 = vpack.c.b16 %v5083, %v5071
    %v6236 = vpack.c.b16 %v5084, %v5072
    %v6237 = vpack.c.b16 %v5085, %v5073
    %v6238 = vpack.c.b16 %v5098, %v5086
    %v6239 = vpack.c.b16 %v5099, %v5087
    %v6240 = vpack.c.b16 %v5100, %v5088
    %v6241 = vpack.c.b16 %v5101, %v5089
    %v6242 = vpack.c.b16 %v5102, %v5090
    %v6243 = vpack.c.b16 %v5103, %v5091
    %v6244 = vpack.c.b16 %v5104, %v5092
    %v6245 = vpack.c.b16 %v5105, %v5093
    %v6246 = vpack.c.b16 %v5106, %v5094
    %v6247 = vpack.c.b16 %v5107, %v5095
    %v6248 = vpack.c.b16 %v5108, %v5096
    %v6249 = vpack.c.b16 %v5109, %v5097
    %v6250 = vpack.c.b16 %v5122, %v5110
    %v6251 = vpack.c.b16 %v5123, %v5111
    %v6252 = vpack.c.b16 %v5124, %v5112
    %v6253 = vpack.c.b16 %v5125, %v5113
    %v6254 = vpack.c.b16 %v5126, %v5114
    %v6255 = vpack.c.b16 %v5127, %v5115
    %v6256 = vpack.c.b16 %v5128, %v5116
    %v6257 = vpack.c.b16 %v5129, %v5117
    %v6258 = vpack.c.b16 %v5130, %v5118
    %v6259 = vpack.c.b16 %v5131, %v5119
    %v6260 = vpack.c.b16 %v5132, %v5120
    %v6261 = vpack.c.b16 %v5133, %v5121
    %v6262 = vpack.c.b16 %v5146, %v5134
    %v6263 = vpack.c.b16 %v5147, %v5135
    %v6264 = vpack.c.b16 %v5148, %v5136
    %v6265 = vpack.c.b16 %v5149, %v5137
    %v6266 = vpack.c.b16 %v5150, %v5138
    %v6267 = vpack.c.b16 %v5151, %v5139
    %v6268 = vpack.c.b16 %v5152, %v5140
    %v6269 = vpack.c.b16 %v5153, %v5141
    %v6270 = vpack.c.b16 %v5154, %v5142
    %v6271 = vpack.c.b16 %v5155, %v5143
    %v6272 = vpack.c.b16 %v5156, %v5144
    %v6273 = vpack.c.b16 %v5157, %v5145
    %v6274 = vpack.c.b16 %v5170, %v5158
    %v6275 = vpack.c.b16 %v5171, %v5159
    %v6276 = vpack.c.b16 %v5172, %v5160
    %v6277 = vpack.c.b16 %v5173, %v5161
    %v6278 = vpack.c.b16 %v5174, %v5162
    %v6279 = vpack.c.b16 %v5175, %v5163
    %v6280 = vpack.c.b16 %v5176, %v5164
    %v6281 = vpack.c.b16 %v5177, %v5165
    %v6282 = vpack.c.b16 %v5178, %v5166
    %v6283 = vpack.c.b16 %v5179, %v5167
    %v6284 = vpack.c.b16 %v5180, %v5168
    %v6285 = vpack.c.b16 %v5181, %v5169
    %v6286 = vpack.c.b16 %v5194, %v5182
    %v6287 = vpack.c.b16 %v5195, %v5183
    %v6288 = vpack.c.b16 %v5196, %v5184
    %v6289 = vpack.c.b16 %v5197, %v5185
    %v6290 = vpack.c.b16 %v5198, %v5186
    %v6291 = vpack.c.b16 %v5199, %v5187
    %v6292 = vpack.c.b16 %v5200, %v5188
    %v6293 = vpack.c.b16 %v5201, %v5189
    %v6294 = vpack.c.b16 %v5202, %v5190
    %v6295 = vpack.c.b16 %v5203, %v5191
    %v6296 = vpack.c.b16 %v5204, %v5192
    %v6297 = vpack.c.b16 %v5205, %v5193
    %v6298 = vpack.c.b16 %v5218, %v5206
    %v6299 = vpack.c.b16 %v5219, %v5207
    %v6300 = vpack.c.b16 %v5220, %v5208
    %v6301 = vpack.c.b16 %v5221, %v5209
    %v6302 = vpack.c.b16 %v5222, %v5210
    %v6303 = vpack.c.b16 %v5223, %v5211
    %v6304 = vpack.c.b16 %v5224, %v5212
    %v6305 = vpack.c.b16 %v5225, %v5213
    %v6306 = vpack.c.b16 %v5226, %v5214
    %v6307 = vpack.c.b16 %v5227, %v5215
    %v6308 = vpack.c.b16 %v5228, %v5216
    %v6309 = vpack.c.b16 %v5229, %v5217
    %v6310 = vpack.c.b16 %v5242, %v5230
    %v6311 = vpack.c.b16 %v5243, %v5231
    %v6312 = vpack.c.b16 %v5244, %v5232
    %v6313 = vpack.c.b16 %v5245, %v5233
    %v6314 = vpack.c.b16 %v5246, %v5234
    %v6315 = vpack.c.b16 %v5247, %v5235
    %v6316 = vpack.c.b16 %v5248, %v5236
    %v6317 = vpack.c.b16 %v5249, %v5237
    %v6318 = vpack.c.b16 %v5250, %v5238
    %v6319 = vpack.c.b16 %v5251, %v5239
    %v6320 = vpack.c.b16 %v5252, %v5240
    %v6321 = vpack.c.b16 %v5253, %v5241
    %v6322 = vpack.c.b16 %v5266, %v5254
    %v6323 = vpack.c.b16 %v5267, %v5255
    %v6324 = vpack.c.b16 %v5268, %v5256
    %v6325 = vpack.c.b16 %v5269, %v5257
    %v6326 = vpack.c.b16 %v5270, %v5258
    %v6327 = vpack.c.b16 %v5271, %v5259
    %v6328 = vpack.c.b16 %v5272, %v5260
    %v6329 = vpack.c.b16 %v5273, %v5261
    %v6330 = vpack.c.b16 %v5274, %v5262
    %v6331 = vpack.c.b16 %v5275, %v5263
    %v6332 = vpack.c.b16 %v5276, %v5264
    %v6333 = vpack.c.b16 %v5277, %v5265
    %v6334 = vpack.c.b16 %v5290, %v5278
    %v6335 = vpack.c.b16 %v5291, %v5279
    %v6336 = vpack.c.b16 %v5292, %v5280
    %v6337 = vpack.c.b16 %v5293, %v5281
    %v6338 = vpack.c.b16 %v5294, %v5282
    %v6339 = vpack.c.b16 %v5295, %v5283
    %v6340 = vpack.c.b16 %v5296, %v5284
    %v6341 = vpack.c.b16 %v5297, %v5285
    %v6342 = vpack.c.b16 %v5298, %v5286
    %v6343 = vpack.c.b16 %v5299, %v5287
    %v6344 = vpack.c.b16 %v5300, %v5288
    %v6345 = vpack.c.b16 %v5301, %v5289
    %v6346 = vpack.c.b16 %v5314, %v5302
    %v6347 = vpack.c.b16 %v5315, %v5303
    %v6348 = vpack.c.b16 %v5316, %v5304
    %v6349 = vpack.c.b16 %v5317, %v5305
    %v6350 = vpack.c.b16 %v5318, %v5306
    %v6351 = vpack.c.b16 %v5319, %v5307
    %v6352 = vpack.c.b16 %v5320, %v5308
    %v6353 = vpack.c.b16 %v5321, %v5309
    %v6354 = vpack.c.b16 %v5322, %v5310
    %v6355 = vpack.c.b16 %v5323, %v5311
    %v6356 = vpack.c.b16 %v5324, %v5312
    %v6357 = vpack.c.b16 %v5325, %v5313
    %v6358 = vpack.c.b16 %v5338, %v5326
    %v6359 = vpack.c.b16 %v5339, %v5327
    %v6360 = vpack.c.b16 %v5340, %v5328
    %v6361 = vpack.c.b16 %v5341, %v5329
    %v6362 = vpack.c.b16 %v5342, %v5330
    %v6363 = vpack.c.b16 %v5343, %v5331
    %v6364 = vpack.c.b16 %v5344, %v5332
    %v6365 = vpack.c.b16 %v5345, %v5333
    %v6366 = vpack.c.b16 %v5346, %v5334
    %v6367 = vpack.c.b16 %v5347, %v5335
    %v6368 = vpack.c.b16 %v5348, %v5336
    %v6369 = vpack.c.b16 %v5349, %v5337
    %v6370 = vpack.c.b16 %v5362, %v5350
    %v6371 = vpack.c.b16 %v5363, %v5351
    %v6372 = vpack.c.b16 %v5364, %v5352
    %v6373 = vpack.c.b16 %v5365, %v5353
    %v6374 = vpack.c.b16 %v5366, %v5354
    %v6375 = vpack.c.b16 %v5367, %v5355
    %v6376 = vpack.c.b16 %v5368, %v5356
    %v6377 = vpack.c.b16 %v5369, %v5357
    %v6378 = vpack.c.b16 %v5370, %v5358
    %v6379 = vpack.c.b16 %v5371, %v5359
    %v6380 = vpack.c.b16 %v5372, %v5360
    %v6381 = vpack.c.b16 %v5373, %v5361
    %v6382 = vpack.c.b16 %v5386, %v5374
    %v6383 = vpack.c.b16 %v5387, %v5375
    %v6384 = vpack.c.b16 %v5388, %v5376
    %v6385 = vpack.c.b16 %v5389, %v5377
    %v6386 = vpack.c.b16 %v5390, %v5378
    %v6387 = vpack.c.b16 %v5391, %v5379
    %v6388 = vpack.c.b16 %v5392, %v5380
    %v6389 = vpack.c.b16 %v5393, %v5381
    %v6390 = vpack.c.b16 %v5394, %v5382
    %v6391 = vpack.c.b16 %v5395, %v5383
    %v6392 = vpack.c.b16 %v5396, %v5384
    %v6393 = vpack.c.b16 %v5397, %v5385
    %v6394 = vpack.c.b16 %v5410, %v5398
    %v6395 = vpack.c.b16 %v5411, %v5399
    %v6396 = vpack.c.b16 %v5412, %v5400
    %v6397 = vpack.c.b16 %v5413, %v5401
    %v6398 = vpack.c.b16 %v5414, %v5402
    %v6399 = vpack.c.b16 %v5415, %v5403
    %v6400 = vpack.c.b16 %v5416, %v5404
    %v6401 = vpack.c.b16 %v5417, %v5405
    %v6402 = vpack.c.b16 %v5418, %v5406
    %v6403 = vpack.c.b16 %v5419, %v5407
    %v6404 = vpack.c.b16 %v5420, %v5408
    %v6405 = vpack.c.b16 %v5421, %v5409
    %v6406 = vpack.c.b16 %v5434, %v5422
    %v6407 = vpack.c.b16 %v5435, %v5423
    %v6408 = vpack.c.b16 %v5436, %v5424
    %v6409 = vpack.c.b16 %v5437, %v5425
    %v6410 = vpack.c.b16 %v5438, %v5426
    %v6411 = vpack.c.b16 %v5439, %v5427
    %v6412 = vpack.c.b16 %v5440, %v5428
    %v6413 = vpack.c.b16 %v5441, %v5429
    %v6414 = vpack.c.b16 %v5442, %v5430
    %v6415 = vpack.c.b16 %v5443, %v5431
    %v6416 = vpack.c.b16 %v5444, %v5432
    %v6417 = vpack.c.b16 %v5445, %v5433
    %v6418 = vpack.c.b16 %v5458, %v5446
    %v6419 = vpack.c.b16 %v5459, %v5447
    %v6420 = vpack.c.b16 %v5460, %v5448
    %v6421 = vpack.c.b16 %v5461, %v5449
    %v6422 = vpack.c.b16 %v5462, %v5450
    %v6423 = vpack.c.b16 %v5463, %v5451
    %v6424 = vpack.c.b16 %v5464, %v5452
    %v6425 = vpack.c.b16 %v5465, %v5453
    %v6426 = vpack.c.b16 %v5466, %v5454
    %v6427 = vpack.c.b16 %v5467, %v5455
    %v6428 = vpack.c.b16 %v5468, %v5456
    %v6429 = vpack.c.b16 %v5469, %v5457
    %v6430 = vpack.c.b16 %v5482, %v5470
    %v6431 = vpack.c.b16 %v5483, %v5471
    %v6432 = vpack.c.b16 %v5484, %v5472
    %v6433 = vpack.c.b16 %v5485, %v5473
    %v6434 = vpack.c.b16 %v5486, %v5474
    %v6435 = vpack.c.b16 %v5487, %v5475
    %v6436 = vpack.c.b16 %v5488, %v5476
    %v6437 = vpack.c.b16 %v5489, %v5477
    %v6438 = vpack.c.b16 %v5490, %v5478
    %v6439 = vpack.c.b16 %v5491, %v5479
    %v6440 = vpack.c.b16 %v5492, %v5480
    %v6441 = vpack.c.b16 %v5493, %v5481
    %v6442 = vpack.c.b16 %v5506, %v5494
    %v6443 = vpack.c.b16 %v5507, %v5495
    %v6444 = vpack.c.b16 %v5508, %v5496
    %v6445 = vpack.c.b16 %v5509, %v5497
    %v6446 = vpack.c.b16 %v5510, %v5498
    %v6447 = vpack.c.b16 %v5511, %v5499
    %v6448 = vpack.c.b16 %v5512, %v5500
    %v6449 = vpack.c.b16 %v5513, %v5501
    %v6450 = vpack.c.b16 %v5514, %v5502
    %v6451 = vpack.c.b16 %v5515, %v5503
    %v6452 = vpack.c.b16 %v5516, %v5504
    %v6453 = vpack.c.b16 %v5517, %v5505
    %v6454 = vpack.c.b16 %v5530, %v5518
    %v6455 = vpack.c.b16 %v5531, %v5519
    %v6456 = vpack.c.b16 %v5532, %v5520
    %v6457 = vpack.c.b16 %v5533, %v5521
    %v6458 = vpack.c.b16 %v5534, %v5522
    %v6459 = vpack.c.b16 %v5535, %v5523
    %v6460 = vpack.c.b16 %v5536, %v5524
    %v6461 = vpack.c.b16 %v5537, %v5525
    %v6462 = vpack.c.b16 %v5538, %v5526
    %v6463 = vpack.c.b16 %v5539, %v5527
    %v6464 = vpack.c.b16 %v5540, %v5528
    %v6465 = vpack.c.b16 %v5541, %v5529
    %v6466 = vpack.c.b16 %v5554, %v5542
    %v6467 = vpack.c.b16 %v5555, %v5543
    %v6468 = vpack.c.b16 %v5556, %v5544
    %v6469 = vpack.c.b16 %v5557, %v5545
    %v6470 = vpack.c.b16 %v5558, %v5546
    %v6471 = vpack.c.b16 %v5559, %v5547
    %v6472 = vpack.c.b16 %v5560, %v5548
    %v6473 = vpack.c.b16 %v5561, %v5549
    %v6474 = vpack.c.b16 %v5562, %v5550
    %v6475 = vpack.c.b16 %v5563, %v5551
    %v6476 = vpack.c.b16 %v5564, %v5552
    %v6477 = vpack.c.b16 %v5565, %v5553
    %v6478 = vpack.c.b16 %v5578, %v5566
    %v6479 = vpack.c.b16 %v5579, %v5567
    %v6480 = vpack.c.b16 %v5580, %v5568
    %v6481 = vpack.c.b16 %v5581, %v5569
    %v6482 = vpack.c.b16 %v5582, %v5570
    %v6483 = vpack.c.b16 %v5583, %v5571
    %v6484 = vpack.c.b16 %v5584, %v5572
    %v6485 = vpack.c.b16 %v5585, %v5573
    %v6486 = vpack.c.b16 %v5586, %v5574
    %v6487 = vpack.c.b16 %v5587, %v5575
    %v6488 = vpack.c.b16 %v5588, %v5576
    %v6489 = vpack.c.b16 %v5589, %v5577
    %v6490 = vpack.c.b16 %v5602, %v5590
    %v6491 = vpack.c.b16 %v5603, %v5591
    %v6492 = vpack.c.b16 %v5604, %v5592
    %v6493 = vpack.c.b16 %v5605, %v5593
    %v6494 = vpack.c.b16 %v5606, %v5594
    %v6495 = vpack.c.b16 %v5607, %v5595
    %v6496 = vpack.c.b16 %v5608, %v5596
    %v6497 = vpack.c.b16 %v5609, %v5597
    %v6498 = vpack.c.b16 %v5610, %v5598
    %v6499 = vpack.c.b16 %v5611, %v5599
    %v6500 = vpack.c.b16 %v5612, %v5600
    %v6501 = vpack.c.b16 %v5613, %v5601
    %v6502 = vpack.c.b16 %v5626, %v5614
    %v6503 = vpack.c.b16 %v5627, %v5615
    %v6504 = vpack.c.b16 %v5628, %v5616
    %v6505 = vpack.c.b16 %v5629, %v5617
    %v6506 = vpack.c.b16 %v5630, %v5618
    %v6507 = vpack.c.b16 %v5631, %v5619
    %v6508 = vpack.c.b16 %v5632, %v5620
    %v6509 = vpack.c.b16 %v5633, %v5621
    %v6510 = vpack.c.b16 %v5634, %v5622
    %v6511 = vpack.c.b16 %v5635, %v5623
    %v6512 = vpack.c.b16 %v5636, %v5624
    %v6513 = vpack.c.b16 %v5637, %v5625
    %v6514 = vpack.c.b16 %v5650, %v5638
    %v6515 = vpack.c.b16 %v5651, %v5639
    %v6516 = vpack.c.b16 %v5652, %v5640
    %v6517 = vpack.c.b16 %v5653, %v5641
    %v6518 = vpack.c.b16 %v5654, %v5642
    %v6519 = vpack.c.b16 %v5655, %v5643
    %v6520 = vpack.c.b16 %v5656, %v5644
    %v6521 = vpack.c.b16 %v5657, %v5645
    %v6522 = vpack.c.b16 %v5658, %v5646
    %v6523 = vpack.c.b16 %v5659, %v5647
    %v6524 = vpack.c.b16 %v5660, %v5648
    %v6525 = vpack.c.b16 %v5661, %v5649
    %v6526 = vpack.c.b16 %v5674, %v5662
    %v6527 = vpack.c.b16 %v5675, %v5663
    %v6528 = vpack.c.b16 %v5676, %v5664
    %v6529 = vpack.c.b16 %v5677, %v5665
    %v6530 = vpack.c.b16 %v5678, %v5666
    %v6531 = vpack.c.b16 %v5679, %v5667
    %v6532 = vpack.c.b16 %v5680, %v5668
    %v6533 = vpack.c.b16 %v5681, %v5669
    %v6534 = vpack.c.b16 %v5682, %v5670
    %v6535 = vpack.c.b16 %v5683, %v5671
    %v6536 = vpack.c.b16 %v5684, %v5672
    %v6537 = vpack.c.b16 %v5685, %v5673
    %v6538 = vpack.c.b16 %v5698, %v5686
    %v6539 = vpack.c.b16 %v5699, %v5687
    %v6540 = vpack.c.b16 %v5700, %v5688
    %v6541 = vpack.c.b16 %v5701, %v5689
    %v6542 = vpack.c.b16 %v5702, %v5690
    %v6543 = vpack.c.b16 %v5703, %v5691
    %v6544 = vpack.c.b16 %v5704, %v5692
    %v6545 = vpack.c.b16 %v5705, %v5693
    %v6546 = vpack.c.b16 %v5706, %v5694
    %v6547 = vpack.c.b16 %v5707, %v5695
    %v6548 = vpack.c.b16 %v5708, %v5696
    %v6549 = vpack.c.b16 %v5709, %v5697
    %v6550 = vpack.c.b16 %v5722, %v5710
    %v6551 = vpack.c.b16 %v5723, %v5711
    %v6552 = vpack.c.b16 %v5724, %v5712
    %v6553 = vpack.c.b16 %v5725, %v5713
    %v6554 = vpack.c.b16 %v5726, %v5714
    %v6555 = vpack.c.b16 %v5727, %v5715
    %v6556 = vpack.c.b16 %v5728, %v5716
    %v6557 = vpack.c.b16 %v5729, %v5717
    %v6558 = vpack.c.b16 %v5730, %v5718
    %v6559 = vpack.c.b16 %v5731, %v5719
    %v6560 = vpack.c.b16 %v5732, %v5720
    %v6561 = vpack.c.b16 %v5733, %v5721
    %v6562 = vpack.c.b16 %v5746, %v5734
    %v6563 = vpack.c.b16 %v5747, %v5735
    %v6564 = vpack.c.b16 %v5748, %v5736
    %v6565 = vpack.c.b16 %v5749, %v5737
    %v6566 = vpack.c.b16 %v5750, %v5738
    %v6567 = vpack.c.b16 %v5751, %v5739
    %v6568 = vpack.c.b16 %v5752, %v5740
    %v6569 = vpack.c.b16 %v5753, %v5741
    %v6570 = vpack.c.b16 %v5754, %v5742
    %v6571 = vpack.c.b16 %v5755, %v5743
    %v6572 = vpack.c.b16 %v5756, %v5744
    %v6573 = vpack.c.b16 %v5757, %v5745
    %v6574 = vpack.c.b16 %v5770, %v5758
    %v6575 = vpack.c.b16 %v5771, %v5759
    %v6576 = vpack.c.b16 %v5772, %v5760
    %v6577 = vpack.c.b16 %v5773, %v5761
    %v6578 = vpack.c.b16 %v5774, %v5762
    %v6579 = vpack.c.b16 %v5775, %v5763
    %v6580 = vpack.c.b16 %v5776, %v5764
    %v6581 = vpack.c.b16 %v5777, %v5765
    %v6582 = vpack.c.b16 %v5778, %v5766
    %v6583 = vpack.c.b16 %v5779, %v5767
    %v6584 = vpack.c.b16 %v5780, %v5768
    %v6585 = vpack.c.b16 %v5781, %v5769
    %v6586 = vpack.c.b16 %v5794, %v5782
    %v6587 = vpack.c.b16 %v5795, %v5783
    %v6588 = vpack.c.b16 %v5796, %v5784
    %v6589 = vpack.c.b16 %v5797, %v5785
    %v6590 = vpack.c.b16 %v5798, %v5786
    %v6591 = vpack.c.b16 %v5799, %v5787
    %v6592 = vpack.c.b16 %v5800, %v5788
    %v6593 = vpack.c.b16 %v5801, %v5789
    %v6594 = vpack.c.b16 %v5802, %v5790
    %v6595 = vpack.c.b16 %v5803, %v5791
    %v6596 = vpack.c.b16 %v5804, %v5792
    %v6597 = vpack.c.b16 %v5805, %v5793
    %v6598 = vpack.c.b16 %v5818, %v5806
    %v6599 = vpack.c.b16 %v5819, %v5807
    %v6600 = vpack.c.b16 %v5820, %v5808
    %v6601 = vpack.c.b16 %v5821, %v5809
    %v6602 = vpack.c.b16 %v5822, %v5810
    %v6603 = vpack.c.b16 %v5823, %v5811
    %v6604 = vpack.c.b16 %v5824, %v5812
    %v6605 = vpack.c.b16 %v5825, %v5813
    %v6606 = vpack.c.b16 %v5826, %v5814
    %v6607 = vpack.c.b16 %v5827, %v5815
    %v6608 = vpack.c.b16 %v5828, %v5816
    %v6609 = vpack.c.b16 %v5829, %v5817
    %v6610 = vpack.c.b16 %v5842, %v5830
    %v6611 = vpack.c.b16 %v5843, %v5831
    %v6612 = vpack.c.b16 %v5844, %v5832
    %v6613 = vpack.c.b16 %v5845, %v5833
    %v6614 = vpack.c.b16 %v5846, %v5834
    %v6615 = vpack.c.b16 %v5847, %v5835
    %v6616 = vpack.c.b16 %v5848, %v5836
    %v6617 = vpack.c.b16 %v5849, %v5837
    %v6618 = vpack.c.b16 %v5850, %v5838
    %v6619 = vpack.c.b16 %v5851, %v5839
    %v6620 = vpack.c.b16 %v5852, %v5840
    %v6621 = vpack.c.b16 %v5853, %v5841
    %7390 = vmatprep.subr.bf16.mxu0 %v5939
    %7391 = vmatpush1.bf16.msra.mxu0 %v5938
    %7392 = vmatprep.subr.bf16.mxu0 %v5927
    %7393 = vmatpush1.bf16.msra.mxu0 %v5926
    %7394 = vmatprep.subr.bf16.mxu0 %v5915
    %7395 = vmatpush1.bf16.msra.mxu0 %v5914
    %7396 = vmatprep.subr.bf16.mxu0 %v5903
    %7397 = vmatpush1.bf16.msra.mxu0 %v5902
    %7398 = vmatprep.subr.bf16.mxu0 %v5891
    %7399 = vmatpush1.bf16.msra.mxu0 %v5890
    %7400 = vmatprep.subr.bf16.mxu0 %v5879
    %7401 = vmatpush1.bf16.msra.mxu0 %v5878
    %7402 = vmatprep.subr.bf16.mxu0 %v5867
    %7403 = vmatpush1.bf16.msra.mxu0 %v5866
    %7404 = vmatprep.subr.bf16.mxu0 %v5855
    %7405 = vmatpush1.bf16.msra.mxu0 %v5854
    %7406 = vmatprep.subr.bf16.mxu0 %v6035
    %7407 = vmatpush2.bf16.msra.mxu0 %v6034
    %7408 = vmatprep.subr.bf16.mxu0 %v6023
    %7409 = vmatpush2.bf16.msra.mxu0 %v6022
    %7410 = vmatprep.subr.bf16.mxu0 %v6011
    %7411 = vmatpush2.bf16.msra.mxu0 %v6010
    %7412 = vmatprep.subr.bf16.mxu0 %v5999
    %7413 = vmatpush2.bf16.msra.mxu0 %v5998
    %7414 = vmatprep.subr.bf16.mxu0 %v5987
    %7415 = vmatpush2.bf16.msra.mxu0 %v5986
    %7416 = vmatprep.subr.bf16.mxu0 %v5975
    %7417 = vmatpush2.bf16.msra.mxu0 %v5974
    %7418 = vmatprep.subr.bf16.mxu0 %v5963
    %7419 = vmatpush2.bf16.msra.mxu0 %v5962
    %7420 = vmatprep.subr.bf16.mxu0 %v5951
    %7421 = vmatpush2.bf16.msra.mxu0 %v5950
    %7422 = vmatprep.mubr.bf16.mxu0 %v2711
    %7423 = vmatmul.mubr.bf16.gmra.mxu0 %v2710
    %v7424 = vpop.f32.mrf.mxu0
    %v7425 = vadd.f32 %v3493, %v7424
    %v7426 = vpop.f32.mrf.mxu0
    %v7427 = vadd.f32 %v3497, %v7426
    %v7428 = vpop.f32.mrf.mxu0
    %v7429 = vpop.f32.mrf.mxu0
    %7430 = vdwg.mxu0
    %7431 = vmatprep.subr.bf16.mxu0 %v6131
    %7432 = vmatpush1.bf16.msra.mxu0 %v6130
    %7433 = vmatprep.subr.bf16.mxu0 %v6119
    %7434 = vmatpush1.bf16.msra.mxu0 %v6118
    %7435 = vmatprep.subr.bf16.mxu0 %v6107
    %7436 = vmatpush1.bf16.msra.mxu0 %v6106
    %7437 = vmatprep.subr.bf16.mxu0 %v6095
    %7438 = vmatpush1.bf16.msra.mxu0 %v6094
    %7439 = vmatprep.subr.bf16.mxu0 %v6083
    %7440 = vmatpush1.bf16.msra.mxu0 %v6082
    %7441 = vmatprep.subr.bf16.mxu0 %v6071
    %7442 = vmatpush1.bf16.msra.mxu0 %v6070
    %7443 = vmatprep.subr.bf16.mxu0 %v6059
    %7444 = vmatpush1.bf16.msra.mxu0 %v6058
    %7445 = vmatprep.subr.bf16.mxu0 %v6047
    %7446 = vmatpush1.bf16.msra.mxu0 %v6046
    %7447 = vmatprep.subr.bf16.mxu0 %v6227
    %7448 = vmatpush2.bf16.msra.mxu0 %v6226
    %7449 = vmatprep.subr.bf16.mxu0 %v6215
    %7450 = vmatpush2.bf16.msra.mxu0 %v6214
    %7451 = vmatprep.subr.bf16.mxu0 %v6203
    %7452 = vmatpush2.bf16.msra.mxu0 %v6202
    %7453 = vmatprep.subr.bf16.mxu0 %v6191
    %7454 = vmatpush2.bf16.msra.mxu0 %v6190
    %7455 = vmatprep.subr.bf16.mxu0 %v6179
    %7456 = vmatpush2.bf16.msra.mxu0 %v6178
    %7457 = vmatprep.subr.bf16.mxu0 %v6167
    %7458 = vmatpush2.bf16.msra.mxu0 %v6166
    %7459 = vmatprep.subr.bf16.mxu0 %v6155
    %7460 = vmatpush2.bf16.msra.mxu0 %v6154
    %7461 = vmatprep.subr.bf16.mxu0 %v6143
    %7462 = vmatpush2.bf16.msra.mxu0 %v6142
    %7463 = vmatprep.mubr.bf16.mxu0 %v2713
    %7464 = vmatmul.mubr.bf16.gmra.mxu0 %v2712
    %v7465 = vpop.f32.mrf.mxu0
    %v7466 = vadd.f32 %v7425, %v7465
    %v7467 = vpop.f32.mrf.mxu0
    %v7468 = vadd.f32 %v7427, %v7467
    %v7469 = vpop.f32.mrf.mxu0
    %v7470 = vpop.f32.mrf.mxu0
    %7471 = vdwg.mxu0
    %7472 = vmatprep.subr.bf16.mxu0 %v6323
    %7473 = vmatpush1.bf16.msra.mxu0 %v6322
    %7474 = vmatprep.subr.bf16.mxu0 %v6311
    %7475 = vmatpush1.bf16.msra.mxu0 %v6310
    %7476 = vmatprep.subr.bf16.mxu0 %v6299
    %7477 = vmatpush1.bf16.msra.mxu0 %v6298
    %7478 = vmatprep.subr.bf16.mxu0 %v6287
    %7479 = vmatpush1.bf16.msra.mxu0 %v6286
    %7480 = vmatprep.subr.bf16.mxu0 %v6275
    %7481 = vmatpush1.bf16.msra.mxu0 %v6274
    %7482 = vmatprep.subr.bf16.mxu0 %v6263
    %7483 = vmatpush1.bf16.msra.mxu0 %v6262
    %7484 = vmatprep.subr.bf16.mxu0 %v6251
    %7485 = vmatpush1.bf16.msra.mxu0 %v6250
    %7486 = vmatprep.subr.bf16.mxu0 %v6239
    %7487 = vmatpush1.bf16.msra.mxu0 %v6238
    %7488 = vmatprep.subr.bf16.mxu0 %v6419
    %7489 = vmatpush2.bf16.msra.mxu0 %v6418
    %7490 = vmatprep.subr.bf16.mxu0 %v6407
    %7491 = vmatpush2.bf16.msra.mxu0 %v6406
    %7492 = vmatprep.subr.bf16.mxu0 %v6395
    %7493 = vmatpush2.bf16.msra.mxu0 %v6394
    %7494 = vmatprep.subr.bf16.mxu0 %v6383
    %7495 = vmatpush2.bf16.msra.mxu0 %v6382
    %7496 = vmatprep.subr.bf16.mxu0 %v6371
    %7497 = vmatpush2.bf16.msra.mxu0 %v6370
    %7498 = vmatprep.subr.bf16.mxu0 %v6359
    %7499 = vmatpush2.bf16.msra.mxu0 %v6358
    %7500 = vmatprep.subr.bf16.mxu0 %v6347
    %7501 = vmatpush2.bf16.msra.mxu0 %v6346
    %7502 = vmatprep.subr.bf16.mxu0 %v6335
    %7503 = vmatpush2.bf16.msra.mxu0 %v6334
    %7504 = vmatprep.mubr.bf16.mxu0 %v2715
    %7505 = vmatmul.mubr.bf16.gmra.mxu0 %v2714
    %v7506 = vpop.f32.mrf.mxu0
    %v7507 = vadd.f32 %v7466, %v7506
    %v7508 = vpop.f32.mrf.mxu0
    %v7509 = vadd.f32 %v7468, %v7508
    %v7510 = vpop.f32.mrf.mxu0
    %v7511 = vpop.f32.mrf.mxu0
    %7512 = vdwg.mxu0
    %7513 = vmatprep.subr.bf16.mxu0 %v6515
    %7514 = vmatpush1.bf16.msra.mxu0 %v6514
    %7515 = vmatprep.subr.bf16.mxu0 %v6503
    %7516 = vmatpush1.bf16.msra.mxu0 %v6502
    %7517 = vmatprep.subr.bf16.mxu0 %v6491
    %7518 = vmatpush1.bf16.msra.mxu0 %v6490
    %7519 = vmatprep.subr.bf16.mxu0 %v6479
    %7520 = vmatpush1.bf16.msra.mxu0 %v6478
    %7521 = vmatprep.subr.bf16.mxu0 %v6467
    %7522 = vmatpush1.bf16.msra.mxu0 %v6466
    %7523 = vmatprep.subr.bf16.mxu0 %v6455
    %7524 = vmatpush1.bf16.msra.mxu0 %v6454
    %7525 = vmatprep.subr.bf16.mxu0 %v6443
    %7526 = vmatpush1.bf16.msra.mxu0 %v6442
    %7527 = vmatprep.subr.bf16.mxu0 %v6431
    %7528 = vmatpush1.bf16.msra.mxu0 %v6430
    %7529 = vmatprep.subr.bf16.mxu0 %v6611
    %7530 = vmatpush2.bf16.msra.mxu0 %v6610
    %7531 = vmatprep.subr.bf16.mxu0 %v6599
    %7532 = vmatpush2.bf16.msra.mxu0 %v6598
    %7533 = vmatprep.subr.bf16.mxu0 %v6587
    %7534 = vmatpush2.bf16.msra.mxu0 %v6586
    %7535 = vmatprep.subr.bf16.mxu0 %v6575
    %7536 = vmatpush2.bf16.msra.mxu0 %v6574
    %7537 = vmatprep.subr.bf16.mxu0 %v6563
    %7538 = vmatpush2.bf16.msra.mxu0 %v6562
    %7539 = vmatprep.subr.bf16.mxu0 %v6551
    %7540 = vmatpush2.bf16.msra.mxu0 %v6550
    %7541 = vmatprep.subr.bf16.mxu0 %v6539
    %7542 = vmatpush2.bf16.msra.mxu0 %v6538
    %7543 = vmatprep.subr.bf16.mxu0 %v6527
    %7544 = vmatpush2.bf16.msra.mxu0 %v6526
    %7545 = vmatprep.mubr.bf16.mxu0 %v2717
    %7546 = vmatmul.mubr.bf16.gmra.mxu0 %v2716
    %v7547 = vpop.f32.mrf.mxu0
    %v7548 = vadd.f32 %v7507, %v7547
    %v7549 = vpop.f32.mrf.mxu0
    %v7550 = vadd.f32 %v7509, %v7549
    %v7551 = vpop.f32.mrf.mxu0
    %v7552 = vpop.f32.mrf.mxu0
    %7553 = vdwg.mxu0
    %7554 = vmatprep.subr.bf16.mxu0 %v5941
    %7555 = vmatpush1.bf16.msra.mxu0 %v5940
    %7556 = vmatprep.subr.bf16.mxu0 %v5929
    %7557 = vmatpush1.bf16.msra.mxu0 %v5928
    %7558 = vmatprep.subr.bf16.mxu0 %v5917
    %7559 = vmatpush1.bf16.msra.mxu0 %v5916
    %7560 = vmatprep.subr.bf16.mxu0 %v5905
    %7561 = vmatpush1.bf16.msra.mxu0 %v5904
    %7562 = vmatprep.subr.bf16.mxu0 %v5893
    %7563 = vmatpush1.bf16.msra.mxu0 %v5892
    %7564 = vmatprep.subr.bf16.mxu0 %v5881
    %7565 = vmatpush1.bf16.msra.mxu0 %v5880
    %7566 = vmatprep.subr.bf16.mxu0 %v5869
    %7567 = vmatpush1.bf16.msra.mxu0 %v5868
    %7568 = vmatprep.subr.bf16.mxu0 %v5857
    %7569 = vmatpush1.bf16.msra.mxu0 %v5856
    %7570 = vmatprep.subr.bf16.mxu0 %v6037
    %7571 = vmatpush2.bf16.msra.mxu0 %v6036
    %7572 = vmatprep.subr.bf16.mxu0 %v6025
    %7573 = vmatpush2.bf16.msra.mxu0 %v6024
    %7574 = vmatprep.subr.bf16.mxu0 %v6013
    %7575 = vmatpush2.bf16.msra.mxu0 %v6012
    %7576 = vmatprep.subr.bf16.mxu0 %v6001
    %7577 = vmatpush2.bf16.msra.mxu0 %v6000
    %7578 = vmatprep.subr.bf16.mxu0 %v5989
    %7579 = vmatpush2.bf16.msra.mxu0 %v5988
    %7580 = vmatprep.subr.bf16.mxu0 %v5977
    %7581 = vmatpush2.bf16.msra.mxu0 %v5976
    %7582 = vmatprep.subr.bf16.mxu0 %v5965
    %7583 = vmatpush2.bf16.msra.mxu0 %v5964
    %7584 = vmatprep.subr.bf16.mxu0 %v5953
    %7585 = vmatpush2.bf16.msra.mxu0 %v5952
    %7586 = vmatprep.mubr.bf16.mxu0 %v2711
    %7587 = vmatmul.mubr.bf16.gmra.mxu0 %v2710
    %v7588 = vpop.f32.mrf.mxu0
    %v7589 = vadd.f32 %v3501, %v7588
    %v7590 = vpop.f32.mrf.mxu0
    %v7591 = vadd.f32 %v3505, %v7590
    %v7592 = vpop.f32.mrf.mxu0
    %v7593 = vpop.f32.mrf.mxu0
    %7594 = vdwg.mxu0
    %7595 = vmatprep.subr.bf16.mxu0 %v6133
    %7596 = vmatpush1.bf16.msra.mxu0 %v6132
    %7597 = vmatprep.subr.bf16.mxu0 %v6121
    %7598 = vmatpush1.bf16.msra.mxu0 %v6120
    %7599 = vmatprep.subr.bf16.mxu0 %v6109
    %7600 = vmatpush1.bf16.msra.mxu0 %v6108
    %7601 = vmatprep.subr.bf16.mxu0 %v6097
    %7602 = vmatpush1.bf16.msra.mxu0 %v6096
    %7603 = vmatprep.subr.bf16.mxu0 %v6085
    %7604 = vmatpush1.bf16.msra.mxu0 %v6084
    %7605 = vmatprep.subr.bf16.mxu0 %v6073
    %7606 = vmatpush1.bf16.msra.mxu0 %v6072
    %7607 = vmatprep.subr.bf16.mxu0 %v6061
    %7608 = vmatpush1.bf16.msra.mxu0 %v6060
    %7609 = vmatprep.subr.bf16.mxu0 %v6049
    %7610 = vmatpush1.bf16.msra.mxu0 %v6048
    %7611 = vmatprep.subr.bf16.mxu0 %v6229
    %7612 = vmatpush2.bf16.msra.mxu0 %v6228
    %7613 = vmatprep.subr.bf16.mxu0 %v6217
    %7614 = vmatpush2.bf16.msra.mxu0 %v6216
    %7615 = vmatprep.subr.bf16.mxu0 %v6205
    %7616 = vmatpush2.bf16.msra.mxu0 %v6204
    %7617 = vmatprep.subr.bf16.mxu0 %v6193
    %7618 = vmatpush2.bf16.msra.mxu0 %v6192
    %7619 = vmatprep.subr.bf16.mxu0 %v6181
    %7620 = vmatpush2.bf16.msra.mxu0 %v6180
    %7621 = vmatprep.subr.bf16.mxu0 %v6169
    %7622 = vmatpush2.bf16.msra.mxu0 %v6168
    %7623 = vmatprep.subr.bf16.mxu0 %v6157
    %7624 = vmatpush2.bf16.msra.mxu0 %v6156
    %7625 = vmatprep.subr.bf16.mxu0 %v6145
    %7626 = vmatpush2.bf16.msra.mxu0 %v6144
    %7627 = vmatprep.mubr.bf16.mxu0 %v2713
    %7628 = vmatmul.mubr.bf16.gmra.mxu0 %v2712
    %v7629 = vpop.f32.mrf.mxu0
    %v7630 = vadd.f32 %v7589, %v7629
    %v7631 = vpop.f32.mrf.mxu0
    %v7632 = vadd.f32 %v7591, %v7631
    %v7633 = vpop.f32.mrf.mxu0
    %v7634 = vpop.f32.mrf.mxu0
    %7635 = vdwg.mxu0
    %7636 = vmatprep.subr.bf16.mxu0 %v6325
    %7637 = vmatpush1.bf16.msra.mxu0 %v6324
    %7638 = vmatprep.subr.bf16.mxu0 %v6313
    %7639 = vmatpush1.bf16.msra.mxu0 %v6312
    %7640 = vmatprep.subr.bf16.mxu0 %v6301
    %7641 = vmatpush1.bf16.msra.mxu0 %v6300
    %7642 = vmatprep.subr.bf16.mxu0 %v6289
    %7643 = vmatpush1.bf16.msra.mxu0 %v6288
    %7644 = vmatprep.subr.bf16.mxu0 %v6277
    %7645 = vmatpush1.bf16.msra.mxu0 %v6276
    %7646 = vmatprep.subr.bf16.mxu0 %v6265
    %7647 = vmatpush1.bf16.msra.mxu0 %v6264
    %7648 = vmatprep.subr.bf16.mxu0 %v6253
    %7649 = vmatpush1.bf16.msra.mxu0 %v6252
    %7650 = vmatprep.subr.bf16.mxu0 %v6241
    %7651 = vmatpush1.bf16.msra.mxu0 %v6240
    %7652 = vmatprep.subr.bf16.mxu0 %v6421
    %7653 = vmatpush2.bf16.msra.mxu0 %v6420
    %7654 = vmatprep.subr.bf16.mxu0 %v6409
    %7655 = vmatpush2.bf16.msra.mxu0 %v6408
    %7656 = vmatprep.subr.bf16.mxu0 %v6397
    %7657 = vmatpush2.bf16.msra.mxu0 %v6396
    %7658 = vmatprep.subr.bf16.mxu0 %v6385
    %7659 = vmatpush2.bf16.msra.mxu0 %v6384
    %7660 = vmatprep.subr.bf16.mxu0 %v6373
    %7661 = vmatpush2.bf16.msra.mxu0 %v6372
    %7662 = vmatprep.subr.bf16.mxu0 %v6361
    %7663 = vmatpush2.bf16.msra.mxu0 %v6360
    %7664 = vmatprep.subr.bf16.mxu0 %v6349
    %7665 = vmatpush2.bf16.msra.mxu0 %v6348
    %7666 = vmatprep.subr.bf16.mxu0 %v6337
    %7667 = vmatpush2.bf16.msra.mxu0 %v6336
    %7668 = vmatprep.mubr.bf16.mxu0 %v2715
    %7669 = vmatmul.mubr.bf16.gmra.mxu0 %v2714
    %v7670 = vpop.f32.mrf.mxu0
    %v7671 = vadd.f32 %v7630, %v7670
    %v7672 = vpop.f32.mrf.mxu0
    %v7673 = vadd.f32 %v7632, %v7672
    %v7674 = vpop.f32.mrf.mxu0
    %v7675 = vpop.f32.mrf.mxu0
    %7676 = vdwg.mxu0
    %7677 = vmatprep.subr.bf16.mxu0 %v6517
    %7678 = vmatpush1.bf16.msra.mxu0 %v6516
    %7679 = vmatprep.subr.bf16.mxu0 %v6505
    %7680 = vmatpush1.bf16.msra.mxu0 %v6504
    %7681 = vmatprep.subr.bf16.mxu0 %v6493
    %7682 = vmatpush1.bf16.msra.mxu0 %v6492
    %7683 = vmatprep.subr.bf16.mxu0 %v6481
    %7684 = vmatpush1.bf16.msra.mxu0 %v6480
    %7685 = vmatprep.subr.bf16.mxu0 %v6469
    %7686 = vmatpush1.bf16.msra.mxu0 %v6468
    %7687 = vmatprep.subr.bf16.mxu0 %v6457
    %7688 = vmatpush1.bf16.msra.mxu0 %v6456
    %7689 = vmatprep.subr.bf16.mxu0 %v6445
    %7690 = vmatpush1.bf16.msra.mxu0 %v6444
    %7691 = vmatprep.subr.bf16.mxu0 %v6433
    %7692 = vmatpush1.bf16.msra.mxu0 %v6432
    %7693 = vmatprep.subr.bf16.mxu0 %v6613
    %7694 = vmatpush2.bf16.msra.mxu0 %v6612
    %7695 = vmatprep.subr.bf16.mxu0 %v6601
    %7696 = vmatpush2.bf16.msra.mxu0 %v6600
    %7697 = vmatprep.subr.bf16.mxu0 %v6589
    %7698 = vmatpush2.bf16.msra.mxu0 %v6588
    %7699 = vmatprep.subr.bf16.mxu0 %v6577
    %7700 = vmatpush2.bf16.msra.mxu0 %v6576
    %7701 = vmatprep.subr.bf16.mxu0 %v6565
    %7702 = vmatpush2.bf16.msra.mxu0 %v6564
    %7703 = vmatprep.subr.bf16.mxu0 %v6553
    %7704 = vmatpush2.bf16.msra.mxu0 %v6552
    %7705 = vmatprep.subr.bf16.mxu0 %v6541
    %7706 = vmatpush2.bf16.msra.mxu0 %v6540
    %7707 = vmatprep.subr.bf16.mxu0 %v6529
    %7708 = vmatpush2.bf16.msra.mxu0 %v6528
    %7709 = vmatprep.mubr.bf16.mxu0 %v2717
    %7710 = vmatmul.mubr.bf16.gmra.mxu0 %v2716
    %v7711 = vpop.f32.mrf.mxu0
    %v7712 = vadd.f32 %v7671, %v7711
    %v7713 = vpop.f32.mrf.mxu0
    %v7714 = vadd.f32 %v7673, %v7713
    %v7715 = vpop.f32.mrf.mxu0
    %v7716 = vpop.f32.mrf.mxu0
    %7717 = vdwg.mxu0
    %7718 = vmatprep.subr.bf16.mxu0 %v5943
    %7719 = vmatpush1.bf16.msra.mxu0 %v5942
    %7720 = vmatprep.subr.bf16.mxu0 %v5931
    %7721 = vmatpush1.bf16.msra.mxu0 %v5930
    %7722 = vmatprep.subr.bf16.mxu0 %v5919
    %7723 = vmatpush1.bf16.msra.mxu0 %v5918
    %7724 = vmatprep.subr.bf16.mxu0 %v5907
    %7725 = vmatpush1.bf16.msra.mxu0 %v5906
    %7726 = vmatprep.subr.bf16.mxu0 %v5895
    %7727 = vmatpush1.bf16.msra.mxu0 %v5894
    %7728 = vmatprep.subr.bf16.mxu0 %v5883
    %7729 = vmatpush1.bf16.msra.mxu0 %v5882
    %7730 = vmatprep.subr.bf16.mxu0 %v5871
    %7731 = vmatpush1.bf16.msra.mxu0 %v5870
    %7732 = vmatprep.subr.bf16.mxu0 %v5859
    %7733 = vmatpush1.bf16.msra.mxu0 %v5858
    %7734 = vmatprep.subr.bf16.mxu0 %v6039
    %7735 = vmatpush2.bf16.msra.mxu0 %v6038
    %7736 = vmatprep.subr.bf16.mxu0 %v6027
    %7737 = vmatpush2.bf16.msra.mxu0 %v6026
    %7738 = vmatprep.subr.bf16.mxu0 %v6015
    %7739 = vmatpush2.bf16.msra.mxu0 %v6014
    %7740 = vmatprep.subr.bf16.mxu0 %v6003
    %7741 = vmatpush2.bf16.msra.mxu0 %v6002
    %7742 = vmatprep.subr.bf16.mxu0 %v5991
    %7743 = vmatpush2.bf16.msra.mxu0 %v5990
    %7744 = vmatprep.subr.bf16.mxu0 %v5979
    %7745 = vmatpush2.bf16.msra.mxu0 %v5978
    %7746 = vmatprep.subr.bf16.mxu0 %v5967
    %7747 = vmatpush2.bf16.msra.mxu0 %v5966
    %7748 = vmatprep.subr.bf16.mxu0 %v5955
    %7749 = vmatpush2.bf16.msra.mxu0 %v5954
    %7750 = vmatprep.mubr.bf16.mxu0 %v2711
    %7751 = vmatmul.mubr.bf16.gmra.mxu0 %v2710
    %v7752 = vpop.f32.mrf.mxu0
    %v7753 = vadd.f32 %v3509, %v7752
    %v7754 = vpop.f32.mrf.mxu0
    %v7755 = vadd.f32 %v3513, %v7754
    %v7756 = vpop.f32.mrf.mxu0
    %v7757 = vpop.f32.mrf.mxu0
    %7758 = vdwg.mxu0
    %7759 = vmatprep.subr.bf16.mxu0 %v6135
    %7760 = vmatpush1.bf16.msra.mxu0 %v6134
    %7761 = vmatprep.subr.bf16.mxu0 %v6123
    %7762 = vmatpush1.bf16.msra.mxu0 %v6122
    %7763 = vmatprep.subr.bf16.mxu0 %v6111
    %7764 = vmatpush1.bf16.msra.mxu0 %v6110
    %7765 = vmatprep.subr.bf16.mxu0 %v6099
    %7766 = vmatpush1.bf16.msra.mxu0 %v6098
    %7767 = vmatprep.subr.bf16.mxu0 %v6087
    %7768 = vmatpush1.bf16.msra.mxu0 %v6086
    %7769 = vmatprep.subr.bf16.mxu0 %v6075
    %7770 = vmatpush1.bf16.msra.mxu0 %v6074
    %7771 = vmatprep.subr.bf16.mxu0 %v6063
    %7772 = vmatpush1.bf16.msra.mxu0 %v6062
    %7773 = vmatprep.subr.bf16.mxu0 %v6051
    %7774 = vmatpush1.bf16.msra.mxu0 %v6050
    %7775 = vmatprep.subr.bf16.mxu0 %v6231
    %7776 = vmatpush2.bf16.msra.mxu0 %v6230
    %7777 = vmatprep.subr.bf16.mxu0 %v6219
    %7778 = vmatpush2.bf16.msra.mxu0 %v6218
    %7779 = vmatprep.subr.bf16.mxu0 %v6207
    %7780 = vmatpush2.bf16.msra.mxu0 %v6206
    %7781 = vmatprep.subr.bf16.mxu0 %v6195
    %7782 = vmatpush2.bf16.msra.mxu0 %v6194
    %7783 = vmatprep.subr.bf16.mxu0 %v6183
    %7784 = vmatpush2.bf16.msra.mxu0 %v6182
    %7785 = vmatprep.subr.bf16.mxu0 %v6171
    %7786 = vmatpush2.bf16.msra.mxu0 %v6170
    %7787 = vmatprep.subr.bf16.mxu0 %v6159
    %7788 = vmatpush2.bf16.msra.mxu0 %v6158
    %7789 = vmatprep.subr.bf16.mxu0 %v6147
    %7790 = vmatpush2.bf16.msra.mxu0 %v6146
    %7791 = vmatprep.mubr.bf16.mxu0 %v2713
    %7792 = vmatmul.mubr.bf16.gmra.mxu0 %v2712
    %v7793 = vpop.f32.mrf.mxu0
    %v7794 = vadd.f32 %v7753, %v7793
    %v7795 = vpop.f32.mrf.mxu0
    %v7796 = vadd.f32 %v7755, %v7795
    %v7797 = vpop.f32.mrf.mxu0
    %v7798 = vpop.f32.mrf.mxu0
    %7799 = vdwg.mxu0
    %7800 = vmatprep.subr.bf16.mxu0 %v6327
    %7801 = vmatpush1.bf16.msra.mxu0 %v6326
    %7802 = vmatprep.subr.bf16.mxu0 %v6315
    %7803 = vmatpush1.bf16.msra.mxu0 %v6314
    %7804 = vmatprep.subr.bf16.mxu0 %v6303
    %7805 = vmatpush1.bf16.msra.mxu0 %v6302
    %7806 = vmatprep.subr.bf16.mxu0 %v6291
    %7807 = vmatpush1.bf16.msra.mxu0 %v6290
    %7808 = vmatprep.subr.bf16.mxu0 %v6279
    %7809 = vmatpush1.bf16.msra.mxu0 %v6278
    %7810 = vmatprep.subr.bf16.mxu0 %v6267
    %7811 = vmatpush1.bf16.msra.mxu0 %v6266
    %7812 = vmatprep.subr.bf16.mxu0 %v6255
    %7813 = vmatpush1.bf16.msra.mxu0 %v6254
    %7814 = vmatprep.subr.bf16.mxu0 %v6243
    %7815 = vmatpush1.bf16.msra.mxu0 %v6242
    %7816 = vmatprep.subr.bf16.mxu0 %v6423
    %7817 = vmatpush2.bf16.msra.mxu0 %v6422
    %7818 = vmatprep.subr.bf16.mxu0 %v6411
    %7819 = vmatpush2.bf16.msra.mxu0 %v6410
    %7820 = vmatprep.subr.bf16.mxu0 %v6399
    %7821 = vmatpush2.bf16.msra.mxu0 %v6398
    %7822 = vmatprep.subr.bf16.mxu0 %v6387
    %7823 = vmatpush2.bf16.msra.mxu0 %v6386
    %7824 = vmatprep.subr.bf16.mxu0 %v6375
    %7825 = vmatpush2.bf16.msra.mxu0 %v6374
    %7826 = vmatprep.subr.bf16.mxu0 %v6363
    %7827 = vmatpush2.bf16.msra.mxu0 %v6362
    %7828 = vmatprep.subr.bf16.mxu0 %v6351
    %7829 = vmatpush2.bf16.msra.mxu0 %v6350
    %7830 = vmatprep.subr.bf16.mxu0 %v6339
    %7831 = vmatpush2.bf16.msra.mxu0 %v6338
    %7832 = vmatprep.mubr.bf16.mxu0 %v2715
    %7833 = vmatmul.mubr.bf16.gmra.mxu0 %v2714
    %v7834 = vpop.f32.mrf.mxu0
    %v7835 = vadd.f32 %v7794, %v7834
    %v7836 = vpop.f32.mrf.mxu0
    %v7837 = vadd.f32 %v7796, %v7836
    %v7838 = vpop.f32.mrf.mxu0
    %v7839 = vpop.f32.mrf.mxu0
    %7840 = vdwg.mxu0
    %7841 = vmatprep.subr.bf16.mxu0 %v6519
    %7842 = vmatpush1.bf16.msra.mxu0 %v6518
    %7843 = vmatprep.subr.bf16.mxu0 %v6507
    %7844 = vmatpush1.bf16.msra.mxu0 %v6506
    %7845 = vmatprep.subr.bf16.mxu0 %v6495
    %7846 = vmatpush1.bf16.msra.mxu0 %v6494
    %7847 = vmatprep.subr.bf16.mxu0 %v6483
    %7848 = vmatpush1.bf16.msra.mxu0 %v6482
    %7849 = vmatprep.subr.bf16.mxu0 %v6471
    %7850 = vmatpush1.bf16.msra.mxu0 %v6470
    %7851 = vmatprep.subr.bf16.mxu0 %v6459
    %7852 = vmatpush1.bf16.msra.mxu0 %v6458
    %7853 = vmatprep.subr.bf16.mxu0 %v6447
    %7854 = vmatpush1.bf16.msra.mxu0 %v6446
    %7855 = vmatprep.subr.bf16.mxu0 %v6435
    %7856 = vmatpush1.bf16.msra.mxu0 %v6434
    %7857 = vmatprep.subr.bf16.mxu0 %v6615
    %7858 = vmatpush2.bf16.msra.mxu0 %v6614
    %7859 = vmatprep.subr.bf16.mxu0 %v6603
    %7860 = vmatpush2.bf16.msra.mxu0 %v6602
    %7861 = vmatprep.subr.bf16.mxu0 %v6591
    %7862 = vmatpush2.bf16.msra.mxu0 %v6590
    %7863 = vmatprep.subr.bf16.mxu0 %v6579
    %7864 = vmatpush2.bf16.msra.mxu0 %v6578
    %7865 = vmatprep.subr.bf16.mxu0 %v6567
    %7866 = vmatpush2.bf16.msra.mxu0 %v6566
    %7867 = vmatprep.subr.bf16.mxu0 %v6555
    %7868 = vmatpush2.bf16.msra.mxu0 %v6554
    %7869 = vmatprep.subr.bf16.mxu0 %v6543
    %7870 = vmatpush2.bf16.msra.mxu0 %v6542
    %7871 = vmatprep.subr.bf16.mxu0 %v6531
    %7872 = vmatpush2.bf16.msra.mxu0 %v6530
    %7873 = vmatprep.mubr.bf16.mxu0 %v2717
    %7874 = vmatmul.mubr.bf16.gmra.mxu0 %v2716
    %v7875 = vpop.f32.mrf.mxu0
    %v7876 = vadd.f32 %v7835, %v7875
    %v7877 = vpop.f32.mrf.mxu0
    %v7878 = vadd.f32 %v7837, %v7877
    %v7879 = vpop.f32.mrf.mxu0
    %v7880 = vpop.f32.mrf.mxu0
    %7881 = vdwg.mxu0
    %7882 = vmatprep.subr.bf16.mxu0 %v5945
    %7883 = vmatpush1.bf16.msra.mxu0 %v5944
    %7884 = vmatprep.subr.bf16.mxu0 %v5933
    %7885 = vmatpush1.bf16.msra.mxu0 %v5932
    %7886 = vmatprep.subr.bf16.mxu0 %v5921
    %7887 = vmatpush1.bf16.msra.mxu0 %v5920
    %7888 = vmatprep.subr.bf16.mxu0 %v5909
    %7889 = vmatpush1.bf16.msra.mxu0 %v5908
    %7890 = vmatprep.subr.bf16.mxu0 %v5897
    %7891 = vmatpush1.bf16.msra.mxu0 %v5896
    %7892 = vmatprep.subr.bf16.mxu0 %v5885
    %7893 = vmatpush1.bf16.msra.mxu0 %v5884
    %7894 = vmatprep.subr.bf16.mxu0 %v5873
    %7895 = vmatpush1.bf16.msra.mxu0 %v5872
    %7896 = vmatprep.subr.bf16.mxu0 %v5861
    %7897 = vmatpush1.bf16.msra.mxu0 %v5860
    %7898 = vmatprep.subr.bf16.mxu0 %v6041
    %7899 = vmatpush2.bf16.msra.mxu0 %v6040
    %7900 = vmatprep.subr.bf16.mxu0 %v6029
    %7901 = vmatpush2.bf16.msra.mxu0 %v6028
    %7902 = vmatprep.subr.bf16.mxu0 %v6017
    %7903 = vmatpush2.bf16.msra.mxu0 %v6016
    %7904 = vmatprep.subr.bf16.mxu0 %v6005
    %7905 = vmatpush2.bf16.msra.mxu0 %v6004
    %7906 = vmatprep.subr.bf16.mxu0 %v5993
    %7907 = vmatpush2.bf16.msra.mxu0 %v5992
    %7908 = vmatprep.subr.bf16.mxu0 %v5981
    %7909 = vmatpush2.bf16.msra.mxu0 %v5980
    %7910 = vmatprep.subr.bf16.mxu0 %v5969
    %7911 = vmatpush2.bf16.msra.mxu0 %v5968
    %7912 = vmatprep.subr.bf16.mxu0 %v5957
    %7913 = vmatpush2.bf16.msra.mxu0 %v5956
    %7914 = vmatprep.mubr.bf16.mxu0 %v2711
    %7915 = vmatmul.mubr.bf16.gmra.mxu0 %v2710
    %v7916 = vpop.f32.mrf.mxu0
    %v7917 = vadd.f32 %v3517, %v7916
    %v7918 = vpop.f32.mrf.mxu0
    %v7919 = vadd.f32 %v3521, %v7918
    %v7920 = vpop.f32.mrf.mxu0
    %v7921 = vpop.f32.mrf.mxu0
    %7922 = vdwg.mxu0
    %7923 = vmatprep.subr.bf16.mxu0 %v6137
    %7924 = vmatpush1.bf16.msra.mxu0 %v6136
    %7925 = vmatprep.subr.bf16.mxu0 %v6125
    %7926 = vmatpush1.bf16.msra.mxu0 %v6124
    %7927 = vmatprep.subr.bf16.mxu0 %v6113
    %7928 = vmatpush1.bf16.msra.mxu0 %v6112
    %7929 = vmatprep.subr.bf16.mxu0 %v6101
    %7930 = vmatpush1.bf16.msra.mxu0 %v6100
    %7931 = vmatprep.subr.bf16.mxu0 %v6089
    %7932 = vmatpush1.bf16.msra.mxu0 %v6088
    %7933 = vmatprep.subr.bf16.mxu0 %v6077
    %7934 = vmatpush1.bf16.msra.mxu0 %v6076
    %7935 = vmatprep.subr.bf16.mxu0 %v6065
    %7936 = vmatpush1.bf16.msra.mxu0 %v6064
    %7937 = vmatprep.subr.bf16.mxu0 %v6053
    %7938 = vmatpush1.bf16.msra.mxu0 %v6052
    %7939 = vmatprep.subr.bf16.mxu0 %v6233
    %7940 = vmatpush2.bf16.msra.mxu0 %v6232
    %7941 = vmatprep.subr.bf16.mxu0 %v6221
    %7942 = vmatpush2.bf16.msra.mxu0 %v6220
    %7943 = vmatprep.subr.bf16.mxu0 %v6209
    %7944 = vmatpush2.bf16.msra.mxu0 %v6208
    %7945 = vmatprep.subr.bf16.mxu0 %v6197
    %7946 = vmatpush2.bf16.msra.mxu0 %v6196
    %7947 = vmatprep.subr.bf16.mxu0 %v6185
    %7948 = vmatpush2.bf16.msra.mxu0 %v6184
    %7949 = vmatprep.subr.bf16.mxu0 %v6173
    %7950 = vmatpush2.bf16.msra.mxu0 %v6172
    %7951 = vmatprep.subr.bf16.mxu0 %v6161
    %7952 = vmatpush2.bf16.msra.mxu0 %v6160
    %7953 = vmatprep.subr.bf16.mxu0 %v6149
    %7954 = vmatpush2.bf16.msra.mxu0 %v6148
    %7955 = vmatprep.mubr.bf16.mxu0 %v2713
    %7956 = vmatmul.mubr.bf16.gmra.mxu0 %v2712
    %v7957 = vpop.f32.mrf.mxu0
    %v7958 = vadd.f32 %v7917, %v7957
    %v7959 = vpop.f32.mrf.mxu0
    %v7960 = vadd.f32 %v7919, %v7959
    %v7961 = vpop.f32.mrf.mxu0
    %v7962 = vpop.f32.mrf.mxu0
    %7963 = vdwg.mxu0
    %7964 = vmatprep.subr.bf16.mxu0 %v6329
    %7965 = vmatpush1.bf16.msra.mxu0 %v6328
    %7966 = vmatprep.subr.bf16.mxu0 %v6317
    %7967 = vmatpush1.bf16.msra.mxu0 %v6316
    %7968 = vmatprep.subr.bf16.mxu0 %v6305
    %7969 = vmatpush1.bf16.msra.mxu0 %v6304
    %7970 = vmatprep.subr.bf16.mxu0 %v6293
    %7971 = vmatpush1.bf16.msra.mxu0 %v6292
    %7972 = vmatprep.subr.bf16.mxu0 %v6281
    %7973 = vmatpush1.bf16.msra.mxu0 %v6280
    %7974 = vmatprep.subr.bf16.mxu0 %v6269
    %7975 = vmatpush1.bf16.msra.mxu0 %v6268
    %7976 = vmatprep.subr.bf16.mxu0 %v6257
    %7977 = vmatpush1.bf16.msra.mxu0 %v6256
    %7978 = vmatprep.subr.bf16.mxu0 %v6245
    %7979 = vmatpush1.bf16.msra.mxu0 %v6244
    %7980 = vmatprep.subr.bf16.mxu0 %v6425
    %7981 = vmatpush2.bf16.msra.mxu0 %v6424
    %7982 = vmatprep.subr.bf16.mxu0 %v6413
    %7983 = vmatpush2.bf16.msra.mxu0 %v6412
    %7984 = vmatprep.subr.bf16.mxu0 %v6401
    %7985 = vmatpush2.bf16.msra.mxu0 %v6400
    %7986 = vmatprep.subr.bf16.mxu0 %v6389
    %7987 = vmatpush2.bf16.msra.mxu0 %v6388
    %7988 = vmatprep.subr.bf16.mxu0 %v6377
    %7989 = vmatpush2.bf16.msra.mxu0 %v6376
    %7990 = vmatprep.subr.bf16.mxu0 %v6365
    %7991 = vmatpush2.bf16.msra.mxu0 %v6364
    %7992 = vmatprep.subr.bf16.mxu0 %v6353
    %7993 = vmatpush2.bf16.msra.mxu0 %v6352
    %7994 = vmatprep.subr.bf16.mxu0 %v6341
    %7995 = vmatpush2.bf16.msra.mxu0 %v6340
    %7996 = vmatprep.mubr.bf16.mxu0 %v2715
    %7997 = vmatmul.mubr.bf16.gmra.mxu0 %v2714
    %v7998 = vpop.f32.mrf.mxu0
    %v7999 = vadd.f32 %v7958, %v7998
    %v8000 = vpop.f32.mrf.mxu0
    %v8001 = vadd.f32 %v7960, %v8000
    %v8002 = vpop.f32.mrf.mxu0
    %v8003 = vpop.f32.mrf.mxu0
    %8004 = vdwg.mxu0
    %8005 = vmatprep.subr.bf16.mxu0 %v6521
    %8006 = vmatpush1.bf16.msra.mxu0 %v6520
    %8007 = vmatprep.subr.bf16.mxu0 %v6509
    %8008 = vmatpush1.bf16.msra.mxu0 %v6508
    %8009 = vmatprep.subr.bf16.mxu0 %v6497
    %8010 = vmatpush1.bf16.msra.mxu0 %v6496
    %8011 = vmatprep.subr.bf16.mxu0 %v6485
    %8012 = vmatpush1.bf16.msra.mxu0 %v6484
    %8013 = vmatprep.subr.bf16.mxu0 %v6473
    %8014 = vmatpush1.bf16.msra.mxu0 %v6472
    %8015 = vmatprep.subr.bf16.mxu0 %v6461
    %8016 = vmatpush1.bf16.msra.mxu0 %v6460
    %8017 = vmatprep.subr.bf16.mxu0 %v6449
    %8018 = vmatpush1.bf16.msra.mxu0 %v6448
    %8019 = vmatprep.subr.bf16.mxu0 %v6437
    %8020 = vmatpush1.bf16.msra.mxu0 %v6436
    %8021 = vmatprep.subr.bf16.mxu0 %v6617
    %8022 = vmatpush2.bf16.msra.mxu0 %v6616
    %8023 = vmatprep.subr.bf16.mxu0 %v6605
    %8024 = vmatpush2.bf16.msra.mxu0 %v6604
    %8025 = vmatprep.subr.bf16.mxu0 %v6593
    %8026 = vmatpush2.bf16.msra.mxu0 %v6592
    %8027 = vmatprep.subr.bf16.mxu0 %v6581
    %8028 = vmatpush2.bf16.msra.mxu0 %v6580
    %8029 = vmatprep.subr.bf16.mxu0 %v6569
    %8030 = vmatpush2.bf16.msra.mxu0 %v6568
    %8031 = vmatprep.subr.bf16.mxu0 %v6557
    %8032 = vmatpush2.bf16.msra.mxu0 %v6556
    %8033 = vmatprep.subr.bf16.mxu0 %v6545
    %8034 = vmatpush2.bf16.msra.mxu0 %v6544
    %8035 = vmatprep.subr.bf16.mxu0 %v6533
    %8036 = vmatpush2.bf16.msra.mxu0 %v6532
    %8037 = vmatprep.mubr.bf16.mxu0 %v2717
    %8038 = vmatmul.mubr.bf16.gmra.mxu0 %v2716
    %v8039 = vpop.f32.mrf.mxu0
    %v8040 = vadd.f32 %v7999, %v8039
    %v8041 = vpop.f32.mrf.mxu0
    %v8042 = vadd.f32 %v8001, %v8041
    %v8043 = vpop.f32.mrf.mxu0
    %v8044 = vpop.f32.mrf.mxu0
    %8045 = vdwg.mxu0
    %8046 = vmatprep.subr.bf16.mxu0 %v5947
    %8047 = vmatpush1.bf16.msra.mxu0 %v5946
    %8048 = vmatprep.subr.bf16.mxu0 %v5935
    %8049 = vmatpush1.bf16.msra.mxu0 %v5934
    %8050 = vmatprep.subr.bf16.mxu0 %v5923
    %8051 = vmatpush1.bf16.msra.mxu0 %v5922
    %8052 = vmatprep.subr.bf16.mxu0 %v5911
    %8053 = vmatpush1.bf16.msra.mxu0 %v5910
    %8054 = vmatprep.subr.bf16.mxu0 %v5899
    %8055 = vmatpush1.bf16.msra.mxu0 %v5898
    %8056 = vmatprep.subr.bf16.mxu0 %v5887
    %8057 = vmatpush1.bf16.msra.mxu0 %v5886
    %8058 = vmatprep.subr.bf16.mxu0 %v5875
    %8059 = vmatpush1.bf16.msra.mxu0 %v5874
    %8060 = vmatprep.subr.bf16.mxu0 %v5863
    %8061 = vmatpush1.bf16.msra.mxu0 %v5862
    %8062 = vmatprep.subr.bf16.mxu0 %v6043
    %8063 = vmatpush2.bf16.msra.mxu0 %v6042
    %8064 = vmatprep.subr.bf16.mxu0 %v6031
    %8065 = vmatpush2.bf16.msra.mxu0 %v6030
    %8066 = vmatprep.subr.bf16.mxu0 %v6019
    %8067 = vmatpush2.bf16.msra.mxu0 %v6018
    %8068 = vmatprep.subr.bf16.mxu0 %v6007
    %8069 = vmatpush2.bf16.msra.mxu0 %v6006
    %8070 = vmatprep.subr.bf16.mxu0 %v5995
    %8071 = vmatpush2.bf16.msra.mxu0 %v5994
    %8072 = vmatprep.subr.bf16.mxu0 %v5983
    %8073 = vmatpush2.bf16.msra.mxu0 %v5982
    %8074 = vmatprep.subr.bf16.mxu0 %v5971
    %8075 = vmatpush2.bf16.msra.mxu0 %v5970
    %8076 = vmatprep.subr.bf16.mxu0 %v5959
    %8077 = vmatpush2.bf16.msra.mxu0 %v5958
    %8078 = vmatprep.mubr.bf16.mxu0 %v2711
    %8079 = vmatmul.mubr.bf16.gmra.mxu0 %v2710
    %v8080 = vpop.f32.mrf.mxu0
    %v8081 = vadd.f32 %v3525, %v8080
    %v8082 = vpop.f32.mrf.mxu0
    %v8083 = vadd.f32 %v3529, %v8082
    %v8084 = vpop.f32.mrf.mxu0
    %v8085 = vpop.f32.mrf.mxu0
    %8086 = vdwg.mxu0
    %8087 = vmatprep.subr.bf16.mxu0 %v6139
    %8088 = vmatpush1.bf16.msra.mxu0 %v6138
    %8089 = vmatprep.subr.bf16.mxu0 %v6127
    %8090 = vmatpush1.bf16.msra.mxu0 %v6126
    %8091 = vmatprep.subr.bf16.mxu0 %v6115
    %8092 = vmatpush1.bf16.msra.mxu0 %v6114
    %8093 = vmatprep.subr.bf16.mxu0 %v6103
    %8094 = vmatpush1.bf16.msra.mxu0 %v6102
    %8095 = vmatprep.subr.bf16.mxu0 %v6091
    %8096 = vmatpush1.bf16.msra.mxu0 %v6090
    %8097 = vmatprep.subr.bf16.mxu0 %v6079
    %8098 = vmatpush1.bf16.msra.mxu0 %v6078
    %8099 = vmatprep.subr.bf16.mxu0 %v6067
    %8100 = vmatpush1.bf16.msra.mxu0 %v6066
    %8101 = vmatprep.subr.bf16.mxu0 %v6055
    %8102 = vmatpush1.bf16.msra.mxu0 %v6054
    %8103 = vmatprep.subr.bf16.mxu0 %v6235
    %8104 = vmatpush2.bf16.msra.mxu0 %v6234
    %8105 = vmatprep.subr.bf16.mxu0 %v6223
    %8106 = vmatpush2.bf16.msra.mxu0 %v6222
    %8107 = vmatprep.subr.bf16.mxu0 %v6211
    %8108 = vmatpush2.bf16.msra.mxu0 %v6210
    %8109 = vmatprep.subr.bf16.mxu0 %v6199
    %8110 = vmatpush2.bf16.msra.mxu0 %v6198
    %8111 = vmatprep.subr.bf16.mxu0 %v6187
    %8112 = vmatpush2.bf16.msra.mxu0 %v6186
    %8113 = vmatprep.subr.bf16.mxu0 %v6175
    %8114 = vmatpush2.bf16.msra.mxu0 %v6174
    %8115 = vmatprep.subr.bf16.mxu0 %v6163
    %8116 = vmatpush2.bf16.msra.mxu0 %v6162
    %8117 = vmatprep.subr.bf16.mxu0 %v6151
    %8118 = vmatpush2.bf16.msra.mxu0 %v6150
    %8119 = vmatprep.mubr.bf16.mxu0 %v2713
    %8120 = vmatmul.mubr.bf16.gmra.mxu0 %v2712
    %v8121 = vpop.f32.mrf.mxu0
    %v8122 = vadd.f32 %v8081, %v8121
    %v8123 = vpop.f32.mrf.mxu0
    %v8124 = vadd.f32 %v8083, %v8123
    %v8125 = vpop.f32.mrf.mxu0
    %v8126 = vpop.f32.mrf.mxu0
    %8127 = vdwg.mxu0
    %8128 = vmatprep.subr.bf16.mxu0 %v6331
    %8129 = vmatpush1.bf16.msra.mxu0 %v6330
    %8130 = vmatprep.subr.bf16.mxu0 %v6319
    %8131 = vmatpush1.bf16.msra.mxu0 %v6318
    %8132 = vmatprep.subr.bf16.mxu0 %v6307
    %8133 = vmatpush1.bf16.msra.mxu0 %v6306
    %8134 = vmatprep.subr.bf16.mxu0 %v6295
    %8135 = vmatpush1.bf16.msra.mxu0 %v6294
    %8136 = vmatprep.subr.bf16.mxu0 %v6283
    %8137 = vmatpush1.bf16.msra.mxu0 %v6282
    %8138 = vmatprep.subr.bf16.mxu0 %v6271
    %8139 = vmatpush1.bf16.msra.mxu0 %v6270
    %8140 = vmatprep.subr.bf16.mxu0 %v6259
    %8141 = vmatpush1.bf16.msra.mxu0 %v6258
    %8142 = vmatprep.subr.bf16.mxu0 %v6247
    %8143 = vmatpush1.bf16.msra.mxu0 %v6246
    %8144 = vmatprep.subr.bf16.mxu0 %v6427
    %8145 = vmatpush2.bf16.msra.mxu0 %v6426
    %8146 = vmatprep.subr.bf16.mxu0 %v6415
    %8147 = vmatpush2.bf16.msra.mxu0 %v6414
    %8148 = vmatprep.subr.bf16.mxu0 %v6403
    %8149 = vmatpush2.bf16.msra.mxu0 %v6402
    %8150 = vmatprep.subr.bf16.mxu0 %v6391
    %8151 = vmatpush2.bf16.msra.mxu0 %v6390
    %8152 = vmatprep.subr.bf16.mxu0 %v6379
    %8153 = vmatpush2.bf16.msra.mxu0 %v6378
    %8154 = vmatprep.subr.bf16.mxu0 %v6367
    %8155 = vmatpush2.bf16.msra.mxu0 %v6366
    %8156 = vmatprep.subr.bf16.mxu0 %v6355
    %8157 = vmatpush2.bf16.msra.mxu0 %v6354
    %8158 = vmatprep.subr.bf16.mxu0 %v6343
    %8159 = vmatpush2.bf16.msra.mxu0 %v6342
    %8160 = vmatprep.mubr.bf16.mxu0 %v2715
    %8161 = vmatmul.mubr.bf16.gmra.mxu0 %v2714
    %v8162 = vpop.f32.mrf.mxu0
    %v8163 = vadd.f32 %v8122, %v8162
    %v8164 = vpop.f32.mrf.mxu0
    %v8165 = vadd.f32 %v8124, %v8164
    %v8166 = vpop.f32.mrf.mxu0
    %v8167 = vpop.f32.mrf.mxu0
    %8168 = vdwg.mxu0
    %8169 = vmatprep.subr.bf16.mxu0 %v6523
    %8170 = vmatpush1.bf16.msra.mxu0 %v6522
    %8171 = vmatprep.subr.bf16.mxu0 %v6511
    %8172 = vmatpush1.bf16.msra.mxu0 %v6510
    %8173 = vmatprep.subr.bf16.mxu0 %v6499
    %8174 = vmatpush1.bf16.msra.mxu0 %v6498
    %8175 = vmatprep.subr.bf16.mxu0 %v6487
    %8176 = vmatpush1.bf16.msra.mxu0 %v6486
    %8177 = vmatprep.subr.bf16.mxu0 %v6475
    %8178 = vmatpush1.bf16.msra.mxu0 %v6474
    %8179 = vmatprep.subr.bf16.mxu0 %v6463
    %8180 = vmatpush1.bf16.msra.mxu0 %v6462
    %8181 = vmatprep.subr.bf16.mxu0 %v6451
    %8182 = vmatpush1.bf16.msra.mxu0 %v6450
    %8183 = vmatprep.subr.bf16.mxu0 %v6439
    %8184 = vmatpush1.bf16.msra.mxu0 %v6438
    %8185 = vmatprep.subr.bf16.mxu0 %v6619
    %8186 = vmatpush2.bf16.msra.mxu0 %v6618
    %8187 = vmatprep.subr.bf16.mxu0 %v6607
    %8188 = vmatpush2.bf16.msra.mxu0 %v6606
    %8189 = vmatprep.subr.bf16.mxu0 %v6595
    %8190 = vmatpush2.bf16.msra.mxu0 %v6594
    %8191 = vmatprep.subr.bf16.mxu0 %v6583
    %8192 = vmatpush2.bf16.msra.mxu0 %v6582
    %8193 = vmatprep.subr.bf16.mxu0 %v6571
    %8194 = vmatpush2.bf16.msra.mxu0 %v6570
    %8195 = vmatprep.subr.bf16.mxu0 %v6559
    %8196 = vmatpush2.bf16.msra.mxu0 %v6558
    %8197 = vmatprep.subr.bf16.mxu0 %v6547
    %8198 = vmatpush2.bf16.msra.mxu0 %v6546
    %8199 = vmatprep.subr.bf16.mxu0 %v6535
    %8200 = vmatpush2.bf16.msra.mxu0 %v6534
    %8201 = vmatprep.mubr.bf16.mxu0 %v2717
    %8202 = vmatmul.mubr.bf16.gmra.mxu0 %v2716
    %v8203 = vpop.f32.mrf.mxu0
    %v8204 = vadd.f32 %v8163, %v8203
    %v8205 = vpop.f32.mrf.mxu0
    %v8206 = vadd.f32 %v8165, %v8205
    %v8207 = vpop.f32.mrf.mxu0
    %v8208 = vpop.f32.mrf.mxu0
    %8209 = vdwg.mxu0
    %8210 = vmatprep.subr.bf16.mxu0 %v5949
    %8211 = vmatpush1.bf16.msra.mxu0 %v5948
    %8212 = vmatprep.subr.bf16.mxu0 %v5937
    %8213 = vmatpush1.bf16.msra.mxu0 %v5936
    %8214 = vmatprep.subr.bf16.mxu0 %v5925
    %8215 = vmatpush1.bf16.msra.mxu0 %v5924
    %8216 = vmatprep.subr.bf16.mxu0 %v5913
    %8217 = vmatpush1.bf16.msra.mxu0 %v5912
    %8218 = vmatprep.subr.bf16.mxu0 %v5901
    %8219 = vmatpush1.bf16.msra.mxu0 %v5900
    %8220 = vmatprep.subr.bf16.mxu0 %v5889
    %8221 = vmatpush1.bf16.msra.mxu0 %v5888
    %8222 = vmatprep.subr.bf16.mxu0 %v5877
    %8223 = vmatpush1.bf16.msra.mxu0 %v5876
    %8224 = vmatprep.subr.bf16.mxu0 %v5865
    %8225 = vmatpush1.bf16.msra.mxu0 %v5864
    %8226 = vmatprep.subr.bf16.mxu0 %v6045
    %8227 = vmatpush2.bf16.msra.mxu0 %v6044
    %8228 = vmatprep.subr.bf16.mxu0 %v6033
    %8229 = vmatpush2.bf16.msra.mxu0 %v6032
    %8230 = vmatprep.subr.bf16.mxu0 %v6021
    %8231 = vmatpush2.bf16.msra.mxu0 %v6020
    %8232 = vmatprep.subr.bf16.mxu0 %v6009
    %8233 = vmatpush2.bf16.msra.mxu0 %v6008
    %8234 = vmatprep.subr.bf16.mxu0 %v5997
    %8235 = vmatpush2.bf16.msra.mxu0 %v5996
    %8236 = vmatprep.subr.bf16.mxu0 %v5985
    %8237 = vmatpush2.bf16.msra.mxu0 %v5984
    %8238 = vmatprep.subr.bf16.mxu0 %v5973
    %8239 = vmatpush2.bf16.msra.mxu0 %v5972
    %8240 = vmatprep.subr.bf16.mxu0 %v5961
    %8241 = vmatpush2.bf16.msra.mxu0 %v5960
    %8242 = vmatprep.mubr.bf16.mxu0 %v2711
    %8243 = vmatmul.mubr.bf16.gmra.mxu0 %v2710
    %v8244 = vpop.f32.mrf.mxu0
    %v8245 = vadd.f32 %v3533, %v8244
    %v8246 = vpop.f32.mrf.mxu0
    %v8247 = vadd.f32 %v3537, %v8246
    %v8248 = vpop.f32.mrf.mxu0
    %v8249 = vpop.f32.mrf.mxu0
    %8250 = vdwg.mxu0
    %8251 = vmatprep.subr.bf16.mxu0 %v6141
    %8252 = vmatpush1.bf16.msra.mxu0 %v6140
    %8253 = vmatprep.subr.bf16.mxu0 %v6129
    %8254 = vmatpush1.bf16.msra.mxu0 %v6128
    %8255 = vmatprep.subr.bf16.mxu0 %v6117
    %8256 = vmatpush1.bf16.msra.mxu0 %v6116
    %8257 = vmatprep.subr.bf16.mxu0 %v6105
    %8258 = vmatpush1.bf16.msra.mxu0 %v6104
    %8259 = vmatprep.subr.bf16.mxu0 %v6093
    %8260 = vmatpush1.bf16.msra.mxu0 %v6092
    %8261 = vmatprep.subr.bf16.mxu0 %v6081
    %8262 = vmatpush1.bf16.msra.mxu0 %v6080
    %8263 = vmatprep.subr.bf16.mxu0 %v6069
    %8264 = vmatpush1.bf16.msra.mxu0 %v6068
    %8265 = vmatprep.subr.bf16.mxu0 %v6057
    %8266 = vmatpush1.bf16.msra.mxu0 %v6056
    %8267 = vmatprep.subr.bf16.mxu0 %v6237
    %8268 = vmatpush2.bf16.msra.mxu0 %v6236
    %8269 = vmatprep.subr.bf16.mxu0 %v6225
    %8270 = vmatpush2.bf16.msra.mxu0 %v6224
    %8271 = vmatprep.subr.bf16.mxu0 %v6213
    %8272 = vmatpush2.bf16.msra.mxu0 %v6212
    %8273 = vmatprep.subr.bf16.mxu0 %v6201
    %8274 = vmatpush2.bf16.msra.mxu0 %v6200
    %8275 = vmatprep.subr.bf16.mxu0 %v6189
    %8276 = vmatpush2.bf16.msra.mxu0 %v6188
    %8277 = vmatprep.subr.bf16.mxu0 %v6177
    %8278 = vmatpush2.bf16.msra.mxu0 %v6176
    %8279 = vmatprep.subr.bf16.mxu0 %v6165
    %8280 = vmatpush2.bf16.msra.mxu0 %v6164
    %8281 = vmatprep.subr.bf16.mxu0 %v6153
    %8282 = vmatpush2.bf16.msra.mxu0 %v6152
    %8283 = vmatprep.mubr.bf16.mxu0 %v2713
    %8284 = vmatmul.mubr.bf16.gmra.mxu0 %v2712
    %v8285 = vpop.f32.mrf.mxu0
    %v8286 = vadd.f32 %v8245, %v8285
    %v8287 = vpop.f32.mrf.mxu0
    %v8288 = vadd.f32 %v8247, %v8287
    %v8289 = vpop.f32.mrf.mxu0
    %v8290 = vpop.f32.mrf.mxu0
    %8291 = vdwg.mxu0
    %8292 = vmatprep.subr.bf16.mxu0 %v6333
    %8293 = vmatpush1.bf16.msra.mxu0 %v6332
    %8294 = vmatprep.subr.bf16.mxu0 %v6321
    %8295 = vmatpush1.bf16.msra.mxu0 %v6320
    %8296 = vmatprep.subr.bf16.mxu0 %v6309
    %8297 = vmatpush1.bf16.msra.mxu0 %v6308
    %8298 = vmatprep.subr.bf16.mxu0 %v6297
    %8299 = vmatpush1.bf16.msra.mxu0 %v6296
    %8300 = vmatprep.subr.bf16.mxu0 %v6285
    %8301 = vmatpush1.bf16.msra.mxu0 %v6284
    %8302 = vmatprep.subr.bf16.mxu0 %v6273
    %8303 = vmatpush1.bf16.msra.mxu0 %v6272
    %8304 = vmatprep.subr.bf16.mxu0 %v6261
    %8305 = vmatpush1.bf16.msra.mxu0 %v6260
    %8306 = vmatprep.subr.bf16.mxu0 %v6249
    %8307 = vmatpush1.bf16.msra.mxu0 %v6248
    %8308 = vmatprep.subr.bf16.mxu0 %v6429
    %8309 = vmatpush2.bf16.msra.mxu0 %v6428
    %8310 = vmatprep.subr.bf16.mxu0 %v6417
    %8311 = vmatpush2.bf16.msra.mxu0 %v6416
    %8312 = vmatprep.subr.bf16.mxu0 %v6405
    %8313 = vmatpush2.bf16.msra.mxu0 %v6404
    %8314 = vmatprep.subr.bf16.mxu0 %v6393
    %8315 = vmatpush2.bf16.msra.mxu0 %v6392
    %8316 = vmatprep.subr.bf16.mxu0 %v6381
    %8317 = vmatpush2.bf16.msra.mxu0 %v6380
    %8318 = vmatprep.subr.bf16.mxu0 %v6369
    %8319 = vmatpush2.bf16.msra.mxu0 %v6368
    %8320 = vmatprep.subr.bf16.mxu0 %v6357
    %8321 = vmatpush2.bf16.msra.mxu0 %v6356
    %8322 = vmatprep.subr.bf16.mxu0 %v6345
    %8323 = vmatpush2.bf16.msra.mxu0 %v6344
    %8324 = vmatprep.mubr.bf16.mxu0 %v2715
    %8325 = vmatmul.mubr.bf16.gmra.mxu0 %v2714
    %v8326 = vpop.f32.mrf.mxu0
    %v8327 = vadd.f32 %v8286, %v8326
    %v8328 = vpop.f32.mrf.mxu0
    %v8329 = vadd.f32 %v8288, %v8328
    %v8330 = vpop.f32.mrf.mxu0
    %v8331 = vpop.f32.mrf.mxu0
    %8332 = vdwg.mxu0
    %8333 = vmatprep.subr.bf16.mxu0 %v6525
    %8334 = vmatpush1.bf16.msra.mxu0 %v6524
    %8335 = vmatprep.subr.bf16.mxu0 %v6513
    %8336 = vmatpush1.bf16.msra.mxu0 %v6512
    %8337 = vmatprep.subr.bf16.mxu0 %v6501
    %8338 = vmatpush1.bf16.msra.mxu0 %v6500
    %8339 = vmatprep.subr.bf16.mxu0 %v6489
    %8340 = vmatpush1.bf16.msra.mxu0 %v6488
    %8341 = vmatprep.subr.bf16.mxu0 %v6477
    %8342 = vmatpush1.bf16.msra.mxu0 %v6476
    %8343 = vmatprep.subr.bf16.mxu0 %v6465
    %8344 = vmatpush1.bf16.msra.mxu0 %v6464
    %8345 = vmatprep.subr.bf16.mxu0 %v6453
    %8346 = vmatpush1.bf16.msra.mxu0 %v6452
    %8347 = vmatprep.subr.bf16.mxu0 %v6441
    %8348 = vmatpush1.bf16.msra.mxu0 %v6440
    %8349 = vmatprep.subr.bf16.mxu0 %v6621
    %8350 = vmatpush2.bf16.msra.mxu0 %v6620
    %8351 = vmatprep.subr.bf16.mxu0 %v6609
    %8352 = vmatpush2.bf16.msra.mxu0 %v6608
    %8353 = vmatprep.subr.bf16.mxu0 %v6597
    %8354 = vmatpush2.bf16.msra.mxu0 %v6596
    %8355 = vmatprep.subr.bf16.mxu0 %v6585
    %8356 = vmatpush2.bf16.msra.mxu0 %v6584
    %8357 = vmatprep.subr.bf16.mxu0 %v6573
    %8358 = vmatpush2.bf16.msra.mxu0 %v6572
    %8359 = vmatprep.subr.bf16.mxu0 %v6561
    %8360 = vmatpush2.bf16.msra.mxu0 %v6560
    %8361 = vmatprep.subr.bf16.mxu0 %v6549
    %8362 = vmatpush2.bf16.msra.mxu0 %v6548
    %8363 = vmatprep.subr.bf16.mxu0 %v6537
    %8364 = vmatpush2.bf16.msra.mxu0 %v6536
    %8365 = vmatprep.mubr.bf16.mxu0 %v2717
    %8366 = vmatmul.mubr.bf16.gmra.mxu0 %v2716
    %v8367 = vpop.f32.mrf.mxu0
    %v8368 = vadd.f32 %v8327, %v8367
    %v8369 = vpop.f32.mrf.mxu0
    %v8370 = vadd.f32 %v8329, %v8369
    %v8371 = vpop.f32.mrf.mxu0
    %v8372 = vpop.f32.mrf.mxu0
    %8373 = vdwg.mxu0
    %8374 = vst [vmem:[#allocation17] sm:$0xff] %v7548
    %8375 = vst [vmem:[#allocation17 + $0x8] sm:$0xff] %v7550
    %8376 = vst [vmem:[#allocation17 + $0x10] sm:$0xff] %v7712
    %8377 = vst [vmem:[#allocation17 + $0x18] sm:$0xff] %v7714
    %8378 = vst [vmem:[#allocation17 + $0x20] sm:$0xff] %v7876
    %8379 = vst [vmem:[#allocation17 + $0x28] sm:$0xff] %v7878
    %8380 = vst [vmem:[#allocation17 + $0x30] sm:$0xff] %v8040
    %8381 = vst [vmem:[#allocation17 + $0x38] sm:$0xff] %v8042
    %8382 = vst [vmem:[#allocation17 + $0x40] sm:$0xff] %v8204
    %8383 = vst [vmem:[#allocation17 + $0x48] sm:$0xff] %v8206
    %8384 = vst [vmem:[#allocation17 + $0x50] sm:$0xff] %v8368
    %8385 = vst [vmem:[#allocation17 + $0x58] sm:$0xff] %v8370
    // Predicated region
    $region74: #{tpu_custom_call.1} parent=1 // pred_check
      _
    $region75: #{tpu_custom_call.1} parent=1 // pred_check_branch
      %8387 = sbr.rel (0) target = $region77
    $region76: #{tpu_custom_call.1} parent=1 // pred_region
      %s8389 = ssub.s32 1536, 1536
      %8390 = vsyncadd [#allocation4], %s8389
      %s8392 = sshll.u32 [#allocation17], 4
      %s8393 = int_to_ptr.vmem [resolvable:$true] %s8392
      %8395 = dma.vmem_to_hbm [thread:$0]  %s8393, 1536, %s9, [#allocation4]
    $region77: #{tpu_custom_call.1} parent=1 // pred_fallthru
      _
    // Predicated region
    $region78: #{tpu_custom_call.1} parent=1 // pred_check
      _
    $region79: #{tpu_custom_call.1} parent=1 // pred_check_branch
      %8397 = sbr.rel (0) target = $region81
    $region80: #{tpu_custom_call.1} parent=1 // pred_region
      %8398 = dma.done [#allocation4], 1536
    $region81: #{tpu_custom_call.1} parent=1 // pred_fallthru
      _
    %8399 = vsyncpa [#allocation3], 1
    %8400 = vsyncpa [#allocation6], 1
    %8401 = vsyncpa [#allocation9], 1
    %8402 = vsyncpa [#allocation12], 1
    %8403 = vsyncpa [#allocation15], 1
    %8404 = vsyncpa [#allocation4], 1

</llo_original>
